<compile_context>
chip_gen: v7x
topology: tpu7x:2x2x1
jax: 0.10.0
libtpu: 0.0.40
codegen_flags: <defaults>
</compile_context>

<pallas_src>
import functools
import numpy as np

import jax
import jax.numpy as jnp
from jax import lax
from jax.experimental import pallas as pl
from jax.experimental.pallas import tpu as pltpu

EPS_ZERO = float(np.finfo(float).eps)   # np.finfo(float).eps used by ES_EE.ee
SQRT2 = float(np.sqrt(2.0))
E_PAD = 128                              # experts padded to one lane width for the gating slab
NEG_BIG = -1e30
TIE_EPS = 1e-6                           # per-expert tie-break epsilon (added in the wrapper)
GELU_C0 = 0.7978845608028654             # sqrt(2/pi)
GELU_C1 = 0.044715


def _gelu_tanh(x):
    # tanh-approx GELU: the tanh goes to the EUP (its own VLIW slot) instead of a long VALU
    # erf polynomial.  Max abs error vs exact erf-GELU ~2e-4, far inside the check tolerance.
    return 0.5 * x * (1.0 + jnp.tanh(GELU_C0 * (x + GELU_C1 * x * x * x)))


def _moe_kernel(x_ref, gd_ref, wgx_ref, w1_ref, b1_ref, w2_ref, b2_ref, expand_ref, s_ref,
                y_ref, wsum_ref, wcnt_ref, *, sub_m, n_sub):
    # small hoists: per-batch gate offset (padded lanes already -1e30) and the f32 gate weights
    gd = gd_ref[...]                                      # (1, E_PAD)
    wgx = wgx_ref[...]                                    # (C, E_PAD)
    neg = jnp.float32(NEG_BIG)

    def chunk(i, carry):
        wsum, wcnt = carry
        r0 = pl.multiple_of(i * sub_m, sub_m)
        x = x_ref[pl.ds(r0, sub_m), :]                    # (sub_m, C) f32

        # ---- gating: logits = x @ w_g[:C] + (fc(prompt) @ w_g[C:] + pad/tie-break) (hoisted)
        logits = jnp.dot(x, wgx, preferred_element_type=jnp.float32) + gd
        # top-1 / top-2 via equality masks (2 XLU reductions); exact ties are broken by the
        # per-expert epsilon baked into gd in the wrapper, so masks are one-hot in practice.
        m1 = jnp.max(logits, axis=1, keepdims=True)
        top1 = logits == m1
        l2 = jnp.where(top1, neg, logits)
        m2 = jnp.max(l2, axis=1, keepdims=True)
        top2 = l2 == m2
        e2 = jnp.exp(m2 - m1)
        g1 = 1.0 / (1.0 + e2)                             # softmax over the two selected logits
        g2 = e2 * g1
        gates = jnp.where(top1, g1, 0.0) + jnp.where(top2, g2, 0.0)      # (sub_m, E_PAD)

        # ---- balance-loss statistics: accumulated over sub-chunks, reduced in the wrapper
        wsum = wsum + jnp.sum(gates, axis=0, keepdims=True)
        wcnt = wcnt + jnp.sum((gates > 0.0).astype(jnp.float32), axis=0, keepdims=True)

        # ---- fused experts: one fc1 matmul + one block-diagonal fc2 matmul (bf16, f32 acc)
        xb = x.astype(jnp.bfloat16)
        h = jnp.dot(xb, w1_ref[...], preferred_element_type=jnp.float32) + b1_ref[...]
        h = _gelu_tanh(h)                                 # (sub_m, E*Hd)
        o = jnp.dot(h.astype(jnp.bfloat16), w2_ref[...],
                    preferred_element_type=jnp.float32) + b2_ref[...]    # (sub_m, E*C)
        # TODO(synk): no max-subtraction before exp (matches the PyTorch reference exactly, but
        # can overflow for very large expert outputs).
        p = jnp.exp(o)

        # gate broadcast over the (sub_m, E*C) slab via a constant 0/1 expansion matmul (MXU),
        # then ES_EE "sum over experts" via the group-sum selection matmul (MXU).
        g_all = jnp.dot(gates, expand_ref[...], preferred_element_type=jnp.float32)
        acc = jnp.dot(g_all * p, s_ref[...], preferred_element_type=jnp.float32)   # (sub_m, C)

        y = jnp.log(jnp.where(acc == 0.0, jnp.float32(EPS_ZERO), acc)) + x   # residual add
        # TODO(synk): C=32 < 128 lanes -> masked stores; lane-dense output layout would help v5e.
        y_ref[pl.ds(r0, sub_m), :] = y.astype(y_ref.dtype)
        return wsum, wcnt

    zero = jnp.zeros((1, E_PAD), jnp.float32)
    wsum, wcnt = lax.fori_loop(0, n_sub, chunk, (zero, zero), unroll=True)
    wsum_ref[...] = wsum
    wcnt_ref[...] = wcnt


def _balance(v):
    # torch: x.float().var() / (x.float().mean()**2 + eps), unbiased var
    eps = 1e-10
    if v.shape[0] == 1:
        return jnp.zeros((), v.dtype)
    m = jnp.mean(v)
    var = jnp.sum((v - m) ** 2) / (v.shape[0] - 1)
    return var / (m * m + eps)


def stpg_g_mese_forward(x, prompt, params, *, tile_m=512, sub_m=128):
    B, C, H, W = x.shape
    HW = H * W
    E = params["num_experts"]
    Hd = params["w1"].shape[-1]
    EC, EH = E * C, E * Hd

    tile_m = min(tile_m, HW)
    # v7x megacore: keep >= 2 total grid steps so both TensorCores get work.
    while B * (HW // tile_m) < 2 and tile_m > 8:
        tile_m //= 2
    sub_m = min(sub_m, tile_m)
    assert HW % tile_m == 0 and tile_m % sub_m == 0 and sub_m % 8 == 0
    n_m = HW // tile_m
    n_sub = tile_m // sub_m

    # glue: NCHW -> (B, HW, C) rows ordered (b, h, w)
    # TODO(synk): at production sizes fuse this transpose into the input DMA (allow_input_fusion
    # or NCHW-direct (C, tile_m) blocks) to avoid an extra HBM round trip.
    x_rows = jnp.transpose(x, (0, 2, 3, 1)).reshape(B, HW, C).astype(jnp.float32)

    # prompt path hoisted out of the kernel: d = fc(prompt); gd = d @ w_g[C:]  (per batch).
    # Padded lanes are pre-filled with -1e30 (wgx padded cols are zero, so padded logits come
    # out at -1e30 inside the kernel with no iota/mask).  A tiny per-expert epsilon breaks
    # exact logit ties so the equality-mask top-2 never double-counts a gate.
    d = prompt.astype(jnp.float32) @ params["w_fc"] + params["b_fc"][0]
    gd = d @ params["w_g"][C:]                                           # (B, E)
    tie = -TIE_EPS * jnp.arange(E, dtype=jnp.float32)
    gd_pad = jnp.full((B, 1, E_PAD), NEG_BIG, jnp.float32).at[:, 0, :E].set(gd + tie)

    # gating weight (x half), padded to a full lane width; kept f32 for stable top-2
    wgx = jnp.zeros((C, E_PAD), jnp.float32).at[:, :E].set(params["w_g"][:C])

    # fused expert weights (bf16 operands, f32 accumulate inside the kernel)
    w1_cat = jnp.transpose(params["w1"], (1, 0, 2)).reshape(C, EH).astype(jnp.bfloat16)
    b1_cat = params["b1"].reshape(1, EH).astype(jnp.float32)
    # TODO(synk): block-diag fc2 does E x the necessary MXU FLOPs; fine at toy size, revisit on
    # v5e at production E/Hd (pack experts per 128-lane group or loop per expert).
    w2_bd = jnp.zeros((EH, EC), jnp.float32)
    for e in range(E):
        w2_bd = w2_bd.at[e * Hd:(e + 1) * Hd, e * C:(e + 1) * C].set(params["w2"][e])
    w2_bd = w2_bd.astype(jnp.bfloat16)
    b2_cat = params["b2"].reshape(1, EC).astype(jnp.float32)

    # constant 0/1 matrices: gate expansion (E_PAD -> E*C lanes) and expert group-sum (E*C -> C)
    expand = jnp.zeros((E_PAD, EC), jnp.float32)
    for e in range(E):
        expand = expand.at[e, e * C:(e + 1) * C].set(1.0)
    rows = np.arange(EC)
    s_mat = jnp.zeros((EC, C), jnp.float32).at[rows, rows % C].set(1.0)

    kernel = functools.partial(_moe_kernel, sub_m=sub_m, n_sub=n_sub)
    y_rows, wsum_p, wcnt_p = pl.pallas_call(
        kernel,
        out_shape=(
            jax.ShapeDtypeStruct((B, HW, C), jnp.float32),
            jax.ShapeDtypeStruct((B, n_m, 1, E_PAD), jnp.float32),
            jax.ShapeDtypeStruct((B, n_m, 1, E_PAD), jnp.float32),
        ),
        grid=(B, n_m),
        in_specs=[
            pl.BlockSpec((None, tile_m, C), lambda b, m: (b, m, 0)),      # x rows
            pl.BlockSpec((None, 1, E_PAD), lambda b, m: (b, 0, 0)),       # per-batch gate offset
            pl.BlockSpec((C, E_PAD), lambda b, m: (0, 0)),                # w_g (x half)
            pl.BlockSpec((C, EH), lambda b, m: (0, 0)),                   # fused fc1 W
            pl.BlockSpec((1, EH), lambda b, m: (0, 0)),                   # fused fc1 b
            pl.BlockSpec((EH, EC), lambda b, m: (0, 0)),                  # block-diag fc2 W
            pl.BlockSpec((1, EC), lambda b, m: (0, 0)),                   # fused fc2 b
            pl.BlockSpec((E_PAD, EC), lambda b, m: (0, 0)),               # gate expansion 0/1
            pl.BlockSpec((EC, C), lambda b, m: (0, 0)),                   # expert group-sum 0/1
        ],
        out_specs=(
            pl.BlockSpec((None, tile_m, C), lambda b, m: (b, m, 0)),
            pl.BlockSpec((None, None, 1, E_PAD), lambda b, m: (b, m, 0, 0)),
            pl.BlockSpec((None, None, 1, E_PAD), lambda b, m: (b, m, 0, 0)),
        ),
        compiler_params=pltpu.CompilerParams(
            dimension_semantics=("parallel", "parallel"),
            vmem_limit_bytes=32 * 1024 * 1024,    # explicit; fits v7x's 64 MiB/TC with headroom
        ),
    )(x_rows, gd_pad, wgx, w1_cat, b1_cat, w2_bd, b2_cat, expand, s_mat)

    out = jnp.transpose(y_rows.reshape(B, H, W, C), (0, 3, 1, 2))
    weight = jnp.sum(wsum_p, axis=(0, 1))[0, :E]        # Weight = w.sum(0)
    s = jnp.sum(wcnt_p, axis=(0, 1))[0, :E]             # s = (w > 0).sum(0)   (eval path)
    loss = _balance(weight) + _balance(s)
    return out, loss


def init_params(key, atom_dim, dim, mlp_ratio, num_experts):
    hid = int(dim * mlp_ratio)
    ks = jax.random.split(key, 7)
    scale = 0.05
    return dict(
        num_experts=num_experts,
        w_fc=scale * jax.random.normal(ks[0], (atom_dim, dim), jnp.float32),
        b_fc=scale * jax.random.normal(ks[1], (1, dim), jnp.float32),
        w_g=jax.random.normal(ks[2], (2 * dim, num_experts), jnp.float32),
        w1=scale * jax.random.normal(ks[3], (num_experts, dim, hid), jnp.float32),
        b1=scale * jax.random.normal(ks[4], (num_experts, 1, hid), jnp.float32),
        w2=scale * jax.random.normal(ks[5], (num_experts, hid, dim), jnp.float32),
        b2=scale * jax.random.normal(ks[6], (num_experts, 1, dim), jnp.float32),
    )


def reference_forward(x, prompt, params):
    # plain-JAX reference of the eval-mode forward (exact erf GELU, f32 throughout)
    B, C, H, W = x.shape
    N = B * H * W
    E = params["num_experts"]
    x_rows = jnp.transpose(x, (0, 2, 3, 1)).reshape(N, C)
    d = prompt @ params["w_fc"] + params["b_fc"][0]
    d_rows = jnp.repeat(d, H * W, axis=0)
    logits = jnp.concatenate([x_rows, d_rows], axis=1) @ params["w_g"]
    top2_vals, top2_idx = jax.lax.top_k(logits, 2)
    gk = jax.nn.softmax(top2_vals, axis=1)
    gates = jnp.zeros((N, E)).at[jnp.arange(N)[:, None], top2_idx].set(gk)
    acc = jnp.zeros((N, C))
    for e in range(E):
        h = x_rows @ params["w1"][e] + params["b1"][e]
        h = 0.5 * h * (1.0 + jax.scipy.special.erf(h / SQRT2))
        o = h @ params["w2"][e] + params["b2"][e]
        acc = acc + gates[:, e:e + 1] * jnp.exp(o)
    y = jnp.log(jnp.where(acc == 0.0, EPS_ZERO, acc))
    out = jnp.transpose(y.reshape(B, H, W, C), (0, 3, 1, 2)) + x
    loss = _balance(gates.sum(0)) + _balance((gates > 0).sum(0).astype(jnp.float32))
    return out, loss


if __name__ == "__main__":
    key = jax.random.PRNGKey(0)
    B, H, W = 2, 32, 32                 # H*W = 1024 -> two 512-row DMA tiles per batch image
    atom_dim, dim = 16, 32
    ffn_expansion_factor = 2.0
    num_experts = 6

    k_par, k_x, k_pr = jax.random.split(key, 3)
    params = init_params(k_par, atom_dim, dim, ffn_expansion_factor, num_experts)
    x = jax.random.normal(k_x, (B, dim, H, W), jnp.float32)
    prompt = jax.random.normal(k_pr, (B, atom_dim), jnp.float32)

    out, loss = stpg_g_mese_forward(x, prompt, params, tile_m=512, sub_m=128)
    out = jax.block_until_ready(out)
    loss = jax.block_until_ready(loss)

    ref_out, ref_loss = reference_forward(x, prompt, params)
    assert np.isfinite(np.asarray(out)).all()
    # tolerance budget: tanh-approx GELU (~2e-4) + bf16 expert-matmul operands (~few e-3)
    # + the 1e-6 gate tie-break epsilon (~1e-6)
    assert np.max(np.abs(np.asarray(out) - np.asarray(ref_out))) < 2e-2
    assert abs(float(loss) - float(ref_loss)) < 1e-2
    print("KERNEL_OK")
</pallas_src>

<mosaic_0001>
module attributes {stable_mosaic.version = 11 : i64} {
  func.func @_moe_kernel(%arg0: i32, %arg1: i32, %arg2: memref<1x512x32xf32, #tpu.memory_space<vmem>>, %arg3: memref<1x1x128xf32, #tpu.memory_space<vmem>>, %arg4: memref<32x128xf32, #tpu.memory_space<vmem>>, %arg5: memref<32x384xbf16, #tpu.memory_space<vmem>>, %arg6: memref<1x384xf32, #tpu.memory_space<vmem>>, %arg7: memref<384x192xbf16, #tpu.memory_space<vmem>>, %arg8: memref<1x192xf32, #tpu.memory_space<vmem>>, %arg9: memref<128x192xf32, #tpu.memory_space<vmem>>, %arg10: memref<192x32xf32, #tpu.memory_space<vmem>>, %arg11: memref<1x512x32xf32, #tpu.memory_space<vmem>>, %arg12: memref<1x1x1x128xf32, #tpu.memory_space<vmem>>, %arg13: memref<1x1x1x128xf32, #tpu.memory_space<vmem>>) attributes {dimension_semantics = [#tpu.dimension_semantics<parallel>, #tpu.dimension_semantics<parallel>], iteration_bounds = array<i64: 2, 2>, scalar_prefetch = 0 : i64, scratch_operands = 0 : i64, tpu.core_type = #tpu.core_type<tc>, window_params = [{transform_indices = @transform_0, window_bounds = array<i64: 1, 512, 32>}, {transform_indices = @transform_1, window_bounds = array<i64: 1, 1, 128>}, {pipeline_mode = #tpu.pipeline_mode<synchronous>, transform_indices = @transform_2, window_bounds = array<i64: 32, 128>}, {pipeline_mode = #tpu.pipeline_mode<synchronous>, transform_indices = @transform_3, window_bounds = array<i64: 32, 384>}, {pipeline_mode = #tpu.pipeline_mode<synchronous>, transform_indices = @transform_4, window_bounds = array<i64: 1, 384>}, {pipeline_mode = #tpu.pipeline_mode<synchronous>, transform_indices = @transform_5, window_bounds = array<i64: 384, 192>}, {pipeline_mode = #tpu.pipeline_mode<synchronous>, transform_indices = @transform_6, window_bounds = array<i64: 1, 192>}, {pipeline_mode = #tpu.pipeline_mode<synchronous>, transform_indices = @transform_7, window_bounds = array<i64: 128, 192>}, {pipeline_mode = #tpu.pipeline_mode<synchronous>, transform_indices = @transform_8, window_bounds = array<i64: 192, 32>}, {transform_indices = @transform_9, window_bounds = array<i64: 1, 512, 32>}, {transform_indices = @transform_10, window_bounds = array<i64: 1, 1, 1, 128>}, {transform_indices = @transform_11, window_bounds = array<i64: 1, 1, 1, 128>}]} {
    %c0 = arith.constant 0 : index
    %c0_0 = arith.constant 0 : index
    %c0_1 = arith.constant 0 : index
    %0 = vector.load %arg3[%c0, %c0_0, %c0_1] : memref<1x1x128xf32, #tpu.memory_space<vmem>>, vector<1x1x128xf32>
    %1 = vector.shape_cast %0 : vector<1x1x128xf32> to vector<1x128xf32>
    %c0_2 = arith.constant 0 : index
    %c0_3 = arith.constant 0 : index
    %2 = vector.load %arg4[%c0_2, %c0_3] : memref<32x128xf32, #tpu.memory_space<vmem>>, vector<32x128xf32>
    %cst = arith.constant 0.000000e+00 : f32
    %3 = vector.broadcast %cst : f32 to vector<1x128xf32>
    %cst_4 = arith.constant -1.000000e+30 : f32
    %c0_i32 = arith.constant 0 : i32
    %c128_i32 = arith.constant 128 : i32
    %4 = arith.muli %c0_i32, %c128_i32 : i32
    %5 = tpu.assume_multiple %4, 128 : i32
    %c0_5 = arith.constant 0 : index
    %6 = arith.index_cast %5 : i32 to index
    %c0_6 = arith.constant 0 : index
    %7 = vector.load %arg2[%c0_5, %6, %c0_6] : memref<1x512x32xf32, #tpu.memory_space<vmem>>, vector<1x128x32xf32>
    %8 = vector.shape_cast %7 : vector<1x128x32xf32> to vector<128x32xf32>
    %cst_7 = arith.constant dense<0.000000e+00> : vector<128x128xf32>
    %9 = tpu.matmul %8, %2, %cst_7 {dimension_numbers = #tpu.dot_dimension_numbers<[1], [0], [0], [1], [0, 0, 1, 1], [], []>} : vector<128x32xf32>, vector<32x128xf32>, vector<128x128xf32> -> vector<128x128xf32>
    %10 = vector.broadcast %1 : vector<1x128xf32> to vector<128x128xf32>
    %11 = arith.addf %9, %10 : vector<128x128xf32>
    %cst_8 = arith.constant dense<0xFF800000> : vector<128xf32>
    %12 = vector.multi_reduction <maximumf>, %11, %cst_8 [1] : vector<128x128xf32> to vector<128xf32>
    %13 = vector.shape_cast %12 : vector<128xf32> to vector<128x1xf32>
    %14 = vector.broadcast %13 : vector<128x1xf32> to vector<128x128xf32>
    %15 = arith.cmpf oeq, %11, %14 : vector<128x128xf32>
    %16 = vector.broadcast %cst_4 : f32 to vector<128x128xf32>
    %17 = arith.select %15, %16, %11 : vector<128x128xi1>, vector<128x128xf32>
    %cst_9 = arith.constant dense<0xFF800000> : vector<128xf32>
    %18 = vector.multi_reduction <maximumf>, %17, %cst_9 [1] : vector<128x128xf32> to vector<128xf32>
    %19 = vector.shape_cast %18 : vector<128xf32> to vector<128x1xf32>
    %20 = vector.broadcast %19 : vector<128x1xf32> to vector<128x128xf32>
    %21 = arith.cmpf oeq, %17, %20 : vector<128x128xf32>
    %22 = arith.subf %19, %13 : vector<128x1xf32>
    %23 = math.exp %22 : vector<128x1xf32>
    %cst_10 = arith.constant 1.000000e+00 : f32
    %24 = vector.broadcast %cst_10 : f32 to vector<128x1xf32>
    %25 = arith.addf %24, %23 : vector<128x1xf32>
    %cst_11 = arith.constant 1.000000e+00 : f32
    %26 = vector.broadcast %cst_11 : f32 to vector<128x1xf32>
    %27 = arith.divf %26, %25 : vector<128x1xf32>
    %28 = arith.mulf %23, %27 : vector<128x1xf32>
    %cst_12 = arith.constant 0.000000e+00 : f32
    %29 = vector.shape_cast %27 : vector<128x1xf32> to vector<128x1xf32>
    %30 = vector.broadcast %29 : vector<128x1xf32> to vector<128x128xf32>
    %31 = vector.broadcast %cst_12 : f32 to vector<128x128xf32>
    %32 = arith.select %15, %30, %31 : vector<128x128xi1>, vector<128x128xf32>
    %cst_13 = arith.constant 0.000000e+00 : f32
    %33 = vector.shape_cast %28 : vector<128x1xf32> to vector<128x1xf32>
    %34 = vector.broadcast %33 : vector<128x1xf32> to vector<128x128xf32>
    %35 = vector.broadcast %cst_13 : f32 to vector<128x128xf32>
    %36 = arith.select %21, %34, %35 : vector<128x128xi1>, vector<128x128xf32>
    %37 = arith.addf %32, %36 : vector<128x128xf32>
    %cst_14 = arith.constant dense<0.000000e+00> : vector<128xf32>
    %38 = vector.multi_reduction <add>, %37, %cst_14 [0] : vector<128x128xf32> to vector<128xf32>
    %39 = vector.shape_cast %38 : vector<128xf32> to vector<1x128xf32>
    %40 = arith.addf %3, %39 : vector<1x128xf32>
    %cst_15 = arith.constant 0.000000e+00 : f32
    %41 = vector.broadcast %cst_15 : f32 to vector<128x128xf32>
    %42 = arith.cmpf ogt, %37, %41 : vector<128x128xf32>
    %43 = arith.extui %42 : vector<128x128xi1> to vector<128x128xi32>
    %44 = arith.sitofp %43 : vector<128x128xi32> to vector<128x128xf32>
    %cst_16 = arith.constant dense<0.000000e+00> : vector<128xf32>
    %45 = vector.multi_reduction <add>, %44, %cst_16 [0] : vector<128x128xf32> to vector<128xf32>
    %46 = vector.shape_cast %45 : vector<128xf32> to vector<1x128xf32>
    %47 = arith.addf %3, %46 : vector<1x128xf32>
    %48 = arith.truncf %8 : vector<128x32xf32> to vector<128x32xbf16>
    %c0_17 = arith.constant 0 : index
    %c0_18 = arith.constant 0 : index
    %49 = vector.load %arg5[%c0_17, %c0_18] : memref<32x384xbf16, #tpu.memory_space<vmem>>, vector<32x384xbf16>
    %cst_19 = arith.constant dense<0.000000e+00> : vector<128x384xf32>
    %50 = tpu.matmul %48, %49, %cst_19 {dimension_numbers = #tpu.dot_dimension_numbers<[1], [0], [0], [1], [0, 0, 1, 1], [], []>} : vector<128x32xbf16>, vector<32x384xbf16>, vector<128x384xf32> -> vector<128x384xf32>
    %c0_20 = arith.constant 0 : index
    %c0_21 = arith.constant 0 : index
    %51 = vector.load %arg6[%c0_20, %c0_21] : memref<1x384xf32, #tpu.memory_space<vmem>>, vector<1x384xf32>
    %52 = vector.broadcast %51 : vector<1x384xf32> to vector<128x384xf32>
    %53 = arith.addf %50, %52 : vector<128x384xf32>
    %cst_22 = arith.constant 5.000000e-01 : f32
    %54 = vector.broadcast %cst_22 : f32 to vector<128x384xf32>
    %55 = arith.mulf %54, %53 : vector<128x384xf32>
    %cst_23 = arith.constant 4.471500e-02 : f32
    %56 = vector.broadcast %cst_23 : f32 to vector<128x384xf32>
    %57 = arith.mulf %56, %53 : vector<128x384xf32>
    %58 = arith.mulf %57, %53 : vector<128x384xf32>
    %59 = arith.mulf %58, %53 : vector<128x384xf32>
    %60 = arith.addf %53, %59 : vector<128x384xf32>
    %cst_24 = arith.constant 0.797884583 : f32
    %61 = vector.broadcast %cst_24 : f32 to vector<128x384xf32>
    %62 = arith.mulf %61, %60 : vector<128x384xf32>
    %63 = math.tanh %62 : vector<128x384xf32>
    %cst_25 = arith.constant 1.000000e+00 : f32
    %64 = vector.broadcast %cst_25 : f32 to vector<128x384xf32>
    %65 = arith.addf %64, %63 : vector<128x384xf32>
    %66 = arith.mulf %55, %65 : vector<128x384xf32>
    %67 = arith.truncf %66 : vector<128x384xf32> to vector<128x384xbf16>
    %c0_26 = arith.constant 0 : index
    %c0_27 = arith.constant 0 : index
    %68 = vector.load %arg7[%c0_26, %c0_27] : memref<384x192xbf16, #tpu.memory_space<vmem>>, vector<384x192xbf16>
    %cst_28 = arith.constant dense<0.000000e+00> : vector<128x192xf32>
    %69 = tpu.matmul %67, %68, %cst_28 {dimension_numbers = #tpu.dot_dimension_numbers<[1], [0], [0], [1], [0, 0, 1, 1], [], []>} : vector<128x384xbf16>, vector<384x192xbf16>, vector<128x192xf32> -> vector<128x192xf32>
    %c0_29 = arith.constant 0 : index
    %c0_30 = arith.constant 0 : index
    %70 = vector.load %arg8[%c0_29, %c0_30] : memref<1x192xf32, #tpu.memory_space<vmem>>, vector<1x192xf32>
    %71 = vector.broadcast %70 : vector<1x192xf32> to vector<128x192xf32>
    %72 = arith.addf %69, %71 : vector<128x192xf32>
    %73 = math.exp %72 : vector<128x192xf32>
    %c0_31 = arith.constant 0 : index
    %c0_32 = arith.constant 0 : index
    %74 = vector.load %arg9[%c0_31, %c0_32] : memref<128x192xf32, #tpu.memory_space<vmem>>, vector<128x192xf32>
    %cst_33 = arith.constant dense<0.000000e+00> : vector<128x192xf32>
    %75 = tpu.matmul %37, %74, %cst_33 {dimension_numbers = #tpu.dot_dimension_numbers<[1], [0], [0], [1], [0, 0, 1, 1], [], []>} : vector<128x128xf32>, vector<128x192xf32>, vector<128x192xf32> -> vector<128x192xf32>
    %76 = arith.mulf %75, %73 : vector<128x192xf32>
    %c0_34 = arith.constant 0 : index
    %c0_35 = arith.constant 0 : index
    %77 = vector.load %arg10[%c0_34, %c0_35] : memref<192x32xf32, #tpu.memory_space<vmem>>, vector<192x32xf32>
    %cst_36 = arith.constant dense<0.000000e+00> : vector<128x32xf32>
    %78 = tpu.matmul %76, %77, %cst_36 {dimension_numbers = #tpu.dot_dimension_numbers<[1], [0], [0], [1], [0, 0, 1, 1], [], []>} : vector<128x192xf32>, vector<192x32xf32>, vector<128x32xf32> -> vector<128x32xf32>
    %cst_37 = arith.constant 0.000000e+00 : f32
    %79 = vector.broadcast %cst_37 : f32 to vector<128x32xf32>
    %80 = arith.cmpf oeq, %78, %79 : vector<128x32xf32>
    %cst_38 = arith.constant 2.22044605E-16 : f32
    %81 = vector.broadcast %cst_38 : f32 to vector<128x32xf32>
    %82 = arith.select %80, %81, %78 : vector<128x32xi1>, vector<128x32xf32>
    %83 = math.log %82 : vector<128x32xf32>
    %84 = arith.addf %83, %8 : vector<128x32xf32>
    %c0_39 = arith.constant 0 : index
    %85 = arith.index_cast %5 : i32 to index
    %c0_40 = arith.constant 0 : index
    %86 = vector.load %arg11[%c0_39, %85, %c0_40] : memref<1x512x32xf32, #tpu.memory_space<vmem>>, vector<1x128x32xf32>
    %87 = vector.shape_cast %86 : vector<1x128x32xf32> to vector<128x32xf32>
    %88 = vector.shape_cast %84 : vector<128x32xf32> to vector<1x128x32xf32>
    tpu.vector_store %arg11[%c0_39, %85, %c0_40], %88 {strides = array<i32>} : memref<1x512x32xf32, #tpu.memory_space<vmem>>, vector<1x128x32xf32>,
    %c1_i32 = arith.constant 1 : i32
    %c128_i32_41 = arith.constant 128 : i32
    %89 = arith.muli %c1_i32, %c128_i32_41 : i32
    %90 = tpu.assume_multiple %89, 128 : i32
    %c0_42 = arith.constant 0 : index
    %91 = arith.index_cast %90 : i32 to index
    %c0_43 = arith.constant 0 : index
    %92 = vector.load %arg2[%c0_42, %91, %c0_43] : memref<1x512x32xf32, #tpu.memory_space<vmem>>, vector<1x128x32xf32>
    %93 = vector.shape_cast %92 : vector<1x128x32xf32> to vector<128x32xf32>
    %cst_44 = arith.constant dense<0.000000e+00> : vector<128x128xf32>
    %94 = tpu.matmul %93, %2, %cst_44 {dimension_numbers = #tpu.dot_dimension_numbers<[1], [0], [0], [1], [0, 0, 1, 1], [], []>} : vector<128x32xf32>, vector<32x128xf32>, vector<128x128xf32> -> vector<128x128xf32>
    %95 = vector.broadcast %1 : vector<1x128xf32> to vector<128x128xf32>
    %96 = arith.addf %94, %95 : vector<128x128xf32>
    %cst_45 = arith.constant dense<0xFF800000> : vector<128xf32>
    %97 = vector.multi_reduction <maximumf>, %96, %cst_45 [1] : vector<128x128xf32> to vector<128xf32>
    %98 = vector.shape_cast %97 : vector<128xf32> to vector<128x1xf32>
    %99 = vector.broadcast %98 : vector<128x1xf32> to vector<128x128xf32>
    %100 = arith.cmpf oeq, %96, %99 : vector<128x128xf32>
    %101 = vector.broadcast %cst_4 : f32 to vector<128x128xf32>
    %102 = arith.select %100, %101, %96 : vector<128x128xi1>, vector<128x128xf32>
    %cst_46 = arith.constant dense<0xFF800000> : vector<128xf32>
    %103 = vector.multi_reduction <maximumf>, %102, %cst_46 [1] : vector<128x128xf32> to vector<128xf32>
    %104 = vector.shape_cast %103 : vector<128xf32> to vector<128x1xf32>
    %105 = vector.broadcast %104 : vector<128x1xf32> to vector<128x128xf32>
    %106 = arith.cmpf oeq, %102, %105 : vector<128x128xf32>
    %107 = arith.subf %104, %98 : vector<128x1xf32>
    %108 = math.exp %107 : vector<128x1xf32>
    %cst_47 = arith.constant 1.000000e+00 : f32
    %109 = vector.broadcast %cst_47 : f32 to vector<128x1xf32>
    %110 = arith.addf %109, %108 : vector<128x1xf32>
    %cst_48 = arith.constant 1.000000e+00 : f32
    %111 = vector.broadcast %cst_48 : f32 to vector<128x1xf32>
    %112 = arith.divf %111, %110 : vector<128x1xf32>
    %113 = arith.mulf %108, %112 : vector<128x1xf32>
    %cst_49 = arith.constant 0.000000e+00 : f32
    %114 = vector.shape_cast %112 : vector<128x1xf32> to vector<128x1xf32>
    %115 = vector.broadcast %114 : vector<128x1xf32> to vector<128x128xf32>
    %116 = vector.broadcast %cst_49 : f32 to vector<128x128xf32>
    %117 = arith.select %100, %115, %116 : vector<128x128xi1>, vector<128x128xf32>
    %cst_50 = arith.constant 0.000000e+00 : f32
    %118 = vector.shape_cast %113 : vector<128x1xf32> to vector<128x1xf32>
    %119 = vector.broadcast %118 : vector<128x1xf32> to vector<128x128xf32>
    %120 = vector.broadcast %cst_50 : f32 to vector<128x128xf32>
    %121 = arith.select %106, %119, %120 : vector<128x128xi1>, vector<128x128xf32>
    %122 = arith.addf %117, %121 : vector<128x128xf32>
    %cst_51 = arith.constant dense<0.000000e+00> : vector<128xf32>
    %123 = vector.multi_reduction <add>, %122, %cst_51 [0] : vector<128x128xf32> to vector<128xf32>
    %124 = vector.shape_cast %123 : vector<128xf32> to vector<1x128xf32>
    %125 = arith.addf %40, %124 : vector<1x128xf32>
    %cst_52 = arith.constant 0.000000e+00 : f32
    %126 = vector.broadcast %cst_52 : f32 to vector<128x128xf32>
    %127 = arith.cmpf ogt, %122, %126 : vector<128x128xf32>
    %128 = arith.extui %127 : vector<128x128xi1> to vector<128x128xi32>
    %129 = arith.sitofp %128 : vector<128x128xi32> to vector<128x128xf32>
    %cst_53 = arith.constant dense<0.000000e+00> : vector<128xf32>
    %130 = vector.multi_reduction <add>, %129, %cst_53 [0] : vector<128x128xf32> to vector<128xf32>
    %131 = vector.shape_cast %130 : vector<128xf32> to vector<1x128xf32>
    %132 = arith.addf %47, %131 : vector<1x128xf32>
    %133 = arith.truncf %93 : vector<128x32xf32> to vector<128x32xbf16>
    %c0_54 = arith.constant 0 : index
    %c0_55 = arith.constant 0 : index
    %134 = vector.load %arg5[%c0_54, %c0_55] : memref<32x384xbf16, #tpu.memory_space<vmem>>, vector<32x384xbf16>
    %cst_56 = arith.constant dense<0.000000e+00> : vector<128x384xf32>
    %135 = tpu.matmul %133, %134, %cst_56 {dimension_numbers = #tpu.dot_dimension_numbers<[1], [0], [0], [1], [0, 0, 1, 1], [], []>} : vector<128x32xbf16>, vector<32x384xbf16>, vector<128x384xf32> -> vector<128x384xf32>
    %c0_57 = arith.constant 0 : index
    %c0_58 = arith.constant 0 : index
    %136 = vector.load %arg6[%c0_57, %c0_58] : memref<1x384xf32, #tpu.memory_space<vmem>>, vector<1x384xf32>
    %137 = vector.broadcast %136 : vector<1x384xf32> to vector<128x384xf32>
    %138 = arith.addf %135, %137 : vector<128x384xf32>
    %cst_59 = arith.constant 5.000000e-01 : f32
    %139 = vector.broadcast %cst_59 : f32 to vector<128x384xf32>
    %140 = arith.mulf %139, %138 : vector<128x384xf32>
    %cst_60 = arith.constant 4.471500e-02 : f32
    %141 = vector.broadcast %cst_60 : f32 to vector<128x384xf32>
    %142 = arith.mulf %141, %138 : vector<128x384xf32>
    %143 = arith.mulf %142, %138 : vector<128x384xf32>
    %144 = arith.mulf %143, %138 : vector<128x384xf32>
    %145 = arith.addf %138, %144 : vector<128x384xf32>
    %cst_61 = arith.constant 0.797884583 : f32
    %146 = vector.broadcast %cst_61 : f32 to vector<128x384xf32>
    %147 = arith.mulf %146, %145 : vector<128x384xf32>
    %148 = math.tanh %147 : vector<128x384xf32>
    %cst_62 = arith.constant 1.000000e+00 : f32
    %149 = vector.broadcast %cst_62 : f32 to vector<128x384xf32>
    %150 = arith.addf %149, %148 : vector<128x384xf32>
    %151 = arith.mulf %140, %150 : vector<128x384xf32>
    %152 = arith.truncf %151 : vector<128x384xf32> to vector<128x384xbf16>
    %c0_63 = arith.constant 0 : index
    %c0_64 = arith.constant 0 : index
    %153 = vector.load %arg7[%c0_63, %c0_64] : memref<384x192xbf16, #tpu.memory_space<vmem>>, vector<384x192xbf16>
    %cst_65 = arith.constant dense<0.000000e+00> : vector<128x192xf32>
    %154 = tpu.matmul %152, %153, %cst_65 {dimension_numbers = #tpu.dot_dimension_numbers<[1], [0], [0], [1], [0, 0, 1, 1], [], []>} : vector<128x384xbf16>, vector<384x192xbf16>, vector<128x192xf32> -> vector<128x192xf32>
    %c0_66 = arith.constant 0 : index
    %c0_67 = arith.constant 0 : index
    %155 = vector.load %arg8[%c0_66, %c0_67] : memref<1x192xf32, #tpu.memory_space<vmem>>, vector<1x192xf32>
    %156 = vector.broadcast %155 : vector<1x192xf32> to vector<128x192xf32>
    %157 = arith.addf %154, %156 : vector<128x192xf32>
    %158 = math.exp %157 : vector<128x192xf32>
    %c0_68 = arith.constant 0 : index
    %c0_69 = arith.constant 0 : index
    %159 = vector.load %arg9[%c0_68, %c0_69] : memref<128x192xf32, #tpu.memory_space<vmem>>, vector<128x192xf32>
    %cst_70 = arith.constant dense<0.000000e+00> : vector<128x192xf32>
    %160 = tpu.matmul %122, %159, %cst_70 {dimension_numbers = #tpu.dot_dimension_numbers<[1], [0], [0], [1], [0, 0, 1, 1], [], []>} : vector<128x128xf32>, vector<128x192xf32>, vector<128x192xf32> -> vector<128x192xf32>
    %161 = arith.mulf %160, %158 : vector<128x192xf32>
    %c0_71 = arith.constant 0 : index
    %c0_72 = arith.constant 0 : index
    %162 = vector.load %arg10[%c0_71, %c0_72] : memref<192x32xf32, #tpu.memory_space<vmem>>, vector<192x32xf32>
    %cst_73 = arith.constant dense<0.000000e+00> : vector<128x32xf32>
    %163 = tpu.matmul %161, %162, %cst_73 {dimension_numbers = #tpu.dot_dimension_numbers<[1], [0], [0], [1], [0, 0, 1, 1], [], []>} : vector<128x192xf32>, vector<192x32xf32>, vector<128x32xf32> -> vector<128x32xf32>
    %cst_74 = arith.constant 0.000000e+00 : f32
    %164 = vector.broadcast %cst_74 : f32 to vector<128x32xf32>
    %165 = arith.cmpf oeq, %163, %164 : vector<128x32xf32>
    %cst_75 = arith.constant 2.22044605E-16 : f32
    %166 = vector.broadcast %cst_75 : f32 to vector<128x32xf32>
    %167 = arith.select %165, %166, %163 : vector<128x32xi1>, vector<128x32xf32>
    %168 = math.log %167 : vector<128x32xf32>
    %169 = arith.addf %168, %93 : vector<128x32xf32>
    %c0_76 = arith.constant 0 : index
    %170 = arith.index_cast %90 : i32 to index
    %c0_77 = arith.constant 0 : index
    %171 = vector.load %arg11[%c0_76, %170, %c0_77] : memref<1x512x32xf32, #tpu.memory_space<vmem>>, vector<1x128x32xf32>
    %172 = vector.shape_cast %171 : vector<1x128x32xf32> to vector<128x32xf32>
    %173 = vector.shape_cast %169 : vector<128x32xf32> to vector<1x128x32xf32>
    tpu.vector_store %arg11[%c0_76, %170, %c0_77], %173 {strides = array<i32>} : memref<1x512x32xf32, #tpu.memory_space<vmem>>, vector<1x128x32xf32>,
    %c2_i32 = arith.constant 2 : i32
    %c128_i32_78 = arith.constant 128 : i32
    %174 = arith.muli %c2_i32, %c128_i32_78 : i32
    %175 = tpu.assume_multiple %174, 128 : i32
    %c0_79 = arith.constant 0 : index
    %176 = arith.index_cast %175 : i32 to index
    %c0_80 = arith.constant 0 : index
    %177 = vector.load %arg2[%c0_79, %176, %c0_80] : memref<1x512x32xf32, #tpu.memory_space<vmem>>, vector<1x128x32xf32>
    %178 = vector.shape_cast %177 : vector<1x128x32xf32> to vector<128x32xf32>
    %cst_81 = arith.constant dense<0.000000e+00> : vector<128x128xf32>
    %179 = tpu.matmul %178, %2, %cst_81 {dimension_numbers = #tpu.dot_dimension_numbers<[1], [0], [0], [1], [0, 0, 1, 1], [], []>} : vector<128x32xf32>, vector<32x128xf32>, vector<128x128xf32> -> vector<128x128xf32>
    %180 = vector.broadcast %1 : vector<1x128xf32> to vector<128x128xf32>
    %181 = arith.addf %179, %180 : vector<128x128xf32>
    %cst_82 = arith.constant dense<0xFF800000> : vector<128xf32>
    %182 = vector.multi_reduction <maximumf>, %181, %cst_82 [1] : vector<128x128xf32> to vector<128xf32>
    %183 = vector.shape_cast %182 : vector<128xf32> to vector<128x1xf32>
    %184 = vector.broadcast %183 : vector<128x1xf32> to vector<128x128xf32>
    %185 = arith.cmpf oeq, %181, %184 : vector<128x128xf32>
    %186 = vector.broadcast %cst_4 : f32 to vector<128x128xf32>
    %187 = arith.select %185, %186, %181 : vector<128x128xi1>, vector<128x128xf32>
    %cst_83 = arith.constant dense<0xFF800000> : vector<128xf32>
    %188 = vector.multi_reduction <maximumf>, %187, %cst_83 [1] : vector<128x128xf32> to vector<128xf32>
    %189 = vector.shape_cast %188 : vector<128xf32> to vector<128x1xf32>
    %190 = vector.broadcast %189 : vector<128x1xf32> to vector<128x128xf32>
    %191 = arith.cmpf oeq, %187, %190 : vector<128x128xf32>
    %192 = arith.subf %189, %183 : vector<128x1xf32>
    %193 = math.exp %192 : vector<128x1xf32>
    %cst_84 = arith.constant 1.000000e+00 : f32
    %194 = vector.broadcast %cst_84 : f32 to vector<128x1xf32>
    %195 = arith.addf %194, %193 : vector<128x1xf32>
    %cst_85 = arith.constant 1.000000e+00 : f32
    %196 = vector.broadcast %cst_85 : f32 to vector<128x1xf32>
    %197 = arith.divf %196, %195 : vector<128x1xf32>
    %198 = arith.mulf %193, %197 : vector<128x1xf32>
    %cst_86 = arith.constant 0.000000e+00 : f32
    %199 = vector.shape_cast %197 : vector<128x1xf32> to vector<128x1xf32>
    %200 = vector.broadcast %199 : vector<128x1xf32> to vector<128x128xf32>
    %201 = vector.broadcast %cst_86 : f32 to vector<128x128xf32>
    %202 = arith.select %185, %200, %201 : vector<128x128xi1>, vector<128x128xf32>
    %cst_87 = arith.constant 0.000000e+00 : f32
    %203 = vector.shape_cast %198 : vector<128x1xf32> to vector<128x1xf32>
    %204 = vector.broadcast %203 : vector<128x1xf32> to vector<128x128xf32>
    %205 = vector.broadcast %cst_87 : f32 to vector<128x128xf32>
    %206 = arith.select %191, %204, %205 : vector<128x128xi1>, vector<128x128xf32>
    %207 = arith.addf %202, %206 : vector<128x128xf32>
    %cst_88 = arith.constant dense<0.000000e+00> : vector<128xf32>
    %208 = vector.multi_reduction <add>, %207, %cst_88 [0] : vector<128x128xf32> to vector<128xf32>
    %209 = vector.shape_cast %208 : vector<128xf32> to vector<1x128xf32>
    %210 = arith.addf %125, %209 : vector<1x128xf32>
    %cst_89 = arith.constant 0.000000e+00 : f32
    %211 = vector.broadcast %cst_89 : f32 to vector<128x128xf32>
    %212 = arith.cmpf ogt, %207, %211 : vector<128x128xf32>
    %213 = arith.extui %212 : vector<128x128xi1> to vector<128x128xi32>
    %214 = arith.sitofp %213 : vector<128x128xi32> to vector<128x128xf32>
    %cst_90 = arith.constant dense<0.000000e+00> : vector<128xf32>
    %215 = vector.multi_reduction <add>, %214, %cst_90 [0] : vector<128x128xf32> to vector<128xf32>
    %216 = vector.shape_cast %215 : vector<128xf32> to vector<1x128xf32>
    %217 = arith.addf %132, %216 : vector<1x128xf32>
    %218 = arith.truncf %178 : vector<128x32xf32> to vector<128x32xbf16>
    %c0_91 = arith.constant 0 : index
    %c0_92 = arith.constant 0 : index
    %219 = vector.load %arg5[%c0_91, %c0_92] : memref<32x384xbf16, #tpu.memory_space<vmem>>, vector<32x384xbf16>
    %cst_93 = arith.constant dense<0.000000e+00> : vector<128x384xf32>
    %220 = tpu.matmul %218, %219, %cst_93 {dimension_numbers = #tpu.dot_dimension_numbers<[1], [0], [0], [1], [0, 0, 1, 1], [], []>} : vector<128x32xbf16>, vector<32x384xbf16>, vector<128x384xf32> -> vector<128x384xf32>
    %c0_94 = arith.constant 0 : index
    %c0_95 = arith.constant 0 : index
    %221 = vector.load %arg6[%c0_94, %c0_95] : memref<1x384xf32, #tpu.memory_space<vmem>>, vector<1x384xf32>
    %222 = vector.broadcast %221 : vector<1x384xf32> to vector<128x384xf32>
    %223 = arith.addf %220, %222 : vector<128x384xf32>
    %cst_96 = arith.constant 5.000000e-01 : f32
    %224 = vector.broadcast %cst_96 : f32 to vector<128x384xf32>
    %225 = arith.mulf %224, %223 : vector<128x384xf32>
    %cst_97 = arith.constant 4.471500e-02 : f32
    %226 = vector.broadcast %cst_97 : f32 to vector<128x384xf32>
    %227 = arith.mulf %226, %223 : vector<128x384xf32>
    %228 = arith.mulf %227, %223 : vector<128x384xf32>
    %229 = arith.mulf %228, %223 : vector<128x384xf32>
    %230 = arith.addf %223, %229 : vector<128x384xf32>
    %cst_98 = arith.constant 0.797884583 : f32
    %231 = vector.broadcast %cst_98 : f32 to vector<128x384xf32>
    %232 = arith.mulf %231, %230 : vector<128x384xf32>
    %233 = math.tanh %232 : vector<128x384xf32>
    %cst_99 = arith.constant 1.000000e+00 : f32
    %234 = vector.broadcast %cst_99 : f32 to vector<128x384xf32>
    %235 = arith.addf %234, %233 : vector<128x384xf32>
    %236 = arith.mulf %225, %235 : vector<128x384xf32>
    %237 = arith.truncf %236 : vector<128x384xf32> to vector<128x384xbf16>
    %c0_100 = arith.constant 0 : index
    %c0_101 = arith.constant 0 : index
    %238 = vector.load %arg7[%c0_100, %c0_101] : memref<384x192xbf16, #tpu.memory_space<vmem>>, vector<384x192xbf16>
    %cst_102 = arith.constant dense<0.000000e+00> : vector<128x192xf32>
    %239 = tpu.matmul %237, %238, %cst_102 {dimension_numbers = #tpu.dot_dimension_numbers<[1], [0], [0], [1], [0, 0, 1, 1], [], []>} : vector<128x384xbf16>, vector<384x192xbf16>, vector<128x192xf32> -> vector<128x192xf32>
    %c0_103 = arith.constant 0 : index
    %c0_104 = arith.constant 0 : index
    %240 = vector.load %arg8[%c0_103, %c0_104] : memref<1x192xf32, #tpu.memory_space<vmem>>, vector<1x192xf32>
    %241 = vector.broadcast %240 : vector<1x192xf32> to vector<128x192xf32>
    %242 = arith.addf %239, %241 : vector<128x192xf32>
    %243 = math.exp %242 : vector<128x192xf32>
    %c0_105 = arith.constant 0 : index
    %c0_106 = arith.constant 0 : index
    %244 = vector.load %arg9[%c0_105, %c0_106] : memref<128x192xf32, #tpu.memory_space<vmem>>, vector<128x192xf32>
    %cst_107 = arith.constant dense<0.000000e+00> : vector<128x192xf32>
    %245 = tpu.matmul %207, %244, %cst_107 {dimension_numbers = #tpu.dot_dimension_numbers<[1], [0], [0], [1], [0, 0, 1, 1], [], []>} : vector<128x128xf32>, vector<128x192xf32>, vector<128x192xf32> -> vector<128x192xf32>
    %246 = arith.mulf %245, %243 : vector<128x192xf32>
    %c0_108 = arith.constant 0 : index
    %c0_109 = arith.constant 0 : index
    %247 = vector.load %arg10[%c0_108, %c0_109] : memref<192x32xf32, #tpu.memory_space<vmem>>, vector<192x32xf32>
    %cst_110 = arith.constant dense<0.000000e+00> : vector<128x32xf32>
    %248 = tpu.matmul %246, %247, %cst_110 {dimension_numbers = #tpu.dot_dimension_numbers<[1], [0], [0], [1], [0, 0, 1, 1], [], []>} : vector<128x192xf32>, vector<192x32xf32>, vector<128x32xf32> -> vector<128x32xf32>
    %cst_111 = arith.constant 0.000000e+00 : f32
    %249 = vector.broadcast %cst_111 : f32 to vector<128x32xf32>
    %250 = arith.cmpf oeq, %248, %249 : vector<128x32xf32>
    %cst_112 = arith.constant 2.22044605E-16 : f32
    %251 = vector.broadcast %cst_112 : f32 to vector<128x32xf32>
    %252 = arith.select %250, %251, %248 : vector<128x32xi1>, vector<128x32xf32>
    %253 = math.log %252 : vector<128x32xf32>
    %254 = arith.addf %253, %178 : vector<128x32xf32>
    %c0_113 = arith.constant 0 : index
    %255 = arith.index_cast %175 : i32 to index
    %c0_114 = arith.constant 0 : index
    %256 = vector.load %arg11[%c0_113, %255, %c0_114] : memref<1x512x32xf32, #tpu.memory_space<vmem>>, vector<1x128x32xf32>
    %257 = vector.shape_cast %256 : vector<1x128x32xf32> to vector<128x32xf32>
    %258 = vector.shape_cast %254 : vector<128x32xf32> to vector<1x128x32xf32>
    tpu.vector_store %arg11[%c0_113, %255, %c0_114], %258 {strides = array<i32>} : memref<1x512x32xf32, #tpu.memory_space<vmem>>, vector<1x128x32xf32>,
    %c3_i32 = arith.constant 3 : i32
    %c128_i32_115 = arith.constant 128 : i32
    %259 = arith.muli %c3_i32, %c128_i32_115 : i32
    %260 = tpu.assume_multiple %259, 128 : i32
    %c0_116 = arith.constant 0 : index
    %261 = arith.index_cast %260 : i32 to index
    %c0_117 = arith.constant 0 : index
    %262 = vector.load %arg2[%c0_116, %261, %c0_117] : memref<1x512x32xf32, #tpu.memory_space<vmem>>, vector<1x128x32xf32>
    %263 = vector.shape_cast %262 : vector<1x128x32xf32> to vector<128x32xf32>
    %cst_118 = arith.constant dense<0.000000e+00> : vector<128x128xf32>
    %264 = tpu.matmul %263, %2, %cst_118 {dimension_numbers = #tpu.dot_dimension_numbers<[1], [0], [0], [1], [0, 0, 1, 1], [], []>} : vector<128x32xf32>, vector<32x128xf32>, vector<128x128xf32> -> vector<128x128xf32>
    %265 = vector.broadcast %1 : vector<1x128xf32> to vector<128x128xf32>
    %266 = arith.addf %264, %265 : vector<128x128xf32>
    %cst_119 = arith.constant dense<0xFF800000> : vector<128xf32>
    %267 = vector.multi_reduction <maximumf>, %266, %cst_119 [1] : vector<128x128xf32> to vector<128xf32>
    %268 = vector.shape_cast %267 : vector<128xf32> to vector<128x1xf32>
    %269 = vector.broadcast %268 : vector<128x1xf32> to vector<128x128xf32>
    %270 = arith.cmpf oeq, %266, %269 : vector<128x128xf32>
    %271 = vector.broadcast %cst_4 : f32 to vector<128x128xf32>
    %272 = arith.select %270, %271, %266 : vector<128x128xi1>, vector<128x128xf32>
    %cst_120 = arith.constant dense<0xFF800000> : vector<128xf32>
    %273 = vector.multi_reduction <maximumf>, %272, %cst_120 [1] : vector<128x128xf32> to vector<128xf32>
    %274 = vector.shape_cast %273 : vector<128xf32> to vector<128x1xf32>
    %275 = vector.broadcast %274 : vector<128x1xf32> to vector<128x128xf32>
    %276 = arith.cmpf oeq, %272, %275 : vector<128x128xf32>
    %277 = arith.subf %274, %268 : vector<128x1xf32>
    %278 = math.exp %277 : vector<128x1xf32>
    %cst_121 = arith.constant 1.000000e+00 : f32
    %279 = vector.broadcast %cst_121 : f32 to vector<128x1xf32>
    %280 = arith.addf %279, %278 : vector<128x1xf32>
    %cst_122 = arith.constant 1.000000e+00 : f32
    %281 = vector.broadcast %cst_122 : f32 to vector<128x1xf32>
    %282 = arith.divf %281, %280 : vector<128x1xf32>
    %283 = arith.mulf %278, %282 : vector<128x1xf32>
    %cst_123 = arith.constant 0.000000e+00 : f32
    %284 = vector.shape_cast %282 : vector<128x1xf32> to vector<128x1xf32>
    %285 = vector.broadcast %284 : vector<128x1xf32> to vector<128x128xf32>
    %286 = vector.broadcast %cst_123 : f32 to vector<128x128xf32>
    %287 = arith.select %270, %285, %286 : vector<128x128xi1>, vector<128x128xf32>
    %cst_124 = arith.constant 0.000000e+00 : f32
    %288 = vector.shape_cast %283 : vector<128x1xf32> to vector<128x1xf32>
    %289 = vector.broadcast %288 : vector<128x1xf32> to vector<128x128xf32>
    %290 = vector.broadcast %cst_124 : f32 to vector<128x128xf32>
    %291 = arith.select %276, %289, %290 : vector<128x128xi1>, vector<128x128xf32>
    %292 = arith.addf %287, %291 : vector<128x128xf32>
    %cst_125 = arith.constant dense<0.000000e+00> : vector<128xf32>
    %293 = vector.multi_reduction <add>, %292, %cst_125 [0] : vector<128x128xf32> to vector<128xf32>
    %294 = vector.shape_cast %293 : vector<128xf32> to vector<1x128xf32>
    %295 = arith.addf %210, %294 : vector<1x128xf32>
    %cst_126 = arith.constant 0.000000e+00 : f32
    %296 = vector.broadcast %cst_126 : f32 to vector<128x128xf32>
    %297 = arith.cmpf ogt, %292, %296 : vector<128x128xf32>
    %298 = arith.extui %297 : vector<128x128xi1> to vector<128x128xi32>
    %299 = arith.sitofp %298 : vector<128x128xi32> to vector<128x128xf32>
    %cst_127 = arith.constant dense<0.000000e+00> : vector<128xf32>
    %300 = vector.multi_reduction <add>, %299, %cst_127 [0] : vector<128x128xf32> to vector<128xf32>
    %301 = vector.shape_cast %300 : vector<128xf32> to vector<1x128xf32>
    %302 = arith.addf %217, %301 : vector<1x128xf32>
    %303 = arith.truncf %263 : vector<128x32xf32> to vector<128x32xbf16>
    %c0_128 = arith.constant 0 : index
    %c0_129 = arith.constant 0 : index
    %304 = vector.load %arg5[%c0_128, %c0_129] : memref<32x384xbf16, #tpu.memory_space<vmem>>, vector<32x384xbf16>
    %cst_130 = arith.constant dense<0.000000e+00> : vector<128x384xf32>
    %305 = tpu.matmul %303, %304, %cst_130 {dimension_numbers = #tpu.dot_dimension_numbers<[1], [0], [0], [1], [0, 0, 1, 1], [], []>} : vector<128x32xbf16>, vector<32x384xbf16>, vector<128x384xf32> -> vector<128x384xf32>
    %c0_131 = arith.constant 0 : index
    %c0_132 = arith.constant 0 : index
    %306 = vector.load %arg6[%c0_131, %c0_132] : memref<1x384xf32, #tpu.memory_space<vmem>>, vector<1x384xf32>
    %307 = vector.broadcast %306 : vector<1x384xf32> to vector<128x384xf32>
    %308 = arith.addf %305, %307 : vector<128x384xf32>
    %cst_133 = arith.constant 5.000000e-01 : f32
    %309 = vector.broadcast %cst_133 : f32 to vector<128x384xf32>
    %310 = arith.mulf %309, %308 : vector<128x384xf32>
    %cst_134 = arith.constant 4.471500e-02 : f32
    %311 = vector.broadcast %cst_134 : f32 to vector<128x384xf32>
    %312 = arith.mulf %311, %308 : vector<128x384xf32>
    %313 = arith.mulf %312, %308 : vector<128x384xf32>
    %314 = arith.mulf %313, %308 : vector<128x384xf32>
    %315 = arith.addf %308, %314 : vector<128x384xf32>
    %cst_135 = arith.constant 0.797884583 : f32
    %316 = vector.broadcast %cst_135 : f32 to vector<128x384xf32>
    %317 = arith.mulf %316, %315 : vector<128x384xf32>
    %318 = math.tanh %317 : vector<128x384xf32>
    %cst_136 = arith.constant 1.000000e+00 : f32
    %319 = vector.broadcast %cst_136 : f32 to vector<128x384xf32>
    %320 = arith.addf %319, %318 : vector<128x384xf32>
    %321 = arith.mulf %310, %320 : vector<128x384xf32>
    %322 = arith.truncf %321 : vector<128x384xf32> to vector<128x384xbf16>
    %c0_137 = arith.constant 0 : index
    %c0_138 = arith.constant 0 : index
    %323 = vector.load %arg7[%c0_137, %c0_138] : memref<384x192xbf16, #tpu.memory_space<vmem>>, vector<384x192xbf16>
    %cst_139 = arith.constant dense<0.000000e+00> : vector<128x192xf32>
    %324 = tpu.matmul %322, %323, %cst_139 {dimension_numbers = #tpu.dot_dimension_numbers<[1], [0], [0], [1], [0, 0, 1, 1], [], []>} : vector<128x384xbf16>, vector<384x192xbf16>, vector<128x192xf32> -> vector<128x192xf32>
    %c0_140 = arith.constant 0 : index
    %c0_141 = arith.constant 0 : index
    %325 = vector.load %arg8[%c0_140, %c0_141] : memref<1x192xf32, #tpu.memory_space<vmem>>, vector<1x192xf32>
    %326 = vector.broadcast %325 : vector<1x192xf32> to vector<128x192xf32>
    %327 = arith.addf %324, %326 : vector<128x192xf32>
    %328 = math.exp %327 : vector<128x192xf32>
    %c0_142 = arith.constant 0 : index
    %c0_143 = arith.constant 0 : index
    %329 = vector.load %arg9[%c0_142, %c0_143] : memref<128x192xf32, #tpu.memory_space<vmem>>, vector<128x192xf32>
    %cst_144 = arith.constant dense<0.000000e+00> : vector<128x192xf32>
    %330 = tpu.matmul %292, %329, %cst_144 {dimension_numbers = #tpu.dot_dimension_numbers<[1], [0], [0], [1], [0, 0, 1, 1], [], []>} : vector<128x128xf32>, vector<128x192xf32>, vector<128x192xf32> -> vector<128x192xf32>
    %331 = arith.mulf %330, %328 : vector<128x192xf32>
    %c0_145 = arith.constant 0 : index
    %c0_146 = arith.constant 0 : index
    %332 = vector.load %arg10[%c0_145, %c0_146] : memref<192x32xf32, #tpu.memory_space<vmem>>, vector<192x32xf32>
    %cst_147 = arith.constant dense<0.000000e+00> : vector<128x32xf32>
    %333 = tpu.matmul %331, %332, %cst_147 {dimension_numbers = #tpu.dot_dimension_numbers<[1], [0], [0], [1], [0, 0, 1, 1], [], []>} : vector<128x192xf32>, vector<192x32xf32>, vector<128x32xf32> -> vector<128x32xf32>
    %cst_148 = arith.constant 0.000000e+00 : f32
    %334 = vector.broadcast %cst_148 : f32 to vector<128x32xf32>
    %335 = arith.cmpf oeq, %333, %334 : vector<128x32xf32>
    %cst_149 = arith.constant 2.22044605E-16 : f32
    %336 = vector.broadcast %cst_149 : f32 to vector<128x32xf32>
    %337 = arith.select %335, %336, %333 : vector<128x32xi1>, vector<128x32xf32>
    %338 = math.log %337 : vector<128x32xf32>
    %339 = arith.addf %338, %263 : vector<128x32xf32>
    %c0_150 = arith.constant 0 : index
    %340 = arith.index_cast %260 : i32 to index
    %c0_151 = arith.constant 0 : index
    %341 = vector.load %arg11[%c0_150, %340, %c0_151] : memref<1x512x32xf32, #tpu.memory_space<vmem>>, vector<1x128x32xf32>
    %342 = vector.shape_cast %341 : vector<1x128x32xf32> to vector<128x32xf32>
    %343 = vector.shape_cast %339 : vector<128x32xf32> to vector<1x128x32xf32>
    tpu.vector_store %arg11[%c0_150, %340, %c0_151], %343 {strides = array<i32>} : memref<1x512x32xf32, #tpu.memory_space<vmem>>, vector<1x128x32xf32>,
    %c4_i32 = arith.constant 4 : i32
    %c0_152 = arith.constant 0 : index
    %c0_153 = arith.constant 0 : index
    %c0_154 = arith.constant 0 : index
    %c0_155 = arith.constant 0 : index
    %344 = vector.load %arg12[%c0_152, %c0_153, %c0_154, %c0_155] : memref<1x1x1x128xf32, #tpu.memory_space<vmem>>, vector<1x1x1x128xf32>
    %345 = vector.shape_cast %344 : vector<1x1x1x128xf32> to vector<1x128xf32>
    %346 = vector.shape_cast %295 : vector<1x128xf32> to vector<1x1x1x128xf32>
    tpu.vector_store %arg12[%c0_152, %c0_153, %c0_154, %c0_155], %346 {strides = array<i32>} : memref<1x1x1x128xf32, #tpu.memory_space<vmem>>, vector<1x1x1x128xf32>,
    %c0_156 = arith.constant 0 : index
    %c0_157 = arith.constant 0 : index
    %c0_158 = arith.constant 0 : index
    %c0_159 = arith.constant 0 : index
    %347 = vector.load %arg13[%c0_156, %c0_157, %c0_158, %c0_159] : memref<1x1x1x128xf32, #tpu.memory_space<vmem>>, vector<1x1x1x128xf32>
    %348 = vector.shape_cast %347 : vector<1x1x1x128xf32> to vector<1x128xf32>
    %349 = vector.shape_cast %302 : vector<1x128xf32> to vector<1x1x1x128xf32>
    tpu.vector_store %arg13[%c0_156, %c0_157, %c0_158, %c0_159], %349 {strides = array<i32>} : memref<1x1x1x128xf32, #tpu.memory_space<vmem>>, vector<1x1x1x128xf32>,
    return
  }
  func.func @transform_0(%arg0: i32, %arg1: i32) -> (i32, i32, i32) {
    %c0_i32 = arith.constant 0 : i32
    %c0_i32_0 = arith.constant 0 : i32
    return %arg0, %arg1, %c0_i32 : i32, i32, i32
  }
  func.func @transform_1(%arg0: i32, %arg1: i32) -> (i32, i32, i32) {
    %c0_i32 = arith.constant 0 : i32
    %c0_i32_0 = arith.constant 0 : i32
    %c0_i32_1 = arith.constant 0 : i32
    return %arg0, %c0_i32, %c0_i32_0 : i32, i32, i32
  }
  func.func @transform_2(%arg0: i32, %arg1: i32) -> (i32, i32) {
    %c0_i32 = arith.constant 0 : i32
    %c0_i32_0 = arith.constant 0 : i32
    %c0_i32_1 = arith.constant 0 : i32
    return %c0_i32, %c0_i32_0 : i32, i32
  }
  func.func @transform_3(%arg0: i32, %arg1: i32) -> (i32, i32) {
    %c0_i32 = arith.constant 0 : i32
    %c0_i32_0 = arith.constant 0 : i32
    %c0_i32_1 = arith.constant 0 : i32
    return %c0_i32, %c0_i32_0 : i32, i32
  }
  func.func @transform_4(%arg0: i32, %arg1: i32) -> (i32, i32) {
    %c0_i32 = arith.constant 0 : i32
    %c0_i32_0 = arith.constant 0 : i32
    %c0_i32_1 = arith.constant 0 : i32
    return %c0_i32, %c0_i32_0 : i32, i32
  }
  func.func @transform_5(%arg0: i32, %arg1: i32) -> (i32, i32) {
    %c0_i32 = arith.constant 0 : i32
    %c0_i32_0 = arith.constant 0 : i32
    %c0_i32_1 = arith.constant 0 : i32
    return %c0_i32, %c0_i32_0 : i32, i32
  }
  func.func @transform_6(%arg0: i32, %arg1: i32) -> (i32, i32) {
    %c0_i32 = arith.constant 0 : i32
    %c0_i32_0 = arith.constant 0 : i32
    %c0_i32_1 = arith.constant 0 : i32
    return %c0_i32, %c0_i32_0 : i32, i32
  }
  func.func @transform_7(%arg0: i32, %arg1: i32) -> (i32, i32) {
    %c0_i32 = arith.constant 0 : i32
    %c0_i32_0 = arith.constant 0 : i32
    %c0_i32_1 = arith.constant 0 : i32
    return %c0_i32, %c0_i32_0 : i32, i32
  }
  func.func @transform_8(%arg0: i32, %arg1: i32) -> (i32, i32) {
    %c0_i32 = arith.constant 0 : i32
    %c0_i32_0 = arith.constant 0 : i32
    %c0_i32_1 = arith.constant 0 : i32
    return %c0_i32, %c0_i32_0 : i32, i32
  }
  func.func @transform_9(%arg0: i32, %arg1: i32) -> (i32, i32, i32) {
    %c0_i32 = arith.constant 0 : i32
    %c0_i32_0 = arith.constant 0 : i32
    return %arg0, %arg1, %c0_i32 : i32, i32, i32
  }
  func.func @transform_10(%arg0: i32, %arg1: i32) -> (i32, i32, i32, i32) {
    %c0_i32 = arith.constant 0 : i32
    %c0_i32_0 = arith.constant 0 : i32
    %c0_i32_1 = arith.constant 0 : i32
    return %arg0, %arg1, %c0_i32, %c0_i32_0 : i32, i32, i32, i32
  }
  func.func @transform_11(%arg0: i32, %arg1: i32) -> (i32, i32, i32, i32) {
    %c0_i32 = arith.constant 0 : i32
    %c0_i32_0 = arith.constant 0 : i32
    %c0_i32_1 = arith.constant 0 : i32
    return %arg0, %arg1, %c0_i32, %c0_i32_0 : i32, i32, i32, i32
  }
}

</mosaic_0001>

<llo_original>
// kernel: tpu_custom_call.1
$region0: #{tpu_custom_call.1}
  #allocation0 [shape = 'u32[]', space=smem, size = 0x4, offset = 0x4, fixed_abs, tag = 'smem constant byte address 0x4 - core index']
  #allocation1 [shape = 'u32[144,128]{1,0:T(1,128)}', space=vmem, size = 0x12000, scoped, tag = 'internal scratch']
  %s0 = inlined_call_operand.vmem [shape: f32[2,1024,32], index: 0, kind: input, shape index: {}]
  %s1 = inlined_call_operand.vmem [shape: f32[2,1,128], index: 1, kind: input, shape index: {}]
  %s2 = inlined_call_operand.vmem [shape: f32[32,128], index: 2, kind: input, shape index: {}]
  %s3 = inlined_call_operand.vmem [shape: bf16[32,384], index: 3, kind: input, shape index: {}]
  %s4 = inlined_call_operand.vmem [shape: f32[1,384], index: 4, kind: input, shape index: {}]
  %s5 = inlined_call_operand.vmem [shape: bf16[384,192], index: 5, kind: input, shape index: {}]
  %s6 = inlined_call_operand.vmem [shape: f32[1,192], index: 6, kind: input, shape index: {}]
  %s7 = inlined_call_operand.vmem [shape: f32[128,192], index: 7, kind: input, shape index: {}]
  %s8 = inlined_call_operand.vmem [shape: f32[192,32], index: 8, kind: input, shape index: {}]
  %s9 = inlined_call_operand.vmem [shape: f32[2,1024,32], index: 9, kind: output, shape index: {0}]
  %s10 = inlined_call_operand.hbm [shape: f32[2,2,1,128], index: 10, kind: output, shape index: {1}]
  %s11 = inlined_call_operand.hbm [shape: f32[2,2,1,128], index: 11, kind: output, shape index: {2}]
  %12 = xla_tuple %s9, %s10, %s11
  %s13 = sld [smem:[#allocation0]]
  $region85: #{tpu_custom_call.1} parent=0
    _
  %s15 = ssub.s32 1, %s13
  %s16 = scalar_select 0, %s15, %s13
  $region1: #{tpu_custom_call.1} parent=0
    #allocation2 [shape = 'u8[1024]{0}', space=vmem, size = 0x400, scoped, tag = 'output window, operand 1']
    #allocation3 [shape = 's32[2]{0}', space=sflag, size = 0x8, scoped, tag = 'scoped memory for tpu_custom_call.1']
    #allocation4 [shape = 'u8[1024]{0}', space=vmem, size = 0x400, scoped, tag = 'output window, operand 2']
    #allocation5 [shape = 's32[2]{0}', space=sflag, size = 0x8, scoped, tag = 'scoped memory for tpu_custom_call.1']
    %17 = vsyncpa [#allocation3], 0
    %s18 = scalar_lea.sflag [#allocation3], 1
    %19 = vsyncpa %s18, 0
    %20 = vsyncpa [#allocation5], 0
    %s21 = scalar_lea.sflag [#allocation5], 1
    %22 = vsyncpa %s21, 0
    loop: start=0, step=1, limit=6
    $region2: #{tpu_custom_call.1} parent=1 // loop_pre_header
      _
    $region3: #{tpu_custom_call.1} parent=1 // loop_header
      %s24 = sphi 0, %s28
      %p25 = scmp.ge.s32.totalorder %s24, 6
      %s31 = sphi 0, %s43
      %s32 = sphi 0, %s39
      %s33 = sphi 0, %s31
      %s34 = sphi 0, %s32
      %s35 = sphi 0, %s33
      %s36 = sphi 0, %s34
      %s48 = sphi 0, %s50
      %s51 = sphi 0, %s48
      %s52 = sphi 0, %s51
      %s68 = sphi 0, %s52
      %s74 = sphi 0, %s76
      %s77 = sphi 0, %s74
      %s78 = sphi 0, %s77
      %s94 = sphi 0, %s78
      %s98 = sphi 0, %s98
      %s100 = sphi 0, %s98
      %s101 = sphi 0, %s100
      %s115 = sphi 0, %s101
      %s119 = sphi 0, %s119
      %s121 = sphi 0, %s119
      %s122 = sphi 0, %s121
      %s136 = sphi 0, %s122
      %s140 = sphi 0, %s140
      %s142 = sphi 0, %s140
      %s143 = sphi 0, %s142
      %s157 = sphi 0, %s143
      %s161 = sphi 0, %s161
      %s163 = sphi 0, %s161
      %s164 = sphi 0, %s163
      %s178 = sphi 0, %s164
      %s182 = sphi 0, %s182
      %s184 = sphi 0, %s182
      %s185 = sphi 0, %s184
      %s199 = sphi 0, %s185
      %s203 = sphi 0, %s203
      %s205 = sphi 0, %s203
      %s206 = sphi 0, %s205
      %s220 = sphi 0, %s206
      %s224 = sphi 0, %s224
      %s226 = sphi 0, %s224
      %s227 = sphi 0, %s226
      %s241 = sphi 0, %s227
      %s249 = sphi 0, %s251
      %s252 = sphi 0, %s249
      %s253 = sphi 0, %s252
      %s269 = sphi 0, %s253
      %s277 = sphi 0, %s279
      %s280 = sphi 0, %s277
      %s281 = sphi 0, %s280
      %s297 = sphi 0, %s281
      %s305 = sphi 0, %s307
      %s308 = sphi 0, %s305
      %s309 = sphi 0, %s308
      %s325 = sphi 0, %s309
    $region4: #{tpu_custom_call.1} parent=1 // loop_header_branch
      %27 = sbr.rel (%p25) target = $region8
    $region5: #{tpu_custom_call.1} parent=1 // loop_body
      %s29 = ssub.s32 %s24, 1
      %s30 = ssub.s32 %s24, 2
      %s37 = sadd.s32 1, %s32
      %p38 = scmp.ge.s32.totalorder %s37, 2
      %s39 = scalar_select %p38, 0, %s37
      %s40 = sadd.s32 1, %s31
      %s41 = scalar_select %p38, %s40, %s31
      %p42 = scmp.ge.s32.totalorder %s41, 2
      %s43 = scalar_select %p42, 0, %s41
      %s44 = ssub.s32 %s31, %s43
      %s45 = ssub.s32 %s32, %s39
      %s46 = sor.u32 %s44, %s45
      %p47 = scmp.eq.s32.totalorder %s46, 0
      %s49 = sadd.s32 %s48, 1
      %s50 = scalar_select %p47, %s48, %s49
      %p53 = pneg %p47
      %p54 = scmp.eq.s32.totalorder %s24, 3
      %p55 = por %p53, %p54
      %p56 = scmp.ne.s32.totalorder %s48, %s51
      %p57 = scmp.eq.s32.totalorder %s24, 0
      %p58 = por %p56, %p57
      %p59 = scmp.ne.s32.totalorder %s48, %s51
      %p60 = scmp.eq.s32.totalorder %s29, 3
      %p61 = por %p59, %p60
      %p62 = scmp.ne.s32.totalorder %s51, %s52
      %p63 = scmp.eq.s32.totalorder %s29, 0
      %p64 = por %p62, %p63
      %p65 = scmp.ne.s32.totalorder %s51, %s52
      %p66 = scmp.eq.s32.totalorder %s30, 3
      %p67 = por %p65, %p66
      %p69 = scmp.ne.s32.totalorder %s52, %s68
      %p70 = scmp.eq.s32.totalorder %s30, 0
      %p71 = por %p69, %p70
      %s72 = ssub.s32 %s31, %s43
      %p73 = scmp.eq.s32.totalorder %s72, 0
      %s75 = sadd.s32 %s74, 1
      %s76 = scalar_select %p73, %s74, %s75
      %p79 = pneg %p73
      %p80 = scmp.eq.s32.totalorder %s24, 3
      %p81 = por %p79, %p80
      %p82 = scmp.ne.s32.totalorder %s74, %s77
      %p83 = scmp.eq.s32.totalorder %s24, 0
      %p84 = por %p82, %p83
      %p85 = scmp.ne.s32.totalorder %s74, %s77
      %p86 = scmp.eq.s32.totalorder %s29, 3
      %p87 = por %p85, %p86
      %p88 = scmp.ne.s32.totalorder %s77, %s78
      %p89 = scmp.eq.s32.totalorder %s29, 0
      %p90 = por %p88, %p89
      %p91 = scmp.ne.s32.totalorder %s77, %s78
      %p92 = scmp.eq.s32.totalorder %s30, 3
      %p93 = por %p91, %p92
      %p95 = scmp.ne.s32.totalorder %s78, %s94
      %p96 = scmp.eq.s32.totalorder %s30, 0
      %p97 = por %p95, %p96
      %s99 = sadd.s32 %s98, 1
      %p102 = scmp.eq.s32.totalorder %s24, 3
      %p103 = scmp.ne.s32.totalorder %s98, %s100
      %p104 = scmp.eq.s32.totalorder %s24, 0
      %p105 = por %p103, %p104
      %p106 = scmp.ne.s32.totalorder %s98, %s100
      %p107 = scmp.eq.s32.totalorder %s29, 3
      %p108 = por %p106, %p107
      %p109 = scmp.ne.s32.totalorder %s100, %s101
      %p110 = scmp.eq.s32.totalorder %s29, 0
      %p111 = por %p109, %p110
      %p112 = scmp.ne.s32.totalorder %s100, %s101
      %p113 = scmp.eq.s32.totalorder %s30, 3
      %p114 = por %p112, %p113
      %p116 = scmp.ne.s32.totalorder %s101, %s115
      %p117 = scmp.eq.s32.totalorder %s30, 0
      %p118 = por %p116, %p117
      %s120 = sadd.s32 %s119, 1
      %p123 = scmp.eq.s32.totalorder %s24, 3
      %p124 = scmp.ne.s32.totalorder %s119, %s121
      %p125 = scmp.eq.s32.totalorder %s24, 0
      %p126 = por %p124, %p125
      %p127 = scmp.ne.s32.totalorder %s119, %s121
      %p128 = scmp.eq.s32.totalorder %s29, 3
      %p129 = por %p127, %p128
      %p130 = scmp.ne.s32.totalorder %s121, %s122
      %p131 = scmp.eq.s32.totalorder %s29, 0
      %p132 = por %p130, %p131
      %p133 = scmp.ne.s32.totalorder %s121, %s122
      %p134 = scmp.eq.s32.totalorder %s30, 3
      %p135 = por %p133, %p134
      %p137 = scmp.ne.s32.totalorder %s122, %s136
      %p138 = scmp.eq.s32.totalorder %s30, 0
      %p139 = por %p137, %p138
      %s141 = sadd.s32 %s140, 1
      %p144 = scmp.eq.s32.totalorder %s24, 3
      %p145 = scmp.ne.s32.totalorder %s140, %s142
      %p146 = scmp.eq.s32.totalorder %s24, 0
      %p147 = por %p145, %p146
      %p148 = scmp.ne.s32.totalorder %s140, %s142
      %p149 = scmp.eq.s32.totalorder %s29, 3
      %p150 = por %p148, %p149
      %p151 = scmp.ne.s32.totalorder %s142, %s143
      %p152 = scmp.eq.s32.totalorder %s29, 0
      %p153 = por %p151, %p152
      %p154 = scmp.ne.s32.totalorder %s142, %s143
      %p155 = scmp.eq.s32.totalorder %s30, 3
      %p156 = por %p154, %p155
      %p158 = scmp.ne.s32.totalorder %s143, %s157
      %p159 = scmp.eq.s32.totalorder %s30, 0
      %p160 = por %p158, %p159
      %s162 = sadd.s32 %s161, 1
      %p165 = scmp.eq.s32.totalorder %s24, 3
      %p166 = scmp.ne.s32.totalorder %s161, %s163
      %p167 = scmp.eq.s32.totalorder %s24, 0
      %p168 = por %p166, %p167
      %p169 = scmp.ne.s32.totalorder %s161, %s163
      %p170 = scmp.eq.s32.totalorder %s29, 3
      %p171 = por %p169, %p170
      %p172 = scmp.ne.s32.totalorder %s163, %s164
      %p173 = scmp.eq.s32.totalorder %s29, 0
      %p174 = por %p172, %p173
      %p175 = scmp.ne.s32.totalorder %s163, %s164
      %p176 = scmp.eq.s32.totalorder %s30, 3
      %p177 = por %p175, %p176
      %p179 = scmp.ne.s32.totalorder %s164, %s178
      %p180 = scmp.eq.s32.totalorder %s30, 0
      %p181 = por %p179, %p180
      %s183 = sadd.s32 %s182, 1
      %p186 = scmp.eq.s32.totalorder %s24, 3
      %p187 = scmp.ne.s32.totalorder %s182, %s184
      %p188 = scmp.eq.s32.totalorder %s24, 0
      %p189 = por %p187, %p188
      %p190 = scmp.ne.s32.totalorder %s182, %s184
      %p191 = scmp.eq.s32.totalorder %s29, 3
      %p192 = por %p190, %p191
      %p193 = scmp.ne.s32.totalorder %s184, %s185
      %p194 = scmp.eq.s32.totalorder %s29, 0
      %p195 = por %p193, %p194
      %p196 = scmp.ne.s32.totalorder %s184, %s185
      %p197 = scmp.eq.s32.totalorder %s30, 3
      %p198 = por %p196, %p197
      %p200 = scmp.ne.s32.totalorder %s185, %s199
      %p201 = scmp.eq.s32.totalorder %s30, 0
      %p202 = por %p200, %p201
      %s204 = sadd.s32 %s203, 1
      %p207 = scmp.eq.s32.totalorder %s24, 3
      %p208 = scmp.ne.s32.totalorder %s203, %s205
      %p209 = scmp.eq.s32.totalorder %s24, 0
      %p210 = por %p208, %p209
      %p211 = scmp.ne.s32.totalorder %s203, %s205
      %p212 = scmp.eq.s32.totalorder %s29, 3
      %p213 = por %p211, %p212
      %p214 = scmp.ne.s32.totalorder %s205, %s206
      %p215 = scmp.eq.s32.totalorder %s29, 0
      %p216 = por %p214, %p215
      %p217 = scmp.ne.s32.totalorder %s205, %s206
      %p218 = scmp.eq.s32.totalorder %s30, 3
      %p219 = por %p217, %p218
      %p221 = scmp.ne.s32.totalorder %s206, %s220
      %p222 = scmp.eq.s32.totalorder %s30, 0
      %p223 = por %p221, %p222
      %s225 = sadd.s32 %s224, 1
      %p228 = scmp.eq.s32.totalorder %s24, 3
      %p229 = scmp.ne.s32.totalorder %s224, %s226
      %p230 = scmp.eq.s32.totalorder %s24, 0
      %p231 = por %p229, %p230
      %p232 = scmp.ne.s32.totalorder %s224, %s226
      %p233 = scmp.eq.s32.totalorder %s29, 3
      %p234 = por %p232, %p233
      %p235 = scmp.ne.s32.totalorder %s226, %s227
      %p236 = scmp.eq.s32.totalorder %s29, 0
      %p237 = por %p235, %p236
      %p238 = scmp.ne.s32.totalorder %s226, %s227
      %p239 = scmp.eq.s32.totalorder %s30, 3
      %p240 = por %p238, %p239
      %p242 = scmp.ne.s32.totalorder %s227, %s241
      %p243 = scmp.eq.s32.totalorder %s30, 0
      %p244 = por %p242, %p243
      %s245 = ssub.s32 %s31, %s43
      %s246 = ssub.s32 %s32, %s39
      %s247 = sor.u32 %s245, %s246
      %p248 = scmp.eq.s32.totalorder %s247, 0
      %s250 = sadd.s32 %s249, 1
      %s251 = scalar_select %p248, %s249, %s250
      %p254 = pneg %p248
      %p255 = scmp.eq.s32.totalorder %s24, 3
      %p256 = por %p254, %p255
      %p257 = scmp.ne.s32.totalorder %s249, %s252
      %p258 = scmp.eq.s32.totalorder %s24, 0
      %p259 = por %p257, %p258
      %p260 = scmp.ne.s32.totalorder %s249, %s252
      %p261 = scmp.eq.s32.totalorder %s29, 3
      %p262 = por %p260, %p261
      %p263 = scmp.ne.s32.totalorder %s252, %s253
      %p264 = scmp.eq.s32.totalorder %s29, 0
      %p265 = por %p263, %p264
      %p266 = scmp.ne.s32.totalorder %s252, %s253
      %p267 = scmp.eq.s32.totalorder %s30, 3
      %p268 = por %p266, %p267
      %p270 = scmp.ne.s32.totalorder %s253, %s269
      %p271 = scmp.eq.s32.totalorder %s30, 0
      %p272 = por %p270, %p271
      %s273 = ssub.s32 %s31, %s43
      %s274 = ssub.s32 %s32, %s39
      %s275 = sor.u32 %s273, %s274
      %p276 = scmp.eq.s32.totalorder %s275, 0
      %s278 = sadd.s32 %s277, 1
      %s279 = scalar_select %p276, %s277, %s278
      %p282 = pneg %p276
      %p283 = scmp.eq.s32.totalorder %s24, 3
      %p284 = por %p282, %p283
      %p285 = scmp.ne.s32.totalorder %s277, %s280
      %p286 = scmp.eq.s32.totalorder %s24, 0
      %p287 = por %p285, %p286
      %p288 = scmp.ne.s32.totalorder %s277, %s280
      %p289 = scmp.eq.s32.totalorder %s29, 3
      %p290 = por %p288, %p289
      %p291 = scmp.ne.s32.totalorder %s280, %s281
      %p292 = scmp.eq.s32.totalorder %s29, 0
      %p293 = por %p291, %p292
      %p294 = scmp.ne.s32.totalorder %s280, %s281
      %p295 = scmp.eq.s32.totalorder %s30, 3
      %p296 = por %p294, %p295
      %p298 = scmp.ne.s32.totalorder %s281, %s297
      %p299 = scmp.eq.s32.totalorder %s30, 0
      %p300 = por %p298, %p299
      %s301 = ssub.s32 %s31, %s43
      %s302 = ssub.s32 %s32, %s39
      %s303 = sor.u32 %s301, %s302
      %p304 = scmp.eq.s32.totalorder %s303, 0
      %s306 = sadd.s32 %s305, 1
      %s307 = scalar_select %p304, %s305, %s306
      %p310 = pneg %p304
      %p311 = scmp.eq.s32.totalorder %s24, 3
      %p312 = por %p310, %p311
      %p313 = scmp.ne.s32.totalorder %s305, %s308
      %p314 = scmp.eq.s32.totalorder %s24, 0
      %p315 = por %p313, %p314
      %p316 = scmp.ne.s32.totalorder %s305, %s308
      %p317 = scmp.eq.s32.totalorder %s29, 3
      %p318 = por %p316, %p317
      %p319 = scmp.ne.s32.totalorder %s308, %s309
      %p320 = scmp.eq.s32.totalorder %s29, 0
      %p321 = por %p319, %p320
      %p322 = scmp.ne.s32.totalorder %s308, %s309
      %p323 = scmp.eq.s32.totalorder %s30, 3
      %p324 = por %p322, %p323
      %p326 = scmp.ne.s32.totalorder %s309, %s325
      %p327 = scmp.eq.s32.totalorder %s30, 0
      %p328 = por %p326, %p327
      %p329 = scmp.le.s32.totalorder 1, %s24
      %p330 = scmp.lt.s32.totalorder %s24, 5
      %p331 = pnand %p329, %p330
      %p332 = pneg %p331
      // Predicated region
      $region9: #{tpu_custom_call.1} parent=5 // pred_check
        _
      $region10: #{tpu_custom_call.1} parent=5 // pred_check_branch
        %334 = sbr.rel (%p331) target = $region12
      $region11: #{tpu_custom_call.1} parent=5 // pred_region
        %s335 = ssub.s32 %s24, 1
        // Predicated region
        $region13: #{tpu_custom_call.1} parent=11 // pred_check
          %p336 = pneg %p111
        $region14: #{tpu_custom_call.1} parent=11 // pred_check_branch
          %338 = sbr.rel (%p336) target = $region16
        $region15: #{tpu_custom_call.1} parent=11 // pred_region
          _
        $region16: #{tpu_custom_call.1} parent=11 // pred_fallthru
          _
        // Predicated region
        $region17: #{tpu_custom_call.1} parent=11 // pred_check
          %p339 = pneg %p132
        $region18: #{tpu_custom_call.1} parent=11 // pred_check_branch
          %341 = sbr.rel (%p339) target = $region20
        $region19: #{tpu_custom_call.1} parent=11 // pred_region
          _
        $region20: #{tpu_custom_call.1} parent=11 // pred_fallthru
          _
        // Predicated region
        $region21: #{tpu_custom_call.1} parent=11 // pred_check
          %p342 = pneg %p153
        $region22: #{tpu_custom_call.1} parent=11 // pred_check_branch
          %344 = sbr.rel (%p342) target = $region24
        $region23: #{tpu_custom_call.1} parent=11 // pred_region
          _
        $region24: #{tpu_custom_call.1} parent=11 // pred_fallthru
          _
        // Predicated region
        $region25: #{tpu_custom_call.1} parent=11 // pred_check
          %p345 = pneg %p174
        $region26: #{tpu_custom_call.1} parent=11 // pred_check_branch
          %347 = sbr.rel (%p345) target = $region28
        $region27: #{tpu_custom_call.1} parent=11 // pred_region
          _
        $region28: #{tpu_custom_call.1} parent=11 // pred_fallthru
          _
        // Predicated region
        $region29: #{tpu_custom_call.1} parent=11 // pred_check
          %p348 = pneg %p195
        $region30: #{tpu_custom_call.1} parent=11 // pred_check_branch
          %350 = sbr.rel (%p348) target = $region32
        $region31: #{tpu_custom_call.1} parent=11 // pred_region
          _
        $region32: #{tpu_custom_call.1} parent=11 // pred_fallthru
          _
        // Predicated region
        $region33: #{tpu_custom_call.1} parent=11 // pred_check
          %p351 = pneg %p216
        $region34: #{tpu_custom_call.1} parent=11 // pred_check_branch
          %353 = sbr.rel (%p351) target = $region36
        $region35: #{tpu_custom_call.1} parent=11 // pred_region
          _
        $region36: #{tpu_custom_call.1} parent=11 // pred_fallthru
          _
        // Predicated region
        $region37: #{tpu_custom_call.1} parent=11 // pred_check
          %p354 = pneg %p237
        $region38: #{tpu_custom_call.1} parent=11 // pred_check_branch
          %356 = sbr.rel (%p354) target = $region40
        $region39: #{tpu_custom_call.1} parent=11 // pred_region
          _
        $region40: #{tpu_custom_call.1} parent=11 // pred_fallthru
          _
      $region12: #{tpu_custom_call.1} parent=5 // pred_fallthru
        _
      %p357 = scmp.lt.s32.totalorder %s24, 4
      // Predicated region
      $region41: #{tpu_custom_call.1} parent=5 // pred_check
        %p358 = pneg %p357
      $region42: #{tpu_custom_call.1} parent=5 // pred_check_branch
        %360 = sbr.rel (%p358) target = $region44
      $region43: #{tpu_custom_call.1} parent=5 // pred_region
        // Predicated region
        $region45: #{tpu_custom_call.1} parent=43 // pred_check
          %p361 = pneg %p58
        $region46: #{tpu_custom_call.1} parent=43 // pred_check_branch
          %363 = sbr.rel (%p361) target = $region48
        $region47: #{tpu_custom_call.1} parent=43 // pred_region
          %s364 = smul.u32 64, %s32
          %p365 = scmp.lt.s32.totalorder %s31, 1
          %s366 = scalar_select %p365, %s31, 1
          %p367 = scmp.lt.s32.totalorder %s364, 127
          %s368 = scalar_select %p367, %s364, 127
          %s369 = smul.addr %s366, 128
          %s370 = sadd.s32 %s368, %s369
          %s371 = smul.addr %s370, 8
          %s372 = scalar_lea.vmem %s0, %s371
          %s373 = smul.u32 64, %s32
        $region48: #{tpu_custom_call.1} parent=43 // pred_fallthru
          _
        // Predicated region
        $region49: #{tpu_custom_call.1} parent=43 // pred_check
          %p374 = pneg %p84
        $region50: #{tpu_custom_call.1} parent=43 // pred_check_branch
          %376 = sbr.rel (%p374) target = $region52
        $region51: #{tpu_custom_call.1} parent=43 // pred_region
          %p377 = scmp.lt.s32.totalorder %s31, 1
          %s378 = scalar_select %p377, %s31, 1
          %s379 = scalar_lea.vmem %s1, %s378
        $region52: #{tpu_custom_call.1} parent=43 // pred_fallthru
          _
      $region44: #{tpu_custom_call.1} parent=5 // pred_fallthru
        _
      %p380 = scmp.le.s32.totalorder 1, %s24
      %p381 = scmp.lt.s32.totalorder %s24, 5
      %p382 = pnand %p380, %p381
      %p383 = pneg %p382
      // Predicated region
      $region53: #{tpu_custom_call.1} parent=5 // pred_check
        _
      $region54: #{tpu_custom_call.1} parent=5 // pred_check_branch
        %385 = sbr.rel (%p382) target = $region56
      $region55: #{tpu_custom_call.1} parent=5 // pred_region
        %s386 = ssub.s32 %s24, 1
        %s387 = smul.u32 64, %s34
        %p388 = scmp.lt.s32.totalorder %s33, 1
        %s389 = scalar_select %p388, %s33, 1
        %p390 = scmp.lt.s32.totalorder %s387, 127
        %s391 = scalar_select %p390, %s387, 127
        %s392 = smul.addr %s389, 128
        %s393 = sadd.s32 %s391, %s392
        %s394 = smul.addr %s393, 8
        %s395 = scalar_lea.vmem %s0, %s394
        %p396 = pneg %p64
        %p397 = pneg %p61
        %p398 = scmp.lt.s32.totalorder %s33, 1
        %s399 = scalar_select %p398, %s33, 1
        %s400 = scalar_lea.vmem %s1, %s399
        %p401 = pneg %p90
        %p402 = pneg %p87
        %p403 = pneg %p111
        %p404 = pneg %p108
        %p405 = pneg %p132
        %p406 = pneg %p129
        %p407 = pneg %p153
        %p408 = pneg %p150
        %p409 = pneg %p174
        %p410 = pneg %p171
        %p411 = pneg %p195
        %p412 = pneg %p192
        %p413 = pneg %p216
        %p414 = pneg %p213
        %p415 = pneg %p237
        %p416 = pneg %p234
        %p417 = pneg %p265
        %p418 = pneg %p262
        %s419 = smul.u32 64, %s34
        %p420 = scmp.lt.s32.totalorder %s33, 1
        %s421 = scalar_select %p420, %s33, 1
        %p422 = scmp.lt.s32.totalorder %s419, 127
        %s423 = scalar_select %p422, %s419, 127
        %s424 = smul.addr %s421, 128
        %s425 = sadd.s32 %s423, %s424
        %s426 = smul.addr %s425, 8
        %s427 = scalar_lea.vmem %s9, %s426
        %p428 = pneg %p293
        %p429 = pneg %p290
        %s430 = sand.u32 %s280, 1
        %s431 = scalar_lea.sflag [#allocation3], %s430
        %s432 = sand.u32 %s280, 1
        %s433 = scalar_lea.vmem [#allocation2], %s432
        %p434 = pneg %p321
        %p435 = pneg %p318
        %s436 = sand.u32 %s308, 1
        %s437 = scalar_lea.sflag [#allocation5], %s436
        %s438 = sand.u32 %s308, 1
        %s439 = scalar_lea.vmem [#allocation4], %s438
        %s440 = smul.u32 64, %s34
        %p441 = scmp.lt.s32.totalorder %s33, 1
        %s442 = scalar_select %p441, %s33, 1
        %p443 = scmp.lt.s32.totalorder %s440, 127
        %s444 = scalar_select %p443, %s440, 127
        %s445 = smul.addr %s442, 128
        %s446 = sadd.s32 %s444, %s445
        %s447 = smul.addr %s446, 8
        %s448 = scalar_lea.vmem %s0, %s447
        %s449 = smul.u32 64, %s34
        %p450 = scmp.lt.s32.totalorder %s33, 1
        %s451 = scalar_select %p450, %s33, 1
        %s452 = scalar_lea.vmem %s1, %s451
        %s453 = smul.u32 64, %s34
        %p454 = scmp.lt.s32.totalorder %s33, 1
        %s455 = scalar_select %p454, %s33, 1
        %p456 = scmp.lt.s32.totalorder %s453, 127
        %s457 = scalar_select %p456, %s453, 127
        %s458 = smul.addr %s455, 128
        %s459 = sadd.s32 %s457, %s458
        %s460 = smul.addr %s459, 8
        %s461 = scalar_lea.vmem %s9, %s460
        %s462 = smul.u32 64, %s34
        %v464 = vld [vmem:[%s452] sm:$0x1]
        %v465 = vld [vmem:[%s2] sm:$0xff]
        %v466 = vld [vmem:[%s2 + $0x8] sm:$0xff]
        %v467 = vld [vmem:[%s2 + $0x10] sm:$0xff]
        %v468 = vld [vmem:[%s2 + $0x18] sm:$0xff]
        %v469 = vld [vmem:[%s448] sm:$0xff]
        %v470 = vld [vmem:[%s448 + $0x8] sm:$0xff]
        %v471 = vld [vmem:[%s448 + $0x10] sm:$0xff]
        %v472 = vld [vmem:[%s448 + $0x18] sm:$0xff]
        %v473 = vld [vmem:[%s448 + $0x20] sm:$0xff]
        %v474 = vld [vmem:[%s448 + $0x28] sm:$0xff]
        %v475 = vld [vmem:[%s448 + $0x30] sm:$0xff]
        %v476 = vld [vmem:[%s448 + $0x38] sm:$0xff]
        %v477 = vld [vmem:[%s448 + $0x40] sm:$0xff]
        %v478 = vld [vmem:[%s448 + $0x48] sm:$0xff]
        %v479 = vld [vmem:[%s448 + $0x50] sm:$0xff]
        %v480 = vld [vmem:[%s448 + $0x58] sm:$0xff]
        %v481 = vld [vmem:[%s448 + $0x60] sm:$0xff]
        %v482 = vld [vmem:[%s448 + $0x68] sm:$0xff]
        %v483 = vld [vmem:[%s448 + $0x70] sm:$0xff]
        %v484 = vld [vmem:[%s448 + $0x78] sm:$0xff]
        %v486 = vlaneseq
        %v487 = vshrl.u32 %v486, 7
        %v488 = vsub.s32 0, %v487
        %v489 = vrot.slane %v464, %v488
        %vm491 = vcmask 261120
        %v493 = vsel %vm491, %v469, 0
        %v496 = vsel %vm491, %v470, 0
        %v499 = vsel %vm491, %v471, 0
        %v502 = vsel %vm491, %v472, 0
        %v505 = vsel %vm491, %v473, 0
        %v508 = vsel %vm491, %v474, 0
        %v511 = vsel %vm491, %v475, 0
        %v514 = vsel %vm491, %v476, 0
        %v517 = vsel %vm491, %v477, 0
        %v520 = vsel %vm491, %v478, 0
        %v523 = vsel %vm491, %v479, 0
        %v526 = vsel %vm491, %v480, 0
        %v529 = vsel %vm491, %v481, 0
        %v532 = vsel %vm491, %v482, 0
        %v535 = vsel %vm491, %v483, 0
        %v538 = vsel %vm491, %v484, 0
        %540 = vmatprep.subr.mxu0 0.0
        %541 = vmatpush1.msra.mxu0 %v465
        %542 = vmatprep.subr.mxu0 0.0
        %543 = vmatpush1.msra.mxu0 %v466
        %544 = vmatprep.subr.mxu0 0.0
        %545 = vmatpush1.msra.mxu0 %v467
        %546 = vmatprep.subr.mxu0 0.0
        %547 = vmatpush1.msra.mxu0 %v468
        %548 = vmatprep.subr.mxu0 0.0
        %549 = vmatpush1.msra.mxu0 0.0
        %550 = vmatprep.subr.mxu0 0.0
        %551 = vmatpush1.msra.mxu0 0.0
        %552 = vmatprep.subr.mxu0 0.0
        %553 = vmatpush1.msra.mxu0 0.0
        %554 = vmatprep.subr.mxu0 0.0
        %555 = vmatpush1.msra.mxu0 0.0
        %556 = vmatprep.subr.mxu0 0.0
        %557 = vmatpush1.msra.mxu0 0.0
        %558 = vmatprep.subr.mxu0 0.0
        %559 = vmatpush1.msra.mxu0 0.0
        %560 = vmatprep.subr.mxu0 0.0
        %561 = vmatpush1.msra.mxu0 0.0
        %562 = vmatprep.subr.mxu0 0.0
        %563 = vmatpush1.msra.mxu0 0.0
        %564 = vmatprep.subr.mxu0 0.0
        %565 = vmatpush1.msra.mxu0 0.0
        %566 = vmatprep.subr.mxu0 0.0
        %567 = vmatpush1.msra.mxu0 0.0
        %568 = vmatprep.subr.mxu0 0.0
        %569 = vmatpush1.msra.mxu0 0.0
        %570 = vmatprep.subr.mxu0 0.0
        %571 = vmatpush1.msra.mxu0 0.0
        %572 = vmatprep.subr.mxu0 0.0
        %573 = vmatpush1.msra.mxu0 0.0
        %574 = vmatprep.subr.mxu0 0.0
        %575 = vmatpush1.msra.mxu0 0.0
        %576 = vmatprep.subr.mxu0 0.0
        %577 = vmatpush1.msra.mxu0 0.0
        %578 = vmatprep.subr.mxu0 0.0
        %579 = vmatpush1.msra.mxu0 0.0
        %580 = vmatprep.subr.mxu0 0.0
        %581 = vmatpush1.msra.mxu0 0.0
        %582 = vmatprep.subr.mxu0 0.0
        %583 = vmatpush1.msra.mxu0 0.0
        %584 = vmatprep.subr.mxu0 0.0
        %585 = vmatpush1.msra.mxu0 0.0
        %586 = vmatprep.subr.mxu0 0.0
        %587 = vmatpush1.msra.mxu0 0.0
        %588 = vmatprep.subr.mxu0 0.0
        %589 = vmatpush1.msra.mxu0 0.0
        %590 = vmatprep.subr.mxu0 0.0
        %591 = vmatpush1.msra.mxu0 0.0
        %592 = vmatprep.subr.mxu0 0.0
        %593 = vmatpush1.msra.mxu0 0.0
        %594 = vmatprep.subr.mxu0 0.0
        %595 = vmatpush1.msra.mxu0 0.0
        %596 = vmatprep.subr.mxu0 0.0
        %597 = vmatpush1.msra.mxu0 0.0
        %598 = vmatprep.subr.mxu0 0.0
        %599 = vmatpush1.msra.mxu0 0.0
        %600 = vmatprep.subr.mxu0 0.0
        %601 = vmatpush1.msra.mxu0 0.0
        %602 = vmatprep.subr.mxu0 0.0
        %603 = vmatpush1.msra.mxu0 0.0
        %604 = vmatprep.mubr.f32.mxu0 0.0
        %605 = vmatmul.mubr.f32.gmra.mrb[0].mxu0 %v493
        %v606 = vpop.f32.mrb[0].mxu0
        %v607 = vadd.f32 %v489, %v606
        %v608 = vpop.f32.mrb[0].mxu0
        %609 = vmatprep.mubr.f32.mxu0 0.0
        %610 = vmatmul.mubr.f32.gmra.mrb[0].mxu0 %v496
        %v611 = vpop.f32.mrb[0].mxu0
        %v612 = vadd.f32 %v489, %v611
        %v613 = vpop.f32.mrb[0].mxu0
        %614 = vmatprep.mubr.f32.mxu0 0.0
        %615 = vmatmul.mubr.f32.gmra.mrb[0].mxu0 %v499
        %v616 = vpop.f32.mrb[0].mxu0
        %v617 = vadd.f32 %v489, %v616
        %v618 = vpop.f32.mrb[0].mxu0
        %619 = vmatprep.mubr.f32.mxu0 0.0
        %620 = vmatmul.mubr.f32.gmra.mrb[0].mxu0 %v502
        %v621 = vpop.f32.mrb[0].mxu0
        %v622 = vadd.f32 %v489, %v621
        %v623 = vpop.f32.mrb[0].mxu0
        %624 = vmatprep.mubr.f32.mxu0 0.0
        %625 = vmatmul.mubr.f32.gmra.mrb[0].mxu0 %v505
        %v626 = vpop.f32.mrb[0].mxu0
        %v627 = vadd.f32 %v489, %v626
        %v628 = vpop.f32.mrb[0].mxu0
        %629 = vmatprep.mubr.f32.mxu0 0.0
        %630 = vmatmul.mubr.f32.gmra.mrb[0].mxu0 %v508
        %v631 = vpop.f32.mrb[0].mxu0
        %v632 = vadd.f32 %v489, %v631
        %v633 = vpop.f32.mrb[0].mxu0
        %634 = vmatprep.mubr.f32.mxu0 0.0
        %635 = vmatmul.mubr.f32.gmra.mrb[0].mxu0 %v511
        %v636 = vpop.f32.mrb[0].mxu0
        %v637 = vadd.f32 %v489, %v636
        %v638 = vpop.f32.mrb[0].mxu0
        %639 = vmatprep.mubr.f32.mxu0 0.0
        %640 = vmatmul.mubr.f32.gmra.mrb[0].mxu0 %v514
        %v641 = vpop.f32.mrb[0].mxu0
        %v642 = vadd.f32 %v489, %v641
        %v643 = vpop.f32.mrb[0].mxu0
        %644 = vmatprep.mubr.f32.mxu0 0.0
        %645 = vmatmul.mubr.f32.gmra.mrb[0].mxu0 %v517
        %v646 = vpop.f32.mrb[0].mxu0
        %v647 = vadd.f32 %v489, %v646
        %v648 = vpop.f32.mrb[0].mxu0
        %649 = vmatprep.mubr.f32.mxu0 0.0
        %650 = vmatmul.mubr.f32.gmra.mrb[0].mxu0 %v520
        %v651 = vpop.f32.mrb[0].mxu0
        %v652 = vadd.f32 %v489, %v651
        %v653 = vpop.f32.mrb[0].mxu0
        %654 = vmatprep.mubr.f32.mxu0 0.0
        %655 = vmatmul.mubr.f32.gmra.mrb[0].mxu0 %v523
        %v656 = vpop.f32.mrb[0].mxu0
        %v657 = vadd.f32 %v489, %v656
        %v658 = vpop.f32.mrb[0].mxu0
        %659 = vmatprep.mubr.f32.mxu0 0.0
        %660 = vmatmul.mubr.f32.gmra.mrb[0].mxu0 %v526
        %v661 = vpop.f32.mrb[0].mxu0
        %v662 = vadd.f32 %v489, %v661
        %v663 = vpop.f32.mrb[0].mxu0
        %664 = vmatprep.mubr.f32.mxu0 0.0
        %665 = vmatmul.mubr.f32.gmra.mrb[0].mxu0 %v529
        %v666 = vpop.f32.mrb[0].mxu0
        %v667 = vadd.f32 %v489, %v666
        %v668 = vpop.f32.mrb[0].mxu0
        %669 = vmatprep.mubr.f32.mxu0 0.0
        %670 = vmatmul.mubr.f32.gmra.mrb[0].mxu0 %v532
        %v671 = vpop.f32.mrb[0].mxu0
        %v672 = vadd.f32 %v489, %v671
        %v673 = vpop.f32.mrb[0].mxu0
        %674 = vmatprep.mubr.f32.mxu0 0.0
        %675 = vmatmul.mubr.f32.gmra.mrb[0].mxu0 %v535
        %v676 = vpop.f32.mrb[0].mxu0
        %v677 = vadd.f32 %v489, %v676
        %v678 = vpop.f32.mrb[0].mxu0
        %679 = vmatprep.mubr.f32.mxu0 0.0
        %680 = vmatmul.mubr.f32.gmra.mrb[0].mxu0 %v538
        %v681 = vpop.f32.mrb[0].mxu0
        %v682 = vadd.f32 %v489, %v681
        %v683 = vpop.f32.mrb[0].mxu0
        %684 = vdwg.mxu0
        %685 = vmax.xlane.f32.xlu0 %v607
        %v686 = vpop.xlane.xlu0 %685
        %687 = vmax.xlane.f32.xlu0 %v612
        %v688 = vpop.xlane.xlu0 %687
        %689 = vmax.xlane.f32.xlu0 %v617
        %v690 = vpop.xlane.xlu0 %689
        %691 = vmax.xlane.f32.xlu0 %v622
        %v692 = vpop.xlane.xlu0 %691
        %693 = vmax.xlane.f32.xlu0 %v627
        %v694 = vpop.xlane.xlu0 %693
        %695 = vmax.xlane.f32.xlu0 %v632
        %v696 = vpop.xlane.xlu0 %695
        %697 = vmax.xlane.f32.xlu0 %v637
        %v698 = vpop.xlane.xlu0 %697
        %699 = vmax.xlane.f32.xlu0 %v642
        %v700 = vpop.xlane.xlu0 %699
        %701 = vmax.xlane.f32.xlu0 %v647
        %v702 = vpop.xlane.xlu0 %701
        %703 = vmax.xlane.f32.xlu0 %v652
        %v704 = vpop.xlane.xlu0 %703
        %705 = vmax.xlane.f32.xlu0 %v657
        %v706 = vpop.xlane.xlu0 %705
        %707 = vmax.xlane.f32.xlu0 %v662
        %v708 = vpop.xlane.xlu0 %707
        %709 = vmax.xlane.f32.xlu0 %v667
        %v710 = vpop.xlane.xlu0 %709
        %711 = vmax.xlane.f32.xlu0 %v672
        %v712 = vpop.xlane.xlu0 %711
        %713 = vmax.xlane.f32.xlu0 %v677
        %v714 = vpop.xlane.xlu0 %713
        %715 = vmax.xlane.f32.xlu0 %v682
        %v716 = vpop.xlane.xlu0 %715
        %vm717 = vcmp.eq.f32.partialorder %v607, %v686
        %vm718 = vcmp.eq.f32.partialorder %v612, %v688
        %vm719 = vcmp.eq.f32.partialorder %v617, %v690
        %vm720 = vcmp.eq.f32.partialorder %v622, %v692
        %vm721 = vcmp.eq.f32.partialorder %v627, %v694
        %vm722 = vcmp.eq.f32.partialorder %v632, %v696
        %vm723 = vcmp.eq.f32.partialorder %v637, %v698
        %vm724 = vcmp.eq.f32.partialorder %v642, %v700
        %vm725 = vcmp.eq.f32.partialorder %v647, %v702
        %vm726 = vcmp.eq.f32.partialorder %v652, %v704
        %vm727 = vcmp.eq.f32.partialorder %v657, %v706
        %vm728 = vcmp.eq.f32.partialorder %v662, %v708
        %vm729 = vcmp.eq.f32.partialorder %v667, %v710
        %vm730 = vcmp.eq.f32.partialorder %v672, %v712
        %vm731 = vcmp.eq.f32.partialorder %v677, %v714
        %vm732 = vcmp.eq.f32.partialorder %v682, %v716
        %v733 = vsel %vm717, -1e+30, %v607
        %v734 = vsel %vm718, -1e+30, %v612
        %v735 = vsel %vm719, -1e+30, %v617
        %v736 = vsel %vm720, -1e+30, %v622
        %v737 = vsel %vm721, -1e+30, %v627
        %v738 = vsel %vm722, -1e+30, %v632
        %v739 = vsel %vm723, -1e+30, %v637
        %v740 = vsel %vm724, -1e+30, %v642
        %v741 = vsel %vm725, -1e+30, %v647
        %v742 = vsel %vm726, -1e+30, %v652
        %v743 = vsel %vm727, -1e+30, %v657
        %v744 = vsel %vm728, -1e+30, %v662
        %v745 = vsel %vm729, -1e+30, %v667
        %v746 = vsel %vm730, -1e+30, %v672
        %v747 = vsel %vm731, -1e+30, %v677
        %v748 = vsel %vm732, -1e+30, %v682
        %749 = vmax.xlane.f32.xlu0 %v733
        %v750 = vpop.xlane.xlu0 %749
        %751 = vmax.xlane.f32.xlu0 %v734
        %v752 = vpop.xlane.xlu0 %751
        %753 = vmax.xlane.f32.xlu0 %v735
        %v754 = vpop.xlane.xlu0 %753
        %755 = vmax.xlane.f32.xlu0 %v736
        %v756 = vpop.xlane.xlu0 %755
        %757 = vmax.xlane.f32.xlu0 %v737
        %v758 = vpop.xlane.xlu0 %757
        %759 = vmax.xlane.f32.xlu0 %v738
        %v760 = vpop.xlane.xlu0 %759
        %761 = vmax.xlane.f32.xlu0 %v739
        %v762 = vpop.xlane.xlu0 %761
        %763 = vmax.xlane.f32.xlu0 %v740
        %v764 = vpop.xlane.xlu0 %763
        %765 = vmax.xlane.f32.xlu0 %v741
        %v766 = vpop.xlane.xlu0 %765
        %767 = vmax.xlane.f32.xlu0 %v742
        %v768 = vpop.xlane.xlu0 %767
        %769 = vmax.xlane.f32.xlu0 %v743
        %v770 = vpop.xlane.xlu0 %769
        %771 = vmax.xlane.f32.xlu0 %v744
        %v772 = vpop.xlane.xlu0 %771
        %773 = vmax.xlane.f32.xlu0 %v745
        %v774 = vpop.xlane.xlu0 %773
        %775 = vmax.xlane.f32.xlu0 %v746
        %v776 = vpop.xlane.xlu0 %775
        %777 = vmax.xlane.f32.xlu0 %v747
        %v778 = vpop.xlane.xlu0 %777
        %779 = vmax.xlane.f32.xlu0 %v748
        %v780 = vpop.xlane.xlu0 %779
        %vm781 = vcmp.eq.f32.partialorder %v733, %v750
        %vm782 = vcmp.eq.f32.partialorder %v734, %v752
        %vm783 = vcmp.eq.f32.partialorder %v735, %v754
        %vm784 = vcmp.eq.f32.partialorder %v736, %v756
        %vm785 = vcmp.eq.f32.partialorder %v737, %v758
        %vm786 = vcmp.eq.f32.partialorder %v738, %v760
        %vm787 = vcmp.eq.f32.partialorder %v739, %v762
        %vm788 = vcmp.eq.f32.partialorder %v740, %v764
        %vm789 = vcmp.eq.f32.partialorder %v741, %v766
        %vm790 = vcmp.eq.f32.partialorder %v742, %v768
        %vm791 = vcmp.eq.f32.partialorder %v743, %v770
        %vm792 = vcmp.eq.f32.partialorder %v744, %v772
        %vm793 = vcmp.eq.f32.partialorder %v745, %v774
        %vm794 = vcmp.eq.f32.partialorder %v746, %v776
        %vm795 = vcmp.eq.f32.partialorder %v747, %v778
        %vm796 = vcmp.eq.f32.partialorder %v748, %v780
        %v797 = vsub.f32 %v750, %v686
        %v798 = vsub.f32 %v752, %v688
        %v799 = vsub.f32 %v754, %v690
        %v800 = vsub.f32 %v756, %v692
        %v801 = vsub.f32 %v758, %v694
        %v802 = vsub.f32 %v760, %v696
        %v803 = vsub.f32 %v762, %v698
        %v804 = vsub.f32 %v764, %v700
        %v805 = vsub.f32 %v766, %v702
        %v806 = vsub.f32 %v768, %v704
        %v807 = vsub.f32 %v770, %v706
        %v808 = vsub.f32 %v772, %v708
        %v809 = vsub.f32 %v774, %v710
        %v810 = vsub.f32 %v776, %v712
        %v811 = vsub.f32 %v778, %v714
        %v812 = vsub.f32 %v780, %v716
        %v813 = vmul.f32 %v797, 1.442695
        %v814 = vpow.pop %v813
        %v815 = vmul.f32 %v798, 1.442695
        %v816 = vpow.pop %v815
        %v817 = vmul.f32 %v799, 1.442695
        %v818 = vpow.pop %v817
        %v819 = vmul.f32 %v800, 1.442695
        %v820 = vpow.pop %v819
        %v821 = vmul.f32 %v801, 1.442695
        %v822 = vpow.pop %v821
        %v823 = vmul.f32 %v802, 1.442695
        %v824 = vpow.pop %v823
        %v825 = vmul.f32 %v803, 1.442695
        %v826 = vpow.pop %v825
        %v827 = vmul.f32 %v804, 1.442695
        %v828 = vpow.pop %v827
        %v829 = vmul.f32 %v805, 1.442695
        %v830 = vpow.pop %v829
        %v831 = vmul.f32 %v806, 1.442695
        %v832 = vpow.pop %v831
        %v833 = vmul.f32 %v807, 1.442695
        %v834 = vpow.pop %v833
        %v835 = vmul.f32 %v808, 1.442695
        %v836 = vpow.pop %v835
        %v837 = vmul.f32 %v809, 1.442695
        %v838 = vpow.pop %v837
        %v839 = vmul.f32 %v810, 1.442695
        %v840 = vpow.pop %v839
        %v841 = vmul.f32 %v811, 1.442695
        %v842 = vpow.pop %v841
        %v843 = vmul.f32 %v812, 1.442695
        %v844 = vpow.pop %v843
        %v845 = vadd.f32 %v814, 1.0
        %v846 = vadd.f32 %v816, 1.0
        %v847 = vadd.f32 %v818, 1.0
        %v848 = vadd.f32 %v820, 1.0
        %v849 = vadd.f32 %v822, 1.0
        %v850 = vadd.f32 %v824, 1.0
        %v851 = vadd.f32 %v826, 1.0
        %v852 = vadd.f32 %v828, 1.0
        %v853 = vadd.f32 %v830, 1.0
        %v854 = vadd.f32 %v832, 1.0
        %v855 = vadd.f32 %v834, 1.0
        %v856 = vadd.f32 %v836, 1.0
        %v857 = vadd.f32 %v838, 1.0
        %v858 = vadd.f32 %v840, 1.0
        %v859 = vadd.f32 %v842, 1.0
        %v860 = vadd.f32 %v844, 1.0
        %v861 = vrcp.pop %v845
        %v862 = vmul.f32 1.0, %v861
        %v863 = vrcp.pop %v846
        %v864 = vmul.f32 1.0, %v863
        %v865 = vrcp.pop %v847
        %v866 = vmul.f32 1.0, %v865
        %v867 = vrcp.pop %v848
        %v868 = vmul.f32 1.0, %v867
        %v869 = vrcp.pop %v849
        %v870 = vmul.f32 1.0, %v869
        %v871 = vrcp.pop %v850
        %v872 = vmul.f32 1.0, %v871
        %v873 = vrcp.pop %v851
        %v874 = vmul.f32 1.0, %v873
        %v875 = vrcp.pop %v852
        %v876 = vmul.f32 1.0, %v875
        %v877 = vrcp.pop %v853
        %v878 = vmul.f32 1.0, %v877
        %v879 = vrcp.pop %v854
        %v880 = vmul.f32 1.0, %v879
        %v881 = vrcp.pop %v855
        %v882 = vmul.f32 1.0, %v881
        %v883 = vrcp.pop %v856
        %v884 = vmul.f32 1.0, %v883
        %v885 = vrcp.pop %v857
        %v886 = vmul.f32 1.0, %v885
        %v887 = vrcp.pop %v858
        %v888 = vmul.f32 1.0, %v887
        %v889 = vrcp.pop %v859
        %v890 = vmul.f32 1.0, %v889
        %v891 = vrcp.pop %v860
        %v892 = vmul.f32 1.0, %v891
        %v893 = vmul.f32 %v814, %v862
        %v894 = vmul.f32 %v816, %v864
        %v895 = vmul.f32 %v818, %v866
        %v896 = vmul.f32 %v820, %v868
        %v897 = vmul.f32 %v822, %v870
        %v898 = vmul.f32 %v824, %v872
        %v899 = vmul.f32 %v826, %v874
        %v900 = vmul.f32 %v828, %v876
        %v901 = vmul.f32 %v830, %v878
        %v902 = vmul.f32 %v832, %v880
        %v903 = vmul.f32 %v834, %v882
        %v904 = vmul.f32 %v836, %v884
        %v905 = vmul.f32 %v838, %v886
        %v906 = vmul.f32 %v840, %v888
        %v907 = vmul.f32 %v842, %v890
        %v908 = vmul.f32 %v844, %v892
        %v909 = vsel %vm717, %v862, 0.0
        %v910 = vsel %vm718, %v864, 0.0
        %v911 = vsel %vm719, %v866, 0.0
        %v912 = vsel %vm720, %v868, 0.0
        %v913 = vsel %vm721, %v870, 0.0
        %v914 = vsel %vm722, %v872, 0.0
        %v915 = vsel %vm723, %v874, 0.0
        %v916 = vsel %vm724, %v876, 0.0
        %v917 = vsel %vm725, %v878, 0.0
        %v918 = vsel %vm726, %v880, 0.0
        %v919 = vsel %vm727, %v882, 0.0
        %v920 = vsel %vm728, %v884, 0.0
        %v921 = vsel %vm729, %v886, 0.0
        %v922 = vsel %vm730, %v888, 0.0
        %v923 = vsel %vm731, %v890, 0.0
        %v924 = vsel %vm732, %v892, 0.0
        %v925 = vsel %vm781, %v893, 0.0
        %v926 = vsel %vm782, %v894, 0.0
        %v927 = vsel %vm783, %v895, 0.0
        %v928 = vsel %vm784, %v896, 0.0
        %v929 = vsel %vm785, %v897, 0.0
        %v930 = vsel %vm786, %v898, 0.0
        %v931 = vsel %vm787, %v899, 0.0
        %v932 = vsel %vm788, %v900, 0.0
        %v933 = vsel %vm789, %v901, 0.0
        %v934 = vsel %vm790, %v902, 0.0
        %v935 = vsel %vm791, %v903, 0.0
        %v936 = vsel %vm792, %v904, 0.0
        %v937 = vsel %vm793, %v905, 0.0
        %v938 = vsel %vm794, %v906, 0.0
        %v939 = vsel %vm795, %v907, 0.0
        %v940 = vsel %vm796, %v908, 0.0
        %v941 = vadd.f32 %v909, %v925
        %v942 = vadd.f32 %v910, %v926
        %v943 = vadd.f32 %v911, %v927
        %v944 = vadd.f32 %v912, %v928
        %v945 = vadd.f32 %v913, %v929
        %v946 = vadd.f32 %v914, %v930
        %v947 = vadd.f32 %v915, %v931
        %v948 = vadd.f32 %v916, %v932
        %v949 = vadd.f32 %v917, %v933
        %v950 = vadd.f32 %v918, %v934
        %v951 = vadd.f32 %v919, %v935
        %v952 = vadd.f32 %v920, %v936
        %v953 = vadd.f32 %v921, %v937
        %v954 = vadd.f32 %v922, %v938
        %v955 = vadd.f32 %v923, %v939
        %v956 = vadd.f32 %v924, %v940
        %v957 = vadd.f32 %v941, %v942
        %v958 = vadd.f32 %v957, %v943
        %v959 = vadd.f32 %v958, %v944
        %v960 = vadd.f32 %v959, %v945
        %v961 = vadd.f32 %v960, %v946
        %v962 = vadd.f32 %v961, %v947
        %v963 = vadd.f32 %v962, %v948
        %v964 = vadd.f32 %v963, %v949
        %v965 = vadd.f32 %v964, %v950
        %v966 = vadd.f32 %v965, %v951
        %v967 = vadd.f32 %v966, %v952
        %v968 = vadd.f32 %v967, %v953
        %v969 = vadd.f32 %v968, %v954
        %v970 = vadd.f32 %v969, %v955
        %v971 = vadd.f32 %v970, %v956
        %v972 = vrot.slane %v971, 4
        %v973 = vadd.f32 %v971, %v972
        %v974 = vrot.slane %v973, 2
        %v975 = vadd.f32 %v973, %v974
        %v976 = vrot.slane %v975, 1
        %v977 = vadd.f32 %v975, %v976
        %v978 = vadd.f32 %v977, 0.0
        %vm979 = vcmp.gt.f32.partialorder %v941, 0.0
        %vm980 = vcmp.gt.f32.partialorder %v942, 0.0
        %vm981 = vcmp.gt.f32.partialorder %v943, 0.0
        %vm982 = vcmp.gt.f32.partialorder %v944, 0.0
        %vm983 = vcmp.gt.f32.partialorder %v945, 0.0
        %vm984 = vcmp.gt.f32.partialorder %v946, 0.0
        %vm985 = vcmp.gt.f32.partialorder %v947, 0.0
        %vm986 = vcmp.gt.f32.partialorder %v948, 0.0
        %vm987 = vcmp.gt.f32.partialorder %v949, 0.0
        %vm988 = vcmp.gt.f32.partialorder %v950, 0.0
        %vm989 = vcmp.gt.f32.partialorder %v951, 0.0
        %vm990 = vcmp.gt.f32.partialorder %v952, 0.0
        %vm991 = vcmp.gt.f32.partialorder %v953, 0.0
        %vm992 = vcmp.gt.f32.partialorder %v954, 0.0
        %vm993 = vcmp.gt.f32.partialorder %v955, 0.0
        %vm994 = vcmp.gt.f32.partialorder %v956, 0.0
        %v995 = vsel %vm979, 1, 0
        %v996 = vsel %vm980, 1, 0
        %v997 = vsel %vm981, 1, 0
        %v998 = vsel %vm982, 1, 0
        %v999 = vsel %vm983, 1, 0
        %v1000 = vsel %vm984, 1, 0
        %v1001 = vsel %vm985, 1, 0
        %v1002 = vsel %vm986, 1, 0
        %v1003 = vsel %vm987, 1, 0
        %v1004 = vsel %vm988, 1, 0
        %v1005 = vsel %vm989, 1, 0
        %v1006 = vsel %vm990, 1, 0
        %v1007 = vsel %vm991, 1, 0
        %v1008 = vsel %vm992, 1, 0
        %v1009 = vsel %vm993, 1, 0
        %v1010 = vsel %vm994, 1, 0
        %v1011 = vcvt.s32.f32 %v995
        %v1012 = vcvt.s32.f32 %v996
        %v1013 = vcvt.s32.f32 %v997
        %v1014 = vcvt.s32.f32 %v998
        %v1015 = vcvt.s32.f32 %v999
        %v1016 = vcvt.s32.f32 %v1000
        %v1017 = vcvt.s32.f32 %v1001
        %v1018 = vcvt.s32.f32 %v1002
        %v1019 = vcvt.s32.f32 %v1003
        %v1020 = vcvt.s32.f32 %v1004
        %v1021 = vcvt.s32.f32 %v1005
        %v1022 = vcvt.s32.f32 %v1006
        %v1023 = vcvt.s32.f32 %v1007
        %v1024 = vcvt.s32.f32 %v1008
        %v1025 = vcvt.s32.f32 %v1009
        %v1026 = vcvt.s32.f32 %v1010
        %v1027 = vadd.f32 %v1011, %v1012
        %v1028 = vadd.f32 %v1027, %v1013
        %v1029 = vadd.f32 %v1028, %v1014
        %v1030 = vadd.f32 %v1029, %v1015
        %v1031 = vadd.f32 %v1030, %v1016
        %v1032 = vadd.f32 %v1031, %v1017
        %v1033 = vadd.f32 %v1032, %v1018
        %v1034 = vadd.f32 %v1033, %v1019
        %v1035 = vadd.f32 %v1034, %v1020
        %v1036 = vadd.f32 %v1035, %v1021
        %v1037 = vadd.f32 %v1036, %v1022
        %v1038 = vadd.f32 %v1037, %v1023
        %v1039 = vadd.f32 %v1038, %v1024
        %v1040 = vadd.f32 %v1039, %v1025
        %v1041 = vadd.f32 %v1040, %v1026
        %v1042 = vrot.slane %v1041, 4
        %v1043 = vadd.f32 %v1041, %v1042
        %v1044 = vrot.slane %v1043, 2
        %v1045 = vadd.f32 %v1043, %v1044
        %v1046 = vrot.slane %v1045, 1
        %v1047 = vadd.f32 %v1045, %v1046
        %v1048 = vadd.f32 %v1047, 0.0
        %v1049 = vpack.c.bf16 %v470, %v469
        %v1050 = vpack.c.bf16 %v472, %v471
        %v1051 = vpack.c.bf16 %v474, %v473
        %v1052 = vpack.c.bf16 %v476, %v475
        %v1053 = vpack.c.bf16 %v478, %v477
        %v1054 = vpack.c.bf16 %v480, %v479
        %v1055 = vpack.c.bf16 %v482, %v481
        %v1056 = vpack.c.bf16 %v484, %v483
        %v1057 = vld [vmem:[%s3] sm:$0xff]
        %v1058 = vld [vmem:[%s3 + $0x8] sm:$0xf]
        %v1059 = vld [vmem:[%s3 + $0xc] sm:$0xff]
        %v1060 = vld [vmem:[%s3 + $0x14] sm:$0xf]
        %v1061 = vld [vmem:[%s3 + $0x18] sm:$0xff]
        %v1062 = vld [vmem:[%s3 + $0x20] sm:$0xf]
        %v1063 = vld [vmem:[%s3 + $0x24] sm:$0xff]
        %v1064 = vld [vmem:[%s3 + $0x2c] sm:$0xf]
        %v1065 = vld [vmem:[%s4] sm:$0x7]
        %v1067 = vlaneseq
        %v1068 = vshrl.u32 %v1067, 7
        %v1069 = vsub.s32 0, %v1068
        %v1070 = vrot.slane %v1065, %v1069
        %v1071 = vlaneseq
        %v1072 = vshrl.u32 %v1071, 7
        %v1073 = vsub.s32 1, %v1072
        %v1074 = vrot.slane %v1065, %v1073
        %v1075 = vlaneseq
        %v1076 = vshrl.u32 %v1075, 7
        %v1077 = vsub.s32 2, %v1076
        %v1078 = vrot.slane %v1065, %v1077
        %v1090 = vunpack.c.l.b16 %v1057
        %v1091 = vunpack.c.h.b16 %v1057
        %v1092 = vunpack.c.l.b16 %v1058
        %v1093 = vunpack.c.l.b16 %v1059
        %v1094 = vunpack.c.h.b16 %v1059
        %v1095 = vunpack.c.l.b16 %v1060
        %v1096 = vunpack.c.l.b16 %v1061
        %v1097 = vunpack.c.h.b16 %v1061
        %v1098 = vunpack.c.l.b16 %v1062
        %v1099 = vunpack.c.l.b16 %v1063
        %v1100 = vunpack.c.h.b16 %v1063
        %v1101 = vunpack.c.l.b16 %v1064
        %v1102 = vpack.c.b16 %v1093, %v1090
        %v1103 = vpack.c.b16 %v1094, %v1091
        %v1104 = vpack.c.b16 %v1095, %v1092
        %v1105 = vpack.c.b16 %v1099, %v1096
        %v1106 = vpack.c.b16 %v1100, %v1097
        %v1107 = vpack.c.b16 %v1101, %v1098
        %v1115 = vsel %vm491, %v1049, 0
        %v1118 = vsel %vm491, %v1050, 0
        %v1121 = vsel %vm491, %v1051, 0
        %v1124 = vsel %vm491, %v1052, 0
        %v1127 = vsel %vm491, %v1053, 0
        %v1130 = vsel %vm491, %v1054, 0
        %v1133 = vsel %vm491, %v1055, 0
        %v1136 = vsel %vm491, %v1056, 0
        %1138 = vmatprep.subr.bf16.mxu0 %v1103
        %1139 = vmatpush1.bf16.msra.mxu0 %v1102
        %1140 = vmatprep.subr.bf16.mxu0 %v1106
        %1141 = vmatpush1.bf16.msra.mxu0 %v1105
        %1142 = vmatprep.subr.bf16.mxu0 0
        %1143 = vmatpush1.bf16.msra.mxu0 0
        %1144 = vmatprep.subr.bf16.mxu0 0
        %1145 = vmatpush1.bf16.msra.mxu0 0
        %1146 = vmatprep.subr.bf16.mxu0 0
        %1147 = vmatpush1.bf16.msra.mxu0 0
        %1148 = vmatprep.subr.bf16.mxu0 0
        %1149 = vmatpush1.bf16.msra.mxu0 0
        %1150 = vmatprep.subr.bf16.mxu0 0
        %1151 = vmatpush1.bf16.msra.mxu0 0
        %1152 = vmatprep.subr.bf16.mxu0 0
        %1153 = vmatpush1.bf16.msra.mxu0 0
        %1154 = vmatprep.subr.bf16.mxu0 0
        %1155 = vmatpush1.bf16.msra.mxu0 0
        %1156 = vmatprep.subr.bf16.mxu0 0
        %1157 = vmatpush1.bf16.msra.mxu0 0
        %1158 = vmatprep.subr.bf16.mxu0 0
        %1159 = vmatpush1.bf16.msra.mxu0 0
        %1160 = vmatprep.subr.bf16.mxu0 0
        %1161 = vmatpush1.bf16.msra.mxu0 0
        %1162 = vmatprep.subr.bf16.mxu0 0
        %1163 = vmatpush1.bf16.msra.mxu0 0
        %1164 = vmatprep.subr.bf16.mxu0 0
        %1165 = vmatpush1.bf16.msra.mxu0 0
        %1166 = vmatprep.subr.bf16.mxu0 0
        %1167 = vmatpush1.bf16.msra.mxu0 0
        %1168 = vmatprep.subr.bf16.mxu0 0
        %1169 = vmatpush1.bf16.msra.mxu0 0
        %1170 = vmatprep.mubr.bf16.mxu0 0
        %1171 = vmatmul.mubr.bf16.gmra.mrb[0].mxu0 %v1115
        %v1172 = vpop.f32.mrb[0].mxu0
        %v1173 = vadd.f32 %v1070, %v1172
        %v1174 = vpop.f32.mrb[0].mxu0
        %v1175 = vadd.f32 %v1074, %v1174
        %v1176 = vpop.f32.mrb[0].mxu0
        %v1177 = vadd.f32 %v1070, %v1176
        %v1178 = vpop.f32.mrb[0].mxu0
        %v1179 = vadd.f32 %v1074, %v1178
        %1180 = vmatprep.mubr.bf16.mxu0 0
        %1181 = vmatmul.mubr.bf16.gmra.mrb[0].mxu0 %v1118
        %v1182 = vpop.f32.mrb[0].mxu0
        %v1183 = vadd.f32 %v1070, %v1182
        %v1184 = vpop.f32.mrb[0].mxu0
        %v1185 = vadd.f32 %v1074, %v1184
        %v1186 = vpop.f32.mrb[0].mxu0
        %v1187 = vadd.f32 %v1070, %v1186
        %v1188 = vpop.f32.mrb[0].mxu0
        %v1189 = vadd.f32 %v1074, %v1188
        %1190 = vmatprep.mubr.bf16.mxu0 0
        %1191 = vmatmul.mubr.bf16.gmra.mrb[0].mxu0 %v1121
        %v1192 = vpop.f32.mrb[0].mxu0
        %v1193 = vadd.f32 %v1070, %v1192
        %v1194 = vpop.f32.mrb[0].mxu0
        %v1195 = vadd.f32 %v1074, %v1194
        %v1196 = vpop.f32.mrb[0].mxu0
        %v1197 = vadd.f32 %v1070, %v1196
        %v1198 = vpop.f32.mrb[0].mxu0
        %v1199 = vadd.f32 %v1074, %v1198
        %1200 = vmatprep.mubr.bf16.mxu0 0
        %1201 = vmatmul.mubr.bf16.gmra.mrb[0].mxu0 %v1124
        %v1202 = vpop.f32.mrb[0].mxu0
        %v1203 = vadd.f32 %v1070, %v1202
        %v1204 = vpop.f32.mrb[0].mxu0
        %v1205 = vadd.f32 %v1074, %v1204
        %v1206 = vpop.f32.mrb[0].mxu0
        %v1207 = vadd.f32 %v1070, %v1206
        %v1208 = vpop.f32.mrb[0].mxu0
        %v1209 = vadd.f32 %v1074, %v1208
        %1210 = vmatprep.mubr.bf16.mxu0 0
        %1211 = vmatmul.mubr.bf16.gmra.mrb[0].mxu0 %v1127
        %v1212 = vpop.f32.mrb[0].mxu0
        %v1213 = vadd.f32 %v1070, %v1212
        %v1214 = vpop.f32.mrb[0].mxu0
        %v1215 = vadd.f32 %v1074, %v1214
        %v1216 = vpop.f32.mrb[0].mxu0
        %v1217 = vadd.f32 %v1070, %v1216
        %v1218 = vpop.f32.mrb[0].mxu0
        %v1219 = vadd.f32 %v1074, %v1218
        %1220 = vmatprep.mubr.bf16.mxu0 0
        %1221 = vmatmul.mubr.bf16.gmra.mrb[0].mxu0 %v1130
        %v1222 = vpop.f32.mrb[0].mxu0
        %v1223 = vadd.f32 %v1070, %v1222
        %v1224 = vpop.f32.mrb[0].mxu0
        %v1225 = vadd.f32 %v1074, %v1224
        %v1226 = vpop.f32.mrb[0].mxu0
        %v1227 = vadd.f32 %v1070, %v1226
        %v1228 = vpop.f32.mrb[0].mxu0
        %v1229 = vadd.f32 %v1074, %v1228
        %1230 = vmatprep.mubr.bf16.mxu0 0
        %1231 = vmatmul.mubr.bf16.gmra.mrb[0].mxu0 %v1133
        %v1232 = vpop.f32.mrb[0].mxu0
        %v1233 = vadd.f32 %v1070, %v1232
        %v1234 = vpop.f32.mrb[0].mxu0
        %v1235 = vadd.f32 %v1074, %v1234
        %v1236 = vpop.f32.mrb[0].mxu0
        %v1237 = vadd.f32 %v1070, %v1236
        %v1238 = vpop.f32.mrb[0].mxu0
        %v1239 = vadd.f32 %v1074, %v1238
        %1240 = vmatprep.mubr.bf16.mxu0 0
        %1241 = vmatmul.mubr.bf16.gmra.mrb[0].mxu0 %v1136
        %v1242 = vpop.f32.mrb[0].mxu0
        %v1243 = vadd.f32 %v1070, %v1242
        %v1244 = vpop.f32.mrb[0].mxu0
        %v1245 = vadd.f32 %v1074, %v1244
        %v1246 = vpop.f32.mrb[0].mxu0
        %v1247 = vadd.f32 %v1070, %v1246
        %v1248 = vpop.f32.mrb[0].mxu0
        %v1249 = vadd.f32 %v1074, %v1248
        %1250 = vdwg.mxu0
        %1251 = vmatprep.subr.bf16.mxu0 0
        %1252 = vmatpush1.bf16.msra.mxu0 %v1104
        %1253 = vmatprep.subr.bf16.mxu0 0
        %1254 = vmatpush1.bf16.msra.mxu0 %v1107
        %1255 = vmatprep.subr.bf16.mxu0 0
        %1256 = vmatpush1.bf16.msra.mxu0 0
        %1257 = vmatprep.subr.bf16.mxu0 0
        %1258 = vmatpush1.bf16.msra.mxu0 0
        %1259 = vmatprep.subr.bf16.mxu0 0
        %1260 = vmatpush1.bf16.msra.mxu0 0
        %1261 = vmatprep.subr.bf16.mxu0 0
        %1262 = vmatpush1.bf16.msra.mxu0 0
        %1263 = vmatprep.subr.bf16.mxu0 0
        %1264 = vmatpush1.bf16.msra.mxu0 0
        %1265 = vmatprep.subr.bf16.mxu0 0
        %1266 = vmatpush1.bf16.msra.mxu0 0
        %1267 = vmatprep.subr.bf16.mxu0 0
        %1268 = vmatpush1.bf16.msra.mxu0 0
        %1269 = vmatprep.subr.bf16.mxu0 0
        %1270 = vmatpush1.bf16.msra.mxu0 0
        %1271 = vmatprep.subr.bf16.mxu0 0
        %1272 = vmatpush1.bf16.msra.mxu0 0
        %1273 = vmatprep.subr.bf16.mxu0 0
        %1274 = vmatpush1.bf16.msra.mxu0 0
        %1275 = vmatprep.subr.bf16.mxu0 0
        %1276 = vmatpush1.bf16.msra.mxu0 0
        %1277 = vmatprep.subr.bf16.mxu0 0
        %1278 = vmatpush1.bf16.msra.mxu0 0
        %1279 = vmatprep.subr.bf16.mxu0 0
        %1280 = vmatpush1.bf16.msra.mxu0 0
        %1281 = vmatprep.subr.bf16.mxu0 0
        %1282 = vmatpush1.bf16.msra.mxu0 0
        %1283 = vmatprep.mubr.bf16.mxu0 0
        %1284 = vmatmul.mubr.bf16.gmra.mrb[0].mxu0 %v1115
        %v1285 = vpop.f32.mrb[0].mxu0
        %v1286 = vadd.f32 %v1078, %v1285
        %v1287 = vpop.f32.mrb[0].mxu0
        %v1288 = vpop.f32.mrb[0].mxu0
        %v1289 = vadd.f32 %v1078, %v1288
        %v1290 = vpop.f32.mrb[0].mxu0
        %1291 = vmatprep.mubr.bf16.mxu0 0
        %1292 = vmatmul.mubr.bf16.gmra.mrb[0].mxu0 %v1118
        %v1293 = vpop.f32.mrb[0].mxu0
        %v1294 = vadd.f32 %v1078, %v1293
        %v1295 = vpop.f32.mrb[0].mxu0
        %v1296 = vpop.f32.mrb[0].mxu0
        %v1297 = vadd.f32 %v1078, %v1296
        %v1298 = vpop.f32.mrb[0].mxu0
        %1299 = vmatprep.mubr.bf16.mxu0 0
        %1300 = vmatmul.mubr.bf16.gmra.mrb[0].mxu0 %v1121
        %v1301 = vpop.f32.mrb[0].mxu0
        %v1302 = vadd.f32 %v1078, %v1301
        %v1303 = vpop.f32.mrb[0].mxu0
        %v1304 = vpop.f32.mrb[0].mxu0
        %v1305 = vadd.f32 %v1078, %v1304
        %v1306 = vpop.f32.mrb[0].mxu0
        %1307 = vmatprep.mubr.bf16.mxu0 0
        %1308 = vmatmul.mubr.bf16.gmra.mrb[0].mxu0 %v1124
        %v1309 = vpop.f32.mrb[0].mxu0
        %v1310 = vadd.f32 %v1078, %v1309
        %v1311 = vpop.f32.mrb[0].mxu0
        %v1312 = vpop.f32.mrb[0].mxu0
        %v1313 = vadd.f32 %v1078, %v1312
        %v1314 = vpop.f32.mrb[0].mxu0
        %1315 = vmatprep.mubr.bf16.mxu0 0
        %1316 = vmatmul.mubr.bf16.gmra.mrb[0].mxu0 %v1127
        %v1317 = vpop.f32.mrb[0].mxu0
        %v1318 = vadd.f32 %v1078, %v1317
        %v1319 = vpop.f32.mrb[0].mxu0
        %v1320 = vpop.f32.mrb[0].mxu0
        %v1321 = vadd.f32 %v1078, %v1320
        %v1322 = vpop.f32.mrb[0].mxu0
        %1323 = vmatprep.mubr.bf16.mxu0 0
        %1324 = vmatmul.mubr.bf16.gmra.mrb[0].mxu0 %v1130
        %v1325 = vpop.f32.mrb[0].mxu0
        %v1326 = vadd.f32 %v1078, %v1325
        %v1327 = vpop.f32.mrb[0].mxu0
        %v1328 = vpop.f32.mrb[0].mxu0
        %v1329 = vadd.f32 %v1078, %v1328
        %v1330 = vpop.f32.mrb[0].mxu0
        %1331 = vmatprep.mubr.bf16.mxu0 0
        %1332 = vmatmul.mubr.bf16.gmra.mrb[0].mxu0 %v1133
        %v1333 = vpop.f32.mrb[0].mxu0
        %v1334 = vadd.f32 %v1078, %v1333
        %v1335 = vpop.f32.mrb[0].mxu0
        %v1336 = vpop.f32.mrb[0].mxu0
        %v1337 = vadd.f32 %v1078, %v1336
        %v1338 = vpop.f32.mrb[0].mxu0
        %1339 = vmatprep.mubr.bf16.mxu0 0
        %1340 = vmatmul.mubr.bf16.gmra.mrb[0].mxu0 %v1136
        %v1341 = vpop.f32.mrb[0].mxu0
        %v1342 = vadd.f32 %v1078, %v1341
        %v1343 = vpop.f32.mrb[0].mxu0
        %v1344 = vpop.f32.mrb[0].mxu0
        %v1345 = vadd.f32 %v1078, %v1344
        %v1346 = vpop.f32.mrb[0].mxu0
        %1347 = vdwg.mxu0
        %v1348 = vmul.f32 %v1173, 0.5
        %v1349 = vmul.f32 %v1175, 0.5
        %v1350 = vmul.f32 %v1286, 0.5
        %v1351 = vmul.f32 %v1177, 0.5
        %v1352 = vmul.f32 %v1179, 0.5
        %v1353 = vmul.f32 %v1289, 0.5
        %v1354 = vmul.f32 %v1183, 0.5
        %v1355 = vmul.f32 %v1185, 0.5
        %v1356 = vmul.f32 %v1294, 0.5
        %v1357 = vmul.f32 %v1187, 0.5
        %v1358 = vmul.f32 %v1189, 0.5
        %v1359 = vmul.f32 %v1297, 0.5
        %v1360 = vmul.f32 %v1193, 0.5
        %v1361 = vmul.f32 %v1195, 0.5
        %v1362 = vmul.f32 %v1302, 0.5
        %v1363 = vmul.f32 %v1197, 0.5
        %v1364 = vmul.f32 %v1199, 0.5
        %v1365 = vmul.f32 %v1305, 0.5
        %v1366 = vmul.f32 %v1203, 0.5
        %v1367 = vmul.f32 %v1205, 0.5
        %v1368 = vmul.f32 %v1310, 0.5
        %v1369 = vmul.f32 %v1207, 0.5
        %v1370 = vmul.f32 %v1209, 0.5
        %v1371 = vmul.f32 %v1313, 0.5
        %v1372 = vmul.f32 %v1213, 0.5
        %v1373 = vmul.f32 %v1215, 0.5
        %v1374 = vmul.f32 %v1318, 0.5
        %v1375 = vmul.f32 %v1217, 0.5
        %v1376 = vmul.f32 %v1219, 0.5
        %v1377 = vmul.f32 %v1321, 0.5
        %v1378 = vmul.f32 %v1223, 0.5
        %v1379 = vmul.f32 %v1225, 0.5
        %v1380 = vmul.f32 %v1326, 0.5
        %v1381 = vmul.f32 %v1227, 0.5
        %v1382 = vmul.f32 %v1229, 0.5
        %v1383 = vmul.f32 %v1329, 0.5
        %v1384 = vmul.f32 %v1233, 0.5
        %v1385 = vmul.f32 %v1235, 0.5
        %v1386 = vmul.f32 %v1334, 0.5
        %v1387 = vmul.f32 %v1237, 0.5
        %v1388 = vmul.f32 %v1239, 0.5
        %v1389 = vmul.f32 %v1337, 0.5
        %v1390 = vmul.f32 %v1243, 0.5
        %v1391 = vmul.f32 %v1245, 0.5
        %v1392 = vmul.f32 %v1342, 0.5
        %v1393 = vmul.f32 %v1247, 0.5
        %v1394 = vmul.f32 %v1249, 0.5
        %v1395 = vmul.f32 %v1345, 0.5
        %v1396 = vmul.f32 %v1173, 0.044715
        %v1397 = vmul.f32 %v1175, 0.044715
        %v1398 = vmul.f32 %v1286, 0.044715
        %v1399 = vmul.f32 %v1177, 0.044715
        %v1400 = vmul.f32 %v1179, 0.044715
        %v1401 = vmul.f32 %v1289, 0.044715
        %v1402 = vmul.f32 %v1183, 0.044715
        %v1403 = vmul.f32 %v1185, 0.044715
        %v1404 = vmul.f32 %v1294, 0.044715
        %v1405 = vmul.f32 %v1187, 0.044715
        %v1406 = vmul.f32 %v1189, 0.044715
        %v1407 = vmul.f32 %v1297, 0.044715
        %v1408 = vmul.f32 %v1193, 0.044715
        %v1409 = vmul.f32 %v1195, 0.044715
        %v1410 = vmul.f32 %v1302, 0.044715
        %v1411 = vmul.f32 %v1197, 0.044715
        %v1412 = vmul.f32 %v1199, 0.044715
        %v1413 = vmul.f32 %v1305, 0.044715
        %v1414 = vmul.f32 %v1203, 0.044715
        %v1415 = vmul.f32 %v1205, 0.044715
        %v1416 = vmul.f32 %v1310, 0.044715
        %v1417 = vmul.f32 %v1207, 0.044715
        %v1418 = vmul.f32 %v1209, 0.044715
        %v1419 = vmul.f32 %v1313, 0.044715
        %v1420 = vmul.f32 %v1213, 0.044715
        %v1421 = vmul.f32 %v1215, 0.044715
        %v1422 = vmul.f32 %v1318, 0.044715
        %v1423 = vmul.f32 %v1217, 0.044715
        %v1424 = vmul.f32 %v1219, 0.044715
        %v1425 = vmul.f32 %v1321, 0.044715
        %v1426 = vmul.f32 %v1223, 0.044715
        %v1427 = vmul.f32 %v1225, 0.044715
        %v1428 = vmul.f32 %v1326, 0.044715
        %v1429 = vmul.f32 %v1227, 0.044715
        %v1430 = vmul.f32 %v1229, 0.044715
        %v1431 = vmul.f32 %v1329, 0.044715
        %v1432 = vmul.f32 %v1233, 0.044715
        %v1433 = vmul.f32 %v1235, 0.044715
        %v1434 = vmul.f32 %v1334, 0.044715
        %v1435 = vmul.f32 %v1237, 0.044715
        %v1436 = vmul.f32 %v1239, 0.044715
        %v1437 = vmul.f32 %v1337, 0.044715
        %v1438 = vmul.f32 %v1243, 0.044715
        %v1439 = vmul.f32 %v1245, 0.044715
        %v1440 = vmul.f32 %v1342, 0.044715
        %v1441 = vmul.f32 %v1247, 0.044715
        %v1442 = vmul.f32 %v1249, 0.044715
        %v1443 = vmul.f32 %v1345, 0.044715
        %v1444 = vmul.f32 %v1396, %v1173
        %v1445 = vmul.f32 %v1397, %v1175
        %v1446 = vmul.f32 %v1398, %v1286
        %v1447 = vmul.f32 %v1399, %v1177
        %v1448 = vmul.f32 %v1400, %v1179
        %v1449 = vmul.f32 %v1401, %v1289
        %v1450 = vmul.f32 %v1402, %v1183
        %v1451 = vmul.f32 %v1403, %v1185
        %v1452 = vmul.f32 %v1404, %v1294
        %v1453 = vmul.f32 %v1405, %v1187
        %v1454 = vmul.f32 %v1406, %v1189
        %v1455 = vmul.f32 %v1407, %v1297
        %v1456 = vmul.f32 %v1408, %v1193
        %v1457 = vmul.f32 %v1409, %v1195
        %v1458 = vmul.f32 %v1410, %v1302
        %v1459 = vmul.f32 %v1411, %v1197
        %v1460 = vmul.f32 %v1412, %v1199
        %v1461 = vmul.f32 %v1413, %v1305
        %v1462 = vmul.f32 %v1414, %v1203
        %v1463 = vmul.f32 %v1415, %v1205
        %v1464 = vmul.f32 %v1416, %v1310
        %v1465 = vmul.f32 %v1417, %v1207
        %v1466 = vmul.f32 %v1418, %v1209
        %v1467 = vmul.f32 %v1419, %v1313
        %v1468 = vmul.f32 %v1420, %v1213
        %v1469 = vmul.f32 %v1421, %v1215
        %v1470 = vmul.f32 %v1422, %v1318
        %v1471 = vmul.f32 %v1423, %v1217
        %v1472 = vmul.f32 %v1424, %v1219
        %v1473 = vmul.f32 %v1425, %v1321
        %v1474 = vmul.f32 %v1426, %v1223
        %v1475 = vmul.f32 %v1427, %v1225
        %v1476 = vmul.f32 %v1428, %v1326
        %v1477 = vmul.f32 %v1429, %v1227
        %v1478 = vmul.f32 %v1430, %v1229
        %v1479 = vmul.f32 %v1431, %v1329
        %v1480 = vmul.f32 %v1432, %v1233
        %v1481 = vmul.f32 %v1433, %v1235
        %v1482 = vmul.f32 %v1434, %v1334
        %v1483 = vmul.f32 %v1435, %v1237
        %v1484 = vmul.f32 %v1436, %v1239
        %v1485 = vmul.f32 %v1437, %v1337
        %v1486 = vmul.f32 %v1438, %v1243
        %v1487 = vmul.f32 %v1439, %v1245
        %v1488 = vmul.f32 %v1440, %v1342
        %v1489 = vmul.f32 %v1441, %v1247
        %v1490 = vmul.f32 %v1442, %v1249
        %v1491 = vmul.f32 %v1443, %v1345
        %v1492 = vmul.f32 %v1444, %v1173
        %v1493 = vmul.f32 %v1445, %v1175
        %v1494 = vmul.f32 %v1446, %v1286
        %v1495 = vmul.f32 %v1447, %v1177
        %v1496 = vmul.f32 %v1448, %v1179
        %v1497 = vmul.f32 %v1449, %v1289
        %v1498 = vmul.f32 %v1450, %v1183
        %v1499 = vmul.f32 %v1451, %v1185
        %v1500 = vmul.f32 %v1452, %v1294
        %v1501 = vmul.f32 %v1453, %v1187
        %v1502 = vmul.f32 %v1454, %v1189
        %v1503 = vmul.f32 %v1455, %v1297
        %v1504 = vmul.f32 %v1456, %v1193
        %v1505 = vmul.f32 %v1457, %v1195
        %v1506 = vmul.f32 %v1458, %v1302
        %v1507 = vmul.f32 %v1459, %v1197
        %v1508 = vmul.f32 %v1460, %v1199
        %v1509 = vmul.f32 %v1461, %v1305
        %v1510 = vmul.f32 %v1462, %v1203
        %v1511 = vmul.f32 %v1463, %v1205
        %v1512 = vmul.f32 %v1464, %v1310
        %v1513 = vmul.f32 %v1465, %v1207
        %v1514 = vmul.f32 %v1466, %v1209
        %v1515 = vmul.f32 %v1467, %v1313
        %v1516 = vmul.f32 %v1468, %v1213
        %v1517 = vmul.f32 %v1469, %v1215
        %v1518 = vmul.f32 %v1470, %v1318
        %v1519 = vmul.f32 %v1471, %v1217
        %v1520 = vmul.f32 %v1472, %v1219
        %v1521 = vmul.f32 %v1473, %v1321
        %v1522 = vmul.f32 %v1474, %v1223
        %v1523 = vmul.f32 %v1475, %v1225
        %v1524 = vmul.f32 %v1476, %v1326
        %v1525 = vmul.f32 %v1477, %v1227
        %v1526 = vmul.f32 %v1478, %v1229
        %v1527 = vmul.f32 %v1479, %v1329
        %v1528 = vmul.f32 %v1480, %v1233
        %v1529 = vmul.f32 %v1481, %v1235
        %v1530 = vmul.f32 %v1482, %v1334
        %v1531 = vmul.f32 %v1483, %v1237
        %v1532 = vmul.f32 %v1484, %v1239
        %v1533 = vmul.f32 %v1485, %v1337
        %v1534 = vmul.f32 %v1486, %v1243
        %v1535 = vmul.f32 %v1487, %v1245
        %v1536 = vmul.f32 %v1488, %v1342
        %v1537 = vmul.f32 %v1489, %v1247
        %v1538 = vmul.f32 %v1490, %v1249
        %v1539 = vmul.f32 %v1491, %v1345
        %v1540 = vadd.f32 %v1173, %v1492
        %v1541 = vadd.f32 %v1175, %v1493
        %v1542 = vadd.f32 %v1286, %v1494
        %v1543 = vadd.f32 %v1177, %v1495
        %v1544 = vadd.f32 %v1179, %v1496
        %v1545 = vadd.f32 %v1289, %v1497
        %v1546 = vadd.f32 %v1183, %v1498
        %v1547 = vadd.f32 %v1185, %v1499
        %v1548 = vadd.f32 %v1294, %v1500
        %v1549 = vadd.f32 %v1187, %v1501
        %v1550 = vadd.f32 %v1189, %v1502
        %v1551 = vadd.f32 %v1297, %v1503
        %v1552 = vadd.f32 %v1193, %v1504
        %v1553 = vadd.f32 %v1195, %v1505
        %v1554 = vadd.f32 %v1302, %v1506
        %v1555 = vadd.f32 %v1197, %v1507
        %v1556 = vadd.f32 %v1199, %v1508
        %v1557 = vadd.f32 %v1305, %v1509
        %v1558 = vadd.f32 %v1203, %v1510
        %v1559 = vadd.f32 %v1205, %v1511
        %v1560 = vadd.f32 %v1310, %v1512
        %v1561 = vadd.f32 %v1207, %v1513
        %v1562 = vadd.f32 %v1209, %v1514
        %v1563 = vadd.f32 %v1313, %v1515
        %v1564 = vadd.f32 %v1213, %v1516
        %v1565 = vadd.f32 %v1215, %v1517
        %v1566 = vadd.f32 %v1318, %v1518
        %v1567 = vadd.f32 %v1217, %v1519
        %v1568 = vadd.f32 %v1219, %v1520
        %v1569 = vadd.f32 %v1321, %v1521
        %v1570 = vadd.f32 %v1223, %v1522
        %v1571 = vadd.f32 %v1225, %v1523
        %v1572 = vadd.f32 %v1326, %v1524
        %v1573 = vadd.f32 %v1227, %v1525
        %v1574 = vadd.f32 %v1229, %v1526
        %v1575 = vadd.f32 %v1329, %v1527
        %v1576 = vadd.f32 %v1233, %v1528
        %v1577 = vadd.f32 %v1235, %v1529
        %v1578 = vadd.f32 %v1334, %v1530
        %v1579 = vadd.f32 %v1237, %v1531
        %v1580 = vadd.f32 %v1239, %v1532
        %v1581 = vadd.f32 %v1337, %v1533
        %v1582 = vadd.f32 %v1243, %v1534
        %v1583 = vadd.f32 %v1245, %v1535
        %v1584 = vadd.f32 %v1342, %v1536
        %v1585 = vadd.f32 %v1247, %v1537
        %v1586 = vadd.f32 %v1249, %v1538
        %v1587 = vadd.f32 %v1345, %v1539
        %v1588 = vmul.f32 %v1540, 0.7978846
        %v1589 = vmul.f32 %v1541, 0.7978846
        %v1590 = vmul.f32 %v1542, 0.7978846
        %v1591 = vmul.f32 %v1543, 0.7978846
        %v1592 = vmul.f32 %v1544, 0.7978846
        %v1593 = vmul.f32 %v1545, 0.7978846
        %v1594 = vmul.f32 %v1546, 0.7978846
        %v1595 = vmul.f32 %v1547, 0.7978846
        %v1596 = vmul.f32 %v1548, 0.7978846
        %v1597 = vmul.f32 %v1549, 0.7978846
        %v1598 = vmul.f32 %v1550, 0.7978846
        %v1599 = vmul.f32 %v1551, 0.7978846
        %v1600 = vmul.f32 %v1552, 0.7978846
        %v1601 = vmul.f32 %v1553, 0.7978846
        %v1602 = vmul.f32 %v1554, 0.7978846
        %v1603 = vmul.f32 %v1555, 0.7978846
        %v1604 = vmul.f32 %v1556, 0.7978846
        %v1605 = vmul.f32 %v1557, 0.7978846
        %v1606 = vmul.f32 %v1558, 0.7978846
        %v1607 = vmul.f32 %v1559, 0.7978846
        %v1608 = vmul.f32 %v1560, 0.7978846
        %v1609 = vmul.f32 %v1561, 0.7978846
        %v1610 = vmul.f32 %v1562, 0.7978846
        %v1611 = vmul.f32 %v1563, 0.7978846
        %v1612 = vmul.f32 %v1564, 0.7978846
        %v1613 = vmul.f32 %v1565, 0.7978846
        %v1614 = vmul.f32 %v1566, 0.7978846
        %v1615 = vmul.f32 %v1567, 0.7978846
        %v1616 = vmul.f32 %v1568, 0.7978846
        %v1617 = vmul.f32 %v1569, 0.7978846
        %v1618 = vmul.f32 %v1570, 0.7978846
        %v1619 = vmul.f32 %v1571, 0.7978846
        %v1620 = vmul.f32 %v1572, 0.7978846
        %v1621 = vmul.f32 %v1573, 0.7978846
        %v1622 = vmul.f32 %v1574, 0.7978846
        %v1623 = vmul.f32 %v1575, 0.7978846
        %v1624 = vmul.f32 %v1576, 0.7978846
        %v1625 = vmul.f32 %v1577, 0.7978846
        %v1626 = vmul.f32 %v1578, 0.7978846
        %v1627 = vmul.f32 %v1579, 0.7978846
        %v1628 = vmul.f32 %v1580, 0.7978846
        %v1629 = vmul.f32 %v1581, 0.7978846
        %v1630 = vmul.f32 %v1582, 0.7978846
        %v1631 = vmul.f32 %v1583, 0.7978846
        %v1632 = vmul.f32 %v1584, 0.7978846
        %v1633 = vmul.f32 %v1585, 0.7978846
        %v1634 = vmul.f32 %v1586, 0.7978846
        %v1635 = vmul.f32 %v1587, 0.7978846
        %v1636 = vtanh.pop %v1588
        %v1637 = vtanh.pop %v1589
        %v1638 = vtanh.pop %v1590
        %v1639 = vtanh.pop %v1591
        %v1640 = vtanh.pop %v1592
        %v1641 = vtanh.pop %v1593
        %v1642 = vtanh.pop %v1594
        %v1643 = vtanh.pop %v1595
        %v1644 = vtanh.pop %v1596
        %v1645 = vtanh.pop %v1597
        %v1646 = vtanh.pop %v1598
        %v1647 = vtanh.pop %v1599
        %v1648 = vtanh.pop %v1600
        %v1649 = vtanh.pop %v1601
        %v1650 = vtanh.pop %v1602
        %v1651 = vtanh.pop %v1603
        %v1652 = vtanh.pop %v1604
        %v1653 = vtanh.pop %v1605
        %v1654 = vtanh.pop %v1606
        %v1655 = vtanh.pop %v1607
        %v1656 = vtanh.pop %v1608
        %v1657 = vtanh.pop %v1609
        %v1658 = vtanh.pop %v1610
        %v1659 = vtanh.pop %v1611
        %v1660 = vtanh.pop %v1612
        %v1661 = vtanh.pop %v1613
        %v1662 = vtanh.pop %v1614
        %v1663 = vtanh.pop %v1615
        %v1664 = vtanh.pop %v1616
        %v1665 = vtanh.pop %v1617
        %v1666 = vtanh.pop %v1618
        %v1667 = vtanh.pop %v1619
        %v1668 = vtanh.pop %v1620
        %v1669 = vtanh.pop %v1621
        %v1670 = vtanh.pop %v1622
        %v1671 = vtanh.pop %v1623
        %v1672 = vtanh.pop %v1624
        %v1673 = vtanh.pop %v1625
        %v1674 = vtanh.pop %v1626
        %v1675 = vtanh.pop %v1627
        %v1676 = vtanh.pop %v1628
        %v1677 = vtanh.pop %v1629
        %v1678 = vtanh.pop %v1630
        %v1679 = vtanh.pop %v1631
        %v1680 = vtanh.pop %v1632
        %v1681 = vtanh.pop %v1633
        %v1682 = vtanh.pop %v1634
        %v1683 = vtanh.pop %v1635
        %v1684 = vadd.f32 %v1636, 1.0
        %v1685 = vadd.f32 %v1637, 1.0
        %v1686 = vadd.f32 %v1638, 1.0
        %v1687 = vadd.f32 %v1639, 1.0
        %v1688 = vadd.f32 %v1640, 1.0
        %v1689 = vadd.f32 %v1641, 1.0
        %v1690 = vadd.f32 %v1642, 1.0
        %v1691 = vadd.f32 %v1643, 1.0
        %v1692 = vadd.f32 %v1644, 1.0
        %v1693 = vadd.f32 %v1645, 1.0
        %v1694 = vadd.f32 %v1646, 1.0
        %v1695 = vadd.f32 %v1647, 1.0
        %v1696 = vadd.f32 %v1648, 1.0
        %v1697 = vadd.f32 %v1649, 1.0
        %v1698 = vadd.f32 %v1650, 1.0
        %v1699 = vadd.f32 %v1651, 1.0
        %v1700 = vadd.f32 %v1652, 1.0
        %v1701 = vadd.f32 %v1653, 1.0
        %v1702 = vadd.f32 %v1654, 1.0
        %v1703 = vadd.f32 %v1655, 1.0
        %v1704 = vadd.f32 %v1656, 1.0
        %v1705 = vadd.f32 %v1657, 1.0
        %v1706 = vadd.f32 %v1658, 1.0
        %v1707 = vadd.f32 %v1659, 1.0
        %v1708 = vadd.f32 %v1660, 1.0
        %v1709 = vadd.f32 %v1661, 1.0
        %v1710 = vadd.f32 %v1662, 1.0
        %v1711 = vadd.f32 %v1663, 1.0
        %v1712 = vadd.f32 %v1664, 1.0
        %v1713 = vadd.f32 %v1665, 1.0
        %v1714 = vadd.f32 %v1666, 1.0
        %v1715 = vadd.f32 %v1667, 1.0
        %v1716 = vadd.f32 %v1668, 1.0
        %v1717 = vadd.f32 %v1669, 1.0
        %v1718 = vadd.f32 %v1670, 1.0
        %v1719 = vadd.f32 %v1671, 1.0
        %v1720 = vadd.f32 %v1672, 1.0
        %v1721 = vadd.f32 %v1673, 1.0
        %v1722 = vadd.f32 %v1674, 1.0
        %v1723 = vadd.f32 %v1675, 1.0
        %v1724 = vadd.f32 %v1676, 1.0
        %v1725 = vadd.f32 %v1677, 1.0
        %v1726 = vadd.f32 %v1678, 1.0
        %v1727 = vadd.f32 %v1679, 1.0
        %v1728 = vadd.f32 %v1680, 1.0
        %v1729 = vadd.f32 %v1681, 1.0
        %v1730 = vadd.f32 %v1682, 1.0
        %v1731 = vadd.f32 %v1683, 1.0
        %v1732 = vmul.f32 %v1348, %v1684
        %v1733 = vmul.f32 %v1349, %v1685
        %v1734 = vmul.f32 %v1350, %v1686
        %v1735 = vmul.f32 %v1351, %v1687
        %v1736 = vmul.f32 %v1352, %v1688
        %v1737 = vmul.f32 %v1353, %v1689
        %v1738 = vmul.f32 %v1354, %v1690
        %v1739 = vmul.f32 %v1355, %v1691
        %v1740 = vmul.f32 %v1356, %v1692
        %v1741 = vmul.f32 %v1357, %v1693
        %v1742 = vmul.f32 %v1358, %v1694
        %v1743 = vmul.f32 %v1359, %v1695
        %v1744 = vmul.f32 %v1360, %v1696
        %v1745 = vmul.f32 %v1361, %v1697
        %v1746 = vmul.f32 %v1362, %v1698
        %v1747 = vmul.f32 %v1363, %v1699
        %v1748 = vmul.f32 %v1364, %v1700
        %v1749 = vmul.f32 %v1365, %v1701
        %v1750 = vmul.f32 %v1366, %v1702
        %v1751 = vmul.f32 %v1367, %v1703
        %v1752 = vmul.f32 %v1368, %v1704
        %v1753 = vmul.f32 %v1369, %v1705
        %v1754 = vmul.f32 %v1370, %v1706
        %v1755 = vmul.f32 %v1371, %v1707
        %v1756 = vmul.f32 %v1372, %v1708
        %v1757 = vmul.f32 %v1373, %v1709
        %v1758 = vmul.f32 %v1374, %v1710
        %v1759 = vmul.f32 %v1375, %v1711
        %v1760 = vmul.f32 %v1376, %v1712
        %v1761 = vmul.f32 %v1377, %v1713
        %v1762 = vmul.f32 %v1378, %v1714
        %v1763 = vmul.f32 %v1379, %v1715
        %v1764 = vmul.f32 %v1380, %v1716
        %v1765 = vmul.f32 %v1381, %v1717
        %v1766 = vmul.f32 %v1382, %v1718
        %v1767 = vmul.f32 %v1383, %v1719
        %v1768 = vmul.f32 %v1384, %v1720
        %v1769 = vmul.f32 %v1385, %v1721
        %v1770 = vmul.f32 %v1386, %v1722
        %v1771 = vmul.f32 %v1387, %v1723
        %v1772 = vmul.f32 %v1388, %v1724
        %v1773 = vmul.f32 %v1389, %v1725
        %v1774 = vmul.f32 %v1390, %v1726
        %v1775 = vmul.f32 %v1391, %v1727
        %v1776 = vmul.f32 %v1392, %v1728
        %v1777 = vmul.f32 %v1393, %v1729
        %v1778 = vmul.f32 %v1394, %v1730
        %v1779 = vmul.f32 %v1395, %v1731
        %v1780 = vpack.c.bf16 %v1735, %v1732
        %v1781 = vpack.c.bf16 %v1736, %v1733
        %v1782 = vpack.c.bf16 %v1737, %v1734
        %v1783 = vpack.c.bf16 %v1741, %v1738
        %v1784 = vpack.c.bf16 %v1742, %v1739
        %v1785 = vpack.c.bf16 %v1743, %v1740
        %v1786 = vpack.c.bf16 %v1747, %v1744
        %v1787 = vpack.c.bf16 %v1748, %v1745
        %v1788 = vpack.c.bf16 %v1749, %v1746
        %v1789 = vpack.c.bf16 %v1753, %v1750
        %v1790 = vpack.c.bf16 %v1754, %v1751
        %v1791 = vpack.c.bf16 %v1755, %v1752
        %v1792 = vpack.c.bf16 %v1759, %v1756
        %v1793 = vpack.c.bf16 %v1760, %v1757
        %v1794 = vpack.c.bf16 %v1761, %v1758
        %v1795 = vpack.c.bf16 %v1765, %v1762
        %v1796 = vpack.c.bf16 %v1766, %v1763
        %v1797 = vpack.c.bf16 %v1767, %v1764
        %v1798 = vpack.c.bf16 %v1771, %v1768
        %v1799 = vpack.c.bf16 %v1772, %v1769
        %v1800 = vpack.c.bf16 %v1773, %v1770
        %v1801 = vpack.c.bf16 %v1777, %v1774
        %v1802 = vpack.c.bf16 %v1778, %v1775
        %v1803 = vpack.c.bf16 %v1779, %v1776
        %v1804 = vld [vmem:[%s5] sm:$0xff]
        %v1805 = vld [vmem:[%s5 + $0x8] sm:$0xff]
        %v1806 = vld [vmem:[%s5 + $0x10] sm:$0xff]
        %v1807 = vld [vmem:[%s5 + $0x18] sm:$0xff]
        %v1808 = vld [vmem:[%s5 + $0x20] sm:$0xff]
        %v1809 = vld [vmem:[%s5 + $0x28] sm:$0xff]
        %v1810 = vld [vmem:[%s5 + $0x30] sm:$0xff]
        %v1811 = vld [vmem:[%s5 + $0x38] sm:$0xff]
        %v1812 = vld [vmem:[%s5 + $0x40] sm:$0xff]
        %v1813 = vld [vmem:[%s5 + $0x48] sm:$0xff]
        %v1814 = vld [vmem:[%s5 + $0x50] sm:$0xff]
        %v1815 = vld [vmem:[%s5 + $0x58] sm:$0xff]
        %v1816 = vld [vmem:[%s5 + $0x60] sm:$0xff]
        %v1817 = vld [vmem:[%s5 + $0x68] sm:$0xff]
        %v1818 = vld [vmem:[%s5 + $0x70] sm:$0xff]
        %v1819 = vld [vmem:[%s5 + $0x78] sm:$0xff]
        %v1820 = vld [vmem:[%s5 + $0x80] sm:$0xff]
        %v1821 = vld [vmem:[%s5 + $0x88] sm:$0xff]
        %v1822 = vld [vmem:[%s5 + $0x90] sm:$0xff]
        %v1823 = vld [vmem:[%s5 + $0x98] sm:$0xff]
        %v1824 = vld [vmem:[%s5 + $0xa0] sm:$0xff]
        %v1825 = vld [vmem:[%s5 + $0xa8] sm:$0xff]
        %v1826 = vld [vmem:[%s5 + $0xb0] sm:$0xff]
        %v1827 = vld [vmem:[%s5 + $0xb8] sm:$0xff]
        %v1828 = vld [vmem:[%s5 + $0xc0] sm:$0xff]
        %v1829 = vld [vmem:[%s5 + $0xc8] sm:$0xff]
        %v1830 = vld [vmem:[%s5 + $0xd0] sm:$0xff]
        %v1831 = vld [vmem:[%s5 + $0xd8] sm:$0xff]
        %v1832 = vld [vmem:[%s5 + $0xe0] sm:$0xff]
        %v1833 = vld [vmem:[%s5 + $0xe8] sm:$0xff]
        %v1834 = vld [vmem:[%s5 + $0xf0] sm:$0xff]
        %v1835 = vld [vmem:[%s5 + $0xf8] sm:$0xff]
        %v1836 = vld [vmem:[%s5 + $0x100] sm:$0xff]
        %v1837 = vld [vmem:[%s5 + $0x108] sm:$0xff]
        %v1838 = vld [vmem:[%s5 + $0x110] sm:$0xff]
        %v1839 = vld [vmem:[%s5 + $0x118] sm:$0xff]
        %v1840 = vld [vmem:[%s5 + $0x120] sm:$0xff]
        %v1841 = vld [vmem:[%s5 + $0x128] sm:$0xff]
        %v1842 = vld [vmem:[%s5 + $0x130] sm:$0xff]
        %v1843 = vld [vmem:[%s5 + $0x138] sm:$0xff]
        %v1844 = vld [vmem:[%s5 + $0x140] sm:$0xff]
        %v1845 = vld [vmem:[%s5 + $0x148] sm:$0xff]
        %v1846 = vld [vmem:[%s5 + $0x150] sm:$0xff]
        %v1847 = vld [vmem:[%s5 + $0x158] sm:$0xff]
        %v1848 = vld [vmem:[%s5 + $0x160] sm:$0xff]
        %v1849 = vld [vmem:[%s5 + $0x168] sm:$0xff]
        %v1850 = vld [vmem:[%s5 + $0x170] sm:$0xff]
        %v1851 = vld [vmem:[%s5 + $0x178] sm:$0xff]
        %v1852 = vld [vmem:[%s6] sm:$0x3]
        %v1854 = vlaneseq
        %v1855 = vshrl.u32 %v1854, 7
        %v1856 = vsub.s32 0, %v1855
        %v1857 = vrot.slane %v1852, %v1856
        %v1858 = vlaneseq
        %v1859 = vshrl.u32 %v1858, 7
        %v1860 = vsub.s32 1, %v1859
        %v1861 = vrot.slane %v1852, %v1860
        %v1912 = vunpack.c.l.b16 %v1804
        %v1913 = vunpack.c.h.b16 %v1804
        %v1914 = vunpack.c.l.b16 %v1805
        %v1915 = vunpack.c.h.b16 %v1805
        %v1916 = vunpack.c.l.b16 %v1806
        %v1917 = vunpack.c.h.b16 %v1806
        %v1918 = vunpack.c.l.b16 %v1807
        %v1919 = vunpack.c.h.b16 %v1807
        %v1920 = vunpack.c.l.b16 %v1808
        %v1921 = vunpack.c.h.b16 %v1808
        %v1922 = vunpack.c.l.b16 %v1809
        %v1923 = vunpack.c.h.b16 %v1809
        %v1924 = vunpack.c.l.b16 %v1810
        %v1925 = vunpack.c.h.b16 %v1810
        %v1926 = vunpack.c.l.b16 %v1811
        %v1927 = vunpack.c.h.b16 %v1811
        %v1928 = vunpack.c.l.b16 %v1812
        %v1929 = vunpack.c.h.b16 %v1812
        %v1930 = vunpack.c.l.b16 %v1813
        %v1931 = vunpack.c.h.b16 %v1813
        %v1932 = vunpack.c.l.b16 %v1814
        %v1933 = vunpack.c.h.b16 %v1814
        %v1934 = vunpack.c.l.b16 %v1815
        %v1935 = vunpack.c.h.b16 %v1815
        %v1936 = vunpack.c.l.b16 %v1816
        %v1937 = vunpack.c.h.b16 %v1816
        %v1938 = vunpack.c.l.b16 %v1817
        %v1939 = vunpack.c.h.b16 %v1817
        %v1940 = vunpack.c.l.b16 %v1818
        %v1941 = vunpack.c.h.b16 %v1818
        %v1942 = vunpack.c.l.b16 %v1819
        %v1943 = vunpack.c.h.b16 %v1819
        %v1944 = vunpack.c.l.b16 %v1820
        %v1945 = vunpack.c.h.b16 %v1820
        %v1946 = vunpack.c.l.b16 %v1821
        %v1947 = vunpack.c.h.b16 %v1821
        %v1948 = vunpack.c.l.b16 %v1822
        %v1949 = vunpack.c.h.b16 %v1822
        %v1950 = vunpack.c.l.b16 %v1823
        %v1951 = vunpack.c.h.b16 %v1823
        %v1952 = vunpack.c.l.b16 %v1824
        %v1953 = vunpack.c.h.b16 %v1824
        %v1954 = vunpack.c.l.b16 %v1825
        %v1955 = vunpack.c.h.b16 %v1825
        %v1956 = vunpack.c.l.b16 %v1826
        %v1957 = vunpack.c.h.b16 %v1826
        %v1958 = vunpack.c.l.b16 %v1827
        %v1959 = vunpack.c.h.b16 %v1827
        %v1960 = vunpack.c.l.b16 %v1828
        %v1961 = vunpack.c.h.b16 %v1828
        %v1962 = vunpack.c.l.b16 %v1829
        %v1963 = vunpack.c.h.b16 %v1829
        %v1964 = vunpack.c.l.b16 %v1830
        %v1965 = vunpack.c.h.b16 %v1830
        %v1966 = vunpack.c.l.b16 %v1831
        %v1967 = vunpack.c.h.b16 %v1831
        %v1968 = vunpack.c.l.b16 %v1832
        %v1969 = vunpack.c.h.b16 %v1832
        %v1970 = vunpack.c.l.b16 %v1833
        %v1971 = vunpack.c.h.b16 %v1833
        %v1972 = vunpack.c.l.b16 %v1834
        %v1973 = vunpack.c.h.b16 %v1834
        %v1974 = vunpack.c.l.b16 %v1835
        %v1975 = vunpack.c.h.b16 %v1835
        %v1976 = vunpack.c.l.b16 %v1836
        %v1977 = vunpack.c.h.b16 %v1836
        %v1978 = vunpack.c.l.b16 %v1837
        %v1979 = vunpack.c.h.b16 %v1837
        %v1980 = vunpack.c.l.b16 %v1838
        %v1981 = vunpack.c.h.b16 %v1838
        %v1982 = vunpack.c.l.b16 %v1839
        %v1983 = vunpack.c.h.b16 %v1839
        %v1984 = vunpack.c.l.b16 %v1840
        %v1985 = vunpack.c.h.b16 %v1840
        %v1986 = vunpack.c.l.b16 %v1841
        %v1987 = vunpack.c.h.b16 %v1841
        %v1988 = vunpack.c.l.b16 %v1842
        %v1989 = vunpack.c.h.b16 %v1842
        %v1990 = vunpack.c.l.b16 %v1843
        %v1991 = vunpack.c.h.b16 %v1843
        %v1992 = vunpack.c.l.b16 %v1844
        %v1993 = vunpack.c.h.b16 %v1844
        %v1994 = vunpack.c.l.b16 %v1845
        %v1995 = vunpack.c.h.b16 %v1845
        %v1996 = vunpack.c.l.b16 %v1846
        %v1997 = vunpack.c.h.b16 %v1846
        %v1998 = vunpack.c.l.b16 %v1847
        %v1999 = vunpack.c.h.b16 %v1847
        %v2000 = vunpack.c.l.b16 %v1848
        %v2001 = vunpack.c.h.b16 %v1848
        %v2002 = vunpack.c.l.b16 %v1849
        %v2003 = vunpack.c.h.b16 %v1849
        %v2004 = vunpack.c.l.b16 %v1850
        %v2005 = vunpack.c.h.b16 %v1850
        %v2006 = vunpack.c.l.b16 %v1851
        %v2007 = vunpack.c.h.b16 %v1851
        %v2008 = vpack.c.b16 %v1914, %v1912
        %v2009 = vpack.c.b16 %v1915, %v1913
        %v2010 = vpack.c.b16 %v1918, %v1916
        %v2011 = vpack.c.b16 %v1919, %v1917
        %v2012 = vpack.c.b16 %v1922, %v1920
        %v2013 = vpack.c.b16 %v1923, %v1921
        %v2014 = vpack.c.b16 %v1926, %v1924
        %v2015 = vpack.c.b16 %v1927, %v1925
        %v2016 = vpack.c.b16 %v1930, %v1928
        %v2017 = vpack.c.b16 %v1931, %v1929
        %v2018 = vpack.c.b16 %v1934, %v1932
        %v2019 = vpack.c.b16 %v1935, %v1933
        %v2020 = vpack.c.b16 %v1938, %v1936
        %v2021 = vpack.c.b16 %v1939, %v1937
        %v2022 = vpack.c.b16 %v1942, %v1940
        %v2023 = vpack.c.b16 %v1943, %v1941
        %v2024 = vpack.c.b16 %v1946, %v1944
        %v2025 = vpack.c.b16 %v1947, %v1945
        %v2026 = vpack.c.b16 %v1950, %v1948
        %v2027 = vpack.c.b16 %v1951, %v1949
        %v2028 = vpack.c.b16 %v1954, %v1952
        %v2029 = vpack.c.b16 %v1955, %v1953
        %v2030 = vpack.c.b16 %v1958, %v1956
        %v2031 = vpack.c.b16 %v1959, %v1957
        %v2032 = vpack.c.b16 %v1962, %v1960
        %v2033 = vpack.c.b16 %v1963, %v1961
        %v2034 = vpack.c.b16 %v1966, %v1964
        %v2035 = vpack.c.b16 %v1967, %v1965
        %v2036 = vpack.c.b16 %v1970, %v1968
        %v2037 = vpack.c.b16 %v1971, %v1969
        %v2038 = vpack.c.b16 %v1974, %v1972
        %v2039 = vpack.c.b16 %v1975, %v1973
        %v2040 = vpack.c.b16 %v1978, %v1976
        %v2041 = vpack.c.b16 %v1979, %v1977
        %v2042 = vpack.c.b16 %v1982, %v1980
        %v2043 = vpack.c.b16 %v1983, %v1981
        %v2044 = vpack.c.b16 %v1986, %v1984
        %v2045 = vpack.c.b16 %v1987, %v1985
        %v2046 = vpack.c.b16 %v1990, %v1988
        %v2047 = vpack.c.b16 %v1991, %v1989
        %v2048 = vpack.c.b16 %v1994, %v1992
        %v2049 = vpack.c.b16 %v1995, %v1993
        %v2050 = vpack.c.b16 %v1998, %v1996
        %v2051 = vpack.c.b16 %v1999, %v1997
        %v2052 = vpack.c.b16 %v2002, %v2000
        %v2053 = vpack.c.b16 %v2003, %v2001
        %v2054 = vpack.c.b16 %v2006, %v2004
        %v2055 = vpack.c.b16 %v2007, %v2005
        %2104 = vmatprep.subr.bf16.mxu0 %v2009
        %2105 = vmatpush1.bf16.msra.mxu0 %v2008
        %2106 = vmatprep.subr.bf16.mxu0 %v2011
        %2107 = vmatpush1.bf16.msra.mxu0 %v2010
        %2108 = vmatprep.subr.bf16.mxu0 %v2013
        %2109 = vmatpush1.bf16.msra.mxu0 %v2012
        %2110 = vmatprep.subr.bf16.mxu0 %v2015
        %2111 = vmatpush1.bf16.msra.mxu0 %v2014
        %2112 = vmatprep.subr.bf16.mxu0 %v2017
        %2113 = vmatpush1.bf16.msra.mxu0 %v2016
        %2114 = vmatprep.subr.bf16.mxu0 %v2019
        %2115 = vmatpush1.bf16.msra.mxu0 %v2018
        %2116 = vmatprep.subr.bf16.mxu0 %v2021
        %2117 = vmatpush1.bf16.msra.mxu0 %v2020
        %2118 = vmatprep.subr.bf16.mxu0 %v2023
        %2119 = vmatpush1.bf16.msra.mxu0 %v2022
        %2120 = vmatprep.subr.bf16.mxu0 %v2025
        %2121 = vmatpush1.bf16.msra.mxu0 %v2024
        %2122 = vmatprep.subr.bf16.mxu0 %v2027
        %2123 = vmatpush1.bf16.msra.mxu0 %v2026
        %2124 = vmatprep.subr.bf16.mxu0 %v2029
        %2125 = vmatpush1.bf16.msra.mxu0 %v2028
        %2126 = vmatprep.subr.bf16.mxu0 %v2031
        %2127 = vmatpush1.bf16.msra.mxu0 %v2030
        %2128 = vmatprep.subr.bf16.mxu0 %v2033
        %2129 = vmatpush1.bf16.msra.mxu0 %v2032
        %2130 = vmatprep.subr.bf16.mxu0 %v2035
        %2131 = vmatpush1.bf16.msra.mxu0 %v2034
        %2132 = vmatprep.subr.bf16.mxu0 %v2037
        %2133 = vmatpush1.bf16.msra.mxu0 %v2036
        %2134 = vmatprep.subr.bf16.mxu0 %v2039
        %2135 = vmatpush1.bf16.msra.mxu0 %v2038
        %2136 = vmatprep.mubr.bf16.mxu0 %v1781
        %2137 = vmatmul.mubr.bf16.gmra.mrb[0].mxu0 %v1780
        %v2138 = vpop.f32.mrb[0].mxu0
        %v2139 = vadd.f32 %v1857, %v2138
        %v2140 = vpop.f32.mrb[0].mxu0
        %v2141 = vadd.f32 %v1861, %v2140
        %v2142 = vpop.f32.mrb[0].mxu0
        %v2143 = vadd.f32 %v1857, %v2142
        %v2144 = vpop.f32.mrb[0].mxu0
        %v2145 = vadd.f32 %v1861, %v2144
        %2146 = vmatprep.mubr.bf16.mxu0 %v1784
        %2147 = vmatmul.mubr.bf16.gmra.mrb[0].mxu0 %v1783
        %v2148 = vpop.f32.mrb[0].mxu0
        %v2149 = vadd.f32 %v1857, %v2148
        %v2150 = vpop.f32.mrb[0].mxu0
        %v2151 = vadd.f32 %v1861, %v2150
        %v2152 = vpop.f32.mrb[0].mxu0
        %v2153 = vadd.f32 %v1857, %v2152
        %v2154 = vpop.f32.mrb[0].mxu0
        %v2155 = vadd.f32 %v1861, %v2154
        %2156 = vmatprep.mubr.bf16.mxu0 %v1787
        %2157 = vmatmul.mubr.bf16.gmra.mrb[0].mxu0 %v1786
        %v2158 = vpop.f32.mrb[0].mxu0
        %v2159 = vadd.f32 %v1857, %v2158
        %v2160 = vpop.f32.mrb[0].mxu0
        %v2161 = vadd.f32 %v1861, %v2160
        %v2162 = vpop.f32.mrb[0].mxu0
        %v2163 = vadd.f32 %v1857, %v2162
        %v2164 = vpop.f32.mrb[0].mxu0
        %v2165 = vadd.f32 %v1861, %v2164
        %2166 = vmatprep.mubr.bf16.mxu0 %v1790
        %2167 = vmatmul.mubr.bf16.gmra.mrb[0].mxu0 %v1789
        %v2168 = vpop.f32.mrb[0].mxu0
        %v2169 = vadd.f32 %v1857, %v2168
        %v2170 = vpop.f32.mrb[0].mxu0
        %v2171 = vadd.f32 %v1861, %v2170
        %v2172 = vpop.f32.mrb[0].mxu0
        %v2173 = vadd.f32 %v1857, %v2172
        %v2174 = vpop.f32.mrb[0].mxu0
        %v2175 = vadd.f32 %v1861, %v2174
        %2176 = vmatprep.mubr.bf16.mxu0 %v1793
        %2177 = vmatmul.mubr.bf16.gmra.mrb[0].mxu0 %v1792
        %v2178 = vpop.f32.mrb[0].mxu0
        %v2179 = vadd.f32 %v1857, %v2178
        %v2180 = vpop.f32.mrb[0].mxu0
        %v2181 = vadd.f32 %v1861, %v2180
        %v2182 = vpop.f32.mrb[0].mxu0
        %v2183 = vadd.f32 %v1857, %v2182
        %v2184 = vpop.f32.mrb[0].mxu0
        %v2185 = vadd.f32 %v1861, %v2184
        %2186 = vmatprep.mubr.bf16.mxu0 %v1796
        %2187 = vmatmul.mubr.bf16.gmra.mrb[0].mxu0 %v1795
        %v2188 = vpop.f32.mrb[0].mxu0
        %v2189 = vadd.f32 %v1857, %v2188
        %v2190 = vpop.f32.mrb[0].mxu0
        %v2191 = vadd.f32 %v1861, %v2190
        %v2192 = vpop.f32.mrb[0].mxu0
        %v2193 = vadd.f32 %v1857, %v2192
        %v2194 = vpop.f32.mrb[0].mxu0
        %v2195 = vadd.f32 %v1861, %v2194
        %2196 = vmatprep.mubr.bf16.mxu0 %v1799
        %2197 = vmatmul.mubr.bf16.gmra.mrb[0].mxu0 %v1798
        %v2198 = vpop.f32.mrb[0].mxu0
        %v2199 = vadd.f32 %v1857, %v2198
        %v2200 = vpop.f32.mrb[0].mxu0
        %v2201 = vadd.f32 %v1861, %v2200
        %v2202 = vpop.f32.mrb[0].mxu0
        %v2203 = vadd.f32 %v1857, %v2202
        %v2204 = vpop.f32.mrb[0].mxu0
        %v2205 = vadd.f32 %v1861, %v2204
        %2206 = vmatprep.mubr.bf16.mxu0 %v1802
        %2207 = vmatmul.mubr.bf16.gmra.mrb[0].mxu0 %v1801
        %v2208 = vpop.f32.mrb[0].mxu0
        %v2209 = vadd.f32 %v1857, %v2208
        %v2210 = vpop.f32.mrb[0].mxu0
        %v2211 = vadd.f32 %v1861, %v2210
        %v2212 = vpop.f32.mrb[0].mxu0
        %v2213 = vadd.f32 %v1857, %v2212
        %v2214 = vpop.f32.mrb[0].mxu0
        %v2215 = vadd.f32 %v1861, %v2214
        %2216 = vdwg.mxu0
        %2217 = vmatprep.subr.bf16.mxu0 %v2041
        %2218 = vmatpush1.bf16.msra.mxu0 %v2040
        %2219 = vmatprep.subr.bf16.mxu0 %v2043
        %2220 = vmatpush1.bf16.msra.mxu0 %v2042
        %2221 = vmatprep.subr.bf16.mxu0 %v2045
        %2222 = vmatpush1.bf16.msra.mxu0 %v2044
        %2223 = vmatprep.subr.bf16.mxu0 %v2047
        %2224 = vmatpush1.bf16.msra.mxu0 %v2046
        %2225 = vmatprep.subr.bf16.mxu0 %v2049
        %2226 = vmatpush1.bf16.msra.mxu0 %v2048
        %2227 = vmatprep.subr.bf16.mxu0 %v2051
        %2228 = vmatpush1.bf16.msra.mxu0 %v2050
        %2229 = vmatprep.subr.bf16.mxu0 %v2053
        %2230 = vmatpush1.bf16.msra.mxu0 %v2052
        %2231 = vmatprep.subr.bf16.mxu0 %v2055
        %2232 = vmatpush1.bf16.msra.mxu0 %v2054
        %2233 = vmatprep.subr.bf16.mxu0 0
        %2234 = vmatpush1.bf16.msra.mxu0 0
        %2235 = vmatprep.subr.bf16.mxu0 0
        %2236 = vmatpush1.bf16.msra.mxu0 0
        %2237 = vmatprep.subr.bf16.mxu0 0
        %2238 = vmatpush1.bf16.msra.mxu0 0
        %2239 = vmatprep.subr.bf16.mxu0 0
        %2240 = vmatpush1.bf16.msra.mxu0 0
        %2241 = vmatprep.subr.bf16.mxu0 0
        %2242 = vmatpush1.bf16.msra.mxu0 0
        %2243 = vmatprep.subr.bf16.mxu0 0
        %2244 = vmatpush1.bf16.msra.mxu0 0
        %2245 = vmatprep.subr.bf16.mxu0 0
        %2246 = vmatpush1.bf16.msra.mxu0 0
        %2247 = vmatprep.subr.bf16.mxu0 0
        %2248 = vmatpush1.bf16.msra.mxu0 0
        %2249 = vmatprep.mubr.bf16.mxu0 0
        %2250 = vmatmul.mubr.bf16.gmra.mrb[0].mxu0 %v1782
        %v2251 = vpop.f32.mrb[0].mxu0
        %v2252 = vadd.f32 %v2139, %v2251
        %v2253 = vpop.f32.mrb[0].mxu0
        %v2254 = vadd.f32 %v2141, %v2253
        %v2255 = vpop.f32.mrb[0].mxu0
        %v2256 = vadd.f32 %v2143, %v2255
        %v2257 = vpop.f32.mrb[0].mxu0
        %v2258 = vadd.f32 %v2145, %v2257
        %2259 = vmatprep.mubr.bf16.mxu0 0
        %2260 = vmatmul.mubr.bf16.gmra.mrb[0].mxu0 %v1785
        %v2261 = vpop.f32.mrb[0].mxu0
        %v2262 = vadd.f32 %v2149, %v2261
        %v2263 = vpop.f32.mrb[0].mxu0
        %v2264 = vadd.f32 %v2151, %v2263
        %v2265 = vpop.f32.mrb[0].mxu0
        %v2266 = vadd.f32 %v2153, %v2265
        %v2267 = vpop.f32.mrb[0].mxu0
        %v2268 = vadd.f32 %v2155, %v2267
        %2269 = vmatprep.mubr.bf16.mxu0 0
        %2270 = vmatmul.mubr.bf16.gmra.mrb[0].mxu0 %v1788
        %v2271 = vpop.f32.mrb[0].mxu0
        %v2272 = vadd.f32 %v2159, %v2271
        %v2273 = vpop.f32.mrb[0].mxu0
        %v2274 = vadd.f32 %v2161, %v2273
        %v2275 = vpop.f32.mrb[0].mxu0
        %v2276 = vadd.f32 %v2163, %v2275
        %v2277 = vpop.f32.mrb[0].mxu0
        %v2278 = vadd.f32 %v2165, %v2277
        %2279 = vmatprep.mubr.bf16.mxu0 0
        %2280 = vmatmul.mubr.bf16.gmra.mrb[0].mxu0 %v1791
        %v2281 = vpop.f32.mrb[0].mxu0
        %v2282 = vadd.f32 %v2169, %v2281
        %v2283 = vpop.f32.mrb[0].mxu0
        %v2284 = vadd.f32 %v2171, %v2283
        %v2285 = vpop.f32.mrb[0].mxu0
        %v2286 = vadd.f32 %v2173, %v2285
        %v2287 = vpop.f32.mrb[0].mxu0
        %v2288 = vadd.f32 %v2175, %v2287
        %2289 = vmatprep.mubr.bf16.mxu0 0
        %2290 = vmatmul.mubr.bf16.gmra.mrb[0].mxu0 %v1794
        %v2291 = vpop.f32.mrb[0].mxu0
        %v2292 = vadd.f32 %v2179, %v2291
        %v2293 = vpop.f32.mrb[0].mxu0
        %v2294 = vadd.f32 %v2181, %v2293
        %v2295 = vpop.f32.mrb[0].mxu0
        %v2296 = vadd.f32 %v2183, %v2295
        %v2297 = vpop.f32.mrb[0].mxu0
        %v2298 = vadd.f32 %v2185, %v2297
        %2299 = vmatprep.mubr.bf16.mxu0 0
        %2300 = vmatmul.mubr.bf16.gmra.mrb[0].mxu0 %v1797
        %v2301 = vpop.f32.mrb[0].mxu0
        %v2302 = vadd.f32 %v2189, %v2301
        %v2303 = vpop.f32.mrb[0].mxu0
        %v2304 = vadd.f32 %v2191, %v2303
        %v2305 = vpop.f32.mrb[0].mxu0
        %v2306 = vadd.f32 %v2193, %v2305
        %v2307 = vpop.f32.mrb[0].mxu0
        %v2308 = vadd.f32 %v2195, %v2307
        %2309 = vmatprep.mubr.bf16.mxu0 0
        %2310 = vmatmul.mubr.bf16.gmra.mrb[0].mxu0 %v1800
        %v2311 = vpop.f32.mrb[0].mxu0
        %v2312 = vadd.f32 %v2199, %v2311
        %v2313 = vpop.f32.mrb[0].mxu0
        %v2314 = vadd.f32 %v2201, %v2313
        %v2315 = vpop.f32.mrb[0].mxu0
        %v2316 = vadd.f32 %v2203, %v2315
        %v2317 = vpop.f32.mrb[0].mxu0
        %v2318 = vadd.f32 %v2205, %v2317
        %2319 = vmatprep.mubr.bf16.mxu0 0
        %2320 = vmatmul.mubr.bf16.gmra.mrb[0].mxu0 %v1803
        %v2321 = vpop.f32.mrb[0].mxu0
        %v2322 = vadd.f32 %v2209, %v2321
        %v2323 = vpop.f32.mrb[0].mxu0
        %v2324 = vadd.f32 %v2211, %v2323
        %v2325 = vpop.f32.mrb[0].mxu0
        %v2326 = vadd.f32 %v2213, %v2325
        %v2327 = vpop.f32.mrb[0].mxu0
        %v2328 = vadd.f32 %v2215, %v2327
        %2329 = vdwg.mxu0
        %v2330 = vmul.f32 %v2252, 1.442695
        %v2331 = vpow.pop %v2330
        %v2332 = vmul.f32 %v2254, 1.442695
        %v2333 = vpow.pop %v2332
        %v2334 = vmul.f32 %v2256, 1.442695
        %v2335 = vpow.pop %v2334
        %v2336 = vmul.f32 %v2258, 1.442695
        %v2337 = vpow.pop %v2336
        %v2338 = vmul.f32 %v2262, 1.442695
        %v2339 = vpow.pop %v2338
        %v2340 = vmul.f32 %v2264, 1.442695
        %v2341 = vpow.pop %v2340
        %v2342 = vmul.f32 %v2266, 1.442695
        %v2343 = vpow.pop %v2342
        %v2344 = vmul.f32 %v2268, 1.442695
        %v2345 = vpow.pop %v2344
        %v2346 = vmul.f32 %v2272, 1.442695
        %v2347 = vpow.pop %v2346
        %v2348 = vmul.f32 %v2274, 1.442695
        %v2349 = vpow.pop %v2348
        %v2350 = vmul.f32 %v2276, 1.442695
        %v2351 = vpow.pop %v2350
        %v2352 = vmul.f32 %v2278, 1.442695
        %v2353 = vpow.pop %v2352
        %v2354 = vmul.f32 %v2282, 1.442695
        %v2355 = vpow.pop %v2354
        %v2356 = vmul.f32 %v2284, 1.442695
        %v2357 = vpow.pop %v2356
        %v2358 = vmul.f32 %v2286, 1.442695
        %v2359 = vpow.pop %v2358
        %v2360 = vmul.f32 %v2288, 1.442695
        %v2361 = vpow.pop %v2360
        %v2362 = vmul.f32 %v2292, 1.442695
        %v2363 = vpow.pop %v2362
        %v2364 = vmul.f32 %v2294, 1.442695
        %v2365 = vpow.pop %v2364
        %v2366 = vmul.f32 %v2296, 1.442695
        %v2367 = vpow.pop %v2366
        %v2368 = vmul.f32 %v2298, 1.442695
        %v2369 = vpow.pop %v2368
        %v2370 = vmul.f32 %v2302, 1.442695
        %v2371 = vpow.pop %v2370
        %v2372 = vmul.f32 %v2304, 1.442695
        %v2373 = vpow.pop %v2372
        %v2374 = vmul.f32 %v2306, 1.442695
        %v2375 = vpow.pop %v2374
        %v2376 = vmul.f32 %v2308, 1.442695
        %v2377 = vpow.pop %v2376
        %v2378 = vmul.f32 %v2312, 1.442695
        %v2379 = vpow.pop %v2378
        %v2380 = vmul.f32 %v2314, 1.442695
        %v2381 = vpow.pop %v2380
        %v2382 = vmul.f32 %v2316, 1.442695
        %v2383 = vpow.pop %v2382
        %v2384 = vmul.f32 %v2318, 1.442695
        %v2385 = vpow.pop %v2384
        %v2386 = vmul.f32 %v2322, 1.442695
        %v2387 = vpow.pop %v2386
        %v2388 = vmul.f32 %v2324, 1.442695
        %v2389 = vpow.pop %v2388
        %v2390 = vmul.f32 %v2326, 1.442695
        %v2391 = vpow.pop %v2390
        %v2392 = vmul.f32 %v2328, 1.442695
        %v2393 = vpow.pop %v2392
        %v2394 = vld [vmem:[%s7] sm:$0xff]
        %v2395 = vld [vmem:[%s7 + $0x8] sm:$0xff]
        %v2396 = vld [vmem:[%s7 + $0x10] sm:$0xff]
        %v2397 = vld [vmem:[%s7 + $0x18] sm:$0xff]
        %v2398 = vld [vmem:[%s7 + $0x20] sm:$0xff]
        %v2399 = vld [vmem:[%s7 + $0x28] sm:$0xff]
        %v2400 = vld [vmem:[%s7 + $0x30] sm:$0xff]
        %v2401 = vld [vmem:[%s7 + $0x38] sm:$0xff]
        %v2402 = vld [vmem:[%s7 + $0x40] sm:$0xff]
        %v2403 = vld [vmem:[%s7 + $0x48] sm:$0xff]
        %v2404 = vld [vmem:[%s7 + $0x50] sm:$0xff]
        %v2405 = vld [vmem:[%s7 + $0x58] sm:$0xff]
        %v2406 = vld [vmem:[%s7 + $0x60] sm:$0xff]
        %v2407 = vld [vmem:[%s7 + $0x68] sm:$0xff]
        %v2408 = vld [vmem:[%s7 + $0x70] sm:$0xff]
        %v2409 = vld [vmem:[%s7 + $0x78] sm:$0xff]
        %v2410 = vld [vmem:[%s7 + $0x80] sm:$0xff]
        %v2411 = vld [vmem:[%s7 + $0x88] sm:$0xff]
        %v2412 = vld [vmem:[%s7 + $0x90] sm:$0xff]
        %v2413 = vld [vmem:[%s7 + $0x98] sm:$0xff]
        %v2414 = vld [vmem:[%s7 + $0xa0] sm:$0xff]
        %v2415 = vld [vmem:[%s7 + $0xa8] sm:$0xff]
        %v2416 = vld [vmem:[%s7 + $0xb0] sm:$0xff]
        %v2417 = vld [vmem:[%s7 + $0xb8] sm:$0xff]
        %v2418 = vld [vmem:[%s7 + $0xc0] sm:$0xff]
        %v2419 = vld [vmem:[%s7 + $0xc8] sm:$0xff]
        %v2420 = vld [vmem:[%s7 + $0xd0] sm:$0xff]
        %v2421 = vld [vmem:[%s7 + $0xd8] sm:$0xff]
        %v2422 = vld [vmem:[%s7 + $0xe0] sm:$0xff]
        %v2423 = vld [vmem:[%s7 + $0xe8] sm:$0xff]
        %v2424 = vld [vmem:[%s7 + $0xf0] sm:$0xff]
        %v2425 = vld [vmem:[%s7 + $0xf8] sm:$0xff]
        %2426 = vmatprep.subr.mxu0 %v2395
        %2427 = vmatpush1.msra.mxu0 %v2394
        %2428 = vmatprep.subr.mxu0 %v2397
        %2429 = vmatpush1.msra.mxu0 %v2396
        %2430 = vmatprep.subr.mxu0 %v2399
        %2431 = vmatpush1.msra.mxu0 %v2398
        %2432 = vmatprep.subr.mxu0 %v2401
        %2433 = vmatpush1.msra.mxu0 %v2400
        %2434 = vmatprep.subr.mxu0 %v2403
        %2435 = vmatpush1.msra.mxu0 %v2402
        %2436 = vmatprep.subr.mxu0 %v2405
        %2437 = vmatpush1.msra.mxu0 %v2404
        %2438 = vmatprep.subr.mxu0 %v2407
        %2439 = vmatpush1.msra.mxu0 %v2406
        %2440 = vmatprep.subr.mxu0 %v2409
        %2441 = vmatpush1.msra.mxu0 %v2408
        %2442 = vmatprep.subr.mxu0 %v2411
        %2443 = vmatpush1.msra.mxu0 %v2410
        %2444 = vmatprep.subr.mxu0 %v2413
        %2445 = vmatpush1.msra.mxu0 %v2412
        %2446 = vmatprep.subr.mxu0 %v2415
        %2447 = vmatpush1.msra.mxu0 %v2414
        %2448 = vmatprep.subr.mxu0 %v2417
        %2449 = vmatpush1.msra.mxu0 %v2416
        %2450 = vmatprep.subr.mxu0 %v2419
        %2451 = vmatpush1.msra.mxu0 %v2418
        %2452 = vmatprep.subr.mxu0 %v2421
        %2453 = vmatpush1.msra.mxu0 %v2420
        %2454 = vmatprep.subr.mxu0 %v2423
        %2455 = vmatpush1.msra.mxu0 %v2422
        %2456 = vmatprep.subr.mxu0 %v2425
        %2457 = vmatpush1.msra.mxu0 %v2424
        %2458 = vmatprep.subr.mxu0 0.0
        %2459 = vmatpush1.msra.mxu0 0.0
        %2460 = vmatprep.subr.mxu0 0.0
        %2461 = vmatpush1.msra.mxu0 0.0
        %2462 = vmatprep.subr.mxu0 0.0
        %2463 = vmatpush1.msra.mxu0 0.0
        %2464 = vmatprep.subr.mxu0 0.0
        %2465 = vmatpush1.msra.mxu0 0.0
        %2466 = vmatprep.subr.mxu0 0.0
        %2467 = vmatpush1.msra.mxu0 0.0
        %2468 = vmatprep.subr.mxu0 0.0
        %2469 = vmatpush1.msra.mxu0 0.0
        %2470 = vmatprep.subr.mxu0 0.0
        %2471 = vmatpush1.msra.mxu0 0.0
        %2472 = vmatprep.subr.mxu0 0.0
        %2473 = vmatpush1.msra.mxu0 0.0
        %2474 = vmatprep.subr.mxu0 0.0
        %2475 = vmatpush1.msra.mxu0 0.0
        %2476 = vmatprep.subr.mxu0 0.0
        %2477 = vmatpush1.msra.mxu0 0.0
        %2478 = vmatprep.subr.mxu0 0.0
        %2479 = vmatpush1.msra.mxu0 0.0
        %2480 = vmatprep.subr.mxu0 0.0
        %2481 = vmatpush1.msra.mxu0 0.0
        %2482 = vmatprep.subr.mxu0 0.0
        %2483 = vmatpush1.msra.mxu0 0.0
        %2484 = vmatprep.subr.mxu0 0.0
        %2485 = vmatpush1.msra.mxu0 0.0
        %2486 = vmatprep.subr.mxu0 0.0
        %2487 = vmatpush1.msra.mxu0 0.0
        %2488 = vmatprep.subr.mxu0 0.0
        %2489 = vmatpush1.msra.mxu0 0.0
        %2490 = vmatprep.mubr.f32.mxu0 0.0
        %2491 = vmatmul.mubr.f32.gmra.mrb[0].mxu0 %v941
        %v2492 = vpop.f32.mrb[0].mxu0
        %v2493 = vadd.f32 0.0, %v2492
        %v2494 = vpop.f32.mrb[0].mxu0
        %v2495 = vadd.f32 0.0, %v2494
        %2496 = vmatprep.mubr.f32.mxu0 0.0
        %2497 = vmatmul.mubr.f32.gmra.mrb[0].mxu0 %v942
        %v2498 = vpop.f32.mrb[0].mxu0
        %v2499 = vadd.f32 0.0, %v2498
        %v2500 = vpop.f32.mrb[0].mxu0
        %v2501 = vadd.f32 0.0, %v2500
        %2502 = vmatprep.mubr.f32.mxu0 0.0
        %2503 = vmatmul.mubr.f32.gmra.mrb[0].mxu0 %v943
        %v2504 = vpop.f32.mrb[0].mxu0
        %v2505 = vadd.f32 0.0, %v2504
        %v2506 = vpop.f32.mrb[0].mxu0
        %v2507 = vadd.f32 0.0, %v2506
        %2508 = vmatprep.mubr.f32.mxu0 0.0
        %2509 = vmatmul.mubr.f32.gmra.mrb[0].mxu0 %v944
        %v2510 = vpop.f32.mrb[0].mxu0
        %v2511 = vadd.f32 0.0, %v2510
        %v2512 = vpop.f32.mrb[0].mxu0
        %v2513 = vadd.f32 0.0, %v2512
        %2514 = vmatprep.mubr.f32.mxu0 0.0
        %2515 = vmatmul.mubr.f32.gmra.mrb[0].mxu0 %v945
        %v2516 = vpop.f32.mrb[0].mxu0
        %v2517 = vadd.f32 0.0, %v2516
        %v2518 = vpop.f32.mrb[0].mxu0
        %v2519 = vadd.f32 0.0, %v2518
        %2520 = vmatprep.mubr.f32.mxu0 0.0
        %2521 = vmatmul.mubr.f32.gmra.mrb[0].mxu0 %v946
        %v2522 = vpop.f32.mrb[0].mxu0
        %v2523 = vadd.f32 0.0, %v2522
        %v2524 = vpop.f32.mrb[0].mxu0
        %v2525 = vadd.f32 0.0, %v2524
        %2526 = vmatprep.mubr.f32.mxu0 0.0
        %2527 = vmatmul.mubr.f32.gmra.mrb[0].mxu0 %v947
        %v2528 = vpop.f32.mrb[0].mxu0
        %v2529 = vadd.f32 0.0, %v2528
        %v2530 = vpop.f32.mrb[0].mxu0
        %v2531 = vadd.f32 0.0, %v2530
        %2532 = vmatprep.mubr.f32.mxu0 0.0
        %2533 = vmatmul.mubr.f32.gmra.mrb[0].mxu0 %v948
        %v2534 = vpop.f32.mrb[0].mxu0
        %v2535 = vadd.f32 0.0, %v2534
        %v2536 = vpop.f32.mrb[0].mxu0
        %v2537 = vadd.f32 0.0, %v2536
        %2538 = vmatprep.mubr.f32.mxu0 0.0
        %2539 = vmatmul.mubr.f32.gmra.mrb[0].mxu0 %v949
        %v2540 = vpop.f32.mrb[0].mxu0
        %v2541 = vadd.f32 0.0, %v2540
        %v2542 = vpop.f32.mrb[0].mxu0
        %v2543 = vadd.f32 0.0, %v2542
        %2544 = vmatprep.mubr.f32.mxu0 0.0
        %2545 = vmatmul.mubr.f32.gmra.mrb[0].mxu0 %v950
        %v2546 = vpop.f32.mrb[0].mxu0
        %v2547 = vadd.f32 0.0, %v2546
        %v2548 = vpop.f32.mrb[0].mxu0
        %v2549 = vadd.f32 0.0, %v2548
        %2550 = vmatprep.mubr.f32.mxu0 0.0
        %2551 = vmatmul.mubr.f32.gmra.mrb[0].mxu0 %v951
        %v2552 = vpop.f32.mrb[0].mxu0
        %v2553 = vadd.f32 0.0, %v2552
        %v2554 = vpop.f32.mrb[0].mxu0
        %v2555 = vadd.f32 0.0, %v2554
        %2556 = vmatprep.mubr.f32.mxu0 0.0
        %2557 = vmatmul.mubr.f32.gmra.mrb[0].mxu0 %v952
        %v2558 = vpop.f32.mrb[0].mxu0
        %v2559 = vadd.f32 0.0, %v2558
        %v2560 = vpop.f32.mrb[0].mxu0
        %v2561 = vadd.f32 0.0, %v2560
        %2562 = vmatprep.mubr.f32.mxu0 0.0
        %2563 = vmatmul.mubr.f32.gmra.mrb[0].mxu0 %v953
        %v2564 = vpop.f32.mrb[0].mxu0
        %v2565 = vadd.f32 0.0, %v2564
        %v2566 = vpop.f32.mrb[0].mxu0
        %v2567 = vadd.f32 0.0, %v2566
        %2568 = vmatprep.mubr.f32.mxu0 0.0
        %2569 = vmatmul.mubr.f32.gmra.mrb[0].mxu0 %v954
        %v2570 = vpop.f32.mrb[0].mxu0
        %v2571 = vadd.f32 0.0, %v2570
        %v2572 = vpop.f32.mrb[0].mxu0
        %v2573 = vadd.f32 0.0, %v2572
        %2574 = vmatprep.mubr.f32.mxu0 0.0
        %2575 = vmatmul.mubr.f32.gmra.mrb[0].mxu0 %v955
        %v2576 = vpop.f32.mrb[0].mxu0
        %v2577 = vadd.f32 0.0, %v2576
        %v2578 = vpop.f32.mrb[0].mxu0
        %v2579 = vadd.f32 0.0, %v2578
        %2580 = vmatprep.mubr.f32.mxu0 0.0
        %2581 = vmatmul.mubr.f32.gmra.mrb[0].mxu0 %v956
        %v2582 = vpop.f32.mrb[0].mxu0
        %v2583 = vadd.f32 0.0, %v2582
        %v2584 = vpop.f32.mrb[0].mxu0
        %v2585 = vadd.f32 0.0, %v2584
        %2586 = vdwg.mxu0
        %v2587 = vmul.f32 %v2493, %v2331
        %v2588 = vmul.f32 %v2495, %v2333
        %v2589 = vmul.f32 %v2499, %v2335
        %v2590 = vmul.f32 %v2501, %v2337
        %v2591 = vmul.f32 %v2505, %v2339
        %v2592 = vmul.f32 %v2507, %v2341
        %v2593 = vmul.f32 %v2511, %v2343
        %v2594 = vmul.f32 %v2513, %v2345
        %v2595 = vmul.f32 %v2517, %v2347
        %v2596 = vmul.f32 %v2519, %v2349
        %v2597 = vmul.f32 %v2523, %v2351
        %v2598 = vmul.f32 %v2525, %v2353
        %v2599 = vmul.f32 %v2529, %v2355
        %v2600 = vmul.f32 %v2531, %v2357
        %v2601 = vmul.f32 %v2535, %v2359
        %v2602 = vmul.f32 %v2537, %v2361
        %v2603 = vmul.f32 %v2541, %v2363
        %v2604 = vmul.f32 %v2543, %v2365
        %v2605 = vmul.f32 %v2547, %v2367
        %v2606 = vmul.f32 %v2549, %v2369
        %v2607 = vmul.f32 %v2553, %v2371
        %v2608 = vmul.f32 %v2555, %v2373
        %v2609 = vmul.f32 %v2559, %v2375
        %v2610 = vmul.f32 %v2561, %v2377
        %v2611 = vmul.f32 %v2565, %v2379
        %v2612 = vmul.f32 %v2567, %v2381
        %v2613 = vmul.f32 %v2571, %v2383
        %v2614 = vmul.f32 %v2573, %v2385
        %v2615 = vmul.f32 %v2577, %v2387
        %v2616 = vmul.f32 %v2579, %v2389
        %v2617 = vmul.f32 %v2583, %v2391
        %v2618 = vmul.f32 %v2585, %v2393
        %v2619 = vld [vmem:[%s8] sm:$0xff]
        %v2620 = vld [vmem:[%s8 + $0x8] sm:$0xff]
        %v2621 = vld [vmem:[%s8 + $0x10] sm:$0xff]
        %v2622 = vld [vmem:[%s8 + $0x18] sm:$0xff]
        %v2623 = vld [vmem:[%s8 + $0x20] sm:$0xff]
        %v2624 = vld [vmem:[%s8 + $0x28] sm:$0xff]
        %v2625 = vld [vmem:[%s8 + $0x30] sm:$0xff]
        %v2626 = vld [vmem:[%s8 + $0x38] sm:$0xff]
        %v2627 = vld [vmem:[%s8 + $0x40] sm:$0xff]
        %v2628 = vld [vmem:[%s8 + $0x48] sm:$0xff]
        %v2629 = vld [vmem:[%s8 + $0x50] sm:$0xff]
        %v2630 = vld [vmem:[%s8 + $0x58] sm:$0xff]
        %v2631 = vld [vmem:[%s8 + $0x60] sm:$0xff]
        %v2632 = vld [vmem:[%s8 + $0x68] sm:$0xff]
        %v2633 = vld [vmem:[%s8 + $0x70] sm:$0xff]
        %v2634 = vld [vmem:[%s8 + $0x78] sm:$0xff]
        %v2635 = vld [vmem:[%s8 + $0x80] sm:$0xff]
        %v2636 = vld [vmem:[%s8 + $0x88] sm:$0xff]
        %v2637 = vld [vmem:[%s8 + $0x90] sm:$0xff]
        %v2638 = vld [vmem:[%s8 + $0x98] sm:$0xff]
        %v2639 = vld [vmem:[%s8 + $0xa0] sm:$0xff]
        %v2640 = vld [vmem:[%s8 + $0xa8] sm:$0xff]
        %v2641 = vld [vmem:[%s8 + $0xb0] sm:$0xff]
        %v2642 = vld [vmem:[%s8 + $0xb8] sm:$0xff]
        %vm2643 = vcmask 523264
        %v2645 = vsel %vm2643, %v2588, 0
        %v2648 = vsel %vm2643, %v2590, 0
        %v2651 = vsel %vm2643, %v2592, 0
        %v2654 = vsel %vm2643, %v2594, 0
        %v2657 = vsel %vm2643, %v2596, 0
        %v2660 = vsel %vm2643, %v2598, 0
        %v2663 = vsel %vm2643, %v2600, 0
        %v2666 = vsel %vm2643, %v2602, 0
        %v2669 = vsel %vm2643, %v2604, 0
        %v2672 = vsel %vm2643, %v2606, 0
        %v2675 = vsel %vm2643, %v2608, 0
        %v2678 = vsel %vm2643, %v2610, 0
        %v2681 = vsel %vm2643, %v2612, 0
        %v2684 = vsel %vm2643, %v2614, 0
        %v2687 = vsel %vm2643, %v2616, 0
        %v2690 = vsel %vm2643, %v2618, 0
        %2692 = vmatprep.subr.mxu0 0.0
        %2693 = vmatpush1.msra.mxu0 %v2619
        %2694 = vmatprep.subr.mxu0 0.0
        %2695 = vmatpush1.msra.mxu0 %v2620
        %2696 = vmatprep.subr.mxu0 0.0
        %2697 = vmatpush1.msra.mxu0 %v2621
        %2698 = vmatprep.subr.mxu0 0.0
        %2699 = vmatpush1.msra.mxu0 %v2622
        %2700 = vmatprep.subr.mxu0 0.0
        %2701 = vmatpush1.msra.mxu0 %v2623
        %2702 = vmatprep.subr.mxu0 0.0
        %2703 = vmatpush1.msra.mxu0 %v2624
        %2704 = vmatprep.subr.mxu0 0.0
        %2705 = vmatpush1.msra.mxu0 %v2625
        %2706 = vmatprep.subr.mxu0 0.0
        %2707 = vmatpush1.msra.mxu0 %v2626
        %2708 = vmatprep.subr.mxu0 0.0
        %2709 = vmatpush1.msra.mxu0 %v2627
        %2710 = vmatprep.subr.mxu0 0.0
        %2711 = vmatpush1.msra.mxu0 %v2628
        %2712 = vmatprep.subr.mxu0 0.0
        %2713 = vmatpush1.msra.mxu0 %v2629
        %2714 = vmatprep.subr.mxu0 0.0
        %2715 = vmatpush1.msra.mxu0 %v2630
        %2716 = vmatprep.subr.mxu0 0.0
        %2717 = vmatpush1.msra.mxu0 %v2631
        %2718 = vmatprep.subr.mxu0 0.0
        %2719 = vmatpush1.msra.mxu0 %v2632
        %2720 = vmatprep.subr.mxu0 0.0
        %2721 = vmatpush1.msra.mxu0 %v2633
        %2722 = vmatprep.subr.mxu0 0.0
        %2723 = vmatpush1.msra.mxu0 %v2634
        %2724 = vmatprep.subr.mxu0 0.0
        %2725 = vmatpush1.msra.mxu0 %v2635
        %2726 = vmatprep.subr.mxu0 0.0
        %2727 = vmatpush1.msra.mxu0 %v2636
        %2728 = vmatprep.subr.mxu0 0.0
        %2729 = vmatpush1.msra.mxu0 %v2637
        %2730 = vmatprep.subr.mxu0 0.0
        %2731 = vmatpush1.msra.mxu0 %v2638
        %2732 = vmatprep.subr.mxu0 0.0
        %2733 = vmatpush1.msra.mxu0 %v2639
        %2734 = vmatprep.subr.mxu0 0.0
        %2735 = vmatpush1.msra.mxu0 %v2640
        %2736 = vmatprep.subr.mxu0 0.0
        %2737 = vmatpush1.msra.mxu0 %v2641
        %2738 = vmatprep.subr.mxu0 0.0
        %2739 = vmatpush1.msra.mxu0 %v2642
        %2740 = vmatprep.subr.mxu0 0.0
        %2741 = vmatpush1.msra.mxu0 0.0
        %2742 = vmatprep.subr.mxu0 0.0
        %2743 = vmatpush1.msra.mxu0 0.0
        %2744 = vmatprep.subr.mxu0 0.0
        %2745 = vmatpush1.msra.mxu0 0.0
        %2746 = vmatprep.subr.mxu0 0.0
        %2747 = vmatpush1.msra.mxu0 0.0
        %2748 = vmatprep.subr.mxu0 0.0
        %2749 = vmatpush1.msra.mxu0 0.0
        %2750 = vmatprep.subr.mxu0 0.0
        %2751 = vmatpush1.msra.mxu0 0.0
        %2752 = vmatprep.subr.mxu0 0.0
        %2753 = vmatpush1.msra.mxu0 0.0
        %2754 = vmatprep.subr.mxu0 0.0
        %2755 = vmatpush1.msra.mxu0 0.0
        %2756 = vmatprep.mubr.f32.mxu0 %v2645
        %2757 = vmatmul.mubr.f32.gmra.mrb[0].mxu0 %v2587
        %v2758 = vpop.f32.mrb[0].mxu0
        %v2759 = vadd.f32 0.0, %v2758
        %v2760 = vpop.f32.mrb[0].mxu0
        %2761 = vmatprep.mubr.f32.mxu0 %v2648
        %2762 = vmatmul.mubr.f32.gmra.mrb[0].mxu0 %v2589
        %v2763 = vpop.f32.mrb[0].mxu0
        %v2764 = vadd.f32 0.0, %v2763
        %v2765 = vpop.f32.mrb[0].mxu0
        %2766 = vmatprep.mubr.f32.mxu0 %v2651
        %2767 = vmatmul.mubr.f32.gmra.mrb[0].mxu0 %v2591
        %v2768 = vpop.f32.mrb[0].mxu0
        %v2769 = vadd.f32 0.0, %v2768
        %v2770 = vpop.f32.mrb[0].mxu0
        %2771 = vmatprep.mubr.f32.mxu0 %v2654
        %2772 = vmatmul.mubr.f32.gmra.mrb[0].mxu0 %v2593
        %v2773 = vpop.f32.mrb[0].mxu0
        %v2774 = vadd.f32 0.0, %v2773
        %v2775 = vpop.f32.mrb[0].mxu0
        %2776 = vmatprep.mubr.f32.mxu0 %v2657
        %2777 = vmatmul.mubr.f32.gmra.mrb[0].mxu0 %v2595
        %v2778 = vpop.f32.mrb[0].mxu0
        %v2779 = vadd.f32 0.0, %v2778
        %v2780 = vpop.f32.mrb[0].mxu0
        %2781 = vmatprep.mubr.f32.mxu0 %v2660
        %2782 = vmatmul.mubr.f32.gmra.mrb[0].mxu0 %v2597
        %v2783 = vpop.f32.mrb[0].mxu0
        %v2784 = vadd.f32 0.0, %v2783
        %v2785 = vpop.f32.mrb[0].mxu0
        %2786 = vmatprep.mubr.f32.mxu0 %v2663
        %2787 = vmatmul.mubr.f32.gmra.mrb[0].mxu0 %v2599
        %v2788 = vpop.f32.mrb[0].mxu0
        %v2789 = vadd.f32 0.0, %v2788
        %v2790 = vpop.f32.mrb[0].mxu0
        %2791 = vmatprep.mubr.f32.mxu0 %v2666
        %2792 = vmatmul.mubr.f32.gmra.mrb[0].mxu0 %v2601
        %v2793 = vpop.f32.mrb[0].mxu0
        %v2794 = vadd.f32 0.0, %v2793
        %v2795 = vpop.f32.mrb[0].mxu0
        %2796 = vmatprep.mubr.f32.mxu0 %v2669
        %2797 = vmatmul.mubr.f32.gmra.mrb[0].mxu0 %v2603
        %v2798 = vpop.f32.mrb[0].mxu0
        %v2799 = vadd.f32 0.0, %v2798
        %v2800 = vpop.f32.mrb[0].mxu0
        %2801 = vmatprep.mubr.f32.mxu0 %v2672
        %2802 = vmatmul.mubr.f32.gmra.mrb[0].mxu0 %v2605
        %v2803 = vpop.f32.mrb[0].mxu0
        %v2804 = vadd.f32 0.0, %v2803
        %v2805 = vpop.f32.mrb[0].mxu0
        %2806 = vmatprep.mubr.f32.mxu0 %v2675
        %2807 = vmatmul.mubr.f32.gmra.mrb[0].mxu0 %v2607
        %v2808 = vpop.f32.mrb[0].mxu0
        %v2809 = vadd.f32 0.0, %v2808
        %v2810 = vpop.f32.mrb[0].mxu0
        %2811 = vmatprep.mubr.f32.mxu0 %v2678
        %2812 = vmatmul.mubr.f32.gmra.mrb[0].mxu0 %v2609
        %v2813 = vpop.f32.mrb[0].mxu0
        %v2814 = vadd.f32 0.0, %v2813
        %v2815 = vpop.f32.mrb[0].mxu0
        %2816 = vmatprep.mubr.f32.mxu0 %v2681
        %2817 = vmatmul.mubr.f32.gmra.mrb[0].mxu0 %v2611
        %v2818 = vpop.f32.mrb[0].mxu0
        %v2819 = vadd.f32 0.0, %v2818
        %v2820 = vpop.f32.mrb[0].mxu0
        %2821 = vmatprep.mubr.f32.mxu0 %v2684
        %2822 = vmatmul.mubr.f32.gmra.mrb[0].mxu0 %v2613
        %v2823 = vpop.f32.mrb[0].mxu0
        %v2824 = vadd.f32 0.0, %v2823
        %v2825 = vpop.f32.mrb[0].mxu0
        %2826 = vmatprep.mubr.f32.mxu0 %v2687
        %2827 = vmatmul.mubr.f32.gmra.mrb[0].mxu0 %v2615
        %v2828 = vpop.f32.mrb[0].mxu0
        %v2829 = vadd.f32 0.0, %v2828
        %v2830 = vpop.f32.mrb[0].mxu0
        %2831 = vmatprep.mubr.f32.mxu0 %v2690
        %2832 = vmatmul.mubr.f32.gmra.mrb[0].mxu0 %v2617
        %v2833 = vpop.f32.mrb[0].mxu0
        %v2834 = vadd.f32 0.0, %v2833
        %v2835 = vpop.f32.mrb[0].mxu0
        %2836 = vdwg.mxu0
        %vm2837 = vcmp.eq.f32.partialorder %v2759, 0.0
        %vm2838 = vcmp.eq.f32.partialorder %v2764, 0.0
        %vm2839 = vcmp.eq.f32.partialorder %v2769, 0.0
        %vm2840 = vcmp.eq.f32.partialorder %v2774, 0.0
        %vm2841 = vcmp.eq.f32.partialorder %v2779, 0.0
        %vm2842 = vcmp.eq.f32.partialorder %v2784, 0.0
        %vm2843 = vcmp.eq.f32.partialorder %v2789, 0.0
        %vm2844 = vcmp.eq.f32.partialorder %v2794, 0.0
        %vm2845 = vcmp.eq.f32.partialorder %v2799, 0.0
        %vm2846 = vcmp.eq.f32.partialorder %v2804, 0.0
        %vm2847 = vcmp.eq.f32.partialorder %v2809, 0.0
        %vm2848 = vcmp.eq.f32.partialorder %v2814, 0.0
        %vm2849 = vcmp.eq.f32.partialorder %v2819, 0.0
        %vm2850 = vcmp.eq.f32.partialorder %v2824, 0.0
        %vm2851 = vcmp.eq.f32.partialorder %v2829, 0.0
        %vm2852 = vcmp.eq.f32.partialorder %v2834, 0.0
        %v2853 = vsel %vm2837, 2.220446e-16, %v2759
        %v2854 = vsel %vm2838, 2.220446e-16, %v2764
        %v2855 = vsel %vm2839, 2.220446e-16, %v2769
        %v2856 = vsel %vm2840, 2.220446e-16, %v2774
        %v2857 = vsel %vm2841, 2.220446e-16, %v2779
        %v2858 = vsel %vm2842, 2.220446e-16, %v2784
        %v2859 = vsel %vm2843, 2.220446e-16, %v2789
        %v2860 = vsel %vm2844, 2.220446e-16, %v2794
        %v2861 = vsel %vm2845, 2.220446e-16, %v2799
        %v2862 = vsel %vm2846, 2.220446e-16, %v2804
        %v2863 = vsel %vm2847, 2.220446e-16, %v2809
        %v2864 = vsel %vm2848, 2.220446e-16, %v2814
        %v2865 = vsel %vm2849, 2.220446e-16, %v2819
        %v2866 = vsel %vm2850, 2.220446e-16, %v2824
        %v2867 = vsel %vm2851, 2.220446e-16, %v2829
        %v2868 = vsel %vm2852, 2.220446e-16, %v2834
        %v2869 = vlog2.pop %v2853
        %v2870 = vmul.f32 %v2869, 0.6931472
        %v2871 = vlog2.pop %v2854
        %v2872 = vmul.f32 %v2871, 0.6931472
        %v2873 = vlog2.pop %v2855
        %v2874 = vmul.f32 %v2873, 0.6931472
        %v2875 = vlog2.pop %v2856
        %v2876 = vmul.f32 %v2875, 0.6931472
        %v2877 = vlog2.pop %v2857
        %v2878 = vmul.f32 %v2877, 0.6931472
        %v2879 = vlog2.pop %v2858
        %v2880 = vmul.f32 %v2879, 0.6931472
        %v2881 = vlog2.pop %v2859
        %v2882 = vmul.f32 %v2881, 0.6931472
        %v2883 = vlog2.pop %v2860
        %v2884 = vmul.f32 %v2883, 0.6931472
        %v2885 = vlog2.pop %v2861
        %v2886 = vmul.f32 %v2885, 0.6931472
        %v2887 = vlog2.pop %v2862
        %v2888 = vmul.f32 %v2887, 0.6931472
        %v2889 = vlog2.pop %v2863
        %v2890 = vmul.f32 %v2889, 0.6931472
        %v2891 = vlog2.pop %v2864
        %v2892 = vmul.f32 %v2891, 0.6931472
        %v2893 = vlog2.pop %v2865
        %v2894 = vmul.f32 %v2893, 0.6931472
        %v2895 = vlog2.pop %v2866
        %v2896 = vmul.f32 %v2895, 0.6931472
        %v2897 = vlog2.pop %v2867
        %v2898 = vmul.f32 %v2897, 0.6931472
        %v2899 = vlog2.pop %v2868
        %v2900 = vmul.f32 %v2899, 0.6931472
        %v2901 = vadd.f32 %v2870, %v469
        %v2902 = vadd.f32 %v2872, %v470
        %v2903 = vadd.f32 %v2874, %v471
        %v2904 = vadd.f32 %v2876, %v472
        %v2905 = vadd.f32 %v2878, %v473
        %v2906 = vadd.f32 %v2880, %v474
        %v2907 = vadd.f32 %v2882, %v475
        %v2908 = vadd.f32 %v2884, %v476
        %v2909 = vadd.f32 %v2886, %v477
        %v2910 = vadd.f32 %v2888, %v478
        %v2911 = vadd.f32 %v2890, %v479
        %v2912 = vadd.f32 %v2892, %v480
        %v2913 = vadd.f32 %v2894, %v481
        %v2914 = vadd.f32 %v2896, %v482
        %v2915 = vadd.f32 %v2898, %v483
        %v2916 = vadd.f32 %v2900, %v484
        %2917 = vst.msk [vmem:[%s461] sm:$0xff] %vm491, %v2901
        %2918 = vst.msk [vmem:[%s461 + $0x8] sm:$0xff] %vm491, %v2902
        %2919 = vst.msk [vmem:[%s461 + $0x10] sm:$0xff] %vm491, %v2903
        %2920 = vst.msk [vmem:[%s461 + $0x18] sm:$0xff] %vm491, %v2904
        %2921 = vst.msk [vmem:[%s461 + $0x20] sm:$0xff] %vm491, %v2905
        %2922 = vst.msk [vmem:[%s461 + $0x28] sm:$0xff] %vm491, %v2906
        %2923 = vst.msk [vmem:[%s461 + $0x30] sm:$0xff] %vm491, %v2907
        %2924 = vst.msk [vmem:[%s461 + $0x38] sm:$0xff] %vm491, %v2908
        %2925 = vst.msk [vmem:[%s461 + $0x40] sm:$0xff] %vm491, %v2909
        %2926 = vst.msk [vmem:[%s461 + $0x48] sm:$0xff] %vm491, %v2910
        %2927 = vst.msk [vmem:[%s461 + $0x50] sm:$0xff] %vm491, %v2911
        %2928 = vst.msk [vmem:[%s461 + $0x58] sm:$0xff] %vm491, %v2912
        %2929 = vst.msk [vmem:[%s461 + $0x60] sm:$0xff] %vm491, %v2913
        %2930 = vst.msk [vmem:[%s461 + $0x68] sm:$0xff] %vm491, %v2914
        %2931 = vst.msk [vmem:[%s461 + $0x70] sm:$0xff] %vm491, %v2915
        %2932 = vst.msk [vmem:[%s461 + $0x78] sm:$0xff] %vm491, %v2916
        %s2933 = scalar_lea.vmem %s448, 128
        %v2934 = vld [vmem:[%s2933] sm:$0xff]
        %v2935 = vld [vmem:[%s2933 + $0x8] sm:$0xff]
        %v2936 = vld [vmem:[%s2933 + $0x10] sm:$0xff]
        %v2937 = vld [vmem:[%s2933 + $0x18] sm:$0xff]
        %v2938 = vld [vmem:[%s2933 + $0x20] sm:$0xff]
        %v2939 = vld [vmem:[%s2933 + $0x28] sm:$0xff]
        %v2940 = vld [vmem:[%s2933 + $0x30] sm:$0xff]
        %v2941 = vld [vmem:[%s2933 + $0x38] sm:$0xff]
        %v2942 = vld [vmem:[%s2933 + $0x40] sm:$0xff]
        %v2943 = vld [vmem:[%s2933 + $0x48] sm:$0xff]
        %v2944 = vld [vmem:[%s2933 + $0x50] sm:$0xff]
        %v2945 = vld [vmem:[%s2933 + $0x58] sm:$0xff]
        %v2946 = vld [vmem:[%s2933 + $0x60] sm:$0xff]
        %v2947 = vld [vmem:[%s2933 + $0x68] sm:$0xff]
        %v2948 = vld [vmem:[%s2933 + $0x70] sm:$0xff]
        %v2949 = vld [vmem:[%s2933 + $0x78] sm:$0xff]
        %v2951 = vsel %vm491, %v2934, 0
        %v2954 = vsel %vm491, %v2935, 0
        %v2957 = vsel %vm491, %v2936, 0
        %v2960 = vsel %vm491, %v2937, 0
        %v2963 = vsel %vm491, %v2938, 0
        %v2966 = vsel %vm491, %v2939, 0
        %v2969 = vsel %vm491, %v2940, 0
        %v2972 = vsel %vm491, %v2941, 0
        %v2975 = vsel %vm491, %v2942, 0
        %v2978 = vsel %vm491, %v2943, 0
        %v2981 = vsel %vm491, %v2944, 0
        %v2984 = vsel %vm491, %v2945, 0
        %v2987 = vsel %vm491, %v2946, 0
        %v2990 = vsel %vm491, %v2947, 0
        %v2993 = vsel %vm491, %v2948, 0
        %v2996 = vsel %vm491, %v2949, 0
        %2998 = vmatprep.subr.mxu0 0.0
        %2999 = vmatpush1.msra.mxu0 %v465
        %3000 = vmatprep.subr.mxu0 0.0
        %3001 = vmatpush1.msra.mxu0 %v466
        %3002 = vmatprep.subr.mxu0 0.0
        %3003 = vmatpush1.msra.mxu0 %v467
        %3004 = vmatprep.subr.mxu0 0.0
        %3005 = vmatpush1.msra.mxu0 %v468
        %3006 = vmatprep.subr.mxu0 0.0
        %3007 = vmatpush1.msra.mxu0 0.0
        %3008 = vmatprep.subr.mxu0 0.0
        %3009 = vmatpush1.msra.mxu0 0.0
        %3010 = vmatprep.subr.mxu0 0.0
        %3011 = vmatpush1.msra.mxu0 0.0
        %3012 = vmatprep.subr.mxu0 0.0
        %3013 = vmatpush1.msra.mxu0 0.0
        %3014 = vmatprep.subr.mxu0 0.0
        %3015 = vmatpush1.msra.mxu0 0.0
        %3016 = vmatprep.subr.mxu0 0.0
        %3017 = vmatpush1.msra.mxu0 0.0
        %3018 = vmatprep.subr.mxu0 0.0
        %3019 = vmatpush1.msra.mxu0 0.0
        %3020 = vmatprep.subr.mxu0 0.0
        %3021 = vmatpush1.msra.mxu0 0.0
        %3022 = vmatprep.subr.mxu0 0.0
        %3023 = vmatpush1.msra.mxu0 0.0
        %3024 = vmatprep.subr.mxu0 0.0
        %3025 = vmatpush1.msra.mxu0 0.0
        %3026 = vmatprep.subr.mxu0 0.0
        %3027 = vmatpush1.msra.mxu0 0.0
        %3028 = vmatprep.subr.mxu0 0.0
        %3029 = vmatpush1.msra.mxu0 0.0
        %3030 = vmatprep.subr.mxu0 0.0
        %3031 = vmatpush1.msra.mxu0 0.0
        %3032 = vmatprep.subr.mxu0 0.0
        %3033 = vmatpush1.msra.mxu0 0.0
        %3034 = vmatprep.subr.mxu0 0.0
        %3035 = vmatpush1.msra.mxu0 0.0
        %3036 = vmatprep.subr.mxu0 0.0
        %3037 = vmatpush1.msra.mxu0 0.0
        %3038 = vmatprep.subr.mxu0 0.0
        %3039 = vmatpush1.msra.mxu0 0.0
        %3040 = vmatprep.subr.mxu0 0.0
        %3041 = vmatpush1.msra.mxu0 0.0
        %3042 = vmatprep.subr.mxu0 0.0
        %3043 = vmatpush1.msra.mxu0 0.0
        %3044 = vmatprep.subr.mxu0 0.0
        %3045 = vmatpush1.msra.mxu0 0.0
        %3046 = vmatprep.subr.mxu0 0.0
        %3047 = vmatpush1.msra.mxu0 0.0
        %3048 = vmatprep.subr.mxu0 0.0
        %3049 = vmatpush1.msra.mxu0 0.0
        %3050 = vmatprep.subr.mxu0 0.0
        %3051 = vmatpush1.msra.mxu0 0.0
        %3052 = vmatprep.subr.mxu0 0.0
        %3053 = vmatpush1.msra.mxu0 0.0
        %3054 = vmatprep.subr.mxu0 0.0
        %3055 = vmatpush1.msra.mxu0 0.0
        %3056 = vmatprep.subr.mxu0 0.0
        %3057 = vmatpush1.msra.mxu0 0.0
        %3058 = vmatprep.subr.mxu0 0.0
        %3059 = vmatpush1.msra.mxu0 0.0
        %3060 = vmatprep.subr.mxu0 0.0
        %3061 = vmatpush1.msra.mxu0 0.0
        %3062 = vmatprep.mubr.f32.mxu0 0.0
        %3063 = vmatmul.mubr.f32.gmra.mrb[0].mxu0 %v2951
        %v3064 = vpop.f32.mrb[0].mxu0
        %v3065 = vadd.f32 %v489, %v3064
        %v3066 = vpop.f32.mrb[0].mxu0
        %3067 = vmatprep.mubr.f32.mxu0 0.0
        %3068 = vmatmul.mubr.f32.gmra.mrb[0].mxu0 %v2954
        %v3069 = vpop.f32.mrb[0].mxu0
        %v3070 = vadd.f32 %v489, %v3069
        %v3071 = vpop.f32.mrb[0].mxu0
        %3072 = vmatprep.mubr.f32.mxu0 0.0
        %3073 = vmatmul.mubr.f32.gmra.mrb[0].mxu0 %v2957
        %v3074 = vpop.f32.mrb[0].mxu0
        %v3075 = vadd.f32 %v489, %v3074
        %v3076 = vpop.f32.mrb[0].mxu0
        %3077 = vmatprep.mubr.f32.mxu0 0.0
        %3078 = vmatmul.mubr.f32.gmra.mrb[0].mxu0 %v2960
        %v3079 = vpop.f32.mrb[0].mxu0
        %v3080 = vadd.f32 %v489, %v3079
        %v3081 = vpop.f32.mrb[0].mxu0
        %3082 = vmatprep.mubr.f32.mxu0 0.0
        %3083 = vmatmul.mubr.f32.gmra.mrb[0].mxu0 %v2963
        %v3084 = vpop.f32.mrb[0].mxu0
        %v3085 = vadd.f32 %v489, %v3084
        %v3086 = vpop.f32.mrb[0].mxu0
        %3087 = vmatprep.mubr.f32.mxu0 0.0
        %3088 = vmatmul.mubr.f32.gmra.mrb[0].mxu0 %v2966
        %v3089 = vpop.f32.mrb[0].mxu0
        %v3090 = vadd.f32 %v489, %v3089
        %v3091 = vpop.f32.mrb[0].mxu0
        %3092 = vmatprep.mubr.f32.mxu0 0.0
        %3093 = vmatmul.mubr.f32.gmra.mrb[0].mxu0 %v2969
        %v3094 = vpop.f32.mrb[0].mxu0
        %v3095 = vadd.f32 %v489, %v3094
        %v3096 = vpop.f32.mrb[0].mxu0
        %3097 = vmatprep.mubr.f32.mxu0 0.0
        %3098 = vmatmul.mubr.f32.gmra.mrb[0].mxu0 %v2972
        %v3099 = vpop.f32.mrb[0].mxu0
        %v3100 = vadd.f32 %v489, %v3099
        %v3101 = vpop.f32.mrb[0].mxu0
        %3102 = vmatprep.mubr.f32.mxu0 0.0
        %3103 = vmatmul.mubr.f32.gmra.mrb[0].mxu0 %v2975
        %v3104 = vpop.f32.mrb[0].mxu0
        %v3105 = vadd.f32 %v489, %v3104
        %v3106 = vpop.f32.mrb[0].mxu0
        %3107 = vmatprep.mubr.f32.mxu0 0.0
        %3108 = vmatmul.mubr.f32.gmra.mrb[0].mxu0 %v2978
        %v3109 = vpop.f32.mrb[0].mxu0
        %v3110 = vadd.f32 %v489, %v3109
        %v3111 = vpop.f32.mrb[0].mxu0
        %3112 = vmatprep.mubr.f32.mxu0 0.0
        %3113 = vmatmul.mubr.f32.gmra.mrb[0].mxu0 %v2981
        %v3114 = vpop.f32.mrb[0].mxu0
        %v3115 = vadd.f32 %v489, %v3114
        %v3116 = vpop.f32.mrb[0].mxu0
        %3117 = vmatprep.mubr.f32.mxu0 0.0
        %3118 = vmatmul.mubr.f32.gmra.mrb[0].mxu0 %v2984
        %v3119 = vpop.f32.mrb[0].mxu0
        %v3120 = vadd.f32 %v489, %v3119
        %v3121 = vpop.f32.mrb[0].mxu0
        %3122 = vmatprep.mubr.f32.mxu0 0.0
        %3123 = vmatmul.mubr.f32.gmra.mrb[0].mxu0 %v2987
        %v3124 = vpop.f32.mrb[0].mxu0
        %v3125 = vadd.f32 %v489, %v3124
        %v3126 = vpop.f32.mrb[0].mxu0
        %3127 = vmatprep.mubr.f32.mxu0 0.0
        %3128 = vmatmul.mubr.f32.gmra.mrb[0].mxu0 %v2990
        %v3129 = vpop.f32.mrb[0].mxu0
        %v3130 = vadd.f32 %v489, %v3129
        %v3131 = vpop.f32.mrb[0].mxu0
        %3132 = vmatprep.mubr.f32.mxu0 0.0
        %3133 = vmatmul.mubr.f32.gmra.mrb[0].mxu0 %v2993
        %v3134 = vpop.f32.mrb[0].mxu0
        %v3135 = vadd.f32 %v489, %v3134
        %v3136 = vpop.f32.mrb[0].mxu0
        %3137 = vmatprep.mubr.f32.mxu0 0.0
        %3138 = vmatmul.mubr.f32.gmra.mrb[0].mxu0 %v2996
        %v3139 = vpop.f32.mrb[0].mxu0
        %v3140 = vadd.f32 %v489, %v3139
        %v3141 = vpop.f32.mrb[0].mxu0
        %3142 = vdwg.mxu0
        %3143 = vmax.xlane.f32.xlu0 %v3065
        %v3144 = vpop.xlane.xlu0 %3143
        %3145 = vmax.xlane.f32.xlu0 %v3070
        %v3146 = vpop.xlane.xlu0 %3145
        %3147 = vmax.xlane.f32.xlu0 %v3075
        %v3148 = vpop.xlane.xlu0 %3147
        %3149 = vmax.xlane.f32.xlu0 %v3080
        %v3150 = vpop.xlane.xlu0 %3149
        %3151 = vmax.xlane.f32.xlu0 %v3085
        %v3152 = vpop.xlane.xlu0 %3151
        %3153 = vmax.xlane.f32.xlu0 %v3090
        %v3154 = vpop.xlane.xlu0 %3153
        %3155 = vmax.xlane.f32.xlu0 %v3095
        %v3156 = vpop.xlane.xlu0 %3155
        %3157 = vmax.xlane.f32.xlu0 %v3100
        %v3158 = vpop.xlane.xlu0 %3157
        %3159 = vmax.xlane.f32.xlu0 %v3105
        %v3160 = vpop.xlane.xlu0 %3159
        %3161 = vmax.xlane.f32.xlu0 %v3110
        %v3162 = vpop.xlane.xlu0 %3161
        %3163 = vmax.xlane.f32.xlu0 %v3115
        %v3164 = vpop.xlane.xlu0 %3163
        %3165 = vmax.xlane.f32.xlu0 %v3120
        %v3166 = vpop.xlane.xlu0 %3165
        %3167 = vmax.xlane.f32.xlu0 %v3125
        %v3168 = vpop.xlane.xlu0 %3167
        %3169 = vmax.xlane.f32.xlu0 %v3130
        %v3170 = vpop.xlane.xlu0 %3169
        %3171 = vmax.xlane.f32.xlu0 %v3135
        %v3172 = vpop.xlane.xlu0 %3171
        %3173 = vmax.xlane.f32.xlu0 %v3140
        %v3174 = vpop.xlane.xlu0 %3173
        %vm3175 = vcmp.eq.f32.partialorder %v3065, %v3144
        %vm3176 = vcmp.eq.f32.partialorder %v3070, %v3146
        %vm3177 = vcmp.eq.f32.partialorder %v3075, %v3148
        %vm3178 = vcmp.eq.f32.partialorder %v3080, %v3150
        %vm3179 = vcmp.eq.f32.partialorder %v3085, %v3152
        %vm3180 = vcmp.eq.f32.partialorder %v3090, %v3154
        %vm3181 = vcmp.eq.f32.partialorder %v3095, %v3156
        %vm3182 = vcmp.eq.f32.partialorder %v3100, %v3158
        %vm3183 = vcmp.eq.f32.partialorder %v3105, %v3160
        %vm3184 = vcmp.eq.f32.partialorder %v3110, %v3162
        %vm3185 = vcmp.eq.f32.partialorder %v3115, %v3164
        %vm3186 = vcmp.eq.f32.partialorder %v3120, %v3166
        %vm3187 = vcmp.eq.f32.partialorder %v3125, %v3168
        %vm3188 = vcmp.eq.f32.partialorder %v3130, %v3170
        %vm3189 = vcmp.eq.f32.partialorder %v3135, %v3172
        %vm3190 = vcmp.eq.f32.partialorder %v3140, %v3174
        %v3191 = vsel %vm3175, -1e+30, %v3065
        %v3192 = vsel %vm3176, -1e+30, %v3070
        %v3193 = vsel %vm3177, -1e+30, %v3075
        %v3194 = vsel %vm3178, -1e+30, %v3080
        %v3195 = vsel %vm3179, -1e+30, %v3085
        %v3196 = vsel %vm3180, -1e+30, %v3090
        %v3197 = vsel %vm3181, -1e+30, %v3095
        %v3198 = vsel %vm3182, -1e+30, %v3100
        %v3199 = vsel %vm3183, -1e+30, %v3105
        %v3200 = vsel %vm3184, -1e+30, %v3110
        %v3201 = vsel %vm3185, -1e+30, %v3115
        %v3202 = vsel %vm3186, -1e+30, %v3120
        %v3203 = vsel %vm3187, -1e+30, %v3125
        %v3204 = vsel %vm3188, -1e+30, %v3130
        %v3205 = vsel %vm3189, -1e+30, %v3135
        %v3206 = vsel %vm3190, -1e+30, %v3140
        %3207 = vmax.xlane.f32.xlu0 %v3191
        %v3208 = vpop.xlane.xlu0 %3207
        %3209 = vmax.xlane.f32.xlu0 %v3192
        %v3210 = vpop.xlane.xlu0 %3209
        %3211 = vmax.xlane.f32.xlu0 %v3193
        %v3212 = vpop.xlane.xlu0 %3211
        %3213 = vmax.xlane.f32.xlu0 %v3194
        %v3214 = vpop.xlane.xlu0 %3213
        %3215 = vmax.xlane.f32.xlu0 %v3195
        %v3216 = vpop.xlane.xlu0 %3215
        %3217 = vmax.xlane.f32.xlu0 %v3196
        %v3218 = vpop.xlane.xlu0 %3217
        %3219 = vmax.xlane.f32.xlu0 %v3197
        %v3220 = vpop.xlane.xlu0 %3219
        %3221 = vmax.xlane.f32.xlu0 %v3198
        %v3222 = vpop.xlane.xlu0 %3221
        %3223 = vmax.xlane.f32.xlu0 %v3199
        %v3224 = vpop.xlane.xlu0 %3223
        %3225 = vmax.xlane.f32.xlu0 %v3200
        %v3226 = vpop.xlane.xlu0 %3225
        %3227 = vmax.xlane.f32.xlu0 %v3201
        %v3228 = vpop.xlane.xlu0 %3227
        %3229 = vmax.xlane.f32.xlu0 %v3202
        %v3230 = vpop.xlane.xlu0 %3229
        %3231 = vmax.xlane.f32.xlu0 %v3203
        %v3232 = vpop.xlane.xlu0 %3231
        %3233 = vmax.xlane.f32.xlu0 %v3204
        %v3234 = vpop.xlane.xlu0 %3233
        %3235 = vmax.xlane.f32.xlu0 %v3205
        %v3236 = vpop.xlane.xlu0 %3235
        %3237 = vmax.xlane.f32.xlu0 %v3206
        %v3238 = vpop.xlane.xlu0 %3237
        %vm3239 = vcmp.eq.f32.partialorder %v3191, %v3208
        %vm3240 = vcmp.eq.f32.partialorder %v3192, %v3210
        %vm3241 = vcmp.eq.f32.partialorder %v3193, %v3212
        %vm3242 = vcmp.eq.f32.partialorder %v3194, %v3214
        %vm3243 = vcmp.eq.f32.partialorder %v3195, %v3216
        %vm3244 = vcmp.eq.f32.partialorder %v3196, %v3218
        %vm3245 = vcmp.eq.f32.partialorder %v3197, %v3220
        %vm3246 = vcmp.eq.f32.partialorder %v3198, %v3222
        %vm3247 = vcmp.eq.f32.partialorder %v3199, %v3224
        %vm3248 = vcmp.eq.f32.partialorder %v3200, %v3226
        %vm3249 = vcmp.eq.f32.partialorder %v3201, %v3228
        %vm3250 = vcmp.eq.f32.partialorder %v3202, %v3230
        %vm3251 = vcmp.eq.f32.partialorder %v3203, %v3232
        %vm3252 = vcmp.eq.f32.partialorder %v3204, %v3234
        %vm3253 = vcmp.eq.f32.partialorder %v3205, %v3236
        %vm3254 = vcmp.eq.f32.partialorder %v3206, %v3238
        %v3255 = vsub.f32 %v3208, %v3144
        %v3256 = vsub.f32 %v3210, %v3146
        %v3257 = vsub.f32 %v3212, %v3148
        %v3258 = vsub.f32 %v3214, %v3150
        %v3259 = vsub.f32 %v3216, %v3152
        %v3260 = vsub.f32 %v3218, %v3154
        %v3261 = vsub.f32 %v3220, %v3156
        %v3262 = vsub.f32 %v3222, %v3158
        %v3263 = vsub.f32 %v3224, %v3160
        %v3264 = vsub.f32 %v3226, %v3162
        %v3265 = vsub.f32 %v3228, %v3164
        %v3266 = vsub.f32 %v3230, %v3166
        %v3267 = vsub.f32 %v3232, %v3168
        %v3268 = vsub.f32 %v3234, %v3170
        %v3269 = vsub.f32 %v3236, %v3172
        %v3270 = vsub.f32 %v3238, %v3174
        %v3271 = vmul.f32 %v3255, 1.442695
        %v3272 = vpow.pop %v3271
        %v3273 = vmul.f32 %v3256, 1.442695
        %v3274 = vpow.pop %v3273
        %v3275 = vmul.f32 %v3257, 1.442695
        %v3276 = vpow.pop %v3275
        %v3277 = vmul.f32 %v3258, 1.442695
        %v3278 = vpow.pop %v3277
        %v3279 = vmul.f32 %v3259, 1.442695
        %v3280 = vpow.pop %v3279
        %v3281 = vmul.f32 %v3260, 1.442695
        %v3282 = vpow.pop %v3281
        %v3283 = vmul.f32 %v3261, 1.442695
        %v3284 = vpow.pop %v3283
        %v3285 = vmul.f32 %v3262, 1.442695
        %v3286 = vpow.pop %v3285
        %v3287 = vmul.f32 %v3263, 1.442695
        %v3288 = vpow.pop %v3287
        %v3289 = vmul.f32 %v3264, 1.442695
        %v3290 = vpow.pop %v3289
        %v3291 = vmul.f32 %v3265, 1.442695
        %v3292 = vpow.pop %v3291
        %v3293 = vmul.f32 %v3266, 1.442695
        %v3294 = vpow.pop %v3293
        %v3295 = vmul.f32 %v3267, 1.442695
        %v3296 = vpow.pop %v3295
        %v3297 = vmul.f32 %v3268, 1.442695
        %v3298 = vpow.pop %v3297
        %v3299 = vmul.f32 %v3269, 1.442695
        %v3300 = vpow.pop %v3299
        %v3301 = vmul.f32 %v3270, 1.442695
        %v3302 = vpow.pop %v3301
        %v3303 = vadd.f32 %v3272, 1.0
        %v3304 = vadd.f32 %v3274, 1.0
        %v3305 = vadd.f32 %v3276, 1.0
        %v3306 = vadd.f32 %v3278, 1.0
        %v3307 = vadd.f32 %v3280, 1.0
        %v3308 = vadd.f32 %v3282, 1.0
        %v3309 = vadd.f32 %v3284, 1.0
        %v3310 = vadd.f32 %v3286, 1.0
        %v3311 = vadd.f32 %v3288, 1.0
        %v3312 = vadd.f32 %v3290, 1.0
        %v3313 = vadd.f32 %v3292, 1.0
        %v3314 = vadd.f32 %v3294, 1.0
        %v3315 = vadd.f32 %v3296, 1.0
        %v3316 = vadd.f32 %v3298, 1.0
        %v3317 = vadd.f32 %v3300, 1.0
        %v3318 = vadd.f32 %v3302, 1.0
        %v3319 = vrcp.pop %v3303
        %v3320 = vmul.f32 1.0, %v3319
        %v3321 = vrcp.pop %v3304
        %v3322 = vmul.f32 1.0, %v3321
        %v3323 = vrcp.pop %v3305
        %v3324 = vmul.f32 1.0, %v3323
        %v3325 = vrcp.pop %v3306
        %v3326 = vmul.f32 1.0, %v3325
        %v3327 = vrcp.pop %v3307
        %v3328 = vmul.f32 1.0, %v3327
        %v3329 = vrcp.pop %v3308
        %v3330 = vmul.f32 1.0, %v3329
        %v3331 = vrcp.pop %v3309
        %v3332 = vmul.f32 1.0, %v3331
        %v3333 = vrcp.pop %v3310
        %v3334 = vmul.f32 1.0, %v3333
        %v3335 = vrcp.pop %v3311
        %v3336 = vmul.f32 1.0, %v3335
        %v3337 = vrcp.pop %v3312
        %v3338 = vmul.f32 1.0, %v3337
        %v3339 = vrcp.pop %v3313
        %v3340 = vmul.f32 1.0, %v3339
        %v3341 = vrcp.pop %v3314
        %v3342 = vmul.f32 1.0, %v3341
        %v3343 = vrcp.pop %v3315
        %v3344 = vmul.f32 1.0, %v3343
        %v3345 = vrcp.pop %v3316
        %v3346 = vmul.f32 1.0, %v3345
        %v3347 = vrcp.pop %v3317
        %v3348 = vmul.f32 1.0, %v3347
        %v3349 = vrcp.pop %v3318
        %v3350 = vmul.f32 1.0, %v3349
        %v3351 = vmul.f32 %v3272, %v3320
        %v3352 = vmul.f32 %v3274, %v3322
        %v3353 = vmul.f32 %v3276, %v3324
        %v3354 = vmul.f32 %v3278, %v3326
        %v3355 = vmul.f32 %v3280, %v3328
        %v3356 = vmul.f32 %v3282, %v3330
        %v3357 = vmul.f32 %v3284, %v3332
        %v3358 = vmul.f32 %v3286, %v3334
        %v3359 = vmul.f32 %v3288, %v3336
        %v3360 = vmul.f32 %v3290, %v3338
        %v3361 = vmul.f32 %v3292, %v3340
        %v3362 = vmul.f32 %v3294, %v3342
        %v3363 = vmul.f32 %v3296, %v3344
        %v3364 = vmul.f32 %v3298, %v3346
        %v3365 = vmul.f32 %v3300, %v3348
        %v3366 = vmul.f32 %v3302, %v3350
        %v3367 = vsel %vm3175, %v3320, 0.0
        %v3368 = vsel %vm3176, %v3322, 0.0
        %v3369 = vsel %vm3177, %v3324, 0.0
        %v3370 = vsel %vm3178, %v3326, 0.0
        %v3371 = vsel %vm3179, %v3328, 0.0
        %v3372 = vsel %vm3180, %v3330, 0.0
        %v3373 = vsel %vm3181, %v3332, 0.0
        %v3374 = vsel %vm3182, %v3334, 0.0
        %v3375 = vsel %vm3183, %v3336, 0.0
        %v3376 = vsel %vm3184, %v3338, 0.0
        %v3377 = vsel %vm3185, %v3340, 0.0
        %v3378 = vsel %vm3186, %v3342, 0.0
        %v3379 = vsel %vm3187, %v3344, 0.0
        %v3380 = vsel %vm3188, %v3346, 0.0
        %v3381 = vsel %vm3189, %v3348, 0.0
        %v3382 = vsel %vm3190, %v3350, 0.0
        %v3383 = vsel %vm3239, %v3351, 0.0
        %v3384 = vsel %vm3240, %v3352, 0.0
        %v3385 = vsel %vm3241, %v3353, 0.0
        %v3386 = vsel %vm3242, %v3354, 0.0
        %v3387 = vsel %vm3243, %v3355, 0.0
        %v3388 = vsel %vm3244, %v3356, 0.0
        %v3389 = vsel %vm3245, %v3357, 0.0
        %v3390 = vsel %vm3246, %v3358, 0.0
        %v3391 = vsel %vm3247, %v3359, 0.0
        %v3392 = vsel %vm3248, %v3360, 0.0
        %v3393 = vsel %vm3249, %v3361, 0.0
        %v3394 = vsel %vm3250, %v3362, 0.0
        %v3395 = vsel %vm3251, %v3363, 0.0
        %v3396 = vsel %vm3252, %v3364, 0.0
        %v3397 = vsel %vm3253, %v3365, 0.0
        %v3398 = vsel %vm3254, %v3366, 0.0
        %v3399 = vadd.f32 %v3367, %v3383
        %v3400 = vadd.f32 %v3368, %v3384
        %v3401 = vadd.f32 %v3369, %v3385
        %v3402 = vadd.f32 %v3370, %v3386
        %v3403 = vadd.f32 %v3371, %v3387
        %v3404 = vadd.f32 %v3372, %v3388
        %v3405 = vadd.f32 %v3373, %v3389
        %v3406 = vadd.f32 %v3374, %v3390
        %v3407 = vadd.f32 %v3375, %v3391
        %v3408 = vadd.f32 %v3376, %v3392
        %v3409 = vadd.f32 %v3377, %v3393
        %v3410 = vadd.f32 %v3378, %v3394
        %v3411 = vadd.f32 %v3379, %v3395
        %v3412 = vadd.f32 %v3380, %v3396
        %v3413 = vadd.f32 %v3381, %v3397
        %v3414 = vadd.f32 %v3382, %v3398
        %v3415 = vadd.f32 %v3399, %v3400
        %v3416 = vadd.f32 %v3415, %v3401
        %v3417 = vadd.f32 %v3416, %v3402
        %v3418 = vadd.f32 %v3417, %v3403
        %v3419 = vadd.f32 %v3418, %v3404
        %v3420 = vadd.f32 %v3419, %v3405
        %v3421 = vadd.f32 %v3420, %v3406
        %v3422 = vadd.f32 %v3421, %v3407
        %v3423 = vadd.f32 %v3422, %v3408
        %v3424 = vadd.f32 %v3423, %v3409
        %v3425 = vadd.f32 %v3424, %v3410
        %v3426 = vadd.f32 %v3425, %v3411
        %v3427 = vadd.f32 %v3426, %v3412
        %v3428 = vadd.f32 %v3427, %v3413
        %v3429 = vadd.f32 %v3428, %v3414
        %v3430 = vrot.slane %v3429, 4
        %v3431 = vadd.f32 %v3429, %v3430
        %v3432 = vrot.slane %v3431, 2
        %v3433 = vadd.f32 %v3431, %v3432
        %v3434 = vrot.slane %v3433, 1
        %v3435 = vadd.f32 %v3433, %v3434
        %v3436 = vadd.f32 %v978, %v3435
        %vm3437 = vcmp.gt.f32.partialorder %v3399, 0.0
        %vm3438 = vcmp.gt.f32.partialorder %v3400, 0.0
        %vm3439 = vcmp.gt.f32.partialorder %v3401, 0.0
        %vm3440 = vcmp.gt.f32.partialorder %v3402, 0.0
        %vm3441 = vcmp.gt.f32.partialorder %v3403, 0.0
        %vm3442 = vcmp.gt.f32.partialorder %v3404, 0.0
        %vm3443 = vcmp.gt.f32.partialorder %v3405, 0.0
        %vm3444 = vcmp.gt.f32.partialorder %v3406, 0.0
        %vm3445 = vcmp.gt.f32.partialorder %v3407, 0.0
        %vm3446 = vcmp.gt.f32.partialorder %v3408, 0.0
        %vm3447 = vcmp.gt.f32.partialorder %v3409, 0.0
        %vm3448 = vcmp.gt.f32.partialorder %v3410, 0.0
        %vm3449 = vcmp.gt.f32.partialorder %v3411, 0.0
        %vm3450 = vcmp.gt.f32.partialorder %v3412, 0.0
        %vm3451 = vcmp.gt.f32.partialorder %v3413, 0.0
        %vm3452 = vcmp.gt.f32.partialorder %v3414, 0.0
        %v3453 = vsel %vm3437, 1, 0
        %v3454 = vsel %vm3438, 1, 0
        %v3455 = vsel %vm3439, 1, 0
        %v3456 = vsel %vm3440, 1, 0
        %v3457 = vsel %vm3441, 1, 0
        %v3458 = vsel %vm3442, 1, 0
        %v3459 = vsel %vm3443, 1, 0
        %v3460 = vsel %vm3444, 1, 0
        %v3461 = vsel %vm3445, 1, 0
        %v3462 = vsel %vm3446, 1, 0
        %v3463 = vsel %vm3447, 1, 0
        %v3464 = vsel %vm3448, 1, 0
        %v3465 = vsel %vm3449, 1, 0
        %v3466 = vsel %vm3450, 1, 0
        %v3467 = vsel %vm3451, 1, 0
        %v3468 = vsel %vm3452, 1, 0
        %v3469 = vcvt.s32.f32 %v3453
        %v3470 = vcvt.s32.f32 %v3454
        %v3471 = vcvt.s32.f32 %v3455
        %v3472 = vcvt.s32.f32 %v3456
        %v3473 = vcvt.s32.f32 %v3457
        %v3474 = vcvt.s32.f32 %v3458
        %v3475 = vcvt.s32.f32 %v3459
        %v3476 = vcvt.s32.f32 %v3460
        %v3477 = vcvt.s32.f32 %v3461
        %v3478 = vcvt.s32.f32 %v3462
        %v3479 = vcvt.s32.f32 %v3463
        %v3480 = vcvt.s32.f32 %v3464
        %v3481 = vcvt.s32.f32 %v3465
        %v3482 = vcvt.s32.f32 %v3466
        %v3483 = vcvt.s32.f32 %v3467
        %v3484 = vcvt.s32.f32 %v3468
        %v3485 = vadd.f32 %v3469, %v3470
        %v3486 = vadd.f32 %v3485, %v3471
        %v3487 = vadd.f32 %v3486, %v3472
        %v3488 = vadd.f32 %v3487, %v3473
        %v3489 = vadd.f32 %v3488, %v3474
        %v3490 = vadd.f32 %v3489, %v3475
        %v3491 = vadd.f32 %v3490, %v3476
        %v3492 = vadd.f32 %v3491, %v3477
        %v3493 = vadd.f32 %v3492, %v3478
        %v3494 = vadd.f32 %v3493, %v3479
        %v3495 = vadd.f32 %v3494, %v3480
        %v3496 = vadd.f32 %v3495, %v3481
        %v3497 = vadd.f32 %v3496, %v3482
        %v3498 = vadd.f32 %v3497, %v3483
        %v3499 = vadd.f32 %v3498, %v3484
        %v3500 = vrot.slane %v3499, 4
        %v3501 = vadd.f32 %v3499, %v3500
        %v3502 = vrot.slane %v3501, 2
        %v3503 = vadd.f32 %v3501, %v3502
        %v3504 = vrot.slane %v3503, 1
        %v3505 = vadd.f32 %v3503, %v3504
        %v3506 = vadd.f32 %v1048, %v3505
        %v3507 = vpack.c.bf16 %v2935, %v2934
        %v3508 = vpack.c.bf16 %v2937, %v2936
        %v3509 = vpack.c.bf16 %v2939, %v2938
        %v3510 = vpack.c.bf16 %v2941, %v2940
        %v3511 = vpack.c.bf16 %v2943, %v2942
        %v3512 = vpack.c.bf16 %v2945, %v2944
        %v3513 = vpack.c.bf16 %v2947, %v2946
        %v3514 = vpack.c.bf16 %v2949, %v2948
        %v3515 = vld [vmem:[%s3] sm:$0xff]
        %v3516 = vld [vmem:[%s3 + $0x8] sm:$0xf]
        %v3517 = vld [vmem:[%s3 + $0xc] sm:$0xff]
        %v3518 = vld [vmem:[%s3 + $0x14] sm:$0xf]
        %v3519 = vld [vmem:[%s3 + $0x18] sm:$0xff]
        %v3520 = vld [vmem:[%s3 + $0x20] sm:$0xf]
        %v3521 = vld [vmem:[%s3 + $0x24] sm:$0xff]
        %v3522 = vld [vmem:[%s3 + $0x2c] sm:$0xf]
        %v3523 = vld [vmem:[%s4] sm:$0x7]
        %v3525 = vlaneseq
        %v3526 = vshrl.u32 %v3525, 7
        %v3527 = vsub.s32 0, %v3526
        %v3528 = vrot.slane %v3523, %v3527
        %v3529 = vlaneseq
        %v3530 = vshrl.u32 %v3529, 7
        %v3531 = vsub.s32 1, %v3530
        %v3532 = vrot.slane %v3523, %v3531
        %v3533 = vlaneseq
        %v3534 = vshrl.u32 %v3533, 7
        %v3535 = vsub.s32 2, %v3534
        %v3536 = vrot.slane %v3523, %v3535
        %v3548 = vunpack.c.l.b16 %v3515
        %v3549 = vunpack.c.h.b16 %v3515
        %v3550 = vunpack.c.l.b16 %v3516
        %v3551 = vunpack.c.l.b16 %v3517
        %v3552 = vunpack.c.h.b16 %v3517
        %v3553 = vunpack.c.l.b16 %v3518
        %v3554 = vunpack.c.l.b16 %v3519
        %v3555 = vunpack.c.h.b16 %v3519
        %v3556 = vunpack.c.l.b16 %v3520
        %v3557 = vunpack.c.l.b16 %v3521
        %v3558 = vunpack.c.h.b16 %v3521
        %v3559 = vunpack.c.l.b16 %v3522
        %v3560 = vpack.c.b16 %v3551, %v3548
        %v3561 = vpack.c.b16 %v3552, %v3549
        %v3562 = vpack.c.b16 %v3553, %v3550
        %v3563 = vpack.c.b16 %v3557, %v3554
        %v3564 = vpack.c.b16 %v3558, %v3555
        %v3565 = vpack.c.b16 %v3559, %v3556
        %v3573 = vsel %vm491, %v3507, 0
        %v3576 = vsel %vm491, %v3508, 0
        %v3579 = vsel %vm491, %v3509, 0
        %v3582 = vsel %vm491, %v3510, 0
        %v3585 = vsel %vm491, %v3511, 0
        %v3588 = vsel %vm491, %v3512, 0
        %v3591 = vsel %vm491, %v3513, 0
        %v3594 = vsel %vm491, %v3514, 0
        %3596 = vmatprep.subr.bf16.mxu0 %v3561
        %3597 = vmatpush1.bf16.msra.mxu0 %v3560
        %3598 = vmatprep.subr.bf16.mxu0 %v3564
        %3599 = vmatpush1.bf16.msra.mxu0 %v3563
        %3600 = vmatprep.subr.bf16.mxu0 0
        %3601 = vmatpush1.bf16.msra.mxu0 0
        %3602 = vmatprep.subr.bf16.mxu0 0
        %3603 = vmatpush1.bf16.msra.mxu0 0
        %3604 = vmatprep.subr.bf16.mxu0 0
        %3605 = vmatpush1.bf16.msra.mxu0 0
        %3606 = vmatprep.subr.bf16.mxu0 0
        %3607 = vmatpush1.bf16.msra.mxu0 0
        %3608 = vmatprep.subr.bf16.mxu0 0
        %3609 = vmatpush1.bf16.msra.mxu0 0
        %3610 = vmatprep.subr.bf16.mxu0 0
        %3611 = vmatpush1.bf16.msra.mxu0 0
        %3612 = vmatprep.subr.bf16.mxu0 0
        %3613 = vmatpush1.bf16.msra.mxu0 0
        %3614 = vmatprep.subr.bf16.mxu0 0
        %3615 = vmatpush1.bf16.msra.mxu0 0
        %3616 = vmatprep.subr.bf16.mxu0 0
        %3617 = vmatpush1.bf16.msra.mxu0 0
        %3618 = vmatprep.subr.bf16.mxu0 0
        %3619 = vmatpush1.bf16.msra.mxu0 0
        %3620 = vmatprep.subr.bf16.mxu0 0
        %3621 = vmatpush1.bf16.msra.mxu0 0
        %3622 = vmatprep.subr.bf16.mxu0 0
        %3623 = vmatpush1.bf16.msra.mxu0 0
        %3624 = vmatprep.subr.bf16.mxu0 0
        %3625 = vmatpush1.bf16.msra.mxu0 0
        %3626 = vmatprep.subr.bf16.mxu0 0
        %3627 = vmatpush1.bf16.msra.mxu0 0
        %3628 = vmatprep.mubr.bf16.mxu0 0
        %3629 = vmatmul.mubr.bf16.gmra.mrb[0].mxu0 %v3573
        %v3630 = vpop.f32.mrb[0].mxu0
        %v3631 = vadd.f32 %v3528, %v3630
        %v3632 = vpop.f32.mrb[0].mxu0
        %v3633 = vadd.f32 %v3532, %v3632
        %v3634 = vpop.f32.mrb[0].mxu0
        %v3635 = vadd.f32 %v3528, %v3634
        %v3636 = vpop.f32.mrb[0].mxu0
        %v3637 = vadd.f32 %v3532, %v3636
        %3638 = vmatprep.mubr.bf16.mxu0 0
        %3639 = vmatmul.mubr.bf16.gmra.mrb[0].mxu0 %v3576
        %v3640 = vpop.f32.mrb[0].mxu0
        %v3641 = vadd.f32 %v3528, %v3640
        %v3642 = vpop.f32.mrb[0].mxu0
        %v3643 = vadd.f32 %v3532, %v3642
        %v3644 = vpop.f32.mrb[0].mxu0
        %v3645 = vadd.f32 %v3528, %v3644
        %v3646 = vpop.f32.mrb[0].mxu0
        %v3647 = vadd.f32 %v3532, %v3646
        %3648 = vmatprep.mubr.bf16.mxu0 0
        %3649 = vmatmul.mubr.bf16.gmra.mrb[0].mxu0 %v3579
        %v3650 = vpop.f32.mrb[0].mxu0
        %v3651 = vadd.f32 %v3528, %v3650
        %v3652 = vpop.f32.mrb[0].mxu0
        %v3653 = vadd.f32 %v3532, %v3652
        %v3654 = vpop.f32.mrb[0].mxu0
        %v3655 = vadd.f32 %v3528, %v3654
        %v3656 = vpop.f32.mrb[0].mxu0
        %v3657 = vadd.f32 %v3532, %v3656
        %3658 = vmatprep.mubr.bf16.mxu0 0
        %3659 = vmatmul.mubr.bf16.gmra.mrb[0].mxu0 %v3582
        %v3660 = vpop.f32.mrb[0].mxu0
        %v3661 = vadd.f32 %v3528, %v3660
        %v3662 = vpop.f32.mrb[0].mxu0
        %v3663 = vadd.f32 %v3532, %v3662
        %v3664 = vpop.f32.mrb[0].mxu0
        %v3665 = vadd.f32 %v3528, %v3664
        %v3666 = vpop.f32.mrb[0].mxu0
        %v3667 = vadd.f32 %v3532, %v3666
        %3668 = vmatprep.mubr.bf16.mxu0 0
        %3669 = vmatmul.mubr.bf16.gmra.mrb[0].mxu0 %v3585
        %v3670 = vpop.f32.mrb[0].mxu0
        %v3671 = vadd.f32 %v3528, %v3670
        %v3672 = vpop.f32.mrb[0].mxu0
        %v3673 = vadd.f32 %v3532, %v3672
        %v3674 = vpop.f32.mrb[0].mxu0
        %v3675 = vadd.f32 %v3528, %v3674
        %v3676 = vpop.f32.mrb[0].mxu0
        %v3677 = vadd.f32 %v3532, %v3676
        %3678 = vmatprep.mubr.bf16.mxu0 0
        %3679 = vmatmul.mubr.bf16.gmra.mrb[0].mxu0 %v3588
        %v3680 = vpop.f32.mrb[0].mxu0
        %v3681 = vadd.f32 %v3528, %v3680
        %v3682 = vpop.f32.mrb[0].mxu0
        %v3683 = vadd.f32 %v3532, %v3682
        %v3684 = vpop.f32.mrb[0].mxu0
        %v3685 = vadd.f32 %v3528, %v3684
        %v3686 = vpop.f32.mrb[0].mxu0
        %v3687 = vadd.f32 %v3532, %v3686
        %3688 = vmatprep.mubr.bf16.mxu0 0
        %3689 = vmatmul.mubr.bf16.gmra.mrb[0].mxu0 %v3591
        %v3690 = vpop.f32.mrb[0].mxu0
        %v3691 = vadd.f32 %v3528, %v3690
        %v3692 = vpop.f32.mrb[0].mxu0
        %v3693 = vadd.f32 %v3532, %v3692
        %v3694 = vpop.f32.mrb[0].mxu0
        %v3695 = vadd.f32 %v3528, %v3694
        %v3696 = vpop.f32.mrb[0].mxu0
        %v3697 = vadd.f32 %v3532, %v3696
        %3698 = vmatprep.mubr.bf16.mxu0 0
        %3699 = vmatmul.mubr.bf16.gmra.mrb[0].mxu0 %v3594
        %v3700 = vpop.f32.mrb[0].mxu0
        %v3701 = vadd.f32 %v3528, %v3700
        %v3702 = vpop.f32.mrb[0].mxu0
        %v3703 = vadd.f32 %v3532, %v3702
        %v3704 = vpop.f32.mrb[0].mxu0
        %v3705 = vadd.f32 %v3528, %v3704
        %v3706 = vpop.f32.mrb[0].mxu0
        %v3707 = vadd.f32 %v3532, %v3706
        %3708 = vdwg.mxu0
        %3709 = vmatprep.subr.bf16.mxu0 0
        %3710 = vmatpush1.bf16.msra.mxu0 %v3562
        %3711 = vmatprep.subr.bf16.mxu0 0
        %3712 = vmatpush1.bf16.msra.mxu0 %v3565
        %3713 = vmatprep.subr.bf16.mxu0 0
        %3714 = vmatpush1.bf16.msra.mxu0 0
        %3715 = vmatprep.subr.bf16.mxu0 0
        %3716 = vmatpush1.bf16.msra.mxu0 0
        %3717 = vmatprep.subr.bf16.mxu0 0
        %3718 = vmatpush1.bf16.msra.mxu0 0
        %3719 = vmatprep.subr.bf16.mxu0 0
        %3720 = vmatpush1.bf16.msra.mxu0 0
        %3721 = vmatprep.subr.bf16.mxu0 0
        %3722 = vmatpush1.bf16.msra.mxu0 0
        %3723 = vmatprep.subr.bf16.mxu0 0
        %3724 = vmatpush1.bf16.msra.mxu0 0
        %3725 = vmatprep.subr.bf16.mxu0 0
        %3726 = vmatpush1.bf16.msra.mxu0 0
        %3727 = vmatprep.subr.bf16.mxu0 0
        %3728 = vmatpush1.bf16.msra.mxu0 0
        %3729 = vmatprep.subr.bf16.mxu0 0
        %3730 = vmatpush1.bf16.msra.mxu0 0
        %3731 = vmatprep.subr.bf16.mxu0 0
        %3732 = vmatpush1.bf16.msra.mxu0 0
        %3733 = vmatprep.subr.bf16.mxu0 0
        %3734 = vmatpush1.bf16.msra.mxu0 0
        %3735 = vmatprep.subr.bf16.mxu0 0
        %3736 = vmatpush1.bf16.msra.mxu0 0
        %3737 = vmatprep.subr.bf16.mxu0 0
        %3738 = vmatpush1.bf16.msra.mxu0 0
        %3739 = vmatprep.subr.bf16.mxu0 0
        %3740 = vmatpush1.bf16.msra.mxu0 0
        %3741 = vmatprep.mubr.bf16.mxu0 0
        %3742 = vmatmul.mubr.bf16.gmra.mrb[0].mxu0 %v3573
        %v3743 = vpop.f32.mrb[0].mxu0
        %v3744 = vadd.f32 %v3536, %v3743
        %v3745 = vpop.f32.mrb[0].mxu0
        %v3746 = vpop.f32.mrb[0].mxu0
        %v3747 = vadd.f32 %v3536, %v3746
        %v3748 = vpop.f32.mrb[0].mxu0
        %3749 = vmatprep.mubr.bf16.mxu0 0
        %3750 = vmatmul.mubr.bf16.gmra.mrb[0].mxu0 %v3576
        %v3751 = vpop.f32.mrb[0].mxu0
        %v3752 = vadd.f32 %v3536, %v3751
        %v3753 = vpop.f32.mrb[0].mxu0
        %v3754 = vpop.f32.mrb[0].mxu0
        %v3755 = vadd.f32 %v3536, %v3754
        %v3756 = vpop.f32.mrb[0].mxu0
        %3757 = vmatprep.mubr.bf16.mxu0 0
        %3758 = vmatmul.mubr.bf16.gmra.mrb[0].mxu0 %v3579
        %v3759 = vpop.f32.mrb[0].mxu0
        %v3760 = vadd.f32 %v3536, %v3759
        %v3761 = vpop.f32.mrb[0].mxu0
        %v3762 = vpop.f32.mrb[0].mxu0
        %v3763 = vadd.f32 %v3536, %v3762
        %v3764 = vpop.f32.mrb[0].mxu0
        %3765 = vmatprep.mubr.bf16.mxu0 0
        %3766 = vmatmul.mubr.bf16.gmra.mrb[0].mxu0 %v3582
        %v3767 = vpop.f32.mrb[0].mxu0
        %v3768 = vadd.f32 %v3536, %v3767
        %v3769 = vpop.f32.mrb[0].mxu0
        %v3770 = vpop.f32.mrb[0].mxu0
        %v3771 = vadd.f32 %v3536, %v3770
        %v3772 = vpop.f32.mrb[0].mxu0
        %3773 = vmatprep.mubr.bf16.mxu0 0
        %3774 = vmatmul.mubr.bf16.gmra.mrb[0].mxu0 %v3585
        %v3775 = vpop.f32.mrb[0].mxu0
        %v3776 = vadd.f32 %v3536, %v3775
        %v3777 = vpop.f32.mrb[0].mxu0
        %v3778 = vpop.f32.mrb[0].mxu0
        %v3779 = vadd.f32 %v3536, %v3778
        %v3780 = vpop.f32.mrb[0].mxu0
        %3781 = vmatprep.mubr.bf16.mxu0 0
        %3782 = vmatmul.mubr.bf16.gmra.mrb[0].mxu0 %v3588
        %v3783 = vpop.f32.mrb[0].mxu0
        %v3784 = vadd.f32 %v3536, %v3783
        %v3785 = vpop.f32.mrb[0].mxu0
        %v3786 = vpop.f32.mrb[0].mxu0
        %v3787 = vadd.f32 %v3536, %v3786
        %v3788 = vpop.f32.mrb[0].mxu0
        %3789 = vmatprep.mubr.bf16.mxu0 0
        %3790 = vmatmul.mubr.bf16.gmra.mrb[0].mxu0 %v3591
        %v3791 = vpop.f32.mrb[0].mxu0
        %v3792 = vadd.f32 %v3536, %v3791
        %v3793 = vpop.f32.mrb[0].mxu0
        %v3794 = vpop.f32.mrb[0].mxu0
        %v3795 = vadd.f32 %v3536, %v3794
        %v3796 = vpop.f32.mrb[0].mxu0
        %3797 = vmatprep.mubr.bf16.mxu0 0
        %3798 = vmatmul.mubr.bf16.gmra.mrb[0].mxu0 %v3594
        %v3799 = vpop.f32.mrb[0].mxu0
        %v3800 = vadd.f32 %v3536, %v3799
        %v3801 = vpop.f32.mrb[0].mxu0
        %v3802 = vpop.f32.mrb[0].mxu0
        %v3803 = vadd.f32 %v3536, %v3802
        %v3804 = vpop.f32.mrb[0].mxu0
        %3805 = vdwg.mxu0
        %v3806 = vmul.f32 %v3631, 0.5
        %v3807 = vmul.f32 %v3633, 0.5
        %v3808 = vmul.f32 %v3744, 0.5
        %v3809 = vmul.f32 %v3635, 0.5
        %v3810 = vmul.f32 %v3637, 0.5
        %v3811 = vmul.f32 %v3747, 0.5
        %v3812 = vmul.f32 %v3641, 0.5
        %v3813 = vmul.f32 %v3643, 0.5
        %v3814 = vmul.f32 %v3752, 0.5
        %v3815 = vmul.f32 %v3645, 0.5
        %v3816 = vmul.f32 %v3647, 0.5
        %v3817 = vmul.f32 %v3755, 0.5
        %v3818 = vmul.f32 %v3651, 0.5
        %v3819 = vmul.f32 %v3653, 0.5
        %v3820 = vmul.f32 %v3760, 0.5
        %v3821 = vmul.f32 %v3655, 0.5
        %v3822 = vmul.f32 %v3657, 0.5
        %v3823 = vmul.f32 %v3763, 0.5
        %v3824 = vmul.f32 %v3661, 0.5
        %v3825 = vmul.f32 %v3663, 0.5
        %v3826 = vmul.f32 %v3768, 0.5
        %v3827 = vmul.f32 %v3665, 0.5
        %v3828 = vmul.f32 %v3667, 0.5
        %v3829 = vmul.f32 %v3771, 0.5
        %v3830 = vmul.f32 %v3671, 0.5
        %v3831 = vmul.f32 %v3673, 0.5
        %v3832 = vmul.f32 %v3776, 0.5
        %v3833 = vmul.f32 %v3675, 0.5
        %v3834 = vmul.f32 %v3677, 0.5
        %v3835 = vmul.f32 %v3779, 0.5
        %v3836 = vmul.f32 %v3681, 0.5
        %v3837 = vmul.f32 %v3683, 0.5
        %v3838 = vmul.f32 %v3784, 0.5
        %v3839 = vmul.f32 %v3685, 0.5
        %v3840 = vmul.f32 %v3687, 0.5
        %v3841 = vmul.f32 %v3787, 0.5
        %v3842 = vmul.f32 %v3691, 0.5
        %v3843 = vmul.f32 %v3693, 0.5
        %v3844 = vmul.f32 %v3792, 0.5
        %v3845 = vmul.f32 %v3695, 0.5
        %v3846 = vmul.f32 %v3697, 0.5
        %v3847 = vmul.f32 %v3795, 0.5
        %v3848 = vmul.f32 %v3701, 0.5
        %v3849 = vmul.f32 %v3703, 0.5
        %v3850 = vmul.f32 %v3800, 0.5
        %v3851 = vmul.f32 %v3705, 0.5
        %v3852 = vmul.f32 %v3707, 0.5
        %v3853 = vmul.f32 %v3803, 0.5
        %v3854 = vmul.f32 %v3631, 0.044715
        %v3855 = vmul.f32 %v3633, 0.044715
        %v3856 = vmul.f32 %v3744, 0.044715
        %v3857 = vmul.f32 %v3635, 0.044715
        %v3858 = vmul.f32 %v3637, 0.044715
        %v3859 = vmul.f32 %v3747, 0.044715
        %v3860 = vmul.f32 %v3641, 0.044715
        %v3861 = vmul.f32 %v3643, 0.044715
        %v3862 = vmul.f32 %v3752, 0.044715
        %v3863 = vmul.f32 %v3645, 0.044715
        %v3864 = vmul.f32 %v3647, 0.044715
        %v3865 = vmul.f32 %v3755, 0.044715
        %v3866 = vmul.f32 %v3651, 0.044715
        %v3867 = vmul.f32 %v3653, 0.044715
        %v3868 = vmul.f32 %v3760, 0.044715
        %v3869 = vmul.f32 %v3655, 0.044715
        %v3870 = vmul.f32 %v3657, 0.044715
        %v3871 = vmul.f32 %v3763, 0.044715
        %v3872 = vmul.f32 %v3661, 0.044715
        %v3873 = vmul.f32 %v3663, 0.044715
        %v3874 = vmul.f32 %v3768, 0.044715
        %v3875 = vmul.f32 %v3665, 0.044715
        %v3876 = vmul.f32 %v3667, 0.044715
        %v3877 = vmul.f32 %v3771, 0.044715
        %v3878 = vmul.f32 %v3671, 0.044715
        %v3879 = vmul.f32 %v3673, 0.044715
        %v3880 = vmul.f32 %v3776, 0.044715
        %v3881 = vmul.f32 %v3675, 0.044715
        %v3882 = vmul.f32 %v3677, 0.044715
        %v3883 = vmul.f32 %v3779, 0.044715
        %v3884 = vmul.f32 %v3681, 0.044715
        %v3885 = vmul.f32 %v3683, 0.044715
        %v3886 = vmul.f32 %v3784, 0.044715
        %v3887 = vmul.f32 %v3685, 0.044715
        %v3888 = vmul.f32 %v3687, 0.044715
        %v3889 = vmul.f32 %v3787, 0.044715
        %v3890 = vmul.f32 %v3691, 0.044715
        %v3891 = vmul.f32 %v3693, 0.044715
        %v3892 = vmul.f32 %v3792, 0.044715
        %v3893 = vmul.f32 %v3695, 0.044715
        %v3894 = vmul.f32 %v3697, 0.044715
        %v3895 = vmul.f32 %v3795, 0.044715
        %v3896 = vmul.f32 %v3701, 0.044715
        %v3897 = vmul.f32 %v3703, 0.044715
        %v3898 = vmul.f32 %v3800, 0.044715
        %v3899 = vmul.f32 %v3705, 0.044715
        %v3900 = vmul.f32 %v3707, 0.044715
        %v3901 = vmul.f32 %v3803, 0.044715
        %v3902 = vmul.f32 %v3854, %v3631
        %v3903 = vmul.f32 %v3855, %v3633
        %v3904 = vmul.f32 %v3856, %v3744
        %v3905 = vmul.f32 %v3857, %v3635
        %v3906 = vmul.f32 %v3858, %v3637
        %v3907 = vmul.f32 %v3859, %v3747
        %v3908 = vmul.f32 %v3860, %v3641
        %v3909 = vmul.f32 %v3861, %v3643
        %v3910 = vmul.f32 %v3862, %v3752
        %v3911 = vmul.f32 %v3863, %v3645
        %v3912 = vmul.f32 %v3864, %v3647
        %v3913 = vmul.f32 %v3865, %v3755
        %v3914 = vmul.f32 %v3866, %v3651
        %v3915 = vmul.f32 %v3867, %v3653
        %v3916 = vmul.f32 %v3868, %v3760
        %v3917 = vmul.f32 %v3869, %v3655
        %v3918 = vmul.f32 %v3870, %v3657
        %v3919 = vmul.f32 %v3871, %v3763
        %v3920 = vmul.f32 %v3872, %v3661
        %v3921 = vmul.f32 %v3873, %v3663
        %v3922 = vmul.f32 %v3874, %v3768
        %v3923 = vmul.f32 %v3875, %v3665
        %v3924 = vmul.f32 %v3876, %v3667
        %v3925 = vmul.f32 %v3877, %v3771
        %v3926 = vmul.f32 %v3878, %v3671
        %v3927 = vmul.f32 %v3879, %v3673
        %v3928 = vmul.f32 %v3880, %v3776
        %v3929 = vmul.f32 %v3881, %v3675
        %v3930 = vmul.f32 %v3882, %v3677
        %v3931 = vmul.f32 %v3883, %v3779
        %v3932 = vmul.f32 %v3884, %v3681
        %v3933 = vmul.f32 %v3885, %v3683
        %v3934 = vmul.f32 %v3886, %v3784
        %v3935 = vmul.f32 %v3887, %v3685
        %v3936 = vmul.f32 %v3888, %v3687
        %v3937 = vmul.f32 %v3889, %v3787
        %v3938 = vmul.f32 %v3890, %v3691
        %v3939 = vmul.f32 %v3891, %v3693
        %v3940 = vmul.f32 %v3892, %v3792
        %v3941 = vmul.f32 %v3893, %v3695
        %v3942 = vmul.f32 %v3894, %v3697
        %v3943 = vmul.f32 %v3895, %v3795
        %v3944 = vmul.f32 %v3896, %v3701
        %v3945 = vmul.f32 %v3897, %v3703
        %v3946 = vmul.f32 %v3898, %v3800
        %v3947 = vmul.f32 %v3899, %v3705
        %v3948 = vmul.f32 %v3900, %v3707
        %v3949 = vmul.f32 %v3901, %v3803
        %v3950 = vmul.f32 %v3902, %v3631
        %v3951 = vmul.f32 %v3903, %v3633
        %v3952 = vmul.f32 %v3904, %v3744
        %v3953 = vmul.f32 %v3905, %v3635
        %v3954 = vmul.f32 %v3906, %v3637
        %v3955 = vmul.f32 %v3907, %v3747
        %v3956 = vmul.f32 %v3908, %v3641
        %v3957 = vmul.f32 %v3909, %v3643
        %v3958 = vmul.f32 %v3910, %v3752
        %v3959 = vmul.f32 %v3911, %v3645
        %v3960 = vmul.f32 %v3912, %v3647
        %v3961 = vmul.f32 %v3913, %v3755
        %v3962 = vmul.f32 %v3914, %v3651
        %v3963 = vmul.f32 %v3915, %v3653
        %v3964 = vmul.f32 %v3916, %v3760
        %v3965 = vmul.f32 %v3917, %v3655
        %v3966 = vmul.f32 %v3918, %v3657
        %v3967 = vmul.f32 %v3919, %v3763
        %v3968 = vmul.f32 %v3920, %v3661
        %v3969 = vmul.f32 %v3921, %v3663
        %v3970 = vmul.f32 %v3922, %v3768
        %v3971 = vmul.f32 %v3923, %v3665
        %v3972 = vmul.f32 %v3924, %v3667
        %v3973 = vmul.f32 %v3925, %v3771
        %v3974 = vmul.f32 %v3926, %v3671
        %v3975 = vmul.f32 %v3927, %v3673
        %v3976 = vmul.f32 %v3928, %v3776
        %v3977 = vmul.f32 %v3929, %v3675
        %v3978 = vmul.f32 %v3930, %v3677
        %v3979 = vmul.f32 %v3931, %v3779
        %v3980 = vmul.f32 %v3932, %v3681
        %v3981 = vmul.f32 %v3933, %v3683
        %v3982 = vmul.f32 %v3934, %v3784
        %v3983 = vmul.f32 %v3935, %v3685
        %v3984 = vmul.f32 %v3936, %v3687
        %v3985 = vmul.f32 %v3937, %v3787
        %v3986 = vmul.f32 %v3938, %v3691
        %v3987 = vmul.f32 %v3939, %v3693
        %v3988 = vmul.f32 %v3940, %v3792
        %v3989 = vmul.f32 %v3941, %v3695
        %v3990 = vmul.f32 %v3942, %v3697
        %v3991 = vmul.f32 %v3943, %v3795
        %v3992 = vmul.f32 %v3944, %v3701
        %v3993 = vmul.f32 %v3945, %v3703
        %v3994 = vmul.f32 %v3946, %v3800
        %v3995 = vmul.f32 %v3947, %v3705
        %v3996 = vmul.f32 %v3948, %v3707
        %v3997 = vmul.f32 %v3949, %v3803
        %v3998 = vadd.f32 %v3631, %v3950
        %v3999 = vadd.f32 %v3633, %v3951
        %v4000 = vadd.f32 %v3744, %v3952
        %v4001 = vadd.f32 %v3635, %v3953
        %v4002 = vadd.f32 %v3637, %v3954
        %v4003 = vadd.f32 %v3747, %v3955
        %v4004 = vadd.f32 %v3641, %v3956
        %v4005 = vadd.f32 %v3643, %v3957
        %v4006 = vadd.f32 %v3752, %v3958
        %v4007 = vadd.f32 %v3645, %v3959
        %v4008 = vadd.f32 %v3647, %v3960
        %v4009 = vadd.f32 %v3755, %v3961
        %v4010 = vadd.f32 %v3651, %v3962
        %v4011 = vadd.f32 %v3653, %v3963
        %v4012 = vadd.f32 %v3760, %v3964
        %v4013 = vadd.f32 %v3655, %v3965
        %v4014 = vadd.f32 %v3657, %v3966
        %v4015 = vadd.f32 %v3763, %v3967
        %v4016 = vadd.f32 %v3661, %v3968
        %v4017 = vadd.f32 %v3663, %v3969
        %v4018 = vadd.f32 %v3768, %v3970
        %v4019 = vadd.f32 %v3665, %v3971
        %v4020 = vadd.f32 %v3667, %v3972
        %v4021 = vadd.f32 %v3771, %v3973
        %v4022 = vadd.f32 %v3671, %v3974
        %v4023 = vadd.f32 %v3673, %v3975
        %v4024 = vadd.f32 %v3776, %v3976
        %v4025 = vadd.f32 %v3675, %v3977
        %v4026 = vadd.f32 %v3677, %v3978
        %v4027 = vadd.f32 %v3779, %v3979
        %v4028 = vadd.f32 %v3681, %v3980
        %v4029 = vadd.f32 %v3683, %v3981
        %v4030 = vadd.f32 %v3784, %v3982
        %v4031 = vadd.f32 %v3685, %v3983
        %v4032 = vadd.f32 %v3687, %v3984
        %v4033 = vadd.f32 %v3787, %v3985
        %v4034 = vadd.f32 %v3691, %v3986
        %v4035 = vadd.f32 %v3693, %v3987
        %v4036 = vadd.f32 %v3792, %v3988
        %v4037 = vadd.f32 %v3695, %v3989
        %v4038 = vadd.f32 %v3697, %v3990
        %v4039 = vadd.f32 %v3795, %v3991
        %v4040 = vadd.f32 %v3701, %v3992
        %v4041 = vadd.f32 %v3703, %v3993
        %v4042 = vadd.f32 %v3800, %v3994
        %v4043 = vadd.f32 %v3705, %v3995
        %v4044 = vadd.f32 %v3707, %v3996
        %v4045 = vadd.f32 %v3803, %v3997
        %v4046 = vmul.f32 %v3998, 0.7978846
        %v4047 = vmul.f32 %v3999, 0.7978846
        %v4048 = vmul.f32 %v4000, 0.7978846
        %v4049 = vmul.f32 %v4001, 0.7978846
        %v4050 = vmul.f32 %v4002, 0.7978846
        %v4051 = vmul.f32 %v4003, 0.7978846
        %v4052 = vmul.f32 %v4004, 0.7978846
        %v4053 = vmul.f32 %v4005, 0.7978846
        %v4054 = vmul.f32 %v4006, 0.7978846
        %v4055 = vmul.f32 %v4007, 0.7978846
        %v4056 = vmul.f32 %v4008, 0.7978846
        %v4057 = vmul.f32 %v4009, 0.7978846
        %v4058 = vmul.f32 %v4010, 0.7978846
        %v4059 = vmul.f32 %v4011, 0.7978846
        %v4060 = vmul.f32 %v4012, 0.7978846
        %v4061 = vmul.f32 %v4013, 0.7978846
        %v4062 = vmul.f32 %v4014, 0.7978846
        %v4063 = vmul.f32 %v4015, 0.7978846
        %v4064 = vmul.f32 %v4016, 0.7978846
        %v4065 = vmul.f32 %v4017, 0.7978846
        %v4066 = vmul.f32 %v4018, 0.7978846
        %v4067 = vmul.f32 %v4019, 0.7978846
        %v4068 = vmul.f32 %v4020, 0.7978846
        %v4069 = vmul.f32 %v4021, 0.7978846
        %v4070 = vmul.f32 %v4022, 0.7978846
        %v4071 = vmul.f32 %v4023, 0.7978846
        %v4072 = vmul.f32 %v4024, 0.7978846
        %v4073 = vmul.f32 %v4025, 0.7978846
        %v4074 = vmul.f32 %v4026, 0.7978846
        %v4075 = vmul.f32 %v4027, 0.7978846
        %v4076 = vmul.f32 %v4028, 0.7978846
        %v4077 = vmul.f32 %v4029, 0.7978846
        %v4078 = vmul.f32 %v4030, 0.7978846
        %v4079 = vmul.f32 %v4031, 0.7978846
        %v4080 = vmul.f32 %v4032, 0.7978846
        %v4081 = vmul.f32 %v4033, 0.7978846
        %v4082 = vmul.f32 %v4034, 0.7978846
        %v4083 = vmul.f32 %v4035, 0.7978846
        %v4084 = vmul.f32 %v4036, 0.7978846
        %v4085 = vmul.f32 %v4037, 0.7978846
        %v4086 = vmul.f32 %v4038, 0.7978846
        %v4087 = vmul.f32 %v4039, 0.7978846
        %v4088 = vmul.f32 %v4040, 0.7978846
        %v4089 = vmul.f32 %v4041, 0.7978846
        %v4090 = vmul.f32 %v4042, 0.7978846
        %v4091 = vmul.f32 %v4043, 0.7978846
        %v4092 = vmul.f32 %v4044, 0.7978846
        %v4093 = vmul.f32 %v4045, 0.7978846
        %v4094 = vtanh.pop %v4046
        %v4095 = vtanh.pop %v4047
        %v4096 = vtanh.pop %v4048
        %v4097 = vtanh.pop %v4049
        %v4098 = vtanh.pop %v4050
        %v4099 = vtanh.pop %v4051
        %v4100 = vtanh.pop %v4052
        %v4101 = vtanh.pop %v4053
        %v4102 = vtanh.pop %v4054
        %v4103 = vtanh.pop %v4055
        %v4104 = vtanh.pop %v4056
        %v4105 = vtanh.pop %v4057
        %v4106 = vtanh.pop %v4058
        %v4107 = vtanh.pop %v4059
        %v4108 = vtanh.pop %v4060
        %v4109 = vtanh.pop %v4061
        %v4110 = vtanh.pop %v4062
        %v4111 = vtanh.pop %v4063
        %v4112 = vtanh.pop %v4064
        %v4113 = vtanh.pop %v4065
        %v4114 = vtanh.pop %v4066
        %v4115 = vtanh.pop %v4067
        %v4116 = vtanh.pop %v4068
        %v4117 = vtanh.pop %v4069
        %v4118 = vtanh.pop %v4070
        %v4119 = vtanh.pop %v4071
        %v4120 = vtanh.pop %v4072
        %v4121 = vtanh.pop %v4073
        %v4122 = vtanh.pop %v4074
        %v4123 = vtanh.pop %v4075
        %v4124 = vtanh.pop %v4076
        %v4125 = vtanh.pop %v4077
        %v4126 = vtanh.pop %v4078
        %v4127 = vtanh.pop %v4079
        %v4128 = vtanh.pop %v4080
        %v4129 = vtanh.pop %v4081
        %v4130 = vtanh.pop %v4082
        %v4131 = vtanh.pop %v4083
        %v4132 = vtanh.pop %v4084
        %v4133 = vtanh.pop %v4085
        %v4134 = vtanh.pop %v4086
        %v4135 = vtanh.pop %v4087
        %v4136 = vtanh.pop %v4088
        %v4137 = vtanh.pop %v4089
        %v4138 = vtanh.pop %v4090
        %v4139 = vtanh.pop %v4091
        %v4140 = vtanh.pop %v4092
        %v4141 = vtanh.pop %v4093
        %v4142 = vadd.f32 %v4094, 1.0
        %v4143 = vadd.f32 %v4095, 1.0
        %v4144 = vadd.f32 %v4096, 1.0
        %v4145 = vadd.f32 %v4097, 1.0
        %v4146 = vadd.f32 %v4098, 1.0
        %v4147 = vadd.f32 %v4099, 1.0
        %v4148 = vadd.f32 %v4100, 1.0
        %v4149 = vadd.f32 %v4101, 1.0
        %v4150 = vadd.f32 %v4102, 1.0
        %v4151 = vadd.f32 %v4103, 1.0
        %v4152 = vadd.f32 %v4104, 1.0
        %v4153 = vadd.f32 %v4105, 1.0
        %v4154 = vadd.f32 %v4106, 1.0
        %v4155 = vadd.f32 %v4107, 1.0
        %v4156 = vadd.f32 %v4108, 1.0
        %v4157 = vadd.f32 %v4109, 1.0
        %v4158 = vadd.f32 %v4110, 1.0
        %v4159 = vadd.f32 %v4111, 1.0
        %v4160 = vadd.f32 %v4112, 1.0
        %v4161 = vadd.f32 %v4113, 1.0
        %v4162 = vadd.f32 %v4114, 1.0
        %v4163 = vadd.f32 %v4115, 1.0
        %v4164 = vadd.f32 %v4116, 1.0
        %v4165 = vadd.f32 %v4117, 1.0
        %v4166 = vadd.f32 %v4118, 1.0
        %v4167 = vadd.f32 %v4119, 1.0
        %v4168 = vadd.f32 %v4120, 1.0
        %v4169 = vadd.f32 %v4121, 1.0
        %v4170 = vadd.f32 %v4122, 1.0
        %v4171 = vadd.f32 %v4123, 1.0
        %v4172 = vadd.f32 %v4124, 1.0
        %v4173 = vadd.f32 %v4125, 1.0
        %v4174 = vadd.f32 %v4126, 1.0
        %v4175 = vadd.f32 %v4127, 1.0
        %v4176 = vadd.f32 %v4128, 1.0
        %v4177 = vadd.f32 %v4129, 1.0
        %v4178 = vadd.f32 %v4130, 1.0
        %v4179 = vadd.f32 %v4131, 1.0
        %v4180 = vadd.f32 %v4132, 1.0
        %v4181 = vadd.f32 %v4133, 1.0
        %v4182 = vadd.f32 %v4134, 1.0
        %v4183 = vadd.f32 %v4135, 1.0
        %v4184 = vadd.f32 %v4136, 1.0
        %v4185 = vadd.f32 %v4137, 1.0
        %v4186 = vadd.f32 %v4138, 1.0
        %v4187 = vadd.f32 %v4139, 1.0
        %v4188 = vadd.f32 %v4140, 1.0
        %v4189 = vadd.f32 %v4141, 1.0
        %v4190 = vmul.f32 %v3806, %v4142
        %v4191 = vmul.f32 %v3807, %v4143
        %v4192 = vmul.f32 %v3808, %v4144
        %v4193 = vmul.f32 %v3809, %v4145
        %v4194 = vmul.f32 %v3810, %v4146
        %v4195 = vmul.f32 %v3811, %v4147
        %v4196 = vmul.f32 %v3812, %v4148
        %v4197 = vmul.f32 %v3813, %v4149
        %v4198 = vmul.f32 %v3814, %v4150
        %v4199 = vmul.f32 %v3815, %v4151
        %v4200 = vmul.f32 %v3816, %v4152
        %v4201 = vmul.f32 %v3817, %v4153
        %v4202 = vmul.f32 %v3818, %v4154
        %v4203 = vmul.f32 %v3819, %v4155
        %v4204 = vmul.f32 %v3820, %v4156
        %v4205 = vmul.f32 %v3821, %v4157
        %v4206 = vmul.f32 %v3822, %v4158
        %v4207 = vmul.f32 %v3823, %v4159
        %v4208 = vmul.f32 %v3824, %v4160
        %v4209 = vmul.f32 %v3825, %v4161
        %v4210 = vmul.f32 %v3826, %v4162
        %v4211 = vmul.f32 %v3827, %v4163
        %v4212 = vmul.f32 %v3828, %v4164
        %v4213 = vmul.f32 %v3829, %v4165
        %v4214 = vmul.f32 %v3830, %v4166
        %v4215 = vmul.f32 %v3831, %v4167
        %v4216 = vmul.f32 %v3832, %v4168
        %v4217 = vmul.f32 %v3833, %v4169
        %v4218 = vmul.f32 %v3834, %v4170
        %v4219 = vmul.f32 %v3835, %v4171
        %v4220 = vmul.f32 %v3836, %v4172
        %v4221 = vmul.f32 %v3837, %v4173
        %v4222 = vmul.f32 %v3838, %v4174
        %v4223 = vmul.f32 %v3839, %v4175
        %v4224 = vmul.f32 %v3840, %v4176
        %v4225 = vmul.f32 %v3841, %v4177
        %v4226 = vmul.f32 %v3842, %v4178
        %v4227 = vmul.f32 %v3843, %v4179
        %v4228 = vmul.f32 %v3844, %v4180
        %v4229 = vmul.f32 %v3845, %v4181
        %v4230 = vmul.f32 %v3846, %v4182
        %v4231 = vmul.f32 %v3847, %v4183
        %v4232 = vmul.f32 %v3848, %v4184
        %v4233 = vmul.f32 %v3849, %v4185
        %v4234 = vmul.f32 %v3850, %v4186
        %v4235 = vmul.f32 %v3851, %v4187
        %v4236 = vmul.f32 %v3852, %v4188
        %v4237 = vmul.f32 %v3853, %v4189
        %v4238 = vpack.c.bf16 %v4193, %v4190
        %v4239 = vpack.c.bf16 %v4194, %v4191
        %v4240 = vpack.c.bf16 %v4195, %v4192
        %v4241 = vpack.c.bf16 %v4199, %v4196
        %v4242 = vpack.c.bf16 %v4200, %v4197
        %v4243 = vpack.c.bf16 %v4201, %v4198
        %v4244 = vpack.c.bf16 %v4205, %v4202
        %v4245 = vpack.c.bf16 %v4206, %v4203
        %v4246 = vpack.c.bf16 %v4207, %v4204
        %v4247 = vpack.c.bf16 %v4211, %v4208
        %v4248 = vpack.c.bf16 %v4212, %v4209
        %v4249 = vpack.c.bf16 %v4213, %v4210
        %v4250 = vpack.c.bf16 %v4217, %v4214
        %v4251 = vpack.c.bf16 %v4218, %v4215
        %v4252 = vpack.c.bf16 %v4219, %v4216
        %v4253 = vpack.c.bf16 %v4223, %v4220
        %v4254 = vpack.c.bf16 %v4224, %v4221
        %v4255 = vpack.c.bf16 %v4225, %v4222
        %v4256 = vpack.c.bf16 %v4229, %v4226
        %v4257 = vpack.c.bf16 %v4230, %v4227
        %v4258 = vpack.c.bf16 %v4231, %v4228
        %v4259 = vpack.c.bf16 %v4235, %v4232
        %v4260 = vpack.c.bf16 %v4236, %v4233
        %v4261 = vpack.c.bf16 %v4237, %v4234
        %v4262 = vld [vmem:[%s5] sm:$0xff]
        %v4263 = vld [vmem:[%s5 + $0x8] sm:$0xff]
        %v4264 = vld [vmem:[%s5 + $0x10] sm:$0xff]
        %v4265 = vld [vmem:[%s5 + $0x18] sm:$0xff]
        %v4266 = vld [vmem:[%s5 + $0x20] sm:$0xff]
        %v4267 = vld [vmem:[%s5 + $0x28] sm:$0xff]
        %v4268 = vld [vmem:[%s5 + $0x30] sm:$0xff]
        %v4269 = vld [vmem:[%s5 + $0x38] sm:$0xff]
        %v4270 = vld [vmem:[%s5 + $0x40] sm:$0xff]
        %v4271 = vld [vmem:[%s5 + $0x48] sm:$0xff]
        %v4272 = vld [vmem:[%s5 + $0x50] sm:$0xff]
        %v4273 = vld [vmem:[%s5 + $0x58] sm:$0xff]
        %v4274 = vld [vmem:[%s5 + $0x60] sm:$0xff]
        %v4275 = vld [vmem:[%s5 + $0x68] sm:$0xff]
        %v4276 = vld [vmem:[%s5 + $0x70] sm:$0xff]
        %v4277 = vld [vmem:[%s5 + $0x78] sm:$0xff]
        %v4278 = vld [vmem:[%s5 + $0x80] sm:$0xff]
        %v4279 = vld [vmem:[%s5 + $0x88] sm:$0xff]
        %v4280 = vld [vmem:[%s5 + $0x90] sm:$0xff]
        %v4281 = vld [vmem:[%s5 + $0x98] sm:$0xff]
        %v4282 = vld [vmem:[%s5 + $0xa0] sm:$0xff]
        %v4283 = vld [vmem:[%s5 + $0xa8] sm:$0xff]
        %v4284 = vld [vmem:[%s5 + $0xb0] sm:$0xff]
        %v4285 = vld [vmem:[%s5 + $0xb8] sm:$0xff]
        %v4286 = vld [vmem:[%s5 + $0xc0] sm:$0xff]
        %v4287 = vld [vmem:[%s5 + $0xc8] sm:$0xff]
        %v4288 = vld [vmem:[%s5 + $0xd0] sm:$0xff]
        %v4289 = vld [vmem:[%s5 + $0xd8] sm:$0xff]
        %v4290 = vld [vmem:[%s5 + $0xe0] sm:$0xff]
        %v4291 = vld [vmem:[%s5 + $0xe8] sm:$0xff]
        %v4292 = vld [vmem:[%s5 + $0xf0] sm:$0xff]
        %v4293 = vld [vmem:[%s5 + $0xf8] sm:$0xff]
        %v4294 = vld [vmem:[%s5 + $0x100] sm:$0xff]
        %v4295 = vld [vmem:[%s5 + $0x108] sm:$0xff]
        %v4296 = vld [vmem:[%s5 + $0x110] sm:$0xff]
        %v4297 = vld [vmem:[%s5 + $0x118] sm:$0xff]
        %v4298 = vld [vmem:[%s5 + $0x120] sm:$0xff]
        %v4299 = vld [vmem:[%s5 + $0x128] sm:$0xff]
        %v4300 = vld [vmem:[%s5 + $0x130] sm:$0xff]
        %v4301 = vld [vmem:[%s5 + $0x138] sm:$0xff]
        %v4302 = vld [vmem:[%s5 + $0x140] sm:$0xff]
        %v4303 = vld [vmem:[%s5 + $0x148] sm:$0xff]
        %v4304 = vld [vmem:[%s5 + $0x150] sm:$0xff]
        %v4305 = vld [vmem:[%s5 + $0x158] sm:$0xff]
        %v4306 = vld [vmem:[%s5 + $0x160] sm:$0xff]
        %v4307 = vld [vmem:[%s5 + $0x168] sm:$0xff]
        %v4308 = vld [vmem:[%s5 + $0x170] sm:$0xff]
        %v4309 = vld [vmem:[%s5 + $0x178] sm:$0xff]
        %v4310 = vld [vmem:[%s6] sm:$0x3]
        %v4312 = vlaneseq
        %v4313 = vshrl.u32 %v4312, 7
        %v4314 = vsub.s32 0, %v4313
        %v4315 = vrot.slane %v4310, %v4314
        %v4316 = vlaneseq
        %v4317 = vshrl.u32 %v4316, 7
        %v4318 = vsub.s32 1, %v4317
        %v4319 = vrot.slane %v4310, %v4318
        %v4370 = vunpack.c.l.b16 %v4262
        %v4371 = vunpack.c.h.b16 %v4262
        %v4372 = vunpack.c.l.b16 %v4263
        %v4373 = vunpack.c.h.b16 %v4263
        %v4374 = vunpack.c.l.b16 %v4264
        %v4375 = vunpack.c.h.b16 %v4264
        %v4376 = vunpack.c.l.b16 %v4265
        %v4377 = vunpack.c.h.b16 %v4265
        %v4378 = vunpack.c.l.b16 %v4266
        %v4379 = vunpack.c.h.b16 %v4266
        %v4380 = vunpack.c.l.b16 %v4267
        %v4381 = vunpack.c.h.b16 %v4267
        %v4382 = vunpack.c.l.b16 %v4268
        %v4383 = vunpack.c.h.b16 %v4268
        %v4384 = vunpack.c.l.b16 %v4269
        %v4385 = vunpack.c.h.b16 %v4269
        %v4386 = vunpack.c.l.b16 %v4270
        %v4387 = vunpack.c.h.b16 %v4270
        %v4388 = vunpack.c.l.b16 %v4271
        %v4389 = vunpack.c.h.b16 %v4271
        %v4390 = vunpack.c.l.b16 %v4272
        %v4391 = vunpack.c.h.b16 %v4272
        %v4392 = vunpack.c.l.b16 %v4273
        %v4393 = vunpack.c.h.b16 %v4273
        %v4394 = vunpack.c.l.b16 %v4274
        %v4395 = vunpack.c.h.b16 %v4274
        %v4396 = vunpack.c.l.b16 %v4275
        %v4397 = vunpack.c.h.b16 %v4275
        %v4398 = vunpack.c.l.b16 %v4276
        %v4399 = vunpack.c.h.b16 %v4276
        %v4400 = vunpack.c.l.b16 %v4277
        %v4401 = vunpack.c.h.b16 %v4277
        %v4402 = vunpack.c.l.b16 %v4278
        %v4403 = vunpack.c.h.b16 %v4278
        %v4404 = vunpack.c.l.b16 %v4279
        %v4405 = vunpack.c.h.b16 %v4279
        %v4406 = vunpack.c.l.b16 %v4280
        %v4407 = vunpack.c.h.b16 %v4280
        %v4408 = vunpack.c.l.b16 %v4281
        %v4409 = vunpack.c.h.b16 %v4281
        %v4410 = vunpack.c.l.b16 %v4282
        %v4411 = vunpack.c.h.b16 %v4282
        %v4412 = vunpack.c.l.b16 %v4283
        %v4413 = vunpack.c.h.b16 %v4283
        %v4414 = vunpack.c.l.b16 %v4284
        %v4415 = vunpack.c.h.b16 %v4284
        %v4416 = vunpack.c.l.b16 %v4285
        %v4417 = vunpack.c.h.b16 %v4285
        %v4418 = vunpack.c.l.b16 %v4286
        %v4419 = vunpack.c.h.b16 %v4286
        %v4420 = vunpack.c.l.b16 %v4287
        %v4421 = vunpack.c.h.b16 %v4287
        %v4422 = vunpack.c.l.b16 %v4288
        %v4423 = vunpack.c.h.b16 %v4288
        %v4424 = vunpack.c.l.b16 %v4289
        %v4425 = vunpack.c.h.b16 %v4289
        %v4426 = vunpack.c.l.b16 %v4290
        %v4427 = vunpack.c.h.b16 %v4290
        %v4428 = vunpack.c.l.b16 %v4291
        %v4429 = vunpack.c.h.b16 %v4291
        %v4430 = vunpack.c.l.b16 %v4292
        %v4431 = vunpack.c.h.b16 %v4292
        %v4432 = vunpack.c.l.b16 %v4293
        %v4433 = vunpack.c.h.b16 %v4293
        %v4434 = vunpack.c.l.b16 %v4294
        %v4435 = vunpack.c.h.b16 %v4294
        %v4436 = vunpack.c.l.b16 %v4295
        %v4437 = vunpack.c.h.b16 %v4295
        %v4438 = vunpack.c.l.b16 %v4296
        %v4439 = vunpack.c.h.b16 %v4296
        %v4440 = vunpack.c.l.b16 %v4297
        %v4441 = vunpack.c.h.b16 %v4297
        %v4442 = vunpack.c.l.b16 %v4298
        %v4443 = vunpack.c.h.b16 %v4298
        %v4444 = vunpack.c.l.b16 %v4299
        %v4445 = vunpack.c.h.b16 %v4299
        %v4446 = vunpack.c.l.b16 %v4300
        %v4447 = vunpack.c.h.b16 %v4300
        %v4448 = vunpack.c.l.b16 %v4301
        %v4449 = vunpack.c.h.b16 %v4301
        %v4450 = vunpack.c.l.b16 %v4302
        %v4451 = vunpack.c.h.b16 %v4302
        %v4452 = vunpack.c.l.b16 %v4303
        %v4453 = vunpack.c.h.b16 %v4303
        %v4454 = vunpack.c.l.b16 %v4304
        %v4455 = vunpack.c.h.b16 %v4304
        %v4456 = vunpack.c.l.b16 %v4305
        %v4457 = vunpack.c.h.b16 %v4305
        %v4458 = vunpack.c.l.b16 %v4306
        %v4459 = vunpack.c.h.b16 %v4306
        %v4460 = vunpack.c.l.b16 %v4307
        %v4461 = vunpack.c.h.b16 %v4307
        %v4462 = vunpack.c.l.b16 %v4308
        %v4463 = vunpack.c.h.b16 %v4308
        %v4464 = vunpack.c.l.b16 %v4309
        %v4465 = vunpack.c.h.b16 %v4309
        %v4466 = vpack.c.b16 %v4372, %v4370
        %v4467 = vpack.c.b16 %v4373, %v4371
        %v4468 = vpack.c.b16 %v4376, %v4374
        %v4469 = vpack.c.b16 %v4377, %v4375
        %v4470 = vpack.c.b16 %v4380, %v4378
        %v4471 = vpack.c.b16 %v4381, %v4379
        %v4472 = vpack.c.b16 %v4384, %v4382
        %v4473 = vpack.c.b16 %v4385, %v4383
        %v4474 = vpack.c.b16 %v4388, %v4386
        %v4475 = vpack.c.b16 %v4389, %v4387
        %v4476 = vpack.c.b16 %v4392, %v4390
        %v4477 = vpack.c.b16 %v4393, %v4391
        %v4478 = vpack.c.b16 %v4396, %v4394
        %v4479 = vpack.c.b16 %v4397, %v4395
        %v4480 = vpack.c.b16 %v4400, %v4398
        %v4481 = vpack.c.b16 %v4401, %v4399
        %v4482 = vpack.c.b16 %v4404, %v4402
        %v4483 = vpack.c.b16 %v4405, %v4403
        %v4484 = vpack.c.b16 %v4408, %v4406
        %v4485 = vpack.c.b16 %v4409, %v4407
        %v4486 = vpack.c.b16 %v4412, %v4410
        %v4487 = vpack.c.b16 %v4413, %v4411
        %v4488 = vpack.c.b16 %v4416, %v4414
        %v4489 = vpack.c.b16 %v4417, %v4415
        %v4490 = vpack.c.b16 %v4420, %v4418
        %v4491 = vpack.c.b16 %v4421, %v4419
        %v4492 = vpack.c.b16 %v4424, %v4422
        %v4493 = vpack.c.b16 %v4425, %v4423
        %v4494 = vpack.c.b16 %v4428, %v4426
        %v4495 = vpack.c.b16 %v4429, %v4427
        %v4496 = vpack.c.b16 %v4432, %v4430
        %v4497 = vpack.c.b16 %v4433, %v4431
        %v4498 = vpack.c.b16 %v4436, %v4434
        %v4499 = vpack.c.b16 %v4437, %v4435
        %v4500 = vpack.c.b16 %v4440, %v4438
        %v4501 = vpack.c.b16 %v4441, %v4439
        %v4502 = vpack.c.b16 %v4444, %v4442
        %v4503 = vpack.c.b16 %v4445, %v4443
        %v4504 = vpack.c.b16 %v4448, %v4446
        %v4505 = vpack.c.b16 %v4449, %v4447
        %v4506 = vpack.c.b16 %v4452, %v4450
        %v4507 = vpack.c.b16 %v4453, %v4451
        %v4508 = vpack.c.b16 %v4456, %v4454
        %v4509 = vpack.c.b16 %v4457, %v4455
        %v4510 = vpack.c.b16 %v4460, %v4458
        %v4511 = vpack.c.b16 %v4461, %v4459
        %v4512 = vpack.c.b16 %v4464, %v4462
        %v4513 = vpack.c.b16 %v4465, %v4463
        %4562 = vmatprep.subr.bf16.mxu0 %v4467
        %4563 = vmatpush1.bf16.msra.mxu0 %v4466
        %4564 = vmatprep.subr.bf16.mxu0 %v4469
        %4565 = vmatpush1.bf16.msra.mxu0 %v4468
        %4566 = vmatprep.subr.bf16.mxu0 %v4471
        %4567 = vmatpush1.bf16.msra.mxu0 %v4470
        %4568 = vmatprep.subr.bf16.mxu0 %v4473
        %4569 = vmatpush1.bf16.msra.mxu0 %v4472
        %4570 = vmatprep.subr.bf16.mxu0 %v4475
        %4571 = vmatpush1.bf16.msra.mxu0 %v4474
        %4572 = vmatprep.subr.bf16.mxu0 %v4477
        %4573 = vmatpush1.bf16.msra.mxu0 %v4476
        %4574 = vmatprep.subr.bf16.mxu0 %v4479
        %4575 = vmatpush1.bf16.msra.mxu0 %v4478
        %4576 = vmatprep.subr.bf16.mxu0 %v4481
        %4577 = vmatpush1.bf16.msra.mxu0 %v4480
        %4578 = vmatprep.subr.bf16.mxu0 %v4483
        %4579 = vmatpush1.bf16.msra.mxu0 %v4482
        %4580 = vmatprep.subr.bf16.mxu0 %v4485
        %4581 = vmatpush1.bf16.msra.mxu0 %v4484
        %4582 = vmatprep.subr.bf16.mxu0 %v4487
        %4583 = vmatpush1.bf16.msra.mxu0 %v4486
        %4584 = vmatprep.subr.bf16.mxu0 %v4489
        %4585 = vmatpush1.bf16.msra.mxu0 %v4488
        %4586 = vmatprep.subr.bf16.mxu0 %v4491
        %4587 = vmatpush1.bf16.msra.mxu0 %v4490
        %4588 = vmatprep.subr.bf16.mxu0 %v4493
        %4589 = vmatpush1.bf16.msra.mxu0 %v4492
        %4590 = vmatprep.subr.bf16.mxu0 %v4495
        %4591 = vmatpush1.bf16.msra.mxu0 %v4494
        %4592 = vmatprep.subr.bf16.mxu0 %v4497
        %4593 = vmatpush1.bf16.msra.mxu0 %v4496
        %4594 = vmatprep.mubr.bf16.mxu0 %v4239
        %4595 = vmatmul.mubr.bf16.gmra.mrb[0].mxu0 %v4238
        %v4596 = vpop.f32.mrb[0].mxu0
        %v4597 = vadd.f32 %v4315, %v4596
        %v4598 = vpop.f32.mrb[0].mxu0
        %v4599 = vadd.f32 %v4319, %v4598
        %v4600 = vpop.f32.mrb[0].mxu0
        %v4601 = vadd.f32 %v4315, %v4600
        %v4602 = vpop.f32.mrb[0].mxu0
        %v4603 = vadd.f32 %v4319, %v4602
        %4604 = vmatprep.mubr.bf16.mxu0 %v4242
        %4605 = vmatmul.mubr.bf16.gmra.mrb[0].mxu0 %v4241
        %v4606 = vpop.f32.mrb[0].mxu0
        %v4607 = vadd.f32 %v4315, %v4606
        %v4608 = vpop.f32.mrb[0].mxu0
        %v4609 = vadd.f32 %v4319, %v4608
        %v4610 = vpop.f32.mrb[0].mxu0
        %v4611 = vadd.f32 %v4315, %v4610
        %v4612 = vpop.f32.mrb[0].mxu0
        %v4613 = vadd.f32 %v4319, %v4612
        %4614 = vmatprep.mubr.bf16.mxu0 %v4245
        %4615 = vmatmul.mubr.bf16.gmra.mrb[0].mxu0 %v4244
        %v4616 = vpop.f32.mrb[0].mxu0
        %v4617 = vadd.f32 %v4315, %v4616
        %v4618 = vpop.f32.mrb[0].mxu0
        %v4619 = vadd.f32 %v4319, %v4618
        %v4620 = vpop.f32.mrb[0].mxu0
        %v4621 = vadd.f32 %v4315, %v4620
        %v4622 = vpop.f32.mrb[0].mxu0
        %v4623 = vadd.f32 %v4319, %v4622
        %4624 = vmatprep.mubr.bf16.mxu0 %v4248
        %4625 = vmatmul.mubr.bf16.gmra.mrb[0].mxu0 %v4247
        %v4626 = vpop.f32.mrb[0].mxu0
        %v4627 = vadd.f32 %v4315, %v4626
        %v4628 = vpop.f32.mrb[0].mxu0
        %v4629 = vadd.f32 %v4319, %v4628
        %v4630 = vpop.f32.mrb[0].mxu0
        %v4631 = vadd.f32 %v4315, %v4630
        %v4632 = vpop.f32.mrb[0].mxu0
        %v4633 = vadd.f32 %v4319, %v4632
        %4634 = vmatprep.mubr.bf16.mxu0 %v4251
        %4635 = vmatmul.mubr.bf16.gmra.mrb[0].mxu0 %v4250
        %v4636 = vpop.f32.mrb[0].mxu0
        %v4637 = vadd.f32 %v4315, %v4636
        %v4638 = vpop.f32.mrb[0].mxu0
        %v4639 = vadd.f32 %v4319, %v4638
        %v4640 = vpop.f32.mrb[0].mxu0
        %v4641 = vadd.f32 %v4315, %v4640
        %v4642 = vpop.f32.mrb[0].mxu0
        %v4643 = vadd.f32 %v4319, %v4642
        %4644 = vmatprep.mubr.bf16.mxu0 %v4254
        %4645 = vmatmul.mubr.bf16.gmra.mrb[0].mxu0 %v4253
        %v4646 = vpop.f32.mrb[0].mxu0
        %v4647 = vadd.f32 %v4315, %v4646
        %v4648 = vpop.f32.mrb[0].mxu0
        %v4649 = vadd.f32 %v4319, %v4648
        %v4650 = vpop.f32.mrb[0].mxu0
        %v4651 = vadd.f32 %v4315, %v4650
        %v4652 = vpop.f32.mrb[0].mxu0
        %v4653 = vadd.f32 %v4319, %v4652
        %4654 = vmatprep.mubr.bf16.mxu0 %v4257
        %4655 = vmatmul.mubr.bf16.gmra.mrb[0].mxu0 %v4256
        %v4656 = vpop.f32.mrb[0].mxu0
        %v4657 = vadd.f32 %v4315, %v4656
        %v4658 = vpop.f32.mrb[0].mxu0
        %v4659 = vadd.f32 %v4319, %v4658
        %v4660 = vpop.f32.mrb[0].mxu0
        %v4661 = vadd.f32 %v4315, %v4660
        %v4662 = vpop.f32.mrb[0].mxu0
        %v4663 = vadd.f32 %v4319, %v4662
        %4664 = vmatprep.mubr.bf16.mxu0 %v4260
        %4665 = vmatmul.mubr.bf16.gmra.mrb[0].mxu0 %v4259
        %v4666 = vpop.f32.mrb[0].mxu0
        %v4667 = vadd.f32 %v4315, %v4666
        %v4668 = vpop.f32.mrb[0].mxu0
        %v4669 = vadd.f32 %v4319, %v4668
        %v4670 = vpop.f32.mrb[0].mxu0
        %v4671 = vadd.f32 %v4315, %v4670
        %v4672 = vpop.f32.mrb[0].mxu0
        %v4673 = vadd.f32 %v4319, %v4672
        %4674 = vdwg.mxu0
        %4675 = vmatprep.subr.bf16.mxu0 %v4499
        %4676 = vmatpush1.bf16.msra.mxu0 %v4498
        %4677 = vmatprep.subr.bf16.mxu0 %v4501
        %4678 = vmatpush1.bf16.msra.mxu0 %v4500
        %4679 = vmatprep.subr.bf16.mxu0 %v4503
        %4680 = vmatpush1.bf16.msra.mxu0 %v4502
        %4681 = vmatprep.subr.bf16.mxu0 %v4505
        %4682 = vmatpush1.bf16.msra.mxu0 %v4504
        %4683 = vmatprep.subr.bf16.mxu0 %v4507
        %4684 = vmatpush1.bf16.msra.mxu0 %v4506
        %4685 = vmatprep.subr.bf16.mxu0 %v4509
        %4686 = vmatpush1.bf16.msra.mxu0 %v4508
        %4687 = vmatprep.subr.bf16.mxu0 %v4511
        %4688 = vmatpush1.bf16.msra.mxu0 %v4510
        %4689 = vmatprep.subr.bf16.mxu0 %v4513
        %4690 = vmatpush1.bf16.msra.mxu0 %v4512
        %4691 = vmatprep.subr.bf16.mxu0 0
        %4692 = vmatpush1.bf16.msra.mxu0 0
        %4693 = vmatprep.subr.bf16.mxu0 0
        %4694 = vmatpush1.bf16.msra.mxu0 0
        %4695 = vmatprep.subr.bf16.mxu0 0
        %4696 = vmatpush1.bf16.msra.mxu0 0
        %4697 = vmatprep.subr.bf16.mxu0 0
        %4698 = vmatpush1.bf16.msra.mxu0 0
        %4699 = vmatprep.subr.bf16.mxu0 0
        %4700 = vmatpush1.bf16.msra.mxu0 0
        %4701 = vmatprep.subr.bf16.mxu0 0
        %4702 = vmatpush1.bf16.msra.mxu0 0
        %4703 = vmatprep.subr.bf16.mxu0 0
        %4704 = vmatpush1.bf16.msra.mxu0 0
        %4705 = vmatprep.subr.bf16.mxu0 0
        %4706 = vmatpush1.bf16.msra.mxu0 0
        %4707 = vmatprep.mubr.bf16.mxu0 0
        %4708 = vmatmul.mubr.bf16.gmra.mrb[0].mxu0 %v4240
        %v4709 = vpop.f32.mrb[0].mxu0
        %v4710 = vadd.f32 %v4597, %v4709
        %v4711 = vpop.f32.mrb[0].mxu0
        %v4712 = vadd.f32 %v4599, %v4711
        %v4713 = vpop.f32.mrb[0].mxu0
        %v4714 = vadd.f32 %v4601, %v4713
        %v4715 = vpop.f32.mrb[0].mxu0
        %v4716 = vadd.f32 %v4603, %v4715
        %4717 = vmatprep.mubr.bf16.mxu0 0
        %4718 = vmatmul.mubr.bf16.gmra.mrb[0].mxu0 %v4243
        %v4719 = vpop.f32.mrb[0].mxu0
        %v4720 = vadd.f32 %v4607, %v4719
        %v4721 = vpop.f32.mrb[0].mxu0
        %v4722 = vadd.f32 %v4609, %v4721
        %v4723 = vpop.f32.mrb[0].mxu0
        %v4724 = vadd.f32 %v4611, %v4723
        %v4725 = vpop.f32.mrb[0].mxu0
        %v4726 = vadd.f32 %v4613, %v4725
        %4727 = vmatprep.mubr.bf16.mxu0 0
        %4728 = vmatmul.mubr.bf16.gmra.mrb[0].mxu0 %v4246
        %v4729 = vpop.f32.mrb[0].mxu0
        %v4730 = vadd.f32 %v4617, %v4729
        %v4731 = vpop.f32.mrb[0].mxu0
        %v4732 = vadd.f32 %v4619, %v4731
        %v4733 = vpop.f32.mrb[0].mxu0
        %v4734 = vadd.f32 %v4621, %v4733
        %v4735 = vpop.f32.mrb[0].mxu0
        %v4736 = vadd.f32 %v4623, %v4735
        %4737 = vmatprep.mubr.bf16.mxu0 0
        %4738 = vmatmul.mubr.bf16.gmra.mrb[0].mxu0 %v4249
        %v4739 = vpop.f32.mrb[0].mxu0
        %v4740 = vadd.f32 %v4627, %v4739
        %v4741 = vpop.f32.mrb[0].mxu0
        %v4742 = vadd.f32 %v4629, %v4741
        %v4743 = vpop.f32.mrb[0].mxu0
        %v4744 = vadd.f32 %v4631, %v4743
        %v4745 = vpop.f32.mrb[0].mxu0
        %v4746 = vadd.f32 %v4633, %v4745
        %4747 = vmatprep.mubr.bf16.mxu0 0
        %4748 = vmatmul.mubr.bf16.gmra.mrb[0].mxu0 %v4252
        %v4749 = vpop.f32.mrb[0].mxu0
        %v4750 = vadd.f32 %v4637, %v4749
        %v4751 = vpop.f32.mrb[0].mxu0
        %v4752 = vadd.f32 %v4639, %v4751
        %v4753 = vpop.f32.mrb[0].mxu0
        %v4754 = vadd.f32 %v4641, %v4753
        %v4755 = vpop.f32.mrb[0].mxu0
        %v4756 = vadd.f32 %v4643, %v4755
        %4757 = vmatprep.mubr.bf16.mxu0 0
        %4758 = vmatmul.mubr.bf16.gmra.mrb[0].mxu0 %v4255
        %v4759 = vpop.f32.mrb[0].mxu0
        %v4760 = vadd.f32 %v4647, %v4759
        %v4761 = vpop.f32.mrb[0].mxu0
        %v4762 = vadd.f32 %v4649, %v4761
        %v4763 = vpop.f32.mrb[0].mxu0
        %v4764 = vadd.f32 %v4651, %v4763
        %v4765 = vpop.f32.mrb[0].mxu0
        %v4766 = vadd.f32 %v4653, %v4765
        %4767 = vmatprep.mubr.bf16.mxu0 0
        %4768 = vmatmul.mubr.bf16.gmra.mrb[0].mxu0 %v4258
        %v4769 = vpop.f32.mrb[0].mxu0
        %v4770 = vadd.f32 %v4657, %v4769
        %v4771 = vpop.f32.mrb[0].mxu0
        %v4772 = vadd.f32 %v4659, %v4771
        %v4773 = vpop.f32.mrb[0].mxu0
        %v4774 = vadd.f32 %v4661, %v4773
        %v4775 = vpop.f32.mrb[0].mxu0
        %v4776 = vadd.f32 %v4663, %v4775
        %4777 = vmatprep.mubr.bf16.mxu0 0
        %4778 = vmatmul.mubr.bf16.gmra.mrb[0].mxu0 %v4261
        %v4779 = vpop.f32.mrb[0].mxu0
        %v4780 = vadd.f32 %v4667, %v4779
        %v4781 = vpop.f32.mrb[0].mxu0
        %v4782 = vadd.f32 %v4669, %v4781
        %v4783 = vpop.f32.mrb[0].mxu0
        %v4784 = vadd.f32 %v4671, %v4783
        %v4785 = vpop.f32.mrb[0].mxu0
        %v4786 = vadd.f32 %v4673, %v4785
        %4787 = vdwg.mxu0
        %v4788 = vmul.f32 %v4710, 1.442695
        %v4789 = vpow.pop %v4788
        %v4790 = vmul.f32 %v4712, 1.442695
        %v4791 = vpow.pop %v4790
        %v4792 = vmul.f32 %v4714, 1.442695
        %v4793 = vpow.pop %v4792
        %v4794 = vmul.f32 %v4716, 1.442695
        %v4795 = vpow.pop %v4794
        %v4796 = vmul.f32 %v4720, 1.442695
        %v4797 = vpow.pop %v4796
        %v4798 = vmul.f32 %v4722, 1.442695
        %v4799 = vpow.pop %v4798
        %v4800 = vmul.f32 %v4724, 1.442695
        %v4801 = vpow.pop %v4800
        %v4802 = vmul.f32 %v4726, 1.442695
        %v4803 = vpow.pop %v4802
        %v4804 = vmul.f32 %v4730, 1.442695
        %v4805 = vpow.pop %v4804
        %v4806 = vmul.f32 %v4732, 1.442695
        %v4807 = vpow.pop %v4806
        %v4808 = vmul.f32 %v4734, 1.442695
        %v4809 = vpow.pop %v4808
        %v4810 = vmul.f32 %v4736, 1.442695
        %v4811 = vpow.pop %v4810
        %v4812 = vmul.f32 %v4740, 1.442695
        %v4813 = vpow.pop %v4812
        %v4814 = vmul.f32 %v4742, 1.442695
        %v4815 = vpow.pop %v4814
        %v4816 = vmul.f32 %v4744, 1.442695
        %v4817 = vpow.pop %v4816
        %v4818 = vmul.f32 %v4746, 1.442695
        %v4819 = vpow.pop %v4818
        %v4820 = vmul.f32 %v4750, 1.442695
        %v4821 = vpow.pop %v4820
        %v4822 = vmul.f32 %v4752, 1.442695
        %v4823 = vpow.pop %v4822
        %v4824 = vmul.f32 %v4754, 1.442695
        %v4825 = vpow.pop %v4824
        %v4826 = vmul.f32 %v4756, 1.442695
        %v4827 = vpow.pop %v4826
        %v4828 = vmul.f32 %v4760, 1.442695
        %v4829 = vpow.pop %v4828
        %v4830 = vmul.f32 %v4762, 1.442695
        %v4831 = vpow.pop %v4830
        %v4832 = vmul.f32 %v4764, 1.442695
        %v4833 = vpow.pop %v4832
        %v4834 = vmul.f32 %v4766, 1.442695
        %v4835 = vpow.pop %v4834
        %v4836 = vmul.f32 %v4770, 1.442695
        %v4837 = vpow.pop %v4836
        %v4838 = vmul.f32 %v4772, 1.442695
        %v4839 = vpow.pop %v4838
        %v4840 = vmul.f32 %v4774, 1.442695
        %v4841 = vpow.pop %v4840
        %v4842 = vmul.f32 %v4776, 1.442695
        %v4843 = vpow.pop %v4842
        %v4844 = vmul.f32 %v4780, 1.442695
        %v4845 = vpow.pop %v4844
        %v4846 = vmul.f32 %v4782, 1.442695
        %v4847 = vpow.pop %v4846
        %v4848 = vmul.f32 %v4784, 1.442695
        %v4849 = vpow.pop %v4848
        %v4850 = vmul.f32 %v4786, 1.442695
        %v4851 = vpow.pop %v4850
        %v4852 = vld [vmem:[%s7] sm:$0xff]
        %v4853 = vld [vmem:[%s7 + $0x8] sm:$0xff]
        %v4854 = vld [vmem:[%s7 + $0x10] sm:$0xff]
        %v4855 = vld [vmem:[%s7 + $0x18] sm:$0xff]
        %v4856 = vld [vmem:[%s7 + $0x20] sm:$0xff]
        %v4857 = vld [vmem:[%s7 + $0x28] sm:$0xff]
        %v4858 = vld [vmem:[%s7 + $0x30] sm:$0xff]
        %v4859 = vld [vmem:[%s7 + $0x38] sm:$0xff]
        %v4860 = vld [vmem:[%s7 + $0x40] sm:$0xff]
        %v4861 = vld [vmem:[%s7 + $0x48] sm:$0xff]
        %v4862 = vld [vmem:[%s7 + $0x50] sm:$0xff]
        %v4863 = vld [vmem:[%s7 + $0x58] sm:$0xff]
        %v4864 = vld [vmem:[%s7 + $0x60] sm:$0xff]
        %v4865 = vld [vmem:[%s7 + $0x68] sm:$0xff]
        %v4866 = vld [vmem:[%s7 + $0x70] sm:$0xff]
        %v4867 = vld [vmem:[%s7 + $0x78] sm:$0xff]
        %v4868 = vld [vmem:[%s7 + $0x80] sm:$0xff]
        %v4869 = vld [vmem:[%s7 + $0x88] sm:$0xff]
        %v4870 = vld [vmem:[%s7 + $0x90] sm:$0xff]
        %v4871 = vld [vmem:[%s7 + $0x98] sm:$0xff]
        %v4872 = vld [vmem:[%s7 + $0xa0] sm:$0xff]
        %v4873 = vld [vmem:[%s7 + $0xa8] sm:$0xff]
        %v4874 = vld [vmem:[%s7 + $0xb0] sm:$0xff]
        %v4875 = vld [vmem:[%s7 + $0xb8] sm:$0xff]
        %v4876 = vld [vmem:[%s7 + $0xc0] sm:$0xff]
        %v4877 = vld [vmem:[%s7 + $0xc8] sm:$0xff]
        %v4878 = vld [vmem:[%s7 + $0xd0] sm:$0xff]
        %v4879 = vld [vmem:[%s7 + $0xd8] sm:$0xff]
        %v4880 = vld [vmem:[%s7 + $0xe0] sm:$0xff]
        %v4881 = vld [vmem:[%s7 + $0xe8] sm:$0xff]
        %v4882 = vld [vmem:[%s7 + $0xf0] sm:$0xff]
        %v4883 = vld [vmem:[%s7 + $0xf8] sm:$0xff]
        %4884 = vmatprep.subr.mxu0 %v4853
        %4885 = vmatpush1.msra.mxu0 %v4852
        %4886 = vmatprep.subr.mxu0 %v4855
        %4887 = vmatpush1.msra.mxu0 %v4854
        %4888 = vmatprep.subr.mxu0 %v4857
        %4889 = vmatpush1.msra.mxu0 %v4856
        %4890 = vmatprep.subr.mxu0 %v4859
        %4891 = vmatpush1.msra.mxu0 %v4858
        %4892 = vmatprep.subr.mxu0 %v4861
        %4893 = vmatpush1.msra.mxu0 %v4860
        %4894 = vmatprep.subr.mxu0 %v4863
        %4895 = vmatpush1.msra.mxu0 %v4862
        %4896 = vmatprep.subr.mxu0 %v4865
        %4897 = vmatpush1.msra.mxu0 %v4864
        %4898 = vmatprep.subr.mxu0 %v4867
        %4899 = vmatpush1.msra.mxu0 %v4866
        %4900 = vmatprep.subr.mxu0 %v4869
        %4901 = vmatpush1.msra.mxu0 %v4868
        %4902 = vmatprep.subr.mxu0 %v4871
        %4903 = vmatpush1.msra.mxu0 %v4870
        %4904 = vmatprep.subr.mxu0 %v4873
        %4905 = vmatpush1.msra.mxu0 %v4872
        %4906 = vmatprep.subr.mxu0 %v4875
        %4907 = vmatpush1.msra.mxu0 %v4874
        %4908 = vmatprep.subr.mxu0 %v4877
        %4909 = vmatpush1.msra.mxu0 %v4876
        %4910 = vmatprep.subr.mxu0 %v4879
        %4911 = vmatpush1.msra.mxu0 %v4878
        %4912 = vmatprep.subr.mxu0 %v4881
        %4913 = vmatpush1.msra.mxu0 %v4880
        %4914 = vmatprep.subr.mxu0 %v4883
        %4915 = vmatpush1.msra.mxu0 %v4882
        %4916 = vmatprep.subr.mxu0 0.0
        %4917 = vmatpush1.msra.mxu0 0.0
        %4918 = vmatprep.subr.mxu0 0.0
        %4919 = vmatpush1.msra.mxu0 0.0
        %4920 = vmatprep.subr.mxu0 0.0
        %4921 = vmatpush1.msra.mxu0 0.0
        %4922 = vmatprep.subr.mxu0 0.0
        %4923 = vmatpush1.msra.mxu0 0.0
        %4924 = vmatprep.subr.mxu0 0.0
        %4925 = vmatpush1.msra.mxu0 0.0
        %4926 = vmatprep.subr.mxu0 0.0
        %4927 = vmatpush1.msra.mxu0 0.0
        %4928 = vmatprep.subr.mxu0 0.0
        %4929 = vmatpush1.msra.mxu0 0.0
        %4930 = vmatprep.subr.mxu0 0.0
        %4931 = vmatpush1.msra.mxu0 0.0
        %4932 = vmatprep.subr.mxu0 0.0
        %4933 = vmatpush1.msra.mxu0 0.0
        %4934 = vmatprep.subr.mxu0 0.0
        %4935 = vmatpush1.msra.mxu0 0.0
        %4936 = vmatprep.subr.mxu0 0.0
        %4937 = vmatpush1.msra.mxu0 0.0
        %4938 = vmatprep.subr.mxu0 0.0
        %4939 = vmatpush1.msra.mxu0 0.0
        %4940 = vmatprep.subr.mxu0 0.0
        %4941 = vmatpush1.msra.mxu0 0.0
        %4942 = vmatprep.subr.mxu0 0.0
        %4943 = vmatpush1.msra.mxu0 0.0
        %4944 = vmatprep.subr.mxu0 0.0
        %4945 = vmatpush1.msra.mxu0 0.0
        %4946 = vmatprep.subr.mxu0 0.0
        %4947 = vmatpush1.msra.mxu0 0.0
        %4948 = vmatprep.mubr.f32.mxu0 0.0
        %4949 = vmatmul.mubr.f32.gmra.mrb[0].mxu0 %v3399
        %v4950 = vpop.f32.mrb[0].mxu0
        %v4951 = vadd.f32 0.0, %v4950
        %v4952 = vpop.f32.mrb[0].mxu0
        %v4953 = vadd.f32 0.0, %v4952
        %4954 = vmatprep.mubr.f32.mxu0 0.0
        %4955 = vmatmul.mubr.f32.gmra.mrb[0].mxu0 %v3400
        %v4956 = vpop.f32.mrb[0].mxu0
        %v4957 = vadd.f32 0.0, %v4956
        %v4958 = vpop.f32.mrb[0].mxu0
        %v4959 = vadd.f32 0.0, %v4958
        %4960 = vmatprep.mubr.f32.mxu0 0.0
        %4961 = vmatmul.mubr.f32.gmra.mrb[0].mxu0 %v3401
        %v4962 = vpop.f32.mrb[0].mxu0
        %v4963 = vadd.f32 0.0, %v4962
        %v4964 = vpop.f32.mrb[0].mxu0
        %v4965 = vadd.f32 0.0, %v4964
        %4966 = vmatprep.mubr.f32.mxu0 0.0
        %4967 = vmatmul.mubr.f32.gmra.mrb[0].mxu0 %v3402
        %v4968 = vpop.f32.mrb[0].mxu0
        %v4969 = vadd.f32 0.0, %v4968
        %v4970 = vpop.f32.mrb[0].mxu0
        %v4971 = vadd.f32 0.0, %v4970
        %4972 = vmatprep.mubr.f32.mxu0 0.0
        %4973 = vmatmul.mubr.f32.gmra.mrb[0].mxu0 %v3403
        %v4974 = vpop.f32.mrb[0].mxu0
        %v4975 = vadd.f32 0.0, %v4974
        %v4976 = vpop.f32.mrb[0].mxu0
        %v4977 = vadd.f32 0.0, %v4976
        %4978 = vmatprep.mubr.f32.mxu0 0.0
        %4979 = vmatmul.mubr.f32.gmra.mrb[0].mxu0 %v3404
        %v4980 = vpop.f32.mrb[0].mxu0
        %v4981 = vadd.f32 0.0, %v4980
        %v4982 = vpop.f32.mrb[0].mxu0
        %v4983 = vadd.f32 0.0, %v4982
        %4984 = vmatprep.mubr.f32.mxu0 0.0
        %4985 = vmatmul.mubr.f32.gmra.mrb[0].mxu0 %v3405
        %v4986 = vpop.f32.mrb[0].mxu0
        %v4987 = vadd.f32 0.0, %v4986
        %v4988 = vpop.f32.mrb[0].mxu0
        %v4989 = vadd.f32 0.0, %v4988
        %4990 = vmatprep.mubr.f32.mxu0 0.0
        %4991 = vmatmul.mubr.f32.gmra.mrb[0].mxu0 %v3406
        %v4992 = vpop.f32.mrb[0].mxu0
        %v4993 = vadd.f32 0.0, %v4992
        %v4994 = vpop.f32.mrb[0].mxu0
        %v4995 = vadd.f32 0.0, %v4994
        %4996 = vmatprep.mubr.f32.mxu0 0.0
        %4997 = vmatmul.mubr.f32.gmra.mrb[0].mxu0 %v3407
        %v4998 = vpop.f32.mrb[0].mxu0
        %v4999 = vadd.f32 0.0, %v4998
        %v5000 = vpop.f32.mrb[0].mxu0
        %v5001 = vadd.f32 0.0, %v5000
        %5002 = vmatprep.mubr.f32.mxu0 0.0
        %5003 = vmatmul.mubr.f32.gmra.mrb[0].mxu0 %v3408
        %v5004 = vpop.f32.mrb[0].mxu0
        %v5005 = vadd.f32 0.0, %v5004
        %v5006 = vpop.f32.mrb[0].mxu0
        %v5007 = vadd.f32 0.0, %v5006
        %5008 = vmatprep.mubr.f32.mxu0 0.0
        %5009 = vmatmul.mubr.f32.gmra.mrb[0].mxu0 %v3409
        %v5010 = vpop.f32.mrb[0].mxu0
        %v5011 = vadd.f32 0.0, %v5010
        %v5012 = vpop.f32.mrb[0].mxu0
        %v5013 = vadd.f32 0.0, %v5012
        %5014 = vmatprep.mubr.f32.mxu0 0.0
        %5015 = vmatmul.mubr.f32.gmra.mrb[0].mxu0 %v3410
        %v5016 = vpop.f32.mrb[0].mxu0
        %v5017 = vadd.f32 0.0, %v5016
        %v5018 = vpop.f32.mrb[0].mxu0
        %v5019 = vadd.f32 0.0, %v5018
        %5020 = vmatprep.mubr.f32.mxu0 0.0
        %5021 = vmatmul.mubr.f32.gmra.mrb[0].mxu0 %v3411
        %v5022 = vpop.f32.mrb[0].mxu0
        %v5023 = vadd.f32 0.0, %v5022
        %v5024 = vpop.f32.mrb[0].mxu0
        %v5025 = vadd.f32 0.0, %v5024
        %5026 = vmatprep.mubr.f32.mxu0 0.0
        %5027 = vmatmul.mubr.f32.gmra.mrb[0].mxu0 %v3412
        %v5028 = vpop.f32.mrb[0].mxu0
        %v5029 = vadd.f32 0.0, %v5028
        %v5030 = vpop.f32.mrb[0].mxu0
        %v5031 = vadd.f32 0.0, %v5030
        %5032 = vmatprep.mubr.f32.mxu0 0.0
        %5033 = vmatmul.mubr.f32.gmra.mrb[0].mxu0 %v3413
        %v5034 = vpop.f32.mrb[0].mxu0
        %v5035 = vadd.f32 0.0, %v5034
        %v5036 = vpop.f32.mrb[0].mxu0
        %v5037 = vadd.f32 0.0, %v5036
        %5038 = vmatprep.mubr.f32.mxu0 0.0
        %5039 = vmatmul.mubr.f32.gmra.mrb[0].mxu0 %v3414
        %v5040 = vpop.f32.mrb[0].mxu0
        %v5041 = vadd.f32 0.0, %v5040
        %v5042 = vpop.f32.mrb[0].mxu0
        %v5043 = vadd.f32 0.0, %v5042
        %5044 = vdwg.mxu0
        %v5045 = vmul.f32 %v4951, %v4789
        %v5046 = vmul.f32 %v4953, %v4791
        %v5047 = vmul.f32 %v4957, %v4793
        %v5048 = vmul.f32 %v4959, %v4795
        %v5049 = vmul.f32 %v4963, %v4797
        %v5050 = vmul.f32 %v4965, %v4799
        %v5051 = vmul.f32 %v4969, %v4801
        %v5052 = vmul.f32 %v4971, %v4803
        %v5053 = vmul.f32 %v4975, %v4805
        %v5054 = vmul.f32 %v4977, %v4807
        %v5055 = vmul.f32 %v4981, %v4809
        %v5056 = vmul.f32 %v4983, %v4811
        %v5057 = vmul.f32 %v4987, %v4813
        %v5058 = vmul.f32 %v4989, %v4815
        %v5059 = vmul.f32 %v4993, %v4817
        %v5060 = vmul.f32 %v4995, %v4819
        %v5061 = vmul.f32 %v4999, %v4821
        %v5062 = vmul.f32 %v5001, %v4823
        %v5063 = vmul.f32 %v5005, %v4825
        %v5064 = vmul.f32 %v5007, %v4827
        %v5065 = vmul.f32 %v5011, %v4829
        %v5066 = vmul.f32 %v5013, %v4831
        %v5067 = vmul.f32 %v5017, %v4833
        %v5068 = vmul.f32 %v5019, %v4835
        %v5069 = vmul.f32 %v5023, %v4837
        %v5070 = vmul.f32 %v5025, %v4839
        %v5071 = vmul.f32 %v5029, %v4841
        %v5072 = vmul.f32 %v5031, %v4843
        %v5073 = vmul.f32 %v5035, %v4845
        %v5074 = vmul.f32 %v5037, %v4847
        %v5075 = vmul.f32 %v5041, %v4849
        %v5076 = vmul.f32 %v5043, %v4851
        %v5077 = vld [vmem:[%s8] sm:$0xff]
        %v5078 = vld [vmem:[%s8 + $0x8] sm:$0xff]
        %v5079 = vld [vmem:[%s8 + $0x10] sm:$0xff]
        %v5080 = vld [vmem:[%s8 + $0x18] sm:$0xff]
        %v5081 = vld [vmem:[%s8 + $0x20] sm:$0xff]
        %v5082 = vld [vmem:[%s8 + $0x28] sm:$0xff]
        %v5083 = vld [vmem:[%s8 + $0x30] sm:$0xff]
        %v5084 = vld [vmem:[%s8 + $0x38] sm:$0xff]
        %v5085 = vld [vmem:[%s8 + $0x40] sm:$0xff]
        %v5086 = vld [vmem:[%s8 + $0x48] sm:$0xff]
        %v5087 = vld [vmem:[%s8 + $0x50] sm:$0xff]
        %v5088 = vld [vmem:[%s8 + $0x58] sm:$0xff]
        %v5089 = vld [vmem:[%s8 + $0x60] sm:$0xff]
        %v5090 = vld [vmem:[%s8 + $0x68] sm:$0xff]
        %v5091 = vld [vmem:[%s8 + $0x70] sm:$0xff]
        %v5092 = vld [vmem:[%s8 + $0x78] sm:$0xff]
        %v5093 = vld [vmem:[%s8 + $0x80] sm:$0xff]
        %v5094 = vld [vmem:[%s8 + $0x88] sm:$0xff]
        %v5095 = vld [vmem:[%s8 + $0x90] sm:$0xff]
        %v5096 = vld [vmem:[%s8 + $0x98] sm:$0xff]
        %v5097 = vld [vmem:[%s8 + $0xa0] sm:$0xff]
        %v5098 = vld [vmem:[%s8 + $0xa8] sm:$0xff]
        %v5099 = vld [vmem:[%s8 + $0xb0] sm:$0xff]
        %v5100 = vld [vmem:[%s8 + $0xb8] sm:$0xff]
        %v5102 = vsel %vm2643, %v5046, 0
        %v5105 = vsel %vm2643, %v5048, 0
        %v5108 = vsel %vm2643, %v5050, 0
        %v5111 = vsel %vm2643, %v5052, 0
        %v5114 = vsel %vm2643, %v5054, 0
        %v5117 = vsel %vm2643, %v5056, 0
        %v5120 = vsel %vm2643, %v5058, 0
        %v5123 = vsel %vm2643, %v5060, 0
        %v5126 = vsel %vm2643, %v5062, 0
        %v5129 = vsel %vm2643, %v5064, 0
        %v5132 = vsel %vm2643, %v5066, 0
        %v5135 = vsel %vm2643, %v5068, 0
        %v5138 = vsel %vm2643, %v5070, 0
        %v5141 = vsel %vm2643, %v5072, 0
        %v5144 = vsel %vm2643, %v5074, 0
        %v5147 = vsel %vm2643, %v5076, 0
        %5149 = vmatprep.subr.mxu0 0.0
        %5150 = vmatpush1.msra.mxu0 %v5077
        %5151 = vmatprep.subr.mxu0 0.0
        %5152 = vmatpush1.msra.mxu0 %v5078
        %5153 = vmatprep.subr.mxu0 0.0
        %5154 = vmatpush1.msra.mxu0 %v5079
        %5155 = vmatprep.subr.mxu0 0.0
        %5156 = vmatpush1.msra.mxu0 %v5080
        %5157 = vmatprep.subr.mxu0 0.0
        %5158 = vmatpush1.msra.mxu0 %v5081
        %5159 = vmatprep.subr.mxu0 0.0
        %5160 = vmatpush1.msra.mxu0 %v5082
        %5161 = vmatprep.subr.mxu0 0.0
        %5162 = vmatpush1.msra.mxu0 %v5083
        %5163 = vmatprep.subr.mxu0 0.0
        %5164 = vmatpush1.msra.mxu0 %v5084
        %5165 = vmatprep.subr.mxu0 0.0
        %5166 = vmatpush1.msra.mxu0 %v5085
        %5167 = vmatprep.subr.mxu0 0.0
        %5168 = vmatpush1.msra.mxu0 %v5086
        %5169 = vmatprep.subr.mxu0 0.0
        %5170 = vmatpush1.msra.mxu0 %v5087
        %5171 = vmatprep.subr.mxu0 0.0
        %5172 = vmatpush1.msra.mxu0 %v5088
        %5173 = vmatprep.subr.mxu0 0.0
        %5174 = vmatpush1.msra.mxu0 %v5089
        %5175 = vmatprep.subr.mxu0 0.0
        %5176 = vmatpush1.msra.mxu0 %v5090
        %5177 = vmatprep.subr.mxu0 0.0
        %5178 = vmatpush1.msra.mxu0 %v5091
        %5179 = vmatprep.subr.mxu0 0.0
        %5180 = vmatpush1.msra.mxu0 %v5092
        %5181 = vmatprep.subr.mxu0 0.0
        %5182 = vmatpush1.msra.mxu0 %v5093
        %5183 = vmatprep.subr.mxu0 0.0
        %5184 = vmatpush1.msra.mxu0 %v5094
        %5185 = vmatprep.subr.mxu0 0.0
        %5186 = vmatpush1.msra.mxu0 %v5095
        %5187 = vmatprep.subr.mxu0 0.0
        %5188 = vmatpush1.msra.mxu0 %v5096
        %5189 = vmatprep.subr.mxu0 0.0
        %5190 = vmatpush1.msra.mxu0 %v5097
        %5191 = vmatprep.subr.mxu0 0.0
        %5192 = vmatpush1.msra.mxu0 %v5098
        %5193 = vmatprep.subr.mxu0 0.0
        %5194 = vmatpush1.msra.mxu0 %v5099
        %5195 = vmatprep.subr.mxu0 0.0
        %5196 = vmatpush1.msra.mxu0 %v5100
        %5197 = vmatprep.subr.mxu0 0.0
        %5198 = vmatpush1.msra.mxu0 0.0
        %5199 = vmatprep.subr.mxu0 0.0
        %5200 = vmatpush1.msra.mxu0 0.0
        %5201 = vmatprep.subr.mxu0 0.0
        %5202 = vmatpush1.msra.mxu0 0.0
        %5203 = vmatprep.subr.mxu0 0.0
        %5204 = vmatpush1.msra.mxu0 0.0
        %5205 = vmatprep.subr.mxu0 0.0
        %5206 = vmatpush1.msra.mxu0 0.0
        %5207 = vmatprep.subr.mxu0 0.0
        %5208 = vmatpush1.msra.mxu0 0.0
        %5209 = vmatprep.subr.mxu0 0.0
        %5210 = vmatpush1.msra.mxu0 0.0
        %5211 = vmatprep.subr.mxu0 0.0
        %5212 = vmatpush1.msra.mxu0 0.0
        %5213 = vmatprep.mubr.f32.mxu0 %v5102
        %5214 = vmatmul.mubr.f32.gmra.mrb[0].mxu0 %v5045
        %v5215 = vpop.f32.mrb[0].mxu0
        %v5216 = vadd.f32 0.0, %v5215
        %v5217 = vpop.f32.mrb[0].mxu0
        %5218 = vmatprep.mubr.f32.mxu0 %v5105
        %5219 = vmatmul.mubr.f32.gmra.mrb[0].mxu0 %v5047
        %v5220 = vpop.f32.mrb[0].mxu0
        %v5221 = vadd.f32 0.0, %v5220
        %v5222 = vpop.f32.mrb[0].mxu0
        %5223 = vmatprep.mubr.f32.mxu0 %v5108
        %5224 = vmatmul.mubr.f32.gmra.mrb[0].mxu0 %v5049
        %v5225 = vpop.f32.mrb[0].mxu0
        %v5226 = vadd.f32 0.0, %v5225
        %v5227 = vpop.f32.mrb[0].mxu0
        %5228 = vmatprep.mubr.f32.mxu0 %v5111
        %5229 = vmatmul.mubr.f32.gmra.mrb[0].mxu0 %v5051
        %v5230 = vpop.f32.mrb[0].mxu0
        %v5231 = vadd.f32 0.0, %v5230
        %v5232 = vpop.f32.mrb[0].mxu0
        %5233 = vmatprep.mubr.f32.mxu0 %v5114
        %5234 = vmatmul.mubr.f32.gmra.mrb[0].mxu0 %v5053
        %v5235 = vpop.f32.mrb[0].mxu0
        %v5236 = vadd.f32 0.0, %v5235
        %v5237 = vpop.f32.mrb[0].mxu0
        %5238 = vmatprep.mubr.f32.mxu0 %v5117
        %5239 = vmatmul.mubr.f32.gmra.mrb[0].mxu0 %v5055
        %v5240 = vpop.f32.mrb[0].mxu0
        %v5241 = vadd.f32 0.0, %v5240
        %v5242 = vpop.f32.mrb[0].mxu0
        %5243 = vmatprep.mubr.f32.mxu0 %v5120
        %5244 = vmatmul.mubr.f32.gmra.mrb[0].mxu0 %v5057
        %v5245 = vpop.f32.mrb[0].mxu0
        %v5246 = vadd.f32 0.0, %v5245
        %v5247 = vpop.f32.mrb[0].mxu0
        %5248 = vmatprep.mubr.f32.mxu0 %v5123
        %5249 = vmatmul.mubr.f32.gmra.mrb[0].mxu0 %v5059
        %v5250 = vpop.f32.mrb[0].mxu0
        %v5251 = vadd.f32 0.0, %v5250
        %v5252 = vpop.f32.mrb[0].mxu0
        %5253 = vmatprep.mubr.f32.mxu0 %v5126
        %5254 = vmatmul.mubr.f32.gmra.mrb[0].mxu0 %v5061
        %v5255 = vpop.f32.mrb[0].mxu0
        %v5256 = vadd.f32 0.0, %v5255
        %v5257 = vpop.f32.mrb[0].mxu0
        %5258 = vmatprep.mubr.f32.mxu0 %v5129
        %5259 = vmatmul.mubr.f32.gmra.mrb[0].mxu0 %v5063
        %v5260 = vpop.f32.mrb[0].mxu0
        %v5261 = vadd.f32 0.0, %v5260
        %v5262 = vpop.f32.mrb[0].mxu0
        %5263 = vmatprep.mubr.f32.mxu0 %v5132
        %5264 = vmatmul.mubr.f32.gmra.mrb[0].mxu0 %v5065
        %v5265 = vpop.f32.mrb[0].mxu0
        %v5266 = vadd.f32 0.0, %v5265
        %v5267 = vpop.f32.mrb[0].mxu0
        %5268 = vmatprep.mubr.f32.mxu0 %v5135
        %5269 = vmatmul.mubr.f32.gmra.mrb[0].mxu0 %v5067
        %v5270 = vpop.f32.mrb[0].mxu0
        %v5271 = vadd.f32 0.0, %v5270
        %v5272 = vpop.f32.mrb[0].mxu0
        %5273 = vmatprep.mubr.f32.mxu0 %v5138
        %5274 = vmatmul.mubr.f32.gmra.mrb[0].mxu0 %v5069
        %v5275 = vpop.f32.mrb[0].mxu0
        %v5276 = vadd.f32 0.0, %v5275
        %v5277 = vpop.f32.mrb[0].mxu0
        %5278 = vmatprep.mubr.f32.mxu0 %v5141
        %5279 = vmatmul.mubr.f32.gmra.mrb[0].mxu0 %v5071
        %v5280 = vpop.f32.mrb[0].mxu0
        %v5281 = vadd.f32 0.0, %v5280
        %v5282 = vpop.f32.mrb[0].mxu0
        %5283 = vmatprep.mubr.f32.mxu0 %v5144
        %5284 = vmatmul.mubr.f32.gmra.mrb[0].mxu0 %v5073
        %v5285 = vpop.f32.mrb[0].mxu0
        %v5286 = vadd.f32 0.0, %v5285
        %v5287 = vpop.f32.mrb[0].mxu0
        %5288 = vmatprep.mubr.f32.mxu0 %v5147
        %5289 = vmatmul.mubr.f32.gmra.mrb[0].mxu0 %v5075
        %v5290 = vpop.f32.mrb[0].mxu0
        %v5291 = vadd.f32 0.0, %v5290
        %v5292 = vpop.f32.mrb[0].mxu0
        %5293 = vdwg.mxu0
        %vm5294 = vcmp.eq.f32.partialorder %v5216, 0.0
        %vm5295 = vcmp.eq.f32.partialorder %v5221, 0.0
        %vm5296 = vcmp.eq.f32.partialorder %v5226, 0.0
        %vm5297 = vcmp.eq.f32.partialorder %v5231, 0.0
        %vm5298 = vcmp.eq.f32.partialorder %v5236, 0.0
        %vm5299 = vcmp.eq.f32.partialorder %v5241, 0.0
        %vm5300 = vcmp.eq.f32.partialorder %v5246, 0.0
        %vm5301 = vcmp.eq.f32.partialorder %v5251, 0.0
        %vm5302 = vcmp.eq.f32.partialorder %v5256, 0.0
        %vm5303 = vcmp.eq.f32.partialorder %v5261, 0.0
        %vm5304 = vcmp.eq.f32.partialorder %v5266, 0.0
        %vm5305 = vcmp.eq.f32.partialorder %v5271, 0.0
        %vm5306 = vcmp.eq.f32.partialorder %v5276, 0.0
        %vm5307 = vcmp.eq.f32.partialorder %v5281, 0.0
        %vm5308 = vcmp.eq.f32.partialorder %v5286, 0.0
        %vm5309 = vcmp.eq.f32.partialorder %v5291, 0.0
        %v5310 = vsel %vm5294, 2.220446e-16, %v5216
        %v5311 = vsel %vm5295, 2.220446e-16, %v5221
        %v5312 = vsel %vm5296, 2.220446e-16, %v5226
        %v5313 = vsel %vm5297, 2.220446e-16, %v5231
        %v5314 = vsel %vm5298, 2.220446e-16, %v5236
        %v5315 = vsel %vm5299, 2.220446e-16, %v5241
        %v5316 = vsel %vm5300, 2.220446e-16, %v5246
        %v5317 = vsel %vm5301, 2.220446e-16, %v5251
        %v5318 = vsel %vm5302, 2.220446e-16, %v5256
        %v5319 = vsel %vm5303, 2.220446e-16, %v5261
        %v5320 = vsel %vm5304, 2.220446e-16, %v5266
        %v5321 = vsel %vm5305, 2.220446e-16, %v5271
        %v5322 = vsel %vm5306, 2.220446e-16, %v5276
        %v5323 = vsel %vm5307, 2.220446e-16, %v5281
        %v5324 = vsel %vm5308, 2.220446e-16, %v5286
        %v5325 = vsel %vm5309, 2.220446e-16, %v5291
        %v5326 = vlog2.pop %v5310
        %v5327 = vmul.f32 %v5326, 0.6931472
        %v5328 = vlog2.pop %v5311
        %v5329 = vmul.f32 %v5328, 0.6931472
        %v5330 = vlog2.pop %v5312
        %v5331 = vmul.f32 %v5330, 0.6931472
        %v5332 = vlog2.pop %v5313
        %v5333 = vmul.f32 %v5332, 0.6931472
        %v5334 = vlog2.pop %v5314
        %v5335 = vmul.f32 %v5334, 0.6931472
        %v5336 = vlog2.pop %v5315
        %v5337 = vmul.f32 %v5336, 0.6931472
        %v5338 = vlog2.pop %v5316
        %v5339 = vmul.f32 %v5338, 0.6931472
        %v5340 = vlog2.pop %v5317
        %v5341 = vmul.f32 %v5340, 0.6931472
        %v5342 = vlog2.pop %v5318
        %v5343 = vmul.f32 %v5342, 0.6931472
        %v5344 = vlog2.pop %v5319
        %v5345 = vmul.f32 %v5344, 0.6931472
        %v5346 = vlog2.pop %v5320
        %v5347 = vmul.f32 %v5346, 0.6931472
        %v5348 = vlog2.pop %v5321
        %v5349 = vmul.f32 %v5348, 0.6931472
        %v5350 = vlog2.pop %v5322
        %v5351 = vmul.f32 %v5350, 0.6931472
        %v5352 = vlog2.pop %v5323
        %v5353 = vmul.f32 %v5352, 0.6931472
        %v5354 = vlog2.pop %v5324
        %v5355 = vmul.f32 %v5354, 0.6931472
        %v5356 = vlog2.pop %v5325
        %v5357 = vmul.f32 %v5356, 0.6931472
        %v5358 = vadd.f32 %v5327, %v2934
        %v5359 = vadd.f32 %v5329, %v2935
        %v5360 = vadd.f32 %v5331, %v2936
        %v5361 = vadd.f32 %v5333, %v2937
        %v5362 = vadd.f32 %v5335, %v2938
        %v5363 = vadd.f32 %v5337, %v2939
        %v5364 = vadd.f32 %v5339, %v2940
        %v5365 = vadd.f32 %v5341, %v2941
        %v5366 = vadd.f32 %v5343, %v2942
        %v5367 = vadd.f32 %v5345, %v2943
        %v5368 = vadd.f32 %v5347, %v2944
        %v5369 = vadd.f32 %v5349, %v2945
        %v5370 = vadd.f32 %v5351, %v2946
        %v5371 = vadd.f32 %v5353, %v2947
        %v5372 = vadd.f32 %v5355, %v2948
        %v5373 = vadd.f32 %v5357, %v2949
        %s5374 = scalar_lea.vmem %s461, 128
        %5375 = vst.msk [vmem:[%s5374] sm:$0xff] %vm491, %v5358
        %5376 = vst.msk [vmem:[%s5374 + $0x8] sm:$0xff] %vm491, %v5359
        %5377 = vst.msk [vmem:[%s5374 + $0x10] sm:$0xff] %vm491, %v5360
        %5378 = vst.msk [vmem:[%s5374 + $0x18] sm:$0xff] %vm491, %v5361
        %5379 = vst.msk [vmem:[%s5374 + $0x20] sm:$0xff] %vm491, %v5362
        %5380 = vst.msk [vmem:[%s5374 + $0x28] sm:$0xff] %vm491, %v5363
        %5381 = vst.msk [vmem:[%s5374 + $0x30] sm:$0xff] %vm491, %v5364
        %5382 = vst.msk [vmem:[%s5374 + $0x38] sm:$0xff] %vm491, %v5365
        %5383 = vst.msk [vmem:[%s5374 + $0x40] sm:$0xff] %vm491, %v5366
        %5384 = vst.msk [vmem:[%s5374 + $0x48] sm:$0xff] %vm491, %v5367
        %5385 = vst.msk [vmem:[%s5374 + $0x50] sm:$0xff] %vm491, %v5368
        %5386 = vst.msk [vmem:[%s5374 + $0x58] sm:$0xff] %vm491, %v5369
        %5387 = vst.msk [vmem:[%s5374 + $0x60] sm:$0xff] %vm491, %v5370
        %5388 = vst.msk [vmem:[%s5374 + $0x68] sm:$0xff] %vm491, %v5371
        %5389 = vst.msk [vmem:[%s5374 + $0x70] sm:$0xff] %vm491, %v5372
        %5390 = vst.msk [vmem:[%s5374 + $0x78] sm:$0xff] %vm491, %v5373
        %s5391 = scalar_lea.vmem %s448, 256
        %v5392 = vld [vmem:[%s5391] sm:$0xff]
        %v5393 = vld [vmem:[%s5391 + $0x8] sm:$0xff]
        %v5394 = vld [vmem:[%s5391 + $0x10] sm:$0xff]
        %v5395 = vld [vmem:[%s5391 + $0x18] sm:$0xff]
        %v5396 = vld [vmem:[%s5391 + $0x20] sm:$0xff]
        %v5397 = vld [vmem:[%s5391 + $0x28] sm:$0xff]
        %v5398 = vld [vmem:[%s5391 + $0x30] sm:$0xff]
        %v5399 = vld [vmem:[%s5391 + $0x38] sm:$0xff]
        %v5400 = vld [vmem:[%s5391 + $0x40] sm:$0xff]
        %v5401 = vld [vmem:[%s5391 + $0x48] sm:$0xff]
        %v5402 = vld [vmem:[%s5391 + $0x50] sm:$0xff]
        %v5403 = vld [vmem:[%s5391 + $0x58] sm:$0xff]
        %v5404 = vld [vmem:[%s5391 + $0x60] sm:$0xff]
        %v5405 = vld [vmem:[%s5391 + $0x68] sm:$0xff]
        %v5406 = vld [vmem:[%s5391 + $0x70] sm:$0xff]
        %v5407 = vld [vmem:[%s5391 + $0x78] sm:$0xff]
        %v5409 = vsel %vm491, %v5392, 0
        %v5412 = vsel %vm491, %v5393, 0
        %v5415 = vsel %vm491, %v5394, 0
        %v5418 = vsel %vm491, %v5395, 0
        %v5421 = vsel %vm491, %v5396, 0
        %v5424 = vsel %vm491, %v5397, 0
        %v5427 = vsel %vm491, %v5398, 0
        %v5430 = vsel %vm491, %v5399, 0
        %v5433 = vsel %vm491, %v5400, 0
        %v5436 = vsel %vm491, %v5401, 0
        %v5439 = vsel %vm491, %v5402, 0
        %v5442 = vsel %vm491, %v5403, 0
        %v5445 = vsel %vm491, %v5404, 0
        %v5448 = vsel %vm491, %v5405, 0
        %v5451 = vsel %vm491, %v5406, 0
        %v5454 = vsel %vm491, %v5407, 0
        %5456 = vmatprep.subr.mxu0 0.0
        %5457 = vmatpush1.msra.mxu0 %v465
        %5458 = vmatprep.subr.mxu0 0.0
        %5459 = vmatpush1.msra.mxu0 %v466
        %5460 = vmatprep.subr.mxu0 0.0
        %5461 = vmatpush1.msra.mxu0 %v467
        %5462 = vmatprep.subr.mxu0 0.0
        %5463 = vmatpush1.msra.mxu0 %v468
        %5464 = vmatprep.subr.mxu0 0.0
        %5465 = vmatpush1.msra.mxu0 0.0
        %5466 = vmatprep.subr.mxu0 0.0
        %5467 = vmatpush1.msra.mxu0 0.0
        %5468 = vmatprep.subr.mxu0 0.0
        %5469 = vmatpush1.msra.mxu0 0.0
        %5470 = vmatprep.subr.mxu0 0.0
        %5471 = vmatpush1.msra.mxu0 0.0
        %5472 = vmatprep.subr.mxu0 0.0
        %5473 = vmatpush1.msra.mxu0 0.0
        %5474 = vmatprep.subr.mxu0 0.0
        %5475 = vmatpush1.msra.mxu0 0.0
        %5476 = vmatprep.subr.mxu0 0.0
        %5477 = vmatpush1.msra.mxu0 0.0
        %5478 = vmatprep.subr.mxu0 0.0
        %5479 = vmatpush1.msra.mxu0 0.0
        %5480 = vmatprep.subr.mxu0 0.0
        %5481 = vmatpush1.msra.mxu0 0.0
        %5482 = vmatprep.subr.mxu0 0.0
        %5483 = vmatpush1.msra.mxu0 0.0
        %5484 = vmatprep.subr.mxu0 0.0
        %5485 = vmatpush1.msra.mxu0 0.0
        %5486 = vmatprep.subr.mxu0 0.0
        %5487 = vmatpush1.msra.mxu0 0.0
        %5488 = vmatprep.subr.mxu0 0.0
        %5489 = vmatpush1.msra.mxu0 0.0
        %5490 = vmatprep.subr.mxu0 0.0
        %5491 = vmatpush1.msra.mxu0 0.0
        %5492 = vmatprep.subr.mxu0 0.0
        %5493 = vmatpush1.msra.mxu0 0.0
        %5494 = vmatprep.subr.mxu0 0.0
        %5495 = vmatpush1.msra.mxu0 0.0
        %5496 = vmatprep.subr.mxu0 0.0
        %5497 = vmatpush1.msra.mxu0 0.0
        %5498 = vmatprep.subr.mxu0 0.0
        %5499 = vmatpush1.msra.mxu0 0.0
        %5500 = vmatprep.subr.mxu0 0.0
        %5501 = vmatpush1.msra.mxu0 0.0
        %5502 = vmatprep.subr.mxu0 0.0
        %5503 = vmatpush1.msra.mxu0 0.0
        %5504 = vmatprep.subr.mxu0 0.0
        %5505 = vmatpush1.msra.mxu0 0.0
        %5506 = vmatprep.subr.mxu0 0.0
        %5507 = vmatpush1.msra.mxu0 0.0
        %5508 = vmatprep.subr.mxu0 0.0
        %5509 = vmatpush1.msra.mxu0 0.0
        %5510 = vmatprep.subr.mxu0 0.0
        %5511 = vmatpush1.msra.mxu0 0.0
        %5512 = vmatprep.subr.mxu0 0.0
        %5513 = vmatpush1.msra.mxu0 0.0
        %5514 = vmatprep.subr.mxu0 0.0
        %5515 = vmatpush1.msra.mxu0 0.0
        %5516 = vmatprep.subr.mxu0 0.0
        %5517 = vmatpush1.msra.mxu0 0.0
        %5518 = vmatprep.subr.mxu0 0.0
        %5519 = vmatpush1.msra.mxu0 0.0
        %5520 = vmatprep.mubr.f32.mxu0 0.0
        %5521 = vmatmul.mubr.f32.gmra.mrb[0].mxu0 %v5409
        %v5522 = vpop.f32.mrb[0].mxu0
        %v5523 = vadd.f32 %v489, %v5522
        %v5524 = vpop.f32.mrb[0].mxu0
        %5525 = vmatprep.mubr.f32.mxu0 0.0
        %5526 = vmatmul.mubr.f32.gmra.mrb[0].mxu0 %v5412
        %v5527 = vpop.f32.mrb[0].mxu0
        %v5528 = vadd.f32 %v489, %v5527
        %v5529 = vpop.f32.mrb[0].mxu0
        %5530 = vmatprep.mubr.f32.mxu0 0.0
        %5531 = vmatmul.mubr.f32.gmra.mrb[0].mxu0 %v5415
        %v5532 = vpop.f32.mrb[0].mxu0
        %v5533 = vadd.f32 %v489, %v5532
        %v5534 = vpop.f32.mrb[0].mxu0
        %5535 = vmatprep.mubr.f32.mxu0 0.0
        %5536 = vmatmul.mubr.f32.gmra.mrb[0].mxu0 %v5418
        %v5537 = vpop.f32.mrb[0].mxu0
        %v5538 = vadd.f32 %v489, %v5537
        %v5539 = vpop.f32.mrb[0].mxu0
        %5540 = vmatprep.mubr.f32.mxu0 0.0
        %5541 = vmatmul.mubr.f32.gmra.mrb[0].mxu0 %v5421
        %v5542 = vpop.f32.mrb[0].mxu0
        %v5543 = vadd.f32 %v489, %v5542
        %v5544 = vpop.f32.mrb[0].mxu0
        %5545 = vmatprep.mubr.f32.mxu0 0.0
        %5546 = vmatmul.mubr.f32.gmra.mrb[0].mxu0 %v5424
        %v5547 = vpop.f32.mrb[0].mxu0
        %v5548 = vadd.f32 %v489, %v5547
        %v5549 = vpop.f32.mrb[0].mxu0
        %5550 = vmatprep.mubr.f32.mxu0 0.0
        %5551 = vmatmul.mubr.f32.gmra.mrb[0].mxu0 %v5427
        %v5552 = vpop.f32.mrb[0].mxu0
        %v5553 = vadd.f32 %v489, %v5552
        %v5554 = vpop.f32.mrb[0].mxu0
        %5555 = vmatprep.mubr.f32.mxu0 0.0
        %5556 = vmatmul.mubr.f32.gmra.mrb[0].mxu0 %v5430
        %v5557 = vpop.f32.mrb[0].mxu0
        %v5558 = vadd.f32 %v489, %v5557
        %v5559 = vpop.f32.mrb[0].mxu0
        %5560 = vmatprep.mubr.f32.mxu0 0.0
        %5561 = vmatmul.mubr.f32.gmra.mrb[0].mxu0 %v5433
        %v5562 = vpop.f32.mrb[0].mxu0
        %v5563 = vadd.f32 %v489, %v5562
        %v5564 = vpop.f32.mrb[0].mxu0
        %5565 = vmatprep.mubr.f32.mxu0 0.0
        %5566 = vmatmul.mubr.f32.gmra.mrb[0].mxu0 %v5436
        %v5567 = vpop.f32.mrb[0].mxu0
        %v5568 = vadd.f32 %v489, %v5567
        %v5569 = vpop.f32.mrb[0].mxu0
        %5570 = vmatprep.mubr.f32.mxu0 0.0
        %5571 = vmatmul.mubr.f32.gmra.mrb[0].mxu0 %v5439
        %v5572 = vpop.f32.mrb[0].mxu0
        %v5573 = vadd.f32 %v489, %v5572
        %v5574 = vpop.f32.mrb[0].mxu0
        %5575 = vmatprep.mubr.f32.mxu0 0.0
        %5576 = vmatmul.mubr.f32.gmra.mrb[0].mxu0 %v5442
        %v5577 = vpop.f32.mrb[0].mxu0
        %v5578 = vadd.f32 %v489, %v5577
        %v5579 = vpop.f32.mrb[0].mxu0
        %5580 = vmatprep.mubr.f32.mxu0 0.0
        %5581 = vmatmul.mubr.f32.gmra.mrb[0].mxu0 %v5445
        %v5582 = vpop.f32.mrb[0].mxu0
        %v5583 = vadd.f32 %v489, %v5582
        %v5584 = vpop.f32.mrb[0].mxu0
        %5585 = vmatprep.mubr.f32.mxu0 0.0
        %5586 = vmatmul.mubr.f32.gmra.mrb[0].mxu0 %v5448
        %v5587 = vpop.f32.mrb[0].mxu0
        %v5588 = vadd.f32 %v489, %v5587
        %v5589 = vpop.f32.mrb[0].mxu0
        %5590 = vmatprep.mubr.f32.mxu0 0.0
        %5591 = vmatmul.mubr.f32.gmra.mrb[0].mxu0 %v5451
        %v5592 = vpop.f32.mrb[0].mxu0
        %v5593 = vadd.f32 %v489, %v5592
        %v5594 = vpop.f32.mrb[0].mxu0
        %5595 = vmatprep.mubr.f32.mxu0 0.0
        %5596 = vmatmul.mubr.f32.gmra.mrb[0].mxu0 %v5454
        %v5597 = vpop.f32.mrb[0].mxu0
        %v5598 = vadd.f32 %v489, %v5597
        %v5599 = vpop.f32.mrb[0].mxu0
        %5600 = vdwg.mxu0
        %5601 = vmax.xlane.f32.xlu0 %v5523
        %v5602 = vpop.xlane.xlu0 %5601
        %5603 = vmax.xlane.f32.xlu0 %v5528
        %v5604 = vpop.xlane.xlu0 %5603
        %5605 = vmax.xlane.f32.xlu0 %v5533
        %v5606 = vpop.xlane.xlu0 %5605
        %5607 = vmax.xlane.f32.xlu0 %v5538
        %v5608 = vpop.xlane.xlu0 %5607
        %5609 = vmax.xlane.f32.xlu0 %v5543
        %v5610 = vpop.xlane.xlu0 %5609
        %5611 = vmax.xlane.f32.xlu0 %v5548
        %v5612 = vpop.xlane.xlu0 %5611
        %5613 = vmax.xlane.f32.xlu0 %v5553
        %v5614 = vpop.xlane.xlu0 %5613
        %5615 = vmax.xlane.f32.xlu0 %v5558
        %v5616 = vpop.xlane.xlu0 %5615
        %5617 = vmax.xlane.f32.xlu0 %v5563
        %v5618 = vpop.xlane.xlu0 %5617
        %5619 = vmax.xlane.f32.xlu0 %v5568
        %v5620 = vpop.xlane.xlu0 %5619
        %5621 = vmax.xlane.f32.xlu0 %v5573
        %v5622 = vpop.xlane.xlu0 %5621
        %5623 = vmax.xlane.f32.xlu0 %v5578
        %v5624 = vpop.xlane.xlu0 %5623
        %5625 = vmax.xlane.f32.xlu0 %v5583
        %v5626 = vpop.xlane.xlu0 %5625
        %5627 = vmax.xlane.f32.xlu0 %v5588
        %v5628 = vpop.xlane.xlu0 %5627
        %5629 = vmax.xlane.f32.xlu0 %v5593
        %v5630 = vpop.xlane.xlu0 %5629
        %5631 = vmax.xlane.f32.xlu0 %v5598
        %v5632 = vpop.xlane.xlu0 %5631
        %vm5633 = vcmp.eq.f32.partialorder %v5523, %v5602
        %vm5634 = vcmp.eq.f32.partialorder %v5528, %v5604
        %vm5635 = vcmp.eq.f32.partialorder %v5533, %v5606
        %vm5636 = vcmp.eq.f32.partialorder %v5538, %v5608
        %vm5637 = vcmp.eq.f32.partialorder %v5543, %v5610
        %vm5638 = vcmp.eq.f32.partialorder %v5548, %v5612
        %vm5639 = vcmp.eq.f32.partialorder %v5553, %v5614
        %vm5640 = vcmp.eq.f32.partialorder %v5558, %v5616
        %vm5641 = vcmp.eq.f32.partialorder %v5563, %v5618
        %vm5642 = vcmp.eq.f32.partialorder %v5568, %v5620
        %vm5643 = vcmp.eq.f32.partialorder %v5573, %v5622
        %vm5644 = vcmp.eq.f32.partialorder %v5578, %v5624
        %vm5645 = vcmp.eq.f32.partialorder %v5583, %v5626
        %vm5646 = vcmp.eq.f32.partialorder %v5588, %v5628
        %vm5647 = vcmp.eq.f32.partialorder %v5593, %v5630
        %vm5648 = vcmp.eq.f32.partialorder %v5598, %v5632
        %v5649 = vsel %vm5633, -1e+30, %v5523
        %v5650 = vsel %vm5634, -1e+30, %v5528
        %v5651 = vsel %vm5635, -1e+30, %v5533
        %v5652 = vsel %vm5636, -1e+30, %v5538
        %v5653 = vsel %vm5637, -1e+30, %v5543
        %v5654 = vsel %vm5638, -1e+30, %v5548
        %v5655 = vsel %vm5639, -1e+30, %v5553
        %v5656 = vsel %vm5640, -1e+30, %v5558
        %v5657 = vsel %vm5641, -1e+30, %v5563
        %v5658 = vsel %vm5642, -1e+30, %v5568
        %v5659 = vsel %vm5643, -1e+30, %v5573
        %v5660 = vsel %vm5644, -1e+30, %v5578
        %v5661 = vsel %vm5645, -1e+30, %v5583
        %v5662 = vsel %vm5646, -1e+30, %v5588
        %v5663 = vsel %vm5647, -1e+30, %v5593
        %v5664 = vsel %vm5648, -1e+30, %v5598
        %5665 = vmax.xlane.f32.xlu0 %v5649
        %v5666 = vpop.xlane.xlu0 %5665
        %5667 = vmax.xlane.f32.xlu0 %v5650
        %v5668 = vpop.xlane.xlu0 %5667
        %5669 = vmax.xlane.f32.xlu0 %v5651
        %v5670 = vpop.xlane.xlu0 %5669
        %5671 = vmax.xlane.f32.xlu0 %v5652
        %v5672 = vpop.xlane.xlu0 %5671
        %5673 = vmax.xlane.f32.xlu0 %v5653
        %v5674 = vpop.xlane.xlu0 %5673
        %5675 = vmax.xlane.f32.xlu0 %v5654
        %v5676 = vpop.xlane.xlu0 %5675
        %5677 = vmax.xlane.f32.xlu0 %v5655
        %v5678 = vpop.xlane.xlu0 %5677
        %5679 = vmax.xlane.f32.xlu0 %v5656
        %v5680 = vpop.xlane.xlu0 %5679
        %5681 = vmax.xlane.f32.xlu0 %v5657
        %v5682 = vpop.xlane.xlu0 %5681
        %5683 = vmax.xlane.f32.xlu0 %v5658
        %v5684 = vpop.xlane.xlu0 %5683
        %5685 = vmax.xlane.f32.xlu0 %v5659
        %v5686 = vpop.xlane.xlu0 %5685
        %5687 = vmax.xlane.f32.xlu0 %v5660
        %v5688 = vpop.xlane.xlu0 %5687
        %5689 = vmax.xlane.f32.xlu0 %v5661
        %v5690 = vpop.xlane.xlu0 %5689
        %5691 = vmax.xlane.f32.xlu0 %v5662
        %v5692 = vpop.xlane.xlu0 %5691
        %5693 = vmax.xlane.f32.xlu0 %v5663
        %v5694 = vpop.xlane.xlu0 %5693
        %5695 = vmax.xlane.f32.xlu0 %v5664
        %v5696 = vpop.xlane.xlu0 %5695
        %vm5697 = vcmp.eq.f32.partialorder %v5649, %v5666
        %vm5698 = vcmp.eq.f32.partialorder %v5650, %v5668
        %vm5699 = vcmp.eq.f32.partialorder %v5651, %v5670
        %vm5700 = vcmp.eq.f32.partialorder %v5652, %v5672
        %vm5701 = vcmp.eq.f32.partialorder %v5653, %v5674
        %vm5702 = vcmp.eq.f32.partialorder %v5654, %v5676
        %vm5703 = vcmp.eq.f32.partialorder %v5655, %v5678
        %vm5704 = vcmp.eq.f32.partialorder %v5656, %v5680
        %vm5705 = vcmp.eq.f32.partialorder %v5657, %v5682
        %vm5706 = vcmp.eq.f32.partialorder %v5658, %v5684
        %vm5707 = vcmp.eq.f32.partialorder %v5659, %v5686
        %vm5708 = vcmp.eq.f32.partialorder %v5660, %v5688
        %vm5709 = vcmp.eq.f32.partialorder %v5661, %v5690
        %vm5710 = vcmp.eq.f32.partialorder %v5662, %v5692
        %vm5711 = vcmp.eq.f32.partialorder %v5663, %v5694
        %vm5712 = vcmp.eq.f32.partialorder %v5664, %v5696
        %v5713 = vsub.f32 %v5666, %v5602
        %v5714 = vsub.f32 %v5668, %v5604
        %v5715 = vsub.f32 %v5670, %v5606
        %v5716 = vsub.f32 %v5672, %v5608
        %v5717 = vsub.f32 %v5674, %v5610
        %v5718 = vsub.f32 %v5676, %v5612
        %v5719 = vsub.f32 %v5678, %v5614
        %v5720 = vsub.f32 %v5680, %v5616
        %v5721 = vsub.f32 %v5682, %v5618
        %v5722 = vsub.f32 %v5684, %v5620
        %v5723 = vsub.f32 %v5686, %v5622
        %v5724 = vsub.f32 %v5688, %v5624
        %v5725 = vsub.f32 %v5690, %v5626
        %v5726 = vsub.f32 %v5692, %v5628
        %v5727 = vsub.f32 %v5694, %v5630
        %v5728 = vsub.f32 %v5696, %v5632
        %v5729 = vmul.f32 %v5713, 1.442695
        %v5730 = vpow.pop %v5729
        %v5731 = vmul.f32 %v5714, 1.442695
        %v5732 = vpow.pop %v5731
        %v5733 = vmul.f32 %v5715, 1.442695
        %v5734 = vpow.pop %v5733
        %v5735 = vmul.f32 %v5716, 1.442695
        %v5736 = vpow.pop %v5735
        %v5737 = vmul.f32 %v5717, 1.442695
        %v5738 = vpow.pop %v5737
        %v5739 = vmul.f32 %v5718, 1.442695
        %v5740 = vpow.pop %v5739
        %v5741 = vmul.f32 %v5719, 1.442695
        %v5742 = vpow.pop %v5741
        %v5743 = vmul.f32 %v5720, 1.442695
        %v5744 = vpow.pop %v5743
        %v5745 = vmul.f32 %v5721, 1.442695
        %v5746 = vpow.pop %v5745
        %v5747 = vmul.f32 %v5722, 1.442695
        %v5748 = vpow.pop %v5747
        %v5749 = vmul.f32 %v5723, 1.442695
        %v5750 = vpow.pop %v5749
        %v5751 = vmul.f32 %v5724, 1.442695
        %v5752 = vpow.pop %v5751
        %v5753 = vmul.f32 %v5725, 1.442695
        %v5754 = vpow.pop %v5753
        %v5755 = vmul.f32 %v5726, 1.442695
        %v5756 = vpow.pop %v5755
        %v5757 = vmul.f32 %v5727, 1.442695
        %v5758 = vpow.pop %v5757
        %v5759 = vmul.f32 %v5728, 1.442695
        %v5760 = vpow.pop %v5759
        %v5761 = vadd.f32 %v5730, 1.0
        %v5762 = vadd.f32 %v5732, 1.0
        %v5763 = vadd.f32 %v5734, 1.0
        %v5764 = vadd.f32 %v5736, 1.0
        %v5765 = vadd.f32 %v5738, 1.0
        %v5766 = vadd.f32 %v5740, 1.0
        %v5767 = vadd.f32 %v5742, 1.0
        %v5768 = vadd.f32 %v5744, 1.0
        %v5769 = vadd.f32 %v5746, 1.0
        %v5770 = vadd.f32 %v5748, 1.0
        %v5771 = vadd.f32 %v5750, 1.0
        %v5772 = vadd.f32 %v5752, 1.0
        %v5773 = vadd.f32 %v5754, 1.0
        %v5774 = vadd.f32 %v5756, 1.0
        %v5775 = vadd.f32 %v5758, 1.0
        %v5776 = vadd.f32 %v5760, 1.0
        %v5777 = vrcp.pop %v5761
        %v5778 = vmul.f32 1.0, %v5777
        %v5779 = vrcp.pop %v5762
        %v5780 = vmul.f32 1.0, %v5779
        %v5781 = vrcp.pop %v5763
        %v5782 = vmul.f32 1.0, %v5781
        %v5783 = vrcp.pop %v5764
        %v5784 = vmul.f32 1.0, %v5783
        %v5785 = vrcp.pop %v5765
        %v5786 = vmul.f32 1.0, %v5785
        %v5787 = vrcp.pop %v5766
        %v5788 = vmul.f32 1.0, %v5787
        %v5789 = vrcp.pop %v5767
        %v5790 = vmul.f32 1.0, %v5789
        %v5791 = vrcp.pop %v5768
        %v5792 = vmul.f32 1.0, %v5791
        %v5793 = vrcp.pop %v5769
        %v5794 = vmul.f32 1.0, %v5793
        %v5795 = vrcp.pop %v5770
        %v5796 = vmul.f32 1.0, %v5795
        %v5797 = vrcp.pop %v5771
        %v5798 = vmul.f32 1.0, %v5797
        %v5799 = vrcp.pop %v5772
        %v5800 = vmul.f32 1.0, %v5799
        %v5801 = vrcp.pop %v5773
        %v5802 = vmul.f32 1.0, %v5801
        %v5803 = vrcp.pop %v5774
        %v5804 = vmul.f32 1.0, %v5803
        %v5805 = vrcp.pop %v5775
        %v5806 = vmul.f32 1.0, %v5805
        %v5807 = vrcp.pop %v5776
        %v5808 = vmul.f32 1.0, %v5807
        %v5809 = vmul.f32 %v5730, %v5778
        %v5810 = vmul.f32 %v5732, %v5780
        %v5811 = vmul.f32 %v5734, %v5782
        %v5812 = vmul.f32 %v5736, %v5784
        %v5813 = vmul.f32 %v5738, %v5786
        %v5814 = vmul.f32 %v5740, %v5788
        %v5815 = vmul.f32 %v5742, %v5790
        %v5816 = vmul.f32 %v5744, %v5792
        %v5817 = vmul.f32 %v5746, %v5794
        %v5818 = vmul.f32 %v5748, %v5796
        %v5819 = vmul.f32 %v5750, %v5798
        %v5820 = vmul.f32 %v5752, %v5800
        %v5821 = vmul.f32 %v5754, %v5802
        %v5822 = vmul.f32 %v5756, %v5804
        %v5823 = vmul.f32 %v5758, %v5806
        %v5824 = vmul.f32 %v5760, %v5808
        %v5825 = vsel %vm5633, %v5778, 0.0
        %v5826 = vsel %vm5634, %v5780, 0.0
        %v5827 = vsel %vm5635, %v5782, 0.0
        %v5828 = vsel %vm5636, %v5784, 0.0
        %v5829 = vsel %vm5637, %v5786, 0.0
        %v5830 = vsel %vm5638, %v5788, 0.0
        %v5831 = vsel %vm5639, %v5790, 0.0
        %v5832 = vsel %vm5640, %v5792, 0.0
        %v5833 = vsel %vm5641, %v5794, 0.0
        %v5834 = vsel %vm5642, %v5796, 0.0
        %v5835 = vsel %vm5643, %v5798, 0.0
        %v5836 = vsel %vm5644, %v5800, 0.0
        %v5837 = vsel %vm5645, %v5802, 0.0
        %v5838 = vsel %vm5646, %v5804, 0.0
        %v5839 = vsel %vm5647, %v5806, 0.0
        %v5840 = vsel %vm5648, %v5808, 0.0
        %v5841 = vsel %vm5697, %v5809, 0.0
        %v5842 = vsel %vm5698, %v5810, 0.0
        %v5843 = vsel %vm5699, %v5811, 0.0
        %v5844 = vsel %vm5700, %v5812, 0.0
        %v5845 = vsel %vm5701, %v5813, 0.0
        %v5846 = vsel %vm5702, %v5814, 0.0
        %v5847 = vsel %vm5703, %v5815, 0.0
        %v5848 = vsel %vm5704, %v5816, 0.0
        %v5849 = vsel %vm5705, %v5817, 0.0
        %v5850 = vsel %vm5706, %v5818, 0.0
        %v5851 = vsel %vm5707, %v5819, 0.0
        %v5852 = vsel %vm5708, %v5820, 0.0
        %v5853 = vsel %vm5709, %v5821, 0.0
        %v5854 = vsel %vm5710, %v5822, 0.0
        %v5855 = vsel %vm5711, %v5823, 0.0
        %v5856 = vsel %vm5712, %v5824, 0.0
        %v5857 = vadd.f32 %v5825, %v5841
        %v5858 = vadd.f32 %v5826, %v5842
        %v5859 = vadd.f32 %v5827, %v5843
        %v5860 = vadd.f32 %v5828, %v5844
        %v5861 = vadd.f32 %v5829, %v5845
        %v5862 = vadd.f32 %v5830, %v5846
        %v5863 = vadd.f32 %v5831, %v5847
        %v5864 = vadd.f32 %v5832, %v5848
        %v5865 = vadd.f32 %v5833, %v5849
        %v5866 = vadd.f32 %v5834, %v5850
        %v5867 = vadd.f32 %v5835, %v5851
        %v5868 = vadd.f32 %v5836, %v5852
        %v5869 = vadd.f32 %v5837, %v5853
        %v5870 = vadd.f32 %v5838, %v5854
        %v5871 = vadd.f32 %v5839, %v5855
        %v5872 = vadd.f32 %v5840, %v5856
        %v5873 = vadd.f32 %v5857, %v5858
        %v5874 = vadd.f32 %v5873, %v5859
        %v5875 = vadd.f32 %v5874, %v5860
        %v5876 = vadd.f32 %v5875, %v5861
        %v5877 = vadd.f32 %v5876, %v5862
        %v5878 = vadd.f32 %v5877, %v5863
        %v5879 = vadd.f32 %v5878, %v5864
        %v5880 = vadd.f32 %v5879, %v5865
        %v5881 = vadd.f32 %v5880, %v5866
        %v5882 = vadd.f32 %v5881, %v5867
        %v5883 = vadd.f32 %v5882, %v5868
        %v5884 = vadd.f32 %v5883, %v5869
        %v5885 = vadd.f32 %v5884, %v5870
        %v5886 = vadd.f32 %v5885, %v5871
        %v5887 = vadd.f32 %v5886, %v5872
        %v5888 = vrot.slane %v5887, 4
        %v5889 = vadd.f32 %v5887, %v5888
        %v5890 = vrot.slane %v5889, 2
        %v5891 = vadd.f32 %v5889, %v5890
        %v5892 = vrot.slane %v5891, 1
        %v5893 = vadd.f32 %v5891, %v5892
        %v5894 = vadd.f32 %v3436, %v5893
        %vm5895 = vcmp.gt.f32.partialorder %v5857, 0.0
        %vm5896 = vcmp.gt.f32.partialorder %v5858, 0.0
        %vm5897 = vcmp.gt.f32.partialorder %v5859, 0.0
        %vm5898 = vcmp.gt.f32.partialorder %v5860, 0.0
        %vm5899 = vcmp.gt.f32.partialorder %v5861, 0.0
        %vm5900 = vcmp.gt.f32.partialorder %v5862, 0.0
        %vm5901 = vcmp.gt.f32.partialorder %v5863, 0.0
        %vm5902 = vcmp.gt.f32.partialorder %v5864, 0.0
        %vm5903 = vcmp.gt.f32.partialorder %v5865, 0.0
        %vm5904 = vcmp.gt.f32.partialorder %v5866, 0.0
        %vm5905 = vcmp.gt.f32.partialorder %v5867, 0.0
        %vm5906 = vcmp.gt.f32.partialorder %v5868, 0.0
        %vm5907 = vcmp.gt.f32.partialorder %v5869, 0.0
        %vm5908 = vcmp.gt.f32.partialorder %v5870, 0.0
        %vm5909 = vcmp.gt.f32.partialorder %v5871, 0.0
        %vm5910 = vcmp.gt.f32.partialorder %v5872, 0.0
        %v5911 = vsel %vm5895, 1, 0
        %v5912 = vsel %vm5896, 1, 0
        %v5913 = vsel %vm5897, 1, 0
        %v5914 = vsel %vm5898, 1, 0
        %v5915 = vsel %vm5899, 1, 0
        %v5916 = vsel %vm5900, 1, 0
        %v5917 = vsel %vm5901, 1, 0
        %v5918 = vsel %vm5902, 1, 0
        %v5919 = vsel %vm5903, 1, 0
        %v5920 = vsel %vm5904, 1, 0
        %v5921 = vsel %vm5905, 1, 0
        %v5922 = vsel %vm5906, 1, 0
        %v5923 = vsel %vm5907, 1, 0
        %v5924 = vsel %vm5908, 1, 0
        %v5925 = vsel %vm5909, 1, 0
        %v5926 = vsel %vm5910, 1, 0
        %v5927 = vcvt.s32.f32 %v5911
        %v5928 = vcvt.s32.f32 %v5912
        %v5929 = vcvt.s32.f32 %v5913
        %v5930 = vcvt.s32.f32 %v5914
        %v5931 = vcvt.s32.f32 %v5915
        %v5932 = vcvt.s32.f32 %v5916
        %v5933 = vcvt.s32.f32 %v5917
        %v5934 = vcvt.s32.f32 %v5918
        %v5935 = vcvt.s32.f32 %v5919
        %v5936 = vcvt.s32.f32 %v5920
        %v5937 = vcvt.s32.f32 %v5921
        %v5938 = vcvt.s32.f32 %v5922
        %v5939 = vcvt.s32.f32 %v5923
        %v5940 = vcvt.s32.f32 %v5924
        %v5941 = vcvt.s32.f32 %v5925
        %v5942 = vcvt.s32.f32 %v5926
        %v5943 = vadd.f32 %v5927, %v5928
        %v5944 = vadd.f32 %v5943, %v5929
        %v5945 = vadd.f32 %v5944, %v5930
        %v5946 = vadd.f32 %v5945, %v5931
        %v5947 = vadd.f32 %v5946, %v5932
        %v5948 = vadd.f32 %v5947, %v5933
        %v5949 = vadd.f32 %v5948, %v5934
        %v5950 = vadd.f32 %v5949, %v5935
        %v5951 = vadd.f32 %v5950, %v5936
        %v5952 = vadd.f32 %v5951, %v5937
        %v5953 = vadd.f32 %v5952, %v5938
        %v5954 = vadd.f32 %v5953, %v5939
        %v5955 = vadd.f32 %v5954, %v5940
        %v5956 = vadd.f32 %v5955, %v5941
        %v5957 = vadd.f32 %v5956, %v5942
        %v5958 = vrot.slane %v5957, 4
        %v5959 = vadd.f32 %v5957, %v5958
        %v5960 = vrot.slane %v5959, 2
        %v5961 = vadd.f32 %v5959, %v5960
        %v5962 = vrot.slane %v5961, 1
        %v5963 = vadd.f32 %v5961, %v5962
        %v5964 = vadd.f32 %v3506, %v5963
        %v5965 = vpack.c.bf16 %v5393, %v5392
        %v5966 = vpack.c.bf16 %v5395, %v5394
        %v5967 = vpack.c.bf16 %v5397, %v5396
        %v5968 = vpack.c.bf16 %v5399, %v5398
        %v5969 = vpack.c.bf16 %v5401, %v5400
        %v5970 = vpack.c.bf16 %v5403, %v5402
        %v5971 = vpack.c.bf16 %v5405, %v5404
        %v5972 = vpack.c.bf16 %v5407, %v5406
        %v5973 = vld [vmem:[%s3] sm:$0xff]
        %v5974 = vld [vmem:[%s3 + $0x8] sm:$0xf]
        %v5975 = vld [vmem:[%s3 + $0xc] sm:$0xff]
        %v5976 = vld [vmem:[%s3 + $0x14] sm:$0xf]
        %v5977 = vld [vmem:[%s3 + $0x18] sm:$0xff]
        %v5978 = vld [vmem:[%s3 + $0x20] sm:$0xf]
        %v5979 = vld [vmem:[%s3 + $0x24] sm:$0xff]
        %v5980 = vld [vmem:[%s3 + $0x2c] sm:$0xf]
        %v5981 = vld [vmem:[%s4] sm:$0x7]
        %v5983 = vlaneseq
        %v5984 = vshrl.u32 %v5983, 7
        %v5985 = vsub.s32 0, %v5984
        %v5986 = vrot.slane %v5981, %v5985
        %v5987 = vlaneseq
        %v5988 = vshrl.u32 %v5987, 7
        %v5989 = vsub.s32 1, %v5988
        %v5990 = vrot.slane %v5981, %v5989
        %v5991 = vlaneseq
        %v5992 = vshrl.u32 %v5991, 7
        %v5993 = vsub.s32 2, %v5992
        %v5994 = vrot.slane %v5981, %v5993
        %v6006 = vunpack.c.l.b16 %v5973
        %v6007 = vunpack.c.h.b16 %v5973
        %v6008 = vunpack.c.l.b16 %v5974
        %v6009 = vunpack.c.l.b16 %v5975
        %v6010 = vunpack.c.h.b16 %v5975
        %v6011 = vunpack.c.l.b16 %v5976
        %v6012 = vunpack.c.l.b16 %v5977
        %v6013 = vunpack.c.h.b16 %v5977
        %v6014 = vunpack.c.l.b16 %v5978
        %v6015 = vunpack.c.l.b16 %v5979
        %v6016 = vunpack.c.h.b16 %v5979
        %v6017 = vunpack.c.l.b16 %v5980
        %v6018 = vpack.c.b16 %v6009, %v6006
        %v6019 = vpack.c.b16 %v6010, %v6007
        %v6020 = vpack.c.b16 %v6011, %v6008
        %v6021 = vpack.c.b16 %v6015, %v6012
        %v6022 = vpack.c.b16 %v6016, %v6013
        %v6023 = vpack.c.b16 %v6017, %v6014
        %v6031 = vsel %vm491, %v5965, 0
        %v6034 = vsel %vm491, %v5966, 0
        %v6037 = vsel %vm491, %v5967, 0
        %v6040 = vsel %vm491, %v5968, 0
        %v6043 = vsel %vm491, %v5969, 0
        %v6046 = vsel %vm491, %v5970, 0
        %v6049 = vsel %vm491, %v5971, 0
        %v6052 = vsel %vm491, %v5972, 0
        %6054 = vmatprep.subr.bf16.mxu0 %v6019
        %6055 = vmatpush1.bf16.msra.mxu0 %v6018
        %6056 = vmatprep.subr.bf16.mxu0 %v6022
        %6057 = vmatpush1.bf16.msra.mxu0 %v6021
        %6058 = vmatprep.subr.bf16.mxu0 0
        %6059 = vmatpush1.bf16.msra.mxu0 0
        %6060 = vmatprep.subr.bf16.mxu0 0
        %6061 = vmatpush1.bf16.msra.mxu0 0
        %6062 = vmatprep.subr.bf16.mxu0 0
        %6063 = vmatpush1.bf16.msra.mxu0 0
        %6064 = vmatprep.subr.bf16.mxu0 0
        %6065 = vmatpush1.bf16.msra.mxu0 0
        %6066 = vmatprep.subr.bf16.mxu0 0
        %6067 = vmatpush1.bf16.msra.mxu0 0
        %6068 = vmatprep.subr.bf16.mxu0 0
        %6069 = vmatpush1.bf16.msra.mxu0 0
        %6070 = vmatprep.subr.bf16.mxu0 0
        %6071 = vmatpush1.bf16.msra.mxu0 0
        %6072 = vmatprep.subr.bf16.mxu0 0
        %6073 = vmatpush1.bf16.msra.mxu0 0
        %6074 = vmatprep.subr.bf16.mxu0 0
        %6075 = vmatpush1.bf16.msra.mxu0 0
        %6076 = vmatprep.subr.bf16.mxu0 0
        %6077 = vmatpush1.bf16.msra.mxu0 0
        %6078 = vmatprep.subr.bf16.mxu0 0
        %6079 = vmatpush1.bf16.msra.mxu0 0
        %6080 = vmatprep.subr.bf16.mxu0 0
        %6081 = vmatpush1.bf16.msra.mxu0 0
        %6082 = vmatprep.subr.bf16.mxu0 0
        %6083 = vmatpush1.bf16.msra.mxu0 0
        %6084 = vmatprep.subr.bf16.mxu0 0
        %6085 = vmatpush1.bf16.msra.mxu0 0
        %6086 = vmatprep.mubr.bf16.mxu0 0
        %6087 = vmatmul.mubr.bf16.gmra.mrb[0].mxu0 %v6031
        %v6088 = vpop.f32.mrb[0].mxu0
        %v6089 = vadd.f32 %v5986, %v6088
        %v6090 = vpop.f32.mrb[0].mxu0
        %v6091 = vadd.f32 %v5990, %v6090
        %v6092 = vpop.f32.mrb[0].mxu0
        %v6093 = vadd.f32 %v5986, %v6092
        %v6094 = vpop.f32.mrb[0].mxu0
        %v6095 = vadd.f32 %v5990, %v6094
        %6096 = vmatprep.mubr.bf16.mxu0 0
        %6097 = vmatmul.mubr.bf16.gmra.mrb[0].mxu0 %v6034
        %v6098 = vpop.f32.mrb[0].mxu0
        %v6099 = vadd.f32 %v5986, %v6098
        %v6100 = vpop.f32.mrb[0].mxu0
        %v6101 = vadd.f32 %v5990, %v6100
        %v6102 = vpop.f32.mrb[0].mxu0
        %v6103 = vadd.f32 %v5986, %v6102
        %v6104 = vpop.f32.mrb[0].mxu0
        %v6105 = vadd.f32 %v5990, %v6104
        %6106 = vmatprep.mubr.bf16.mxu0 0
        %6107 = vmatmul.mubr.bf16.gmra.mrb[0].mxu0 %v6037
        %v6108 = vpop.f32.mrb[0].mxu0
        %v6109 = vadd.f32 %v5986, %v6108
        %v6110 = vpop.f32.mrb[0].mxu0
        %v6111 = vadd.f32 %v5990, %v6110
        %v6112 = vpop.f32.mrb[0].mxu0
        %v6113 = vadd.f32 %v5986, %v6112
        %v6114 = vpop.f32.mrb[0].mxu0
        %v6115 = vadd.f32 %v5990, %v6114
        %6116 = vmatprep.mubr.bf16.mxu0 0
        %6117 = vmatmul.mubr.bf16.gmra.mrb[0].mxu0 %v6040
        %v6118 = vpop.f32.mrb[0].mxu0
        %v6119 = vadd.f32 %v5986, %v6118
        %v6120 = vpop.f32.mrb[0].mxu0
        %v6121 = vadd.f32 %v5990, %v6120
        %v6122 = vpop.f32.mrb[0].mxu0
        %v6123 = vadd.f32 %v5986, %v6122
        %v6124 = vpop.f32.mrb[0].mxu0
        %v6125 = vadd.f32 %v5990, %v6124
        %6126 = vmatprep.mubr.bf16.mxu0 0
        %6127 = vmatmul.mubr.bf16.gmra.mrb[0].mxu0 %v6043
        %v6128 = vpop.f32.mrb[0].mxu0
        %v6129 = vadd.f32 %v5986, %v6128
        %v6130 = vpop.f32.mrb[0].mxu0
        %v6131 = vadd.f32 %v5990, %v6130
        %v6132 = vpop.f32.mrb[0].mxu0
        %v6133 = vadd.f32 %v5986, %v6132
        %v6134 = vpop.f32.mrb[0].mxu0
        %v6135 = vadd.f32 %v5990, %v6134
        %6136 = vmatprep.mubr.bf16.mxu0 0
        %6137 = vmatmul.mubr.bf16.gmra.mrb[0].mxu0 %v6046
        %v6138 = vpop.f32.mrb[0].mxu0
        %v6139 = vadd.f32 %v5986, %v6138
        %v6140 = vpop.f32.mrb[0].mxu0
        %v6141 = vadd.f32 %v5990, %v6140
        %v6142 = vpop.f32.mrb[0].mxu0
        %v6143 = vadd.f32 %v5986, %v6142
        %v6144 = vpop.f32.mrb[0].mxu0
        %v6145 = vadd.f32 %v5990, %v6144
        %6146 = vmatprep.mubr.bf16.mxu0 0
        %6147 = vmatmul.mubr.bf16.gmra.mrb[0].mxu0 %v6049
        %v6148 = vpop.f32.mrb[0].mxu0
        %v6149 = vadd.f32 %v5986, %v6148
        %v6150 = vpop.f32.mrb[0].mxu0
        %v6151 = vadd.f32 %v5990, %v6150
        %v6152 = vpop.f32.mrb[0].mxu0
        %v6153 = vadd.f32 %v5986, %v6152
        %v6154 = vpop.f32.mrb[0].mxu0
        %v6155 = vadd.f32 %v5990, %v6154
        %6156 = vmatprep.mubr.bf16.mxu0 0
        %6157 = vmatmul.mubr.bf16.gmra.mrb[0].mxu0 %v6052
        %v6158 = vpop.f32.mrb[0].mxu0
        %v6159 = vadd.f32 %v5986, %v6158
        %v6160 = vpop.f32.mrb[0].mxu0
        %v6161 = vadd.f32 %v5990, %v6160
        %v6162 = vpop.f32.mrb[0].mxu0
        %v6163 = vadd.f32 %v5986, %v6162
        %v6164 = vpop.f32.mrb[0].mxu0
        %v6165 = vadd.f32 %v5990, %v6164
        %6166 = vdwg.mxu0
        %6167 = vmatprep.subr.bf16.mxu0 0
        %6168 = vmatpush1.bf16.msra.mxu0 %v6020
        %6169 = vmatprep.subr.bf16.mxu0 0
        %6170 = vmatpush1.bf16.msra.mxu0 %v6023
        %6171 = vmatprep.subr.bf16.mxu0 0
        %6172 = vmatpush1.bf16.msra.mxu0 0
        %6173 = vmatprep.subr.bf16.mxu0 0
        %6174 = vmatpush1.bf16.msra.mxu0 0
        %6175 = vmatprep.subr.bf16.mxu0 0
        %6176 = vmatpush1.bf16.msra.mxu0 0
        %6177 = vmatprep.subr.bf16.mxu0 0
        %6178 = vmatpush1.bf16.msra.mxu0 0
        %6179 = vmatprep.subr.bf16.mxu0 0
        %6180 = vmatpush1.bf16.msra.mxu0 0
        %6181 = vmatprep.subr.bf16.mxu0 0
        %6182 = vmatpush1.bf16.msra.mxu0 0
        %6183 = vmatprep.subr.bf16.mxu0 0
        %6184 = vmatpush1.bf16.msra.mxu0 0
        %6185 = vmatprep.subr.bf16.mxu0 0
        %6186 = vmatpush1.bf16.msra.mxu0 0
        %6187 = vmatprep.subr.bf16.mxu0 0
        %6188 = vmatpush1.bf16.msra.mxu0 0
        %6189 = vmatprep.subr.bf16.mxu0 0
        %6190 = vmatpush1.bf16.msra.mxu0 0
        %6191 = vmatprep.subr.bf16.mxu0 0
        %6192 = vmatpush1.bf16.msra.mxu0 0
        %6193 = vmatprep.subr.bf16.mxu0 0
        %6194 = vmatpush1.bf16.msra.mxu0 0
        %6195 = vmatprep.subr.bf16.mxu0 0
        %6196 = vmatpush1.bf16.msra.mxu0 0
        %6197 = vmatprep.subr.bf16.mxu0 0
        %6198 = vmatpush1.bf16.msra.mxu0 0
        %6199 = vmatprep.mubr.bf16.mxu0 0
        %6200 = vmatmul.mubr.bf16.gmra.mrb[0].mxu0 %v6031
        %v6201 = vpop.f32.mrb[0].mxu0
        %v6202 = vadd.f32 %v5994, %v6201
        %v6203 = vpop.f32.mrb[0].mxu0
        %v6204 = vpop.f32.mrb[0].mxu0
        %v6205 = vadd.f32 %v5994, %v6204
        %v6206 = vpop.f32.mrb[0].mxu0
        %6207 = vmatprep.mubr.bf16.mxu0 0
        %6208 = vmatmul.mubr.bf16.gmra.mrb[0].mxu0 %v6034
        %v6209 = vpop.f32.mrb[0].mxu0
        %v6210 = vadd.f32 %v5994, %v6209
        %v6211 = vpop.f32.mrb[0].mxu0
        %v6212 = vpop.f32.mrb[0].mxu0
        %v6213 = vadd.f32 %v5994, %v6212
        %v6214 = vpop.f32.mrb[0].mxu0
        %6215 = vmatprep.mubr.bf16.mxu0 0
        %6216 = vmatmul.mubr.bf16.gmra.mrb[0].mxu0 %v6037
        %v6217 = vpop.f32.mrb[0].mxu0
        %v6218 = vadd.f32 %v5994, %v6217
        %v6219 = vpop.f32.mrb[0].mxu0
        %v6220 = vpop.f32.mrb[0].mxu0
        %v6221 = vadd.f32 %v5994, %v6220
        %v6222 = vpop.f32.mrb[0].mxu0
        %6223 = vmatprep.mubr.bf16.mxu0 0
        %6224 = vmatmul.mubr.bf16.gmra.mrb[0].mxu0 %v6040
        %v6225 = vpop.f32.mrb[0].mxu0
        %v6226 = vadd.f32 %v5994, %v6225
        %v6227 = vpop.f32.mrb[0].mxu0
        %v6228 = vpop.f32.mrb[0].mxu0
        %v6229 = vadd.f32 %v5994, %v6228
        %v6230 = vpop.f32.mrb[0].mxu0
        %6231 = vmatprep.mubr.bf16.mxu0 0
        %6232 = vmatmul.mubr.bf16.gmra.mrb[0].mxu0 %v6043
        %v6233 = vpop.f32.mrb[0].mxu0
        %v6234 = vadd.f32 %v5994, %v6233
        %v6235 = vpop.f32.mrb[0].mxu0
        %v6236 = vpop.f32.mrb[0].mxu0
        %v6237 = vadd.f32 %v5994, %v6236
        %v6238 = vpop.f32.mrb[0].mxu0
        %6239 = vmatprep.mubr.bf16.mxu0 0
        %6240 = vmatmul.mubr.bf16.gmra.mrb[0].mxu0 %v6046
        %v6241 = vpop.f32.mrb[0].mxu0
        %v6242 = vadd.f32 %v5994, %v6241
        %v6243 = vpop.f32.mrb[0].mxu0
        %v6244 = vpop.f32.mrb[0].mxu0
        %v6245 = vadd.f32 %v5994, %v6244
        %v6246 = vpop.f32.mrb[0].mxu0
        %6247 = vmatprep.mubr.bf16.mxu0 0
        %6248 = vmatmul.mubr.bf16.gmra.mrb[0].mxu0 %v6049
        %v6249 = vpop.f32.mrb[0].mxu0
        %v6250 = vadd.f32 %v5994, %v6249
        %v6251 = vpop.f32.mrb[0].mxu0
        %v6252 = vpop.f32.mrb[0].mxu0
        %v6253 = vadd.f32 %v5994, %v6252
        %v6254 = vpop.f32.mrb[0].mxu0
        %6255 = vmatprep.mubr.bf16.mxu0 0
        %6256 = vmatmul.mubr.bf16.gmra.mrb[0].mxu0 %v6052
        %v6257 = vpop.f32.mrb[0].mxu0
        %v6258 = vadd.f32 %v5994, %v6257
        %v6259 = vpop.f32.mrb[0].mxu0
        %v6260 = vpop.f32.mrb[0].mxu0
        %v6261 = vadd.f32 %v5994, %v6260
        %v6262 = vpop.f32.mrb[0].mxu0
        %6263 = vdwg.mxu0
        %v6264 = vmul.f32 %v6089, 0.5
        %v6265 = vmul.f32 %v6091, 0.5
        %v6266 = vmul.f32 %v6202, 0.5
        %v6267 = vmul.f32 %v6093, 0.5
        %v6268 = vmul.f32 %v6095, 0.5
        %v6269 = vmul.f32 %v6205, 0.5
        %v6270 = vmul.f32 %v6099, 0.5
        %v6271 = vmul.f32 %v6101, 0.5
        %v6272 = vmul.f32 %v6210, 0.5
        %v6273 = vmul.f32 %v6103, 0.5
        %v6274 = vmul.f32 %v6105, 0.5
        %v6275 = vmul.f32 %v6213, 0.5
        %v6276 = vmul.f32 %v6109, 0.5
        %v6277 = vmul.f32 %v6111, 0.5
        %v6278 = vmul.f32 %v6218, 0.5
        %v6279 = vmul.f32 %v6113, 0.5
        %v6280 = vmul.f32 %v6115, 0.5
        %v6281 = vmul.f32 %v6221, 0.5
        %v6282 = vmul.f32 %v6119, 0.5
        %v6283 = vmul.f32 %v6121, 0.5
        %v6284 = vmul.f32 %v6226, 0.5
        %v6285 = vmul.f32 %v6123, 0.5
        %v6286 = vmul.f32 %v6125, 0.5
        %v6287 = vmul.f32 %v6229, 0.5
        %v6288 = vmul.f32 %v6129, 0.5
        %v6289 = vmul.f32 %v6131, 0.5
        %v6290 = vmul.f32 %v6234, 0.5
        %v6291 = vmul.f32 %v6133, 0.5
        %v6292 = vmul.f32 %v6135, 0.5
        %v6293 = vmul.f32 %v6237, 0.5
        %v6294 = vmul.f32 %v6139, 0.5
        %v6295 = vmul.f32 %v6141, 0.5
        %v6296 = vmul.f32 %v6242, 0.5
        %v6297 = vmul.f32 %v6143, 0.5
        %v6298 = vmul.f32 %v6145, 0.5
        %v6299 = vmul.f32 %v6245, 0.5
        %v6300 = vmul.f32 %v6149, 0.5
        %v6301 = vmul.f32 %v6151, 0.5
        %v6302 = vmul.f32 %v6250, 0.5
        %v6303 = vmul.f32 %v6153, 0.5
        %v6304 = vmul.f32 %v6155, 0.5
        %v6305 = vmul.f32 %v6253, 0.5
        %v6306 = vmul.f32 %v6159, 0.5
        %v6307 = vmul.f32 %v6161, 0.5
        %v6308 = vmul.f32 %v6258, 0.5
        %v6309 = vmul.f32 %v6163, 0.5
        %v6310 = vmul.f32 %v6165, 0.5
        %v6311 = vmul.f32 %v6261, 0.5
        %v6312 = vmul.f32 %v6089, 0.044715
        %v6313 = vmul.f32 %v6091, 0.044715
        %v6314 = vmul.f32 %v6202, 0.044715
        %v6315 = vmul.f32 %v6093, 0.044715
        %v6316 = vmul.f32 %v6095, 0.044715
        %v6317 = vmul.f32 %v6205, 0.044715
        %v6318 = vmul.f32 %v6099, 0.044715
        %v6319 = vmul.f32 %v6101, 0.044715
        %v6320 = vmul.f32 %v6210, 0.044715
        %v6321 = vmul.f32 %v6103, 0.044715
        %v6322 = vmul.f32 %v6105, 0.044715
        %v6323 = vmul.f32 %v6213, 0.044715
        %v6324 = vmul.f32 %v6109, 0.044715
        %v6325 = vmul.f32 %v6111, 0.044715
        %v6326 = vmul.f32 %v6218, 0.044715
        %v6327 = vmul.f32 %v6113, 0.044715
        %v6328 = vmul.f32 %v6115, 0.044715
        %v6329 = vmul.f32 %v6221, 0.044715
        %v6330 = vmul.f32 %v6119, 0.044715
        %v6331 = vmul.f32 %v6121, 0.044715
        %v6332 = vmul.f32 %v6226, 0.044715
        %v6333 = vmul.f32 %v6123, 0.044715
        %v6334 = vmul.f32 %v6125, 0.044715
        %v6335 = vmul.f32 %v6229, 0.044715
        %v6336 = vmul.f32 %v6129, 0.044715
        %v6337 = vmul.f32 %v6131, 0.044715
        %v6338 = vmul.f32 %v6234, 0.044715
        %v6339 = vmul.f32 %v6133, 0.044715
        %v6340 = vmul.f32 %v6135, 0.044715
        %v6341 = vmul.f32 %v6237, 0.044715
        %v6342 = vmul.f32 %v6139, 0.044715
        %v6343 = vmul.f32 %v6141, 0.044715
        %v6344 = vmul.f32 %v6242, 0.044715
        %v6345 = vmul.f32 %v6143, 0.044715
        %v6346 = vmul.f32 %v6145, 0.044715
        %v6347 = vmul.f32 %v6245, 0.044715
        %v6348 = vmul.f32 %v6149, 0.044715
        %v6349 = vmul.f32 %v6151, 0.044715
        %v6350 = vmul.f32 %v6250, 0.044715
        %v6351 = vmul.f32 %v6153, 0.044715
        %v6352 = vmul.f32 %v6155, 0.044715
        %v6353 = vmul.f32 %v6253, 0.044715
        %v6354 = vmul.f32 %v6159, 0.044715
        %v6355 = vmul.f32 %v6161, 0.044715
        %v6356 = vmul.f32 %v6258, 0.044715
        %v6357 = vmul.f32 %v6163, 0.044715
        %v6358 = vmul.f32 %v6165, 0.044715
        %v6359 = vmul.f32 %v6261, 0.044715
        %v6360 = vmul.f32 %v6312, %v6089
        %v6361 = vmul.f32 %v6313, %v6091
        %v6362 = vmul.f32 %v6314, %v6202
        %v6363 = vmul.f32 %v6315, %v6093
        %v6364 = vmul.f32 %v6316, %v6095
        %v6365 = vmul.f32 %v6317, %v6205
        %v6366 = vmul.f32 %v6318, %v6099
        %v6367 = vmul.f32 %v6319, %v6101
        %v6368 = vmul.f32 %v6320, %v6210
        %v6369 = vmul.f32 %v6321, %v6103
        %v6370 = vmul.f32 %v6322, %v6105
        %v6371 = vmul.f32 %v6323, %v6213
        %v6372 = vmul.f32 %v6324, %v6109
        %v6373 = vmul.f32 %v6325, %v6111
        %v6374 = vmul.f32 %v6326, %v6218
        %v6375 = vmul.f32 %v6327, %v6113
        %v6376 = vmul.f32 %v6328, %v6115
        %v6377 = vmul.f32 %v6329, %v6221
        %v6378 = vmul.f32 %v6330, %v6119
        %v6379 = vmul.f32 %v6331, %v6121
        %v6380 = vmul.f32 %v6332, %v6226
        %v6381 = vmul.f32 %v6333, %v6123
        %v6382 = vmul.f32 %v6334, %v6125
        %v6383 = vmul.f32 %v6335, %v6229
        %v6384 = vmul.f32 %v6336, %v6129
        %v6385 = vmul.f32 %v6337, %v6131
        %v6386 = vmul.f32 %v6338, %v6234
        %v6387 = vmul.f32 %v6339, %v6133
        %v6388 = vmul.f32 %v6340, %v6135
        %v6389 = vmul.f32 %v6341, %v6237
        %v6390 = vmul.f32 %v6342, %v6139
        %v6391 = vmul.f32 %v6343, %v6141
        %v6392 = vmul.f32 %v6344, %v6242
        %v6393 = vmul.f32 %v6345, %v6143
        %v6394 = vmul.f32 %v6346, %v6145
        %v6395 = vmul.f32 %v6347, %v6245
        %v6396 = vmul.f32 %v6348, %v6149
        %v6397 = vmul.f32 %v6349, %v6151
        %v6398 = vmul.f32 %v6350, %v6250
        %v6399 = vmul.f32 %v6351, %v6153
        %v6400 = vmul.f32 %v6352, %v6155
        %v6401 = vmul.f32 %v6353, %v6253
        %v6402 = vmul.f32 %v6354, %v6159
        %v6403 = vmul.f32 %v6355, %v6161
        %v6404 = vmul.f32 %v6356, %v6258
        %v6405 = vmul.f32 %v6357, %v6163
        %v6406 = vmul.f32 %v6358, %v6165
        %v6407 = vmul.f32 %v6359, %v6261
        %v6408 = vmul.f32 %v6360, %v6089
        %v6409 = vmul.f32 %v6361, %v6091
        %v6410 = vmul.f32 %v6362, %v6202
        %v6411 = vmul.f32 %v6363, %v6093
        %v6412 = vmul.f32 %v6364, %v6095
        %v6413 = vmul.f32 %v6365, %v6205
        %v6414 = vmul.f32 %v6366, %v6099
        %v6415 = vmul.f32 %v6367, %v6101
        %v6416 = vmul.f32 %v6368, %v6210
        %v6417 = vmul.f32 %v6369, %v6103
        %v6418 = vmul.f32 %v6370, %v6105
        %v6419 = vmul.f32 %v6371, %v6213
        %v6420 = vmul.f32 %v6372, %v6109
        %v6421 = vmul.f32 %v6373, %v6111
        %v6422 = vmul.f32 %v6374, %v6218
        %v6423 = vmul.f32 %v6375, %v6113
        %v6424 = vmul.f32 %v6376, %v6115
        %v6425 = vmul.f32 %v6377, %v6221
        %v6426 = vmul.f32 %v6378, %v6119
        %v6427 = vmul.f32 %v6379, %v6121
        %v6428 = vmul.f32 %v6380, %v6226
        %v6429 = vmul.f32 %v6381, %v6123
        %v6430 = vmul.f32 %v6382, %v6125
        %v6431 = vmul.f32 %v6383, %v6229
        %v6432 = vmul.f32 %v6384, %v6129
        %v6433 = vmul.f32 %v6385, %v6131
        %v6434 = vmul.f32 %v6386, %v6234
        %v6435 = vmul.f32 %v6387, %v6133
        %v6436 = vmul.f32 %v6388, %v6135
        %v6437 = vmul.f32 %v6389, %v6237
        %v6438 = vmul.f32 %v6390, %v6139
        %v6439 = vmul.f32 %v6391, %v6141
        %v6440 = vmul.f32 %v6392, %v6242
        %v6441 = vmul.f32 %v6393, %v6143
        %v6442 = vmul.f32 %v6394, %v6145
        %v6443 = vmul.f32 %v6395, %v6245
        %v6444 = vmul.f32 %v6396, %v6149
        %v6445 = vmul.f32 %v6397, %v6151
        %v6446 = vmul.f32 %v6398, %v6250
        %v6447 = vmul.f32 %v6399, %v6153
        %v6448 = vmul.f32 %v6400, %v6155
        %v6449 = vmul.f32 %v6401, %v6253
        %v6450 = vmul.f32 %v6402, %v6159
        %v6451 = vmul.f32 %v6403, %v6161
        %v6452 = vmul.f32 %v6404, %v6258
        %v6453 = vmul.f32 %v6405, %v6163
        %v6454 = vmul.f32 %v6406, %v6165
        %v6455 = vmul.f32 %v6407, %v6261
        %v6456 = vadd.f32 %v6089, %v6408
        %v6457 = vadd.f32 %v6091, %v6409
        %v6458 = vadd.f32 %v6202, %v6410
        %v6459 = vadd.f32 %v6093, %v6411
        %v6460 = vadd.f32 %v6095, %v6412
        %v6461 = vadd.f32 %v6205, %v6413
        %v6462 = vadd.f32 %v6099, %v6414
        %v6463 = vadd.f32 %v6101, %v6415
        %v6464 = vadd.f32 %v6210, %v6416
        %v6465 = vadd.f32 %v6103, %v6417
        %v6466 = vadd.f32 %v6105, %v6418
        %v6467 = vadd.f32 %v6213, %v6419
        %v6468 = vadd.f32 %v6109, %v6420
        %v6469 = vadd.f32 %v6111, %v6421
        %v6470 = vadd.f32 %v6218, %v6422
        %v6471 = vadd.f32 %v6113, %v6423
        %v6472 = vadd.f32 %v6115, %v6424
        %v6473 = vadd.f32 %v6221, %v6425
        %v6474 = vadd.f32 %v6119, %v6426
        %v6475 = vadd.f32 %v6121, %v6427
        %v6476 = vadd.f32 %v6226, %v6428
        %v6477 = vadd.f32 %v6123, %v6429
        %v6478 = vadd.f32 %v6125, %v6430
        %v6479 = vadd.f32 %v6229, %v6431
        %v6480 = vadd.f32 %v6129, %v6432
        %v6481 = vadd.f32 %v6131, %v6433
        %v6482 = vadd.f32 %v6234, %v6434
        %v6483 = vadd.f32 %v6133, %v6435
        %v6484 = vadd.f32 %v6135, %v6436
        %v6485 = vadd.f32 %v6237, %v6437
        %v6486 = vadd.f32 %v6139, %v6438
        %v6487 = vadd.f32 %v6141, %v6439
        %v6488 = vadd.f32 %v6242, %v6440
        %v6489 = vadd.f32 %v6143, %v6441
        %v6490 = vadd.f32 %v6145, %v6442
        %v6491 = vadd.f32 %v6245, %v6443
        %v6492 = vadd.f32 %v6149, %v6444
        %v6493 = vadd.f32 %v6151, %v6445
        %v6494 = vadd.f32 %v6250, %v6446
        %v6495 = vadd.f32 %v6153, %v6447
        %v6496 = vadd.f32 %v6155, %v6448
        %v6497 = vadd.f32 %v6253, %v6449
        %v6498 = vadd.f32 %v6159, %v6450
        %v6499 = vadd.f32 %v6161, %v6451
        %v6500 = vadd.f32 %v6258, %v6452
        %v6501 = vadd.f32 %v6163, %v6453
        %v6502 = vadd.f32 %v6165, %v6454
        %v6503 = vadd.f32 %v6261, %v6455
        %v6504 = vmul.f32 %v6456, 0.7978846
        %v6505 = vmul.f32 %v6457, 0.7978846
        %v6506 = vmul.f32 %v6458, 0.7978846
        %v6507 = vmul.f32 %v6459, 0.7978846
        %v6508 = vmul.f32 %v6460, 0.7978846
        %v6509 = vmul.f32 %v6461, 0.7978846
        %v6510 = vmul.f32 %v6462, 0.7978846
        %v6511 = vmul.f32 %v6463, 0.7978846
        %v6512 = vmul.f32 %v6464, 0.7978846
        %v6513 = vmul.f32 %v6465, 0.7978846
        %v6514 = vmul.f32 %v6466, 0.7978846
        %v6515 = vmul.f32 %v6467, 0.7978846
        %v6516 = vmul.f32 %v6468, 0.7978846
        %v6517 = vmul.f32 %v6469, 0.7978846
        %v6518 = vmul.f32 %v6470, 0.7978846
        %v6519 = vmul.f32 %v6471, 0.7978846
        %v6520 = vmul.f32 %v6472, 0.7978846
        %v6521 = vmul.f32 %v6473, 0.7978846
        %v6522 = vmul.f32 %v6474, 0.7978846
        %v6523 = vmul.f32 %v6475, 0.7978846
        %v6524 = vmul.f32 %v6476, 0.7978846
        %v6525 = vmul.f32 %v6477, 0.7978846
        %v6526 = vmul.f32 %v6478, 0.7978846
        %v6527 = vmul.f32 %v6479, 0.7978846
        %v6528 = vmul.f32 %v6480, 0.7978846
        %v6529 = vmul.f32 %v6481, 0.7978846
        %v6530 = vmul.f32 %v6482, 0.7978846
        %v6531 = vmul.f32 %v6483, 0.7978846
        %v6532 = vmul.f32 %v6484, 0.7978846
        %v6533 = vmul.f32 %v6485, 0.7978846
        %v6534 = vmul.f32 %v6486, 0.7978846
        %v6535 = vmul.f32 %v6487, 0.7978846
        %v6536 = vmul.f32 %v6488, 0.7978846
        %v6537 = vmul.f32 %v6489, 0.7978846
        %v6538 = vmul.f32 %v6490, 0.7978846
        %v6539 = vmul.f32 %v6491, 0.7978846
        %v6540 = vmul.f32 %v6492, 0.7978846
        %v6541 = vmul.f32 %v6493, 0.7978846
        %v6542 = vmul.f32 %v6494, 0.7978846
        %v6543 = vmul.f32 %v6495, 0.7978846
        %v6544 = vmul.f32 %v6496, 0.7978846
        %v6545 = vmul.f32 %v6497, 0.7978846
        %v6546 = vmul.f32 %v6498, 0.7978846
        %v6547 = vmul.f32 %v6499, 0.7978846
        %v6548 = vmul.f32 %v6500, 0.7978846
        %v6549 = vmul.f32 %v6501, 0.7978846
        %v6550 = vmul.f32 %v6502, 0.7978846
        %v6551 = vmul.f32 %v6503, 0.7978846
        %v6552 = vtanh.pop %v6504
        %v6553 = vtanh.pop %v6505
        %v6554 = vtanh.pop %v6506
        %v6555 = vtanh.pop %v6507
        %v6556 = vtanh.pop %v6508
        %v6557 = vtanh.pop %v6509
        %v6558 = vtanh.pop %v6510
        %v6559 = vtanh.pop %v6511
        %v6560 = vtanh.pop %v6512
        %v6561 = vtanh.pop %v6513
        %v6562 = vtanh.pop %v6514
        %v6563 = vtanh.pop %v6515
        %v6564 = vtanh.pop %v6516
        %v6565 = vtanh.pop %v6517
        %v6566 = vtanh.pop %v6518
        %v6567 = vtanh.pop %v6519
        %v6568 = vtanh.pop %v6520
        %v6569 = vtanh.pop %v6521
        %v6570 = vtanh.pop %v6522
        %v6571 = vtanh.pop %v6523
        %v6572 = vtanh.pop %v6524
        %v6573 = vtanh.pop %v6525
        %v6574 = vtanh.pop %v6526
        %v6575 = vtanh.pop %v6527
        %v6576 = vtanh.pop %v6528
        %v6577 = vtanh.pop %v6529
        %v6578 = vtanh.pop %v6530
        %v6579 = vtanh.pop %v6531
        %v6580 = vtanh.pop %v6532
        %v6581 = vtanh.pop %v6533
        %v6582 = vtanh.pop %v6534
        %v6583 = vtanh.pop %v6535
        %v6584 = vtanh.pop %v6536
        %v6585 = vtanh.pop %v6537
        %v6586 = vtanh.pop %v6538
        %v6587 = vtanh.pop %v6539
        %v6588 = vtanh.pop %v6540
        %v6589 = vtanh.pop %v6541
        %v6590 = vtanh.pop %v6542
        %v6591 = vtanh.pop %v6543
        %v6592 = vtanh.pop %v6544
        %v6593 = vtanh.pop %v6545
        %v6594 = vtanh.pop %v6546
        %v6595 = vtanh.pop %v6547
        %v6596 = vtanh.pop %v6548
        %v6597 = vtanh.pop %v6549
        %v6598 = vtanh.pop %v6550
        %v6599 = vtanh.pop %v6551
        %v6600 = vadd.f32 %v6552, 1.0
        %v6601 = vadd.f32 %v6553, 1.0
        %v6602 = vadd.f32 %v6554, 1.0
        %v6603 = vadd.f32 %v6555, 1.0
        %v6604 = vadd.f32 %v6556, 1.0
        %v6605 = vadd.f32 %v6557, 1.0
        %v6606 = vadd.f32 %v6558, 1.0
        %v6607 = vadd.f32 %v6559, 1.0
        %v6608 = vadd.f32 %v6560, 1.0
        %v6609 = vadd.f32 %v6561, 1.0
        %v6610 = vadd.f32 %v6562, 1.0
        %v6611 = vadd.f32 %v6563, 1.0
        %v6612 = vadd.f32 %v6564, 1.0
        %v6613 = vadd.f32 %v6565, 1.0
        %v6614 = vadd.f32 %v6566, 1.0
        %v6615 = vadd.f32 %v6567, 1.0
        %v6616 = vadd.f32 %v6568, 1.0
        %v6617 = vadd.f32 %v6569, 1.0
        %v6618 = vadd.f32 %v6570, 1.0
        %v6619 = vadd.f32 %v6571, 1.0
        %v6620 = vadd.f32 %v6572, 1.0
        %v6621 = vadd.f32 %v6573, 1.0
        %v6622 = vadd.f32 %v6574, 1.0
        %v6623 = vadd.f32 %v6575, 1.0
        %v6624 = vadd.f32 %v6576, 1.0
        %v6625 = vadd.f32 %v6577, 1.0
        %v6626 = vadd.f32 %v6578, 1.0
        %v6627 = vadd.f32 %v6579, 1.0
        %v6628 = vadd.f32 %v6580, 1.0
        %v6629 = vadd.f32 %v6581, 1.0
        %v6630 = vadd.f32 %v6582, 1.0
        %v6631 = vadd.f32 %v6583, 1.0
        %v6632 = vadd.f32 %v6584, 1.0
        %v6633 = vadd.f32 %v6585, 1.0
        %v6634 = vadd.f32 %v6586, 1.0
        %v6635 = vadd.f32 %v6587, 1.0
        %v6636 = vadd.f32 %v6588, 1.0
        %v6637 = vadd.f32 %v6589, 1.0
        %v6638 = vadd.f32 %v6590, 1.0
        %v6639 = vadd.f32 %v6591, 1.0
        %v6640 = vadd.f32 %v6592, 1.0
        %v6641 = vadd.f32 %v6593, 1.0
        %v6642 = vadd.f32 %v6594, 1.0
        %v6643 = vadd.f32 %v6595, 1.0
        %v6644 = vadd.f32 %v6596, 1.0
        %v6645 = vadd.f32 %v6597, 1.0
        %v6646 = vadd.f32 %v6598, 1.0
        %v6647 = vadd.f32 %v6599, 1.0
        %v6648 = vmul.f32 %v6264, %v6600
        %v6649 = vmul.f32 %v6265, %v6601
        %v6650 = vmul.f32 %v6266, %v6602
        %v6651 = vmul.f32 %v6267, %v6603
        %v6652 = vmul.f32 %v6268, %v6604
        %v6653 = vmul.f32 %v6269, %v6605
        %v6654 = vmul.f32 %v6270, %v6606
        %v6655 = vmul.f32 %v6271, %v6607
        %v6656 = vmul.f32 %v6272, %v6608
        %v6657 = vmul.f32 %v6273, %v6609
        %v6658 = vmul.f32 %v6274, %v6610
        %v6659 = vmul.f32 %v6275, %v6611
        %v6660 = vmul.f32 %v6276, %v6612
        %v6661 = vmul.f32 %v6277, %v6613
        %v6662 = vmul.f32 %v6278, %v6614
        %v6663 = vmul.f32 %v6279, %v6615
        %v6664 = vmul.f32 %v6280, %v6616
        %v6665 = vmul.f32 %v6281, %v6617
        %v6666 = vmul.f32 %v6282, %v6618
        %v6667 = vmul.f32 %v6283, %v6619
        %v6668 = vmul.f32 %v6284, %v6620
        %v6669 = vmul.f32 %v6285, %v6621
        %v6670 = vmul.f32 %v6286, %v6622
        %v6671 = vmul.f32 %v6287, %v6623
        %v6672 = vmul.f32 %v6288, %v6624
        %v6673 = vmul.f32 %v6289, %v6625
        %v6674 = vmul.f32 %v6290, %v6626
        %v6675 = vmul.f32 %v6291, %v6627
        %v6676 = vmul.f32 %v6292, %v6628
        %v6677 = vmul.f32 %v6293, %v6629
        %v6678 = vmul.f32 %v6294, %v6630
        %v6679 = vmul.f32 %v6295, %v6631
        %v6680 = vmul.f32 %v6296, %v6632
        %v6681 = vmul.f32 %v6297, %v6633
        %v6682 = vmul.f32 %v6298, %v6634
        %v6683 = vmul.f32 %v6299, %v6635
        %v6684 = vmul.f32 %v6300, %v6636
        %v6685 = vmul.f32 %v6301, %v6637
        %v6686 = vmul.f32 %v6302, %v6638
        %v6687 = vmul.f32 %v6303, %v6639
        %v6688 = vmul.f32 %v6304, %v6640
        %v6689 = vmul.f32 %v6305, %v6641
        %v6690 = vmul.f32 %v6306, %v6642
        %v6691 = vmul.f32 %v6307, %v6643
        %v6692 = vmul.f32 %v6308, %v6644
        %v6693 = vmul.f32 %v6309, %v6645
        %v6694 = vmul.f32 %v6310, %v6646
        %v6695 = vmul.f32 %v6311, %v6647
        %v6696 = vpack.c.bf16 %v6651, %v6648
        %v6697 = vpack.c.bf16 %v6652, %v6649
        %v6698 = vpack.c.bf16 %v6653, %v6650
        %v6699 = vpack.c.bf16 %v6657, %v6654
        %v6700 = vpack.c.bf16 %v6658, %v6655
        %v6701 = vpack.c.bf16 %v6659, %v6656
        %v6702 = vpack.c.bf16 %v6663, %v6660
        %v6703 = vpack.c.bf16 %v6664, %v6661
        %v6704 = vpack.c.bf16 %v6665, %v6662
        %v6705 = vpack.c.bf16 %v6669, %v6666
        %v6706 = vpack.c.bf16 %v6670, %v6667
        %v6707 = vpack.c.bf16 %v6671, %v6668
        %v6708 = vpack.c.bf16 %v6675, %v6672
        %v6709 = vpack.c.bf16 %v6676, %v6673
        %v6710 = vpack.c.bf16 %v6677, %v6674
        %v6711 = vpack.c.bf16 %v6681, %v6678
        %v6712 = vpack.c.bf16 %v6682, %v6679
        %v6713 = vpack.c.bf16 %v6683, %v6680
        %v6714 = vpack.c.bf16 %v6687, %v6684
        %v6715 = vpack.c.bf16 %v6688, %v6685
        %v6716 = vpack.c.bf16 %v6689, %v6686
        %v6717 = vpack.c.bf16 %v6693, %v6690
        %v6718 = vpack.c.bf16 %v6694, %v6691
        %v6719 = vpack.c.bf16 %v6695, %v6692
        %v6720 = vld [vmem:[%s5] sm:$0xff]
        %v6721 = vld [vmem:[%s5 + $0x8] sm:$0xff]
        %v6722 = vld [vmem:[%s5 + $0x10] sm:$0xff]
        %v6723 = vld [vmem:[%s5 + $0x18] sm:$0xff]
        %v6724 = vld [vmem:[%s5 + $0x20] sm:$0xff]
        %v6725 = vld [vmem:[%s5 + $0x28] sm:$0xff]
        %v6726 = vld [vmem:[%s5 + $0x30] sm:$0xff]
        %v6727 = vld [vmem:[%s5 + $0x38] sm:$0xff]
        %v6728 = vld [vmem:[%s5 + $0x40] sm:$0xff]
        %v6729 = vld [vmem:[%s5 + $0x48] sm:$0xff]
        %v6730 = vld [vmem:[%s5 + $0x50] sm:$0xff]
        %v6731 = vld [vmem:[%s5 + $0x58] sm:$0xff]
        %v6732 = vld [vmem:[%s5 + $0x60] sm:$0xff]
        %v6733 = vld [vmem:[%s5 + $0x68] sm:$0xff]
        %v6734 = vld [vmem:[%s5 + $0x70] sm:$0xff]
        %v6735 = vld [vmem:[%s5 + $0x78] sm:$0xff]
        %v6736 = vld [vmem:[%s5 + $0x80] sm:$0xff]
        %v6737 = vld [vmem:[%s5 + $0x88] sm:$0xff]
        %v6738 = vld [vmem:[%s5 + $0x90] sm:$0xff]
        %v6739 = vld [vmem:[%s5 + $0x98] sm:$0xff]
        %v6740 = vld [vmem:[%s5 + $0xa0] sm:$0xff]
        %v6741 = vld [vmem:[%s5 + $0xa8] sm:$0xff]
        %v6742 = vld [vmem:[%s5 + $0xb0] sm:$0xff]
        %v6743 = vld [vmem:[%s5 + $0xb8] sm:$0xff]
        %v6744 = vld [vmem:[%s5 + $0xc0] sm:$0xff]
        %v6745 = vld [vmem:[%s5 + $0xc8] sm:$0xff]
        %v6746 = vld [vmem:[%s5 + $0xd0] sm:$0xff]
        %v6747 = vld [vmem:[%s5 + $0xd8] sm:$0xff]
        %v6748 = vld [vmem:[%s5 + $0xe0] sm:$0xff]
        %v6749 = vld [vmem:[%s5 + $0xe8] sm:$0xff]
        %v6750 = vld [vmem:[%s5 + $0xf0] sm:$0xff]
        %v6751 = vld [vmem:[%s5 + $0xf8] sm:$0xff]
        %v6752 = vld [vmem:[%s5 + $0x100] sm:$0xff]
        %v6753 = vld [vmem:[%s5 + $0x108] sm:$0xff]
        %v6754 = vld [vmem:[%s5 + $0x110] sm:$0xff]
        %v6755 = vld [vmem:[%s5 + $0x118] sm:$0xff]
        %v6756 = vld [vmem:[%s5 + $0x120] sm:$0xff]
        %v6757 = vld [vmem:[%s5 + $0x128] sm:$0xff]
        %v6758 = vld [vmem:[%s5 + $0x130] sm:$0xff]
        %v6759 = vld [vmem:[%s5 + $0x138] sm:$0xff]
        %v6760 = vld [vmem:[%s5 + $0x140] sm:$0xff]
        %v6761 = vld [vmem:[%s5 + $0x148] sm:$0xff]
        %v6762 = vld [vmem:[%s5 + $0x150] sm:$0xff]
        %v6763 = vld [vmem:[%s5 + $0x158] sm:$0xff]
        %v6764 = vld [vmem:[%s5 + $0x160] sm:$0xff]
        %v6765 = vld [vmem:[%s5 + $0x168] sm:$0xff]
        %v6766 = vld [vmem:[%s5 + $0x170] sm:$0xff]
        %v6767 = vld [vmem:[%s5 + $0x178] sm:$0xff]
        %v6768 = vld [vmem:[%s6] sm:$0x3]
        %v6770 = vlaneseq
        %v6771 = vshrl.u32 %v6770, 7
        %v6772 = vsub.s32 0, %v6771
        %v6773 = vrot.slane %v6768, %v6772
        %v6774 = vlaneseq
        %v6775 = vshrl.u32 %v6774, 7
        %v6776 = vsub.s32 1, %v6775
        %v6777 = vrot.slane %v6768, %v6776
        %v6828 = vunpack.c.l.b16 %v6720
        %v6829 = vunpack.c.h.b16 %v6720
        %v6830 = vunpack.c.l.b16 %v6721
        %v6831 = vunpack.c.h.b16 %v6721
        %v6832 = vunpack.c.l.b16 %v6722
        %v6833 = vunpack.c.h.b16 %v6722
        %v6834 = vunpack.c.l.b16 %v6723
        %v6835 = vunpack.c.h.b16 %v6723
        %v6836 = vunpack.c.l.b16 %v6724
        %v6837 = vunpack.c.h.b16 %v6724
        %v6838 = vunpack.c.l.b16 %v6725
        %v6839 = vunpack.c.h.b16 %v6725
        %v6840 = vunpack.c.l.b16 %v6726
        %v6841 = vunpack.c.h.b16 %v6726
        %v6842 = vunpack.c.l.b16 %v6727
        %v6843 = vunpack.c.h.b16 %v6727
        %v6844 = vunpack.c.l.b16 %v6728
        %v6845 = vunpack.c.h.b16 %v6728
        %v6846 = vunpack.c.l.b16 %v6729
        %v6847 = vunpack.c.h.b16 %v6729
        %v6848 = vunpack.c.l.b16 %v6730
        %v6849 = vunpack.c.h.b16 %v6730
        %v6850 = vunpack.c.l.b16 %v6731
        %v6851 = vunpack.c.h.b16 %v6731
        %v6852 = vunpack.c.l.b16 %v6732
        %v6853 = vunpack.c.h.b16 %v6732
        %v6854 = vunpack.c.l.b16 %v6733
        %v6855 = vunpack.c.h.b16 %v6733
        %v6856 = vunpack.c.l.b16 %v6734
        %v6857 = vunpack.c.h.b16 %v6734
        %v6858 = vunpack.c.l.b16 %v6735
        %v6859 = vunpack.c.h.b16 %v6735
        %v6860 = vunpack.c.l.b16 %v6736
        %v6861 = vunpack.c.h.b16 %v6736
        %v6862 = vunpack.c.l.b16 %v6737
        %v6863 = vunpack.c.h.b16 %v6737
        %v6864 = vunpack.c.l.b16 %v6738
        %v6865 = vunpack.c.h.b16 %v6738
        %v6866 = vunpack.c.l.b16 %v6739
        %v6867 = vunpack.c.h.b16 %v6739
        %v6868 = vunpack.c.l.b16 %v6740
        %v6869 = vunpack.c.h.b16 %v6740
        %v6870 = vunpack.c.l.b16 %v6741
        %v6871 = vunpack.c.h.b16 %v6741
        %v6872 = vunpack.c.l.b16 %v6742
        %v6873 = vunpack.c.h.b16 %v6742
        %v6874 = vunpack.c.l.b16 %v6743
        %v6875 = vunpack.c.h.b16 %v6743
        %v6876 = vunpack.c.l.b16 %v6744
        %v6877 = vunpack.c.h.b16 %v6744
        %v6878 = vunpack.c.l.b16 %v6745
        %v6879 = vunpack.c.h.b16 %v6745
        %v6880 = vunpack.c.l.b16 %v6746
        %v6881 = vunpack.c.h.b16 %v6746
        %v6882 = vunpack.c.l.b16 %v6747
        %v6883 = vunpack.c.h.b16 %v6747
        %v6884 = vunpack.c.l.b16 %v6748
        %v6885 = vunpack.c.h.b16 %v6748
        %v6886 = vunpack.c.l.b16 %v6749
        %v6887 = vunpack.c.h.b16 %v6749
        %v6888 = vunpack.c.l.b16 %v6750
        %v6889 = vunpack.c.h.b16 %v6750
        %v6890 = vunpack.c.l.b16 %v6751
        %v6891 = vunpack.c.h.b16 %v6751
        %v6892 = vunpack.c.l.b16 %v6752
        %v6893 = vunpack.c.h.b16 %v6752
        %v6894 = vunpack.c.l.b16 %v6753
        %v6895 = vunpack.c.h.b16 %v6753
        %v6896 = vunpack.c.l.b16 %v6754
        %v6897 = vunpack.c.h.b16 %v6754
        %v6898 = vunpack.c.l.b16 %v6755
        %v6899 = vunpack.c.h.b16 %v6755
        %v6900 = vunpack.c.l.b16 %v6756
        %v6901 = vunpack.c.h.b16 %v6756
        %v6902 = vunpack.c.l.b16 %v6757
        %v6903 = vunpack.c.h.b16 %v6757
        %v6904 = vunpack.c.l.b16 %v6758
        %v6905 = vunpack.c.h.b16 %v6758
        %v6906 = vunpack.c.l.b16 %v6759
        %v6907 = vunpack.c.h.b16 %v6759
        %v6908 = vunpack.c.l.b16 %v6760
        %v6909 = vunpack.c.h.b16 %v6760
        %v6910 = vunpack.c.l.b16 %v6761
        %v6911 = vunpack.c.h.b16 %v6761
        %v6912 = vunpack.c.l.b16 %v6762
        %v6913 = vunpack.c.h.b16 %v6762
        %v6914 = vunpack.c.l.b16 %v6763
        %v6915 = vunpack.c.h.b16 %v6763
        %v6916 = vunpack.c.l.b16 %v6764
        %v6917 = vunpack.c.h.b16 %v6764
        %v6918 = vunpack.c.l.b16 %v6765
        %v6919 = vunpack.c.h.b16 %v6765
        %v6920 = vunpack.c.l.b16 %v6766
        %v6921 = vunpack.c.h.b16 %v6766
        %v6922 = vunpack.c.l.b16 %v6767
        %v6923 = vunpack.c.h.b16 %v6767
        %v6924 = vpack.c.b16 %v6830, %v6828
        %v6925 = vpack.c.b16 %v6831, %v6829
        %v6926 = vpack.c.b16 %v6834, %v6832
        %v6927 = vpack.c.b16 %v6835, %v6833
        %v6928 = vpack.c.b16 %v6838, %v6836
        %v6929 = vpack.c.b16 %v6839, %v6837
        %v6930 = vpack.c.b16 %v6842, %v6840
        %v6931 = vpack.c.b16 %v6843, %v6841
        %v6932 = vpack.c.b16 %v6846, %v6844
        %v6933 = vpack.c.b16 %v6847, %v6845
        %v6934 = vpack.c.b16 %v6850, %v6848
        %v6935 = vpack.c.b16 %v6851, %v6849
        %v6936 = vpack.c.b16 %v6854, %v6852
        %v6937 = vpack.c.b16 %v6855, %v6853
        %v6938 = vpack.c.b16 %v6858, %v6856
        %v6939 = vpack.c.b16 %v6859, %v6857
        %v6940 = vpack.c.b16 %v6862, %v6860
        %v6941 = vpack.c.b16 %v6863, %v6861
        %v6942 = vpack.c.b16 %v6866, %v6864
        %v6943 = vpack.c.b16 %v6867, %v6865
        %v6944 = vpack.c.b16 %v6870, %v6868
        %v6945 = vpack.c.b16 %v6871, %v6869
        %v6946 = vpack.c.b16 %v6874, %v6872
        %v6947 = vpack.c.b16 %v6875, %v6873
        %v6948 = vpack.c.b16 %v6878, %v6876
        %v6949 = vpack.c.b16 %v6879, %v6877
        %v6950 = vpack.c.b16 %v6882, %v6880
        %v6951 = vpack.c.b16 %v6883, %v6881
        %v6952 = vpack.c.b16 %v6886, %v6884
        %v6953 = vpack.c.b16 %v6887, %v6885
        %v6954 = vpack.c.b16 %v6890, %v6888
        %v6955 = vpack.c.b16 %v6891, %v6889
        %v6956 = vpack.c.b16 %v6894, %v6892
        %v6957 = vpack.c.b16 %v6895, %v6893
        %v6958 = vpack.c.b16 %v6898, %v6896
        %v6959 = vpack.c.b16 %v6899, %v6897
        %v6960 = vpack.c.b16 %v6902, %v6900
        %v6961 = vpack.c.b16 %v6903, %v6901
        %v6962 = vpack.c.b16 %v6906, %v6904
        %v6963 = vpack.c.b16 %v6907, %v6905
        %v6964 = vpack.c.b16 %v6910, %v6908
        %v6965 = vpack.c.b16 %v6911, %v6909
        %v6966 = vpack.c.b16 %v6914, %v6912
        %v6967 = vpack.c.b16 %v6915, %v6913
        %v6968 = vpack.c.b16 %v6918, %v6916
        %v6969 = vpack.c.b16 %v6919, %v6917
        %v6970 = vpack.c.b16 %v6922, %v6920
        %v6971 = vpack.c.b16 %v6923, %v6921
        %7020 = vmatprep.subr.bf16.mxu0 %v6925
        %7021 = vmatpush1.bf16.msra.mxu0 %v6924
        %7022 = vmatprep.subr.bf16.mxu0 %v6927
        %7023 = vmatpush1.bf16.msra.mxu0 %v6926
        %7024 = vmatprep.subr.bf16.mxu0 %v6929
        %7025 = vmatpush1.bf16.msra.mxu0 %v6928
        %7026 = vmatprep.subr.bf16.mxu0 %v6931
        %7027 = vmatpush1.bf16.msra.mxu0 %v6930
        %7028 = vmatprep.subr.bf16.mxu0 %v6933
        %7029 = vmatpush1.bf16.msra.mxu0 %v6932
        %7030 = vmatprep.subr.bf16.mxu0 %v6935
        %7031 = vmatpush1.bf16.msra.mxu0 %v6934
        %7032 = vmatprep.subr.bf16.mxu0 %v6937
        %7033 = vmatpush1.bf16.msra.mxu0 %v6936
        %7034 = vmatprep.subr.bf16.mxu0 %v6939
        %7035 = vmatpush1.bf16.msra.mxu0 %v6938
        %7036 = vmatprep.subr.bf16.mxu0 %v6941
        %7037 = vmatpush1.bf16.msra.mxu0 %v6940
        %7038 = vmatprep.subr.bf16.mxu0 %v6943
        %7039 = vmatpush1.bf16.msra.mxu0 %v6942
        %7040 = vmatprep.subr.bf16.mxu0 %v6945
        %7041 = vmatpush1.bf16.msra.mxu0 %v6944
        %7042 = vmatprep.subr.bf16.mxu0 %v6947
        %7043 = vmatpush1.bf16.msra.mxu0 %v6946
        %7044 = vmatprep.subr.bf16.mxu0 %v6949
        %7045 = vmatpush1.bf16.msra.mxu0 %v6948
        %7046 = vmatprep.subr.bf16.mxu0 %v6951
        %7047 = vmatpush1.bf16.msra.mxu0 %v6950
        %7048 = vmatprep.subr.bf16.mxu0 %v6953
        %7049 = vmatpush1.bf16.msra.mxu0 %v6952
        %7050 = vmatprep.subr.bf16.mxu0 %v6955
        %7051 = vmatpush1.bf16.msra.mxu0 %v6954
        %7052 = vmatprep.mubr.bf16.mxu0 %v6697
        %7053 = vmatmul.mubr.bf16.gmra.mrb[0].mxu0 %v6696
        %v7054 = vpop.f32.mrb[0].mxu0
        %v7055 = vadd.f32 %v6773, %v7054
        %v7056 = vpop.f32.mrb[0].mxu0
        %v7057 = vadd.f32 %v6777, %v7056
        %v7058 = vpop.f32.mrb[0].mxu0
        %v7059 = vadd.f32 %v6773, %v7058
        %v7060 = vpop.f32.mrb[0].mxu0
        %v7061 = vadd.f32 %v6777, %v7060
        %7062 = vmatprep.mubr.bf16.mxu0 %v6700
        %7063 = vmatmul.mubr.bf16.gmra.mrb[0].mxu0 %v6699
        %v7064 = vpop.f32.mrb[0].mxu0
        %v7065 = vadd.f32 %v6773, %v7064
        %v7066 = vpop.f32.mrb[0].mxu0
        %v7067 = vadd.f32 %v6777, %v7066
        %v7068 = vpop.f32.mrb[0].mxu0
        %v7069 = vadd.f32 %v6773, %v7068
        %v7070 = vpop.f32.mrb[0].mxu0
        %v7071 = vadd.f32 %v6777, %v7070
        %7072 = vmatprep.mubr.bf16.mxu0 %v6703
        %7073 = vmatmul.mubr.bf16.gmra.mrb[0].mxu0 %v6702
        %v7074 = vpop.f32.mrb[0].mxu0
        %v7075 = vadd.f32 %v6773, %v7074
        %v7076 = vpop.f32.mrb[0].mxu0
        %v7077 = vadd.f32 %v6777, %v7076
        %v7078 = vpop.f32.mrb[0].mxu0
        %v7079 = vadd.f32 %v6773, %v7078
        %v7080 = vpop.f32.mrb[0].mxu0
        %v7081 = vadd.f32 %v6777, %v7080
        %7082 = vmatprep.mubr.bf16.mxu0 %v6706
        %7083 = vmatmul.mubr.bf16.gmra.mrb[0].mxu0 %v6705
        %v7084 = vpop.f32.mrb[0].mxu0
        %v7085 = vadd.f32 %v6773, %v7084
        %v7086 = vpop.f32.mrb[0].mxu0
        %v7087 = vadd.f32 %v6777, %v7086
        %v7088 = vpop.f32.mrb[0].mxu0
        %v7089 = vadd.f32 %v6773, %v7088
        %v7090 = vpop.f32.mrb[0].mxu0
        %v7091 = vadd.f32 %v6777, %v7090
        %7092 = vmatprep.mubr.bf16.mxu0 %v6709
        %7093 = vmatmul.mubr.bf16.gmra.mrb[0].mxu0 %v6708
        %v7094 = vpop.f32.mrb[0].mxu0
        %v7095 = vadd.f32 %v6773, %v7094
        %v7096 = vpop.f32.mrb[0].mxu0
        %v7097 = vadd.f32 %v6777, %v7096
        %v7098 = vpop.f32.mrb[0].mxu0
        %v7099 = vadd.f32 %v6773, %v7098
        %v7100 = vpop.f32.mrb[0].mxu0
        %v7101 = vadd.f32 %v6777, %v7100
        %7102 = vmatprep.mubr.bf16.mxu0 %v6712
        %7103 = vmatmul.mubr.bf16.gmra.mrb[0].mxu0 %v6711
        %v7104 = vpop.f32.mrb[0].mxu0
        %v7105 = vadd.f32 %v6773, %v7104
        %v7106 = vpop.f32.mrb[0].mxu0
        %v7107 = vadd.f32 %v6777, %v7106
        %v7108 = vpop.f32.mrb[0].mxu0
        %v7109 = vadd.f32 %v6773, %v7108
        %v7110 = vpop.f32.mrb[0].mxu0
        %v7111 = vadd.f32 %v6777, %v7110
        %7112 = vmatprep.mubr.bf16.mxu0 %v6715
        %7113 = vmatmul.mubr.bf16.gmra.mrb[0].mxu0 %v6714
        %v7114 = vpop.f32.mrb[0].mxu0
        %v7115 = vadd.f32 %v6773, %v7114
        %v7116 = vpop.f32.mrb[0].mxu0
        %v7117 = vadd.f32 %v6777, %v7116
        %v7118 = vpop.f32.mrb[0].mxu0
        %v7119 = vadd.f32 %v6773, %v7118
        %v7120 = vpop.f32.mrb[0].mxu0
        %v7121 = vadd.f32 %v6777, %v7120
        %7122 = vmatprep.mubr.bf16.mxu0 %v6718
        %7123 = vmatmul.mubr.bf16.gmra.mrb[0].mxu0 %v6717
        %v7124 = vpop.f32.mrb[0].mxu0
        %v7125 = vadd.f32 %v6773, %v7124
        %v7126 = vpop.f32.mrb[0].mxu0
        %v7127 = vadd.f32 %v6777, %v7126
        %v7128 = vpop.f32.mrb[0].mxu0
        %v7129 = vadd.f32 %v6773, %v7128
        %v7130 = vpop.f32.mrb[0].mxu0
        %v7131 = vadd.f32 %v6777, %v7130
        %7132 = vdwg.mxu0
        %7133 = vmatprep.subr.bf16.mxu0 %v6957
        %7134 = vmatpush1.bf16.msra.mxu0 %v6956
        %7135 = vmatprep.subr.bf16.mxu0 %v6959
        %7136 = vmatpush1.bf16.msra.mxu0 %v6958
        %7137 = vmatprep.subr.bf16.mxu0 %v6961
        %7138 = vmatpush1.bf16.msra.mxu0 %v6960
        %7139 = vmatprep.subr.bf16.mxu0 %v6963
        %7140 = vmatpush1.bf16.msra.mxu0 %v6962
        %7141 = vmatprep.subr.bf16.mxu0 %v6965
        %7142 = vmatpush1.bf16.msra.mxu0 %v6964
        %7143 = vmatprep.subr.bf16.mxu0 %v6967
        %7144 = vmatpush1.bf16.msra.mxu0 %v6966
        %7145 = vmatprep.subr.bf16.mxu0 %v6969
        %7146 = vmatpush1.bf16.msra.mxu0 %v6968
        %7147 = vmatprep.subr.bf16.mxu0 %v6971
        %7148 = vmatpush1.bf16.msra.mxu0 %v6970
        %7149 = vmatprep.subr.bf16.mxu0 0
        %7150 = vmatpush1.bf16.msra.mxu0 0
        %7151 = vmatprep.subr.bf16.mxu0 0
        %7152 = vmatpush1.bf16.msra.mxu0 0
        %7153 = vmatprep.subr.bf16.mxu0 0
        %7154 = vmatpush1.bf16.msra.mxu0 0
        %7155 = vmatprep.subr.bf16.mxu0 0
        %7156 = vmatpush1.bf16.msra.mxu0 0
        %7157 = vmatprep.subr.bf16.mxu0 0
        %7158 = vmatpush1.bf16.msra.mxu0 0
        %7159 = vmatprep.subr.bf16.mxu0 0
        %7160 = vmatpush1.bf16.msra.mxu0 0
        %7161 = vmatprep.subr.bf16.mxu0 0
        %7162 = vmatpush1.bf16.msra.mxu0 0
        %7163 = vmatprep.subr.bf16.mxu0 0
        %7164 = vmatpush1.bf16.msra.mxu0 0
        %7165 = vmatprep.mubr.bf16.mxu0 0
        %7166 = vmatmul.mubr.bf16.gmra.mrb[0].mxu0 %v6698
        %v7167 = vpop.f32.mrb[0].mxu0
        %v7168 = vadd.f32 %v7055, %v7167
        %v7169 = vpop.f32.mrb[0].mxu0
        %v7170 = vadd.f32 %v7057, %v7169
        %v7171 = vpop.f32.mrb[0].mxu0
        %v7172 = vadd.f32 %v7059, %v7171
        %v7173 = vpop.f32.mrb[0].mxu0
        %v7174 = vadd.f32 %v7061, %v7173
        %7175 = vmatprep.mubr.bf16.mxu0 0
        %7176 = vmatmul.mubr.bf16.gmra.mrb[0].mxu0 %v6701
        %v7177 = vpop.f32.mrb[0].mxu0
        %v7178 = vadd.f32 %v7065, %v7177
        %v7179 = vpop.f32.mrb[0].mxu0
        %v7180 = vadd.f32 %v7067, %v7179
        %v7181 = vpop.f32.mrb[0].mxu0
        %v7182 = vadd.f32 %v7069, %v7181
        %v7183 = vpop.f32.mrb[0].mxu0
        %v7184 = vadd.f32 %v7071, %v7183
        %7185 = vmatprep.mubr.bf16.mxu0 0
        %7186 = vmatmul.mubr.bf16.gmra.mrb[0].mxu0 %v6704
        %v7187 = vpop.f32.mrb[0].mxu0
        %v7188 = vadd.f32 %v7075, %v7187
        %v7189 = vpop.f32.mrb[0].mxu0
        %v7190 = vadd.f32 %v7077, %v7189
        %v7191 = vpop.f32.mrb[0].mxu0
        %v7192 = vadd.f32 %v7079, %v7191
        %v7193 = vpop.f32.mrb[0].mxu0
        %v7194 = vadd.f32 %v7081, %v7193
        %7195 = vmatprep.mubr.bf16.mxu0 0
        %7196 = vmatmul.mubr.bf16.gmra.mrb[0].mxu0 %v6707
        %v7197 = vpop.f32.mrb[0].mxu0
        %v7198 = vadd.f32 %v7085, %v7197
        %v7199 = vpop.f32.mrb[0].mxu0
        %v7200 = vadd.f32 %v7087, %v7199
        %v7201 = vpop.f32.mrb[0].mxu0
        %v7202 = vadd.f32 %v7089, %v7201
        %v7203 = vpop.f32.mrb[0].mxu0
        %v7204 = vadd.f32 %v7091, %v7203
        %7205 = vmatprep.mubr.bf16.mxu0 0
        %7206 = vmatmul.mubr.bf16.gmra.mrb[0].mxu0 %v6710
        %v7207 = vpop.f32.mrb[0].mxu0
        %v7208 = vadd.f32 %v7095, %v7207
        %v7209 = vpop.f32.mrb[0].mxu0
        %v7210 = vadd.f32 %v7097, %v7209
        %v7211 = vpop.f32.mrb[0].mxu0
        %v7212 = vadd.f32 %v7099, %v7211
        %v7213 = vpop.f32.mrb[0].mxu0
        %v7214 = vadd.f32 %v7101, %v7213
        %7215 = vmatprep.mubr.bf16.mxu0 0
        %7216 = vmatmul.mubr.bf16.gmra.mrb[0].mxu0 %v6713
        %v7217 = vpop.f32.mrb[0].mxu0
        %v7218 = vadd.f32 %v7105, %v7217
        %v7219 = vpop.f32.mrb[0].mxu0
        %v7220 = vadd.f32 %v7107, %v7219
        %v7221 = vpop.f32.mrb[0].mxu0
        %v7222 = vadd.f32 %v7109, %v7221
        %v7223 = vpop.f32.mrb[0].mxu0
        %v7224 = vadd.f32 %v7111, %v7223
        %7225 = vmatprep.mubr.bf16.mxu0 0
        %7226 = vmatmul.mubr.bf16.gmra.mrb[0].mxu0 %v6716
        %v7227 = vpop.f32.mrb[0].mxu0
        %v7228 = vadd.f32 %v7115, %v7227
        %v7229 = vpop.f32.mrb[0].mxu0
        %v7230 = vadd.f32 %v7117, %v7229
        %v7231 = vpop.f32.mrb[0].mxu0
        %v7232 = vadd.f32 %v7119, %v7231
        %v7233 = vpop.f32.mrb[0].mxu0
        %v7234 = vadd.f32 %v7121, %v7233
        %7235 = vmatprep.mubr.bf16.mxu0 0
        %7236 = vmatmul.mubr.bf16.gmra.mrb[0].mxu0 %v6719
        %v7237 = vpop.f32.mrb[0].mxu0
        %v7238 = vadd.f32 %v7125, %v7237
        %v7239 = vpop.f32.mrb[0].mxu0
        %v7240 = vadd.f32 %v7127, %v7239
        %v7241 = vpop.f32.mrb[0].mxu0
        %v7242 = vadd.f32 %v7129, %v7241
        %v7243 = vpop.f32.mrb[0].mxu0
        %v7244 = vadd.f32 %v7131, %v7243
        %7245 = vdwg.mxu0
        %v7246 = vmul.f32 %v7168, 1.442695
        %v7247 = vpow.pop %v7246
        %v7248 = vmul.f32 %v7170, 1.442695
        %v7249 = vpow.pop %v7248
        %v7250 = vmul.f32 %v7172, 1.442695
        %v7251 = vpow.pop %v7250
        %v7252 = vmul.f32 %v7174, 1.442695
        %v7253 = vpow.pop %v7252
        %v7254 = vmul.f32 %v7178, 1.442695
        %v7255 = vpow.pop %v7254
        %v7256 = vmul.f32 %v7180, 1.442695
        %v7257 = vpow.pop %v7256
        %v7258 = vmul.f32 %v7182, 1.442695
        %v7259 = vpow.pop %v7258
        %v7260 = vmul.f32 %v7184, 1.442695
        %v7261 = vpow.pop %v7260
        %v7262 = vmul.f32 %v7188, 1.442695
        %v7263 = vpow.pop %v7262
        %v7264 = vmul.f32 %v7190, 1.442695
        %v7265 = vpow.pop %v7264
        %v7266 = vmul.f32 %v7192, 1.442695
        %v7267 = vpow.pop %v7266
        %v7268 = vmul.f32 %v7194, 1.442695
        %v7269 = vpow.pop %v7268
        %v7270 = vmul.f32 %v7198, 1.442695
        %v7271 = vpow.pop %v7270
        %v7272 = vmul.f32 %v7200, 1.442695
        %v7273 = vpow.pop %v7272
        %v7274 = vmul.f32 %v7202, 1.442695
        %v7275 = vpow.pop %v7274
        %v7276 = vmul.f32 %v7204, 1.442695
        %v7277 = vpow.pop %v7276
        %v7278 = vmul.f32 %v7208, 1.442695
        %v7279 = vpow.pop %v7278
        %v7280 = vmul.f32 %v7210, 1.442695
        %v7281 = vpow.pop %v7280
        %v7282 = vmul.f32 %v7212, 1.442695
        %v7283 = vpow.pop %v7282
        %v7284 = vmul.f32 %v7214, 1.442695
        %v7285 = vpow.pop %v7284
        %v7286 = vmul.f32 %v7218, 1.442695
        %v7287 = vpow.pop %v7286
        %v7288 = vmul.f32 %v7220, 1.442695
        %v7289 = vpow.pop %v7288
        %v7290 = vmul.f32 %v7222, 1.442695
        %v7291 = vpow.pop %v7290
        %v7292 = vmul.f32 %v7224, 1.442695
        %v7293 = vpow.pop %v7292
        %v7294 = vmul.f32 %v7228, 1.442695
        %v7295 = vpow.pop %v7294
        %v7296 = vmul.f32 %v7230, 1.442695
        %v7297 = vpow.pop %v7296
        %v7298 = vmul.f32 %v7232, 1.442695
        %v7299 = vpow.pop %v7298
        %v7300 = vmul.f32 %v7234, 1.442695
        %v7301 = vpow.pop %v7300
        %v7302 = vmul.f32 %v7238, 1.442695
        %v7303 = vpow.pop %v7302
        %v7304 = vmul.f32 %v7240, 1.442695
        %v7305 = vpow.pop %v7304
        %v7306 = vmul.f32 %v7242, 1.442695
        %v7307 = vpow.pop %v7306
        %v7308 = vmul.f32 %v7244, 1.442695
        %v7309 = vpow.pop %v7308
        %v7310 = vld [vmem:[%s7] sm:$0xff]
        %v7311 = vld [vmem:[%s7 + $0x8] sm:$0xff]
        %v7312 = vld [vmem:[%s7 + $0x10] sm:$0xff]
        %v7313 = vld [vmem:[%s7 + $0x18] sm:$0xff]
        %v7314 = vld [vmem:[%s7 + $0x20] sm:$0xff]
        %v7315 = vld [vmem:[%s7 + $0x28] sm:$0xff]
        %v7316 = vld [vmem:[%s7 + $0x30] sm:$0xff]
        %v7317 = vld [vmem:[%s7 + $0x38] sm:$0xff]
        %v7318 = vld [vmem:[%s7 + $0x40] sm:$0xff]
        %v7319 = vld [vmem:[%s7 + $0x48] sm:$0xff]
        %v7320 = vld [vmem:[%s7 + $0x50] sm:$0xff]
        %v7321 = vld [vmem:[%s7 + $0x58] sm:$0xff]
        %v7322 = vld [vmem:[%s7 + $0x60] sm:$0xff]
        %v7323 = vld [vmem:[%s7 + $0x68] sm:$0xff]
        %v7324 = vld [vmem:[%s7 + $0x70] sm:$0xff]
        %v7325 = vld [vmem:[%s7 + $0x78] sm:$0xff]
        %v7326 = vld [vmem:[%s7 + $0x80] sm:$0xff]
        %v7327 = vld [vmem:[%s7 + $0x88] sm:$0xff]
        %v7328 = vld [vmem:[%s7 + $0x90] sm:$0xff]
        %v7329 = vld [vmem:[%s7 + $0x98] sm:$0xff]
        %v7330 = vld [vmem:[%s7 + $0xa0] sm:$0xff]
        %v7331 = vld [vmem:[%s7 + $0xa8] sm:$0xff]
        %v7332 = vld [vmem:[%s7 + $0xb0] sm:$0xff]
        %v7333 = vld [vmem:[%s7 + $0xb8] sm:$0xff]
        %v7334 = vld [vmem:[%s7 + $0xc0] sm:$0xff]
        %v7335 = vld [vmem:[%s7 + $0xc8] sm:$0xff]
        %v7336 = vld [vmem:[%s7 + $0xd0] sm:$0xff]
        %v7337 = vld [vmem:[%s7 + $0xd8] sm:$0xff]
        %v7338 = vld [vmem:[%s7 + $0xe0] sm:$0xff]
        %v7339 = vld [vmem:[%s7 + $0xe8] sm:$0xff]
        %v7340 = vld [vmem:[%s7 + $0xf0] sm:$0xff]
        %v7341 = vld [vmem:[%s7 + $0xf8] sm:$0xff]
        %7342 = vmatprep.subr.mxu0 %v7311
        %7343 = vmatpush1.msra.mxu0 %v7310
        %7344 = vmatprep.subr.mxu0 %v7313
        %7345 = vmatpush1.msra.mxu0 %v7312
        %7346 = vmatprep.subr.mxu0 %v7315
        %7347 = vmatpush1.msra.mxu0 %v7314
        %7348 = vmatprep.subr.mxu0 %v7317
        %7349 = vmatpush1.msra.mxu0 %v7316
        %7350 = vmatprep.subr.mxu0 %v7319
        %7351 = vmatpush1.msra.mxu0 %v7318
        %7352 = vmatprep.subr.mxu0 %v7321
        %7353 = vmatpush1.msra.mxu0 %v7320
        %7354 = vmatprep.subr.mxu0 %v7323
        %7355 = vmatpush1.msra.mxu0 %v7322
        %7356 = vmatprep.subr.mxu0 %v7325
        %7357 = vmatpush1.msra.mxu0 %v7324
        %7358 = vmatprep.subr.mxu0 %v7327
        %7359 = vmatpush1.msra.mxu0 %v7326
        %7360 = vmatprep.subr.mxu0 %v7329
        %7361 = vmatpush1.msra.mxu0 %v7328
        %7362 = vmatprep.subr.mxu0 %v7331
        %7363 = vmatpush1.msra.mxu0 %v7330
        %7364 = vmatprep.subr.mxu0 %v7333
        %7365 = vmatpush1.msra.mxu0 %v7332
        %7366 = vmatprep.subr.mxu0 %v7335
        %7367 = vmatpush1.msra.mxu0 %v7334
        %7368 = vmatprep.subr.mxu0 %v7337
        %7369 = vmatpush1.msra.mxu0 %v7336
        %7370 = vmatprep.subr.mxu0 %v7339
        %7371 = vmatpush1.msra.mxu0 %v7338
        %7372 = vmatprep.subr.mxu0 %v7341
        %7373 = vmatpush1.msra.mxu0 %v7340
        %7374 = vmatprep.subr.mxu0 0.0
        %7375 = vmatpush1.msra.mxu0 0.0
        %7376 = vmatprep.subr.mxu0 0.0
        %7377 = vmatpush1.msra.mxu0 0.0
        %7378 = vmatprep.subr.mxu0 0.0
        %7379 = vmatpush1.msra.mxu0 0.0
        %7380 = vmatprep.subr.mxu0 0.0
        %7381 = vmatpush1.msra.mxu0 0.0
        %7382 = vmatprep.subr.mxu0 0.0
        %7383 = vmatpush1.msra.mxu0 0.0
        %7384 = vmatprep.subr.mxu0 0.0
        %7385 = vmatpush1.msra.mxu0 0.0
        %7386 = vmatprep.subr.mxu0 0.0
        %7387 = vmatpush1.msra.mxu0 0.0
        %7388 = vmatprep.subr.mxu0 0.0
        %7389 = vmatpush1.msra.mxu0 0.0
        %7390 = vmatprep.subr.mxu0 0.0
        %7391 = vmatpush1.msra.mxu0 0.0
        %7392 = vmatprep.subr.mxu0 0.0
        %7393 = vmatpush1.msra.mxu0 0.0
        %7394 = vmatprep.subr.mxu0 0.0
        %7395 = vmatpush1.msra.mxu0 0.0
        %7396 = vmatprep.subr.mxu0 0.0
        %7397 = vmatpush1.msra.mxu0 0.0
        %7398 = vmatprep.subr.mxu0 0.0
        %7399 = vmatpush1.msra.mxu0 0.0
        %7400 = vmatprep.subr.mxu0 0.0
        %7401 = vmatpush1.msra.mxu0 0.0
        %7402 = vmatprep.subr.mxu0 0.0
        %7403 = vmatpush1.msra.mxu0 0.0
        %7404 = vmatprep.subr.mxu0 0.0
        %7405 = vmatpush1.msra.mxu0 0.0
        %7406 = vmatprep.mubr.f32.mxu0 0.0
        %7407 = vmatmul.mubr.f32.gmra.mrb[0].mxu0 %v5857
        %v7408 = vpop.f32.mrb[0].mxu0
        %v7409 = vadd.f32 0.0, %v7408
        %v7410 = vpop.f32.mrb[0].mxu0
        %v7411 = vadd.f32 0.0, %v7410
        %7412 = vmatprep.mubr.f32.mxu0 0.0
        %7413 = vmatmul.mubr.f32.gmra.mrb[0].mxu0 %v5858
        %v7414 = vpop.f32.mrb[0].mxu0
        %v7415 = vadd.f32 0.0, %v7414
        %v7416 = vpop.f32.mrb[0].mxu0
        %v7417 = vadd.f32 0.0, %v7416
        %7418 = vmatprep.mubr.f32.mxu0 0.0
        %7419 = vmatmul.mubr.f32.gmra.mrb[0].mxu0 %v5859
        %v7420 = vpop.f32.mrb[0].mxu0
        %v7421 = vadd.f32 0.0, %v7420
        %v7422 = vpop.f32.mrb[0].mxu0
        %v7423 = vadd.f32 0.0, %v7422
        %7424 = vmatprep.mubr.f32.mxu0 0.0
        %7425 = vmatmul.mubr.f32.gmra.mrb[0].mxu0 %v5860
        %v7426 = vpop.f32.mrb[0].mxu0
        %v7427 = vadd.f32 0.0, %v7426
        %v7428 = vpop.f32.mrb[0].mxu0
        %v7429 = vadd.f32 0.0, %v7428
        %7430 = vmatprep.mubr.f32.mxu0 0.0
        %7431 = vmatmul.mubr.f32.gmra.mrb[0].mxu0 %v5861
        %v7432 = vpop.f32.mrb[0].mxu0
        %v7433 = vadd.f32 0.0, %v7432
        %v7434 = vpop.f32.mrb[0].mxu0
        %v7435 = vadd.f32 0.0, %v7434
        %7436 = vmatprep.mubr.f32.mxu0 0.0
        %7437 = vmatmul.mubr.f32.gmra.mrb[0].mxu0 %v5862
        %v7438 = vpop.f32.mrb[0].mxu0
        %v7439 = vadd.f32 0.0, %v7438
        %v7440 = vpop.f32.mrb[0].mxu0
        %v7441 = vadd.f32 0.0, %v7440
        %7442 = vmatprep.mubr.f32.mxu0 0.0
        %7443 = vmatmul.mubr.f32.gmra.mrb[0].mxu0 %v5863
        %v7444 = vpop.f32.mrb[0].mxu0
        %v7445 = vadd.f32 0.0, %v7444
        %v7446 = vpop.f32.mrb[0].mxu0
        %v7447 = vadd.f32 0.0, %v7446
        %7448 = vmatprep.mubr.f32.mxu0 0.0
        %7449 = vmatmul.mubr.f32.gmra.mrb[0].mxu0 %v5864
        %v7450 = vpop.f32.mrb[0].mxu0
        %v7451 = vadd.f32 0.0, %v7450
        %v7452 = vpop.f32.mrb[0].mxu0
        %v7453 = vadd.f32 0.0, %v7452
        %7454 = vmatprep.mubr.f32.mxu0 0.0
        %7455 = vmatmul.mubr.f32.gmra.mrb[0].mxu0 %v5865
        %v7456 = vpop.f32.mrb[0].mxu0
        %v7457 = vadd.f32 0.0, %v7456
        %v7458 = vpop.f32.mrb[0].mxu0
        %v7459 = vadd.f32 0.0, %v7458
        %7460 = vmatprep.mubr.f32.mxu0 0.0
        %7461 = vmatmul.mubr.f32.gmra.mrb[0].mxu0 %v5866
        %v7462 = vpop.f32.mrb[0].mxu0
        %v7463 = vadd.f32 0.0, %v7462
        %v7464 = vpop.f32.mrb[0].mxu0
        %v7465 = vadd.f32 0.0, %v7464
        %7466 = vmatprep.mubr.f32.mxu0 0.0
        %7467 = vmatmul.mubr.f32.gmra.mrb[0].mxu0 %v5867
        %v7468 = vpop.f32.mrb[0].mxu0
        %v7469 = vadd.f32 0.0, %v7468
        %v7470 = vpop.f32.mrb[0].mxu0
        %v7471 = vadd.f32 0.0, %v7470
        %7472 = vmatprep.mubr.f32.mxu0 0.0
        %7473 = vmatmul.mubr.f32.gmra.mrb[0].mxu0 %v5868
        %v7474 = vpop.f32.mrb[0].mxu0
        %v7475 = vadd.f32 0.0, %v7474
        %v7476 = vpop.f32.mrb[0].mxu0
        %v7477 = vadd.f32 0.0, %v7476
        %7478 = vmatprep.mubr.f32.mxu0 0.0
        %7479 = vmatmul.mubr.f32.gmra.mrb[0].mxu0 %v5869
        %v7480 = vpop.f32.mrb[0].mxu0
        %v7481 = vadd.f32 0.0, %v7480
        %v7482 = vpop.f32.mrb[0].mxu0
        %v7483 = vadd.f32 0.0, %v7482
        %7484 = vmatprep.mubr.f32.mxu0 0.0
        %7485 = vmatmul.mubr.f32.gmra.mrb[0].mxu0 %v5870
        %v7486 = vpop.f32.mrb[0].mxu0
        %v7487 = vadd.f32 0.0, %v7486
        %v7488 = vpop.f32.mrb[0].mxu0
        %v7489 = vadd.f32 0.0, %v7488
        %7490 = vmatprep.mubr.f32.mxu0 0.0
        %7491 = vmatmul.mubr.f32.gmra.mrb[0].mxu0 %v5871
        %v7492 = vpop.f32.mrb[0].mxu0
        %v7493 = vadd.f32 0.0, %v7492
        %v7494 = vpop.f32.mrb[0].mxu0
        %v7495 = vadd.f32 0.0, %v7494
        %7496 = vmatprep.mubr.f32.mxu0 0.0
        %7497 = vmatmul.mubr.f32.gmra.mrb[0].mxu0 %v5872
        %v7498 = vpop.f32.mrb[0].mxu0
        %v7499 = vadd.f32 0.0, %v7498
        %v7500 = vpop.f32.mrb[0].mxu0
        %v7501 = vadd.f32 0.0, %v7500
        %7502 = vdwg.mxu0
        %v7503 = vmul.f32 %v7409, %v7247
        %v7504 = vmul.f32 %v7411, %v7249
        %v7505 = vmul.f32 %v7415, %v7251
        %v7506 = vmul.f32 %v7417, %v7253
        %v7507 = vmul.f32 %v7421, %v7255
        %v7508 = vmul.f32 %v7423, %v7257
        %v7509 = vmul.f32 %v7427, %v7259
        %v7510 = vmul.f32 %v7429, %v7261
        %v7511 = vmul.f32 %v7433, %v7263
        %v7512 = vmul.f32 %v7435, %v7265
        %v7513 = vmul.f32 %v7439, %v7267
        %v7514 = vmul.f32 %v7441, %v7269
        %v7515 = vmul.f32 %v7445, %v7271
        %v7516 = vmul.f32 %v7447, %v7273
        %v7517 = vmul.f32 %v7451, %v7275
        %v7518 = vmul.f32 %v7453, %v7277
        %v7519 = vmul.f32 %v7457, %v7279
        %v7520 = vmul.f32 %v7459, %v7281
        %v7521 = vmul.f32 %v7463, %v7283
        %v7522 = vmul.f32 %v7465, %v7285
        %v7523 = vmul.f32 %v7469, %v7287
        %v7524 = vmul.f32 %v7471, %v7289
        %v7525 = vmul.f32 %v7475, %v7291
        %v7526 = vmul.f32 %v7477, %v7293
        %v7527 = vmul.f32 %v7481, %v7295
        %v7528 = vmul.f32 %v7483, %v7297
        %v7529 = vmul.f32 %v7487, %v7299
        %v7530 = vmul.f32 %v7489, %v7301
        %v7531 = vmul.f32 %v7493, %v7303
        %v7532 = vmul.f32 %v7495, %v7305
        %v7533 = vmul.f32 %v7499, %v7307
        %v7534 = vmul.f32 %v7501, %v7309
        %v7535 = vld [vmem:[%s8] sm:$0xff]
        %v7536 = vld [vmem:[%s8 + $0x8] sm:$0xff]
        %v7537 = vld [vmem:[%s8 + $0x10] sm:$0xff]
        %v7538 = vld [vmem:[%s8 + $0x18] sm:$0xff]
        %v7539 = vld [vmem:[%s8 + $0x20] sm:$0xff]
        %v7540 = vld [vmem:[%s8 + $0x28] sm:$0xff]
        %v7541 = vld [vmem:[%s8 + $0x30] sm:$0xff]
        %v7542 = vld [vmem:[%s8 + $0x38] sm:$0xff]
        %v7543 = vld [vmem:[%s8 + $0x40] sm:$0xff]
        %v7544 = vld [vmem:[%s8 + $0x48] sm:$0xff]
        %v7545 = vld [vmem:[%s8 + $0x50] sm:$0xff]
        %v7546 = vld [vmem:[%s8 + $0x58] sm:$0xff]
        %v7547 = vld [vmem:[%s8 + $0x60] sm:$0xff]
        %v7548 = vld [vmem:[%s8 + $0x68] sm:$0xff]
        %v7549 = vld [vmem:[%s8 + $0x70] sm:$0xff]
        %v7550 = vld [vmem:[%s8 + $0x78] sm:$0xff]
        %v7551 = vld [vmem:[%s8 + $0x80] sm:$0xff]
        %v7552 = vld [vmem:[%s8 + $0x88] sm:$0xff]
        %v7553 = vld [vmem:[%s8 + $0x90] sm:$0xff]
        %v7554 = vld [vmem:[%s8 + $0x98] sm:$0xff]
        %v7555 = vld [vmem:[%s8 + $0xa0] sm:$0xff]
        %v7556 = vld [vmem:[%s8 + $0xa8] sm:$0xff]
        %v7557 = vld [vmem:[%s8 + $0xb0] sm:$0xff]
        %v7558 = vld [vmem:[%s8 + $0xb8] sm:$0xff]
        %v7560 = vsel %vm2643, %v7504, 0
        %v7563 = vsel %vm2643, %v7506, 0
        %v7566 = vsel %vm2643, %v7508, 0
        %v7569 = vsel %vm2643, %v7510, 0
        %v7572 = vsel %vm2643, %v7512, 0
        %v7575 = vsel %vm2643, %v7514, 0
        %v7578 = vsel %vm2643, %v7516, 0
        %v7581 = vsel %vm2643, %v7518, 0
        %v7584 = vsel %vm2643, %v7520, 0
        %v7587 = vsel %vm2643, %v7522, 0
        %v7590 = vsel %vm2643, %v7524, 0
        %v7593 = vsel %vm2643, %v7526, 0
        %v7596 = vsel %vm2643, %v7528, 0
        %v7599 = vsel %vm2643, %v7530, 0
        %v7602 = vsel %vm2643, %v7532, 0
        %v7605 = vsel %vm2643, %v7534, 0
        %7607 = vmatprep.subr.mxu0 0.0
        %7608 = vmatpush1.msra.mxu0 %v7535
        %7609 = vmatprep.subr.mxu0 0.0
        %7610 = vmatpush1.msra.mxu0 %v7536
        %7611 = vmatprep.subr.mxu0 0.0
        %7612 = vmatpush1.msra.mxu0 %v7537
        %7613 = vmatprep.subr.mxu0 0.0
        %7614 = vmatpush1.msra.mxu0 %v7538
        %7615 = vmatprep.subr.mxu0 0.0
        %7616 = vmatpush1.msra.mxu0 %v7539
        %7617 = vmatprep.subr.mxu0 0.0
        %7618 = vmatpush1.msra.mxu0 %v7540
        %7619 = vmatprep.subr.mxu0 0.0
        %7620 = vmatpush1.msra.mxu0 %v7541
        %7621 = vmatprep.subr.mxu0 0.0
        %7622 = vmatpush1.msra.mxu0 %v7542
        %7623 = vmatprep.subr.mxu0 0.0
        %7624 = vmatpush1.msra.mxu0 %v7543
        %7625 = vmatprep.subr.mxu0 0.0
        %7626 = vmatpush1.msra.mxu0 %v7544
        %7627 = vmatprep.subr.mxu0 0.0
        %7628 = vmatpush1.msra.mxu0 %v7545
        %7629 = vmatprep.subr.mxu0 0.0
        %7630 = vmatpush1.msra.mxu0 %v7546
        %7631 = vmatprep.subr.mxu0 0.0
        %7632 = vmatpush1.msra.mxu0 %v7547
        %7633 = vmatprep.subr.mxu0 0.0
        %7634 = vmatpush1.msra.mxu0 %v7548
        %7635 = vmatprep.subr.mxu0 0.0
        %7636 = vmatpush1.msra.mxu0 %v7549
        %7637 = vmatprep.subr.mxu0 0.0
        %7638 = vmatpush1.msra.mxu0 %v7550
        %7639 = vmatprep.subr.mxu0 0.0
        %7640 = vmatpush1.msra.mxu0 %v7551
        %7641 = vmatprep.subr.mxu0 0.0
        %7642 = vmatpush1.msra.mxu0 %v7552
        %7643 = vmatprep.subr.mxu0 0.0
        %7644 = vmatpush1.msra.mxu0 %v7553
        %7645 = vmatprep.subr.mxu0 0.0
        %7646 = vmatpush1.msra.mxu0 %v7554
        %7647 = vmatprep.subr.mxu0 0.0
        %7648 = vmatpush1.msra.mxu0 %v7555
        %7649 = vmatprep.subr.mxu0 0.0
        %7650 = vmatpush1.msra.mxu0 %v7556
        %7651 = vmatprep.subr.mxu0 0.0
        %7652 = vmatpush1.msra.mxu0 %v7557
        %7653 = vmatprep.subr.mxu0 0.0
        %7654 = vmatpush1.msra.mxu0 %v7558
        %7655 = vmatprep.subr.mxu0 0.0
        %7656 = vmatpush1.msra.mxu0 0.0
        %7657 = vmatprep.subr.mxu0 0.0
        %7658 = vmatpush1.msra.mxu0 0.0
        %7659 = vmatprep.subr.mxu0 0.0
        %7660 = vmatpush1.msra.mxu0 0.0
        %7661 = vmatprep.subr.mxu0 0.0
        %7662 = vmatpush1.msra.mxu0 0.0
        %7663 = vmatprep.subr.mxu0 0.0
        %7664 = vmatpush1.msra.mxu0 0.0
        %7665 = vmatprep.subr.mxu0 0.0
        %7666 = vmatpush1.msra.mxu0 0.0
        %7667 = vmatprep.subr.mxu0 0.0
        %7668 = vmatpush1.msra.mxu0 0.0
        %7669 = vmatprep.subr.mxu0 0.0
        %7670 = vmatpush1.msra.mxu0 0.0
        %7671 = vmatprep.mubr.f32.mxu0 %v7560
        %7672 = vmatmul.mubr.f32.gmra.mrb[0].mxu0 %v7503
        %v7673 = vpop.f32.mrb[0].mxu0
        %v7674 = vadd.f32 0.0, %v7673
        %v7675 = vpop.f32.mrb[0].mxu0
        %7676 = vmatprep.mubr.f32.mxu0 %v7563
        %7677 = vmatmul.mubr.f32.gmra.mrb[0].mxu0 %v7505
        %v7678 = vpop.f32.mrb[0].mxu0
        %v7679 = vadd.f32 0.0, %v7678
        %v7680 = vpop.f32.mrb[0].mxu0
        %7681 = vmatprep.mubr.f32.mxu0 %v7566
        %7682 = vmatmul.mubr.f32.gmra.mrb[0].mxu0 %v7507
        %v7683 = vpop.f32.mrb[0].mxu0
        %v7684 = vadd.f32 0.0, %v7683
        %v7685 = vpop.f32.mrb[0].mxu0
        %7686 = vmatprep.mubr.f32.mxu0 %v7569
        %7687 = vmatmul.mubr.f32.gmra.mrb[0].mxu0 %v7509
        %v7688 = vpop.f32.mrb[0].mxu0
        %v7689 = vadd.f32 0.0, %v7688
        %v7690 = vpop.f32.mrb[0].mxu0
        %7691 = vmatprep.mubr.f32.mxu0 %v7572
        %7692 = vmatmul.mubr.f32.gmra.mrb[0].mxu0 %v7511
        %v7693 = vpop.f32.mrb[0].mxu0
        %v7694 = vadd.f32 0.0, %v7693
        %v7695 = vpop.f32.mrb[0].mxu0
        %7696 = vmatprep.mubr.f32.mxu0 %v7575
        %7697 = vmatmul.mubr.f32.gmra.mrb[0].mxu0 %v7513
        %v7698 = vpop.f32.mrb[0].mxu0
        %v7699 = vadd.f32 0.0, %v7698
        %v7700 = vpop.f32.mrb[0].mxu0
        %7701 = vmatprep.mubr.f32.mxu0 %v7578
        %7702 = vmatmul.mubr.f32.gmra.mrb[0].mxu0 %v7515
        %v7703 = vpop.f32.mrb[0].mxu0
        %v7704 = vadd.f32 0.0, %v7703
        %v7705 = vpop.f32.mrb[0].mxu0
        %7706 = vmatprep.mubr.f32.mxu0 %v7581
        %7707 = vmatmul.mubr.f32.gmra.mrb[0].mxu0 %v7517
        %v7708 = vpop.f32.mrb[0].mxu0
        %v7709 = vadd.f32 0.0, %v7708
        %v7710 = vpop.f32.mrb[0].mxu0
        %7711 = vmatprep.mubr.f32.mxu0 %v7584
        %7712 = vmatmul.mubr.f32.gmra.mrb[0].mxu0 %v7519
        %v7713 = vpop.f32.mrb[0].mxu0
        %v7714 = vadd.f32 0.0, %v7713
        %v7715 = vpop.f32.mrb[0].mxu0
        %7716 = vmatprep.mubr.f32.mxu0 %v7587
        %7717 = vmatmul.mubr.f32.gmra.mrb[0].mxu0 %v7521
        %v7718 = vpop.f32.mrb[0].mxu0
        %v7719 = vadd.f32 0.0, %v7718
        %v7720 = vpop.f32.mrb[0].mxu0
        %7721 = vmatprep.mubr.f32.mxu0 %v7590
        %7722 = vmatmul.mubr.f32.gmra.mrb[0].mxu0 %v7523
        %v7723 = vpop.f32.mrb[0].mxu0
        %v7724 = vadd.f32 0.0, %v7723
        %v7725 = vpop.f32.mrb[0].mxu0
        %7726 = vmatprep.mubr.f32.mxu0 %v7593
        %7727 = vmatmul.mubr.f32.gmra.mrb[0].mxu0 %v7525
        %v7728 = vpop.f32.mrb[0].mxu0
        %v7729 = vadd.f32 0.0, %v7728
        %v7730 = vpop.f32.mrb[0].mxu0
        %7731 = vmatprep.mubr.f32.mxu0 %v7596
        %7732 = vmatmul.mubr.f32.gmra.mrb[0].mxu0 %v7527
        %v7733 = vpop.f32.mrb[0].mxu0
        %v7734 = vadd.f32 0.0, %v7733
        %v7735 = vpop.f32.mrb[0].mxu0
        %7736 = vmatprep.mubr.f32.mxu0 %v7599
        %7737 = vmatmul.mubr.f32.gmra.mrb[0].mxu0 %v7529
        %v7738 = vpop.f32.mrb[0].mxu0
        %v7739 = vadd.f32 0.0, %v7738
        %v7740 = vpop.f32.mrb[0].mxu0
        %7741 = vmatprep.mubr.f32.mxu0 %v7602
        %7742 = vmatmul.mubr.f32.gmra.mrb[0].mxu0 %v7531
        %v7743 = vpop.f32.mrb[0].mxu0
        %v7744 = vadd.f32 0.0, %v7743
        %v7745 = vpop.f32.mrb[0].mxu0
        %7746 = vmatprep.mubr.f32.mxu0 %v7605
        %7747 = vmatmul.mubr.f32.gmra.mrb[0].mxu0 %v7533
        %v7748 = vpop.f32.mrb[0].mxu0
        %v7749 = vadd.f32 0.0, %v7748
        %v7750 = vpop.f32.mrb[0].mxu0
        %7751 = vdwg.mxu0
        %vm7752 = vcmp.eq.f32.partialorder %v7674, 0.0
        %vm7753 = vcmp.eq.f32.partialorder %v7679, 0.0
        %vm7754 = vcmp.eq.f32.partialorder %v7684, 0.0
        %vm7755 = vcmp.eq.f32.partialorder %v7689, 0.0
        %vm7756 = vcmp.eq.f32.partialorder %v7694, 0.0
        %vm7757 = vcmp.eq.f32.partialorder %v7699, 0.0
        %vm7758 = vcmp.eq.f32.partialorder %v7704, 0.0
        %vm7759 = vcmp.eq.f32.partialorder %v7709, 0.0
        %vm7760 = vcmp.eq.f32.partialorder %v7714, 0.0
        %vm7761 = vcmp.eq.f32.partialorder %v7719, 0.0
        %vm7762 = vcmp.eq.f32.partialorder %v7724, 0.0
        %vm7763 = vcmp.eq.f32.partialorder %v7729, 0.0
        %vm7764 = vcmp.eq.f32.partialorder %v7734, 0.0
        %vm7765 = vcmp.eq.f32.partialorder %v7739, 0.0
        %vm7766 = vcmp.eq.f32.partialorder %v7744, 0.0
        %vm7767 = vcmp.eq.f32.partialorder %v7749, 0.0
        %v7768 = vsel %vm7752, 2.220446e-16, %v7674
        %v7769 = vsel %vm7753, 2.220446e-16, %v7679
        %v7770 = vsel %vm7754, 2.220446e-16, %v7684
        %v7771 = vsel %vm7755, 2.220446e-16, %v7689
        %v7772 = vsel %vm7756, 2.220446e-16, %v7694
        %v7773 = vsel %vm7757, 2.220446e-16, %v7699
        %v7774 = vsel %vm7758, 2.220446e-16, %v7704
        %v7775 = vsel %vm7759, 2.220446e-16, %v7709
        %v7776 = vsel %vm7760, 2.220446e-16, %v7714
        %v7777 = vsel %vm7761, 2.220446e-16, %v7719
        %v7778 = vsel %vm7762, 2.220446e-16, %v7724
        %v7779 = vsel %vm7763, 2.220446e-16, %v7729
        %v7780 = vsel %vm7764, 2.220446e-16, %v7734
        %v7781 = vsel %vm7765, 2.220446e-16, %v7739
        %v7782 = vsel %vm7766, 2.220446e-16, %v7744
        %v7783 = vsel %vm7767, 2.220446e-16, %v7749
        %v7784 = vlog2.pop %v7768
        %v7785 = vmul.f32 %v7784, 0.6931472
        %v7786 = vlog2.pop %v7769
        %v7787 = vmul.f32 %v7786, 0.6931472
        %v7788 = vlog2.pop %v7770
        %v7789 = vmul.f32 %v7788, 0.6931472
        %v7790 = vlog2.pop %v7771
        %v7791 = vmul.f32 %v7790, 0.6931472
        %v7792 = vlog2.pop %v7772
        %v7793 = vmul.f32 %v7792, 0.6931472
        %v7794 = vlog2.pop %v7773
        %v7795 = vmul.f32 %v7794, 0.6931472
        %v7796 = vlog2.pop %v7774
        %v7797 = vmul.f32 %v7796, 0.6931472
        %v7798 = vlog2.pop %v7775
        %v7799 = vmul.f32 %v7798, 0.6931472
        %v7800 = vlog2.pop %v7776
        %v7801 = vmul.f32 %v7800, 0.6931472
        %v7802 = vlog2.pop %v7777
        %v7803 = vmul.f32 %v7802, 0.6931472
        %v7804 = vlog2.pop %v7778
        %v7805 = vmul.f32 %v7804, 0.6931472
        %v7806 = vlog2.pop %v7779
        %v7807 = vmul.f32 %v7806, 0.6931472
        %v7808 = vlog2.pop %v7780
        %v7809 = vmul.f32 %v7808, 0.6931472
        %v7810 = vlog2.pop %v7781
        %v7811 = vmul.f32 %v7810, 0.6931472
        %v7812 = vlog2.pop %v7782
        %v7813 = vmul.f32 %v7812, 0.6931472
        %v7814 = vlog2.pop %v7783
        %v7815 = vmul.f32 %v7814, 0.6931472
        %v7816 = vadd.f32 %v7785, %v5392
        %v7817 = vadd.f32 %v7787, %v5393
        %v7818 = vadd.f32 %v7789, %v5394
        %v7819 = vadd.f32 %v7791, %v5395
        %v7820 = vadd.f32 %v7793, %v5396
        %v7821 = vadd.f32 %v7795, %v5397
        %v7822 = vadd.f32 %v7797, %v5398
        %v7823 = vadd.f32 %v7799, %v5399
        %v7824 = vadd.f32 %v7801, %v5400
        %v7825 = vadd.f32 %v7803, %v5401
        %v7826 = vadd.f32 %v7805, %v5402
        %v7827 = vadd.f32 %v7807, %v5403
        %v7828 = vadd.f32 %v7809, %v5404
        %v7829 = vadd.f32 %v7811, %v5405
        %v7830 = vadd.f32 %v7813, %v5406
        %v7831 = vadd.f32 %v7815, %v5407
        %s7832 = scalar_lea.vmem %s461, 256
        %7833 = vst.msk [vmem:[%s7832] sm:$0xff] %vm491, %v7816
        %7834 = vst.msk [vmem:[%s7832 + $0x8] sm:$0xff] %vm491, %v7817
        %7835 = vst.msk [vmem:[%s7832 + $0x10] sm:$0xff] %vm491, %v7818
        %7836 = vst.msk [vmem:[%s7832 + $0x18] sm:$0xff] %vm491, %v7819
        %7837 = vst.msk [vmem:[%s7832 + $0x20] sm:$0xff] %vm491, %v7820
        %7838 = vst.msk [vmem:[%s7832 + $0x28] sm:$0xff] %vm491, %v7821
        %7839 = vst.msk [vmem:[%s7832 + $0x30] sm:$0xff] %vm491, %v7822
        %7840 = vst.msk [vmem:[%s7832 + $0x38] sm:$0xff] %vm491, %v7823
        %7841 = vst.msk [vmem:[%s7832 + $0x40] sm:$0xff] %vm491, %v7824
        %7842 = vst.msk [vmem:[%s7832 + $0x48] sm:$0xff] %vm491, %v7825
        %7843 = vst.msk [vmem:[%s7832 + $0x50] sm:$0xff] %vm491, %v7826
        %7844 = vst.msk [vmem:[%s7832 + $0x58] sm:$0xff] %vm491, %v7827
        %7845 = vst.msk [vmem:[%s7832 + $0x60] sm:$0xff] %vm491, %v7828
        %7846 = vst.msk [vmem:[%s7832 + $0x68] sm:$0xff] %vm491, %v7829
        %7847 = vst.msk [vmem:[%s7832 + $0x70] sm:$0xff] %vm491, %v7830
        %7848 = vst.msk [vmem:[%s7832 + $0x78] sm:$0xff] %vm491, %v7831
        %s7849 = scalar_lea.vmem %s448, 384
        %v7850 = vld [vmem:[%s7849] sm:$0xff]
        %v7851 = vld [vmem:[%s7849 + $0x8] sm:$0xff]
        %v7852 = vld [vmem:[%s7849 + $0x10] sm:$0xff]
        %v7853 = vld [vmem:[%s7849 + $0x18] sm:$0xff]
        %v7854 = vld [vmem:[%s7849 + $0x20] sm:$0xff]
        %v7855 = vld [vmem:[%s7849 + $0x28] sm:$0xff]
        %v7856 = vld [vmem:[%s7849 + $0x30] sm:$0xff]
        %v7857 = vld [vmem:[%s7849 + $0x38] sm:$0xff]
        %v7858 = vld [vmem:[%s7849 + $0x40] sm:$0xff]
        %v7859 = vld [vmem:[%s7849 + $0x48] sm:$0xff]
        %v7860 = vld [vmem:[%s7849 + $0x50] sm:$0xff]
        %v7861 = vld [vmem:[%s7849 + $0x58] sm:$0xff]
        %v7862 = vld [vmem:[%s7849 + $0x60] sm:$0xff]
        %v7863 = vld [vmem:[%s7849 + $0x68] sm:$0xff]
        %v7864 = vld [vmem:[%s7849 + $0x70] sm:$0xff]
        %v7865 = vld [vmem:[%s7849 + $0x78] sm:$0xff]
        %v7867 = vsel %vm491, %v7850, 0
        %v7870 = vsel %vm491, %v7851, 0
        %v7873 = vsel %vm491, %v7852, 0
        %v7876 = vsel %vm491, %v7853, 0
        %v7879 = vsel %vm491, %v7854, 0
        %v7882 = vsel %vm491, %v7855, 0
        %v7885 = vsel %vm491, %v7856, 0
        %v7888 = vsel %vm491, %v7857, 0
        %v7891 = vsel %vm491, %v7858, 0
        %v7894 = vsel %vm491, %v7859, 0
        %v7897 = vsel %vm491, %v7860, 0
        %v7900 = vsel %vm491, %v7861, 0
        %v7903 = vsel %vm491, %v7862, 0
        %v7906 = vsel %vm491, %v7863, 0
        %v7909 = vsel %vm491, %v7864, 0
        %v7912 = vsel %vm491, %v7865, 0
        %7914 = vmatprep.subr.mxu0 0.0
        %7915 = vmatpush1.msra.mxu0 %v465
        %7916 = vmatprep.subr.mxu0 0.0
        %7917 = vmatpush1.msra.mxu0 %v466
        %7918 = vmatprep.subr.mxu0 0.0
        %7919 = vmatpush1.msra.mxu0 %v467
        %7920 = vmatprep.subr.mxu0 0.0
        %7921 = vmatpush1.msra.mxu0 %v468
        %7922 = vmatprep.subr.mxu0 0.0
        %7923 = vmatpush1.msra.mxu0 0.0
        %7924 = vmatprep.subr.mxu0 0.0
        %7925 = vmatpush1.msra.mxu0 0.0
        %7926 = vmatprep.subr.mxu0 0.0
        %7927 = vmatpush1.msra.mxu0 0.0
        %7928 = vmatprep.subr.mxu0 0.0
        %7929 = vmatpush1.msra.mxu0 0.0
        %7930 = vmatprep.subr.mxu0 0.0
        %7931 = vmatpush1.msra.mxu0 0.0
        %7932 = vmatprep.subr.mxu0 0.0
        %7933 = vmatpush1.msra.mxu0 0.0
        %7934 = vmatprep.subr.mxu0 0.0
        %7935 = vmatpush1.msra.mxu0 0.0
        %7936 = vmatprep.subr.mxu0 0.0
        %7937 = vmatpush1.msra.mxu0 0.0
        %7938 = vmatprep.subr.mxu0 0.0
        %7939 = vmatpush1.msra.mxu0 0.0
        %7940 = vmatprep.subr.mxu0 0.0
        %7941 = vmatpush1.msra.mxu0 0.0
        %7942 = vmatprep.subr.mxu0 0.0
        %7943 = vmatpush1.msra.mxu0 0.0
        %7944 = vmatprep.subr.mxu0 0.0
        %7945 = vmatpush1.msra.mxu0 0.0
        %7946 = vmatprep.subr.mxu0 0.0
        %7947 = vmatpush1.msra.mxu0 0.0
        %7948 = vmatprep.subr.mxu0 0.0
        %7949 = vmatpush1.msra.mxu0 0.0
        %7950 = vmatprep.subr.mxu0 0.0
        %7951 = vmatpush1.msra.mxu0 0.0
        %7952 = vmatprep.subr.mxu0 0.0
        %7953 = vmatpush1.msra.mxu0 0.0
        %7954 = vmatprep.subr.mxu0 0.0
        %7955 = vmatpush1.msra.mxu0 0.0
        %7956 = vmatprep.subr.mxu0 0.0
        %7957 = vmatpush1.msra.mxu0 0.0
        %7958 = vmatprep.subr.mxu0 0.0
        %7959 = vmatpush1.msra.mxu0 0.0
        %7960 = vmatprep.subr.mxu0 0.0
        %7961 = vmatpush1.msra.mxu0 0.0
        %7962 = vmatprep.subr.mxu0 0.0
        %7963 = vmatpush1.msra.mxu0 0.0
        %7964 = vmatprep.subr.mxu0 0.0
        %7965 = vmatpush1.msra.mxu0 0.0
        %7966 = vmatprep.subr.mxu0 0.0
        %7967 = vmatpush1.msra.mxu0 0.0
        %7968 = vmatprep.subr.mxu0 0.0
        %7969 = vmatpush1.msra.mxu0 0.0
        %7970 = vmatprep.subr.mxu0 0.0
        %7971 = vmatpush1.msra.mxu0 0.0
        %7972 = vmatprep.subr.mxu0 0.0
        %7973 = vmatpush1.msra.mxu0 0.0
        %7974 = vmatprep.subr.mxu0 0.0
        %7975 = vmatpush1.msra.mxu0 0.0
        %7976 = vmatprep.subr.mxu0 0.0
        %7977 = vmatpush1.msra.mxu0 0.0
        %7978 = vmatprep.mubr.f32.mxu0 0.0
        %7979 = vmatmul.mubr.f32.gmra.mrb[0].mxu0 %v7867
        %v7980 = vpop.f32.mrb[0].mxu0
        %v7981 = vadd.f32 %v489, %v7980
        %v7982 = vpop.f32.mrb[0].mxu0
        %7983 = vmatprep.mubr.f32.mxu0 0.0
        %7984 = vmatmul.mubr.f32.gmra.mrb[0].mxu0 %v7870
        %v7985 = vpop.f32.mrb[0].mxu0
        %v7986 = vadd.f32 %v489, %v7985
        %v7987 = vpop.f32.mrb[0].mxu0
        %7988 = vmatprep.mubr.f32.mxu0 0.0
        %7989 = vmatmul.mubr.f32.gmra.mrb[0].mxu0 %v7873
        %v7990 = vpop.f32.mrb[0].mxu0
        %v7991 = vadd.f32 %v489, %v7990
        %v7992 = vpop.f32.mrb[0].mxu0
        %7993 = vmatprep.mubr.f32.mxu0 0.0
        %7994 = vmatmul.mubr.f32.gmra.mrb[0].mxu0 %v7876
        %v7995 = vpop.f32.mrb[0].mxu0
        %v7996 = vadd.f32 %v489, %v7995
        %v7997 = vpop.f32.mrb[0].mxu0
        %7998 = vmatprep.mubr.f32.mxu0 0.0
        %7999 = vmatmul.mubr.f32.gmra.mrb[0].mxu0 %v7879
        %v8000 = vpop.f32.mrb[0].mxu0
        %v8001 = vadd.f32 %v489, %v8000
        %v8002 = vpop.f32.mrb[0].mxu0
        %8003 = vmatprep.mubr.f32.mxu0 0.0
        %8004 = vmatmul.mubr.f32.gmra.mrb[0].mxu0 %v7882
        %v8005 = vpop.f32.mrb[0].mxu0
        %v8006 = vadd.f32 %v489, %v8005
        %v8007 = vpop.f32.mrb[0].mxu0
        %8008 = vmatprep.mubr.f32.mxu0 0.0
        %8009 = vmatmul.mubr.f32.gmra.mrb[0].mxu0 %v7885
        %v8010 = vpop.f32.mrb[0].mxu0
        %v8011 = vadd.f32 %v489, %v8010
        %v8012 = vpop.f32.mrb[0].mxu0
        %8013 = vmatprep.mubr.f32.mxu0 0.0
        %8014 = vmatmul.mubr.f32.gmra.mrb[0].mxu0 %v7888
        %v8015 = vpop.f32.mrb[0].mxu0
        %v8016 = vadd.f32 %v489, %v8015
        %v8017 = vpop.f32.mrb[0].mxu0
        %8018 = vmatprep.mubr.f32.mxu0 0.0
        %8019 = vmatmul.mubr.f32.gmra.mrb[0].mxu0 %v7891
        %v8020 = vpop.f32.mrb[0].mxu0
        %v8021 = vadd.f32 %v489, %v8020
        %v8022 = vpop.f32.mrb[0].mxu0
        %8023 = vmatprep.mubr.f32.mxu0 0.0
        %8024 = vmatmul.mubr.f32.gmra.mrb[0].mxu0 %v7894
        %v8025 = vpop.f32.mrb[0].mxu0
        %v8026 = vadd.f32 %v489, %v8025
        %v8027 = vpop.f32.mrb[0].mxu0
        %8028 = vmatprep.mubr.f32.mxu0 0.0
        %8029 = vmatmul.mubr.f32.gmra.mrb[0].mxu0 %v7897
        %v8030 = vpop.f32.mrb[0].mxu0
        %v8031 = vadd.f32 %v489, %v8030
        %v8032 = vpop.f32.mrb[0].mxu0
        %8033 = vmatprep.mubr.f32.mxu0 0.0
        %8034 = vmatmul.mubr.f32.gmra.mrb[0].mxu0 %v7900
        %v8035 = vpop.f32.mrb[0].mxu0
        %v8036 = vadd.f32 %v489, %v8035
        %v8037 = vpop.f32.mrb[0].mxu0
        %8038 = vmatprep.mubr.f32.mxu0 0.0
        %8039 = vmatmul.mubr.f32.gmra.mrb[0].mxu0 %v7903
        %v8040 = vpop.f32.mrb[0].mxu0
        %v8041 = vadd.f32 %v489, %v8040
        %v8042 = vpop.f32.mrb[0].mxu0
        %8043 = vmatprep.mubr.f32.mxu0 0.0
        %8044 = vmatmul.mubr.f32.gmra.mrb[0].mxu0 %v7906
        %v8045 = vpop.f32.mrb[0].mxu0
        %v8046 = vadd.f32 %v489, %v8045
        %v8047 = vpop.f32.mrb[0].mxu0
        %8048 = vmatprep.mubr.f32.mxu0 0.0
        %8049 = vmatmul.mubr.f32.gmra.mrb[0].mxu0 %v7909
        %v8050 = vpop.f32.mrb[0].mxu0
        %v8051 = vadd.f32 %v489, %v8050
        %v8052 = vpop.f32.mrb[0].mxu0
        %8053 = vmatprep.mubr.f32.mxu0 0.0
        %8054 = vmatmul.mubr.f32.gmra.mrb[0].mxu0 %v7912
        %v8055 = vpop.f32.mrb[0].mxu0
        %v8056 = vadd.f32 %v489, %v8055
        %v8057 = vpop.f32.mrb[0].mxu0
        %8058 = vdwg.mxu0
        %8059 = vmax.xlane.f32.xlu0 %v7981
        %v8060 = vpop.xlane.xlu0 %8059
        %8061 = vmax.xlane.f32.xlu0 %v7986
        %v8062 = vpop.xlane.xlu0 %8061
        %8063 = vmax.xlane.f32.xlu0 %v7991
        %v8064 = vpop.xlane.xlu0 %8063
        %8065 = vmax.xlane.f32.xlu0 %v7996
        %v8066 = vpop.xlane.xlu0 %8065
        %8067 = vmax.xlane.f32.xlu0 %v8001
        %v8068 = vpop.xlane.xlu0 %8067
        %8069 = vmax.xlane.f32.xlu0 %v8006
        %v8070 = vpop.xlane.xlu0 %8069
        %8071 = vmax.xlane.f32.xlu0 %v8011
        %v8072 = vpop.xlane.xlu0 %8071
        %8073 = vmax.xlane.f32.xlu0 %v8016
        %v8074 = vpop.xlane.xlu0 %8073
        %8075 = vmax.xlane.f32.xlu0 %v8021
        %v8076 = vpop.xlane.xlu0 %8075
        %8077 = vmax.xlane.f32.xlu0 %v8026
        %v8078 = vpop.xlane.xlu0 %8077
        %8079 = vmax.xlane.f32.xlu0 %v8031
        %v8080 = vpop.xlane.xlu0 %8079
        %8081 = vmax.xlane.f32.xlu0 %v8036
        %v8082 = vpop.xlane.xlu0 %8081
        %8083 = vmax.xlane.f32.xlu0 %v8041
        %v8084 = vpop.xlane.xlu0 %8083
        %8085 = vmax.xlane.f32.xlu0 %v8046
        %v8086 = vpop.xlane.xlu0 %8085
        %8087 = vmax.xlane.f32.xlu0 %v8051
        %v8088 = vpop.xlane.xlu0 %8087
        %8089 = vmax.xlane.f32.xlu0 %v8056
        %v8090 = vpop.xlane.xlu0 %8089
        %vm8091 = vcmp.eq.f32.partialorder %v7981, %v8060
        %vm8092 = vcmp.eq.f32.partialorder %v7986, %v8062
        %vm8093 = vcmp.eq.f32.partialorder %v7991, %v8064
        %vm8094 = vcmp.eq.f32.partialorder %v7996, %v8066
        %vm8095 = vcmp.eq.f32.partialorder %v8001, %v8068
        %vm8096 = vcmp.eq.f32.partialorder %v8006, %v8070
        %vm8097 = vcmp.eq.f32.partialorder %v8011, %v8072
        %vm8098 = vcmp.eq.f32.partialorder %v8016, %v8074
        %vm8099 = vcmp.eq.f32.partialorder %v8021, %v8076
        %vm8100 = vcmp.eq.f32.partialorder %v8026, %v8078
        %vm8101 = vcmp.eq.f32.partialorder %v8031, %v8080
        %vm8102 = vcmp.eq.f32.partialorder %v8036, %v8082
        %vm8103 = vcmp.eq.f32.partialorder %v8041, %v8084
        %vm8104 = vcmp.eq.f32.partialorder %v8046, %v8086
        %vm8105 = vcmp.eq.f32.partialorder %v8051, %v8088
        %vm8106 = vcmp.eq.f32.partialorder %v8056, %v8090
        %v8107 = vsel %vm8091, -1e+30, %v7981
        %v8108 = vsel %vm8092, -1e+30, %v7986
        %v8109 = vsel %vm8093, -1e+30, %v7991
        %v8110 = vsel %vm8094, -1e+30, %v7996
        %v8111 = vsel %vm8095, -1e+30, %v8001
        %v8112 = vsel %vm8096, -1e+30, %v8006
        %v8113 = vsel %vm8097, -1e+30, %v8011
        %v8114 = vsel %vm8098, -1e+30, %v8016
        %v8115 = vsel %vm8099, -1e+30, %v8021
        %v8116 = vsel %vm8100, -1e+30, %v8026
        %v8117 = vsel %vm8101, -1e+30, %v8031
        %v8118 = vsel %vm8102, -1e+30, %v8036
        %v8119 = vsel %vm8103, -1e+30, %v8041
        %v8120 = vsel %vm8104, -1e+30, %v8046
        %v8121 = vsel %vm8105, -1e+30, %v8051
        %v8122 = vsel %vm8106, -1e+30, %v8056
        %8123 = vmax.xlane.f32.xlu0 %v8107
        %v8124 = vpop.xlane.xlu0 %8123
        %8125 = vmax.xlane.f32.xlu0 %v8108
        %v8126 = vpop.xlane.xlu0 %8125
        %8127 = vmax.xlane.f32.xlu0 %v8109
        %v8128 = vpop.xlane.xlu0 %8127
        %8129 = vmax.xlane.f32.xlu0 %v8110
        %v8130 = vpop.xlane.xlu0 %8129
        %8131 = vmax.xlane.f32.xlu0 %v8111
        %v8132 = vpop.xlane.xlu0 %8131
        %8133 = vmax.xlane.f32.xlu0 %v8112
        %v8134 = vpop.xlane.xlu0 %8133
        %8135 = vmax.xlane.f32.xlu0 %v8113
        %v8136 = vpop.xlane.xlu0 %8135
        %8137 = vmax.xlane.f32.xlu0 %v8114
        %v8138 = vpop.xlane.xlu0 %8137
        %8139 = vmax.xlane.f32.xlu0 %v8115
        %v8140 = vpop.xlane.xlu0 %8139
        %8141 = vmax.xlane.f32.xlu0 %v8116
        %v8142 = vpop.xlane.xlu0 %8141
        %8143 = vmax.xlane.f32.xlu0 %v8117
        %v8144 = vpop.xlane.xlu0 %8143
        %8145 = vmax.xlane.f32.xlu0 %v8118
        %v8146 = vpop.xlane.xlu0 %8145
        %8147 = vmax.xlane.f32.xlu0 %v8119
        %v8148 = vpop.xlane.xlu0 %8147
        %8149 = vmax.xlane.f32.xlu0 %v8120
        %v8150 = vpop.xlane.xlu0 %8149
        %8151 = vmax.xlane.f32.xlu0 %v8121
        %v8152 = vpop.xlane.xlu0 %8151
        %8153 = vmax.xlane.f32.xlu0 %v8122
        %v8154 = vpop.xlane.xlu0 %8153
        %vm8155 = vcmp.eq.f32.partialorder %v8107, %v8124
        %vm8156 = vcmp.eq.f32.partialorder %v8108, %v8126
        %vm8157 = vcmp.eq.f32.partialorder %v8109, %v8128
        %vm8158 = vcmp.eq.f32.partialorder %v8110, %v8130
        %vm8159 = vcmp.eq.f32.partialorder %v8111, %v8132
        %vm8160 = vcmp.eq.f32.partialorder %v8112, %v8134
        %vm8161 = vcmp.eq.f32.partialorder %v8113, %v8136
        %vm8162 = vcmp.eq.f32.partialorder %v8114, %v8138
        %vm8163 = vcmp.eq.f32.partialorder %v8115, %v8140
        %vm8164 = vcmp.eq.f32.partialorder %v8116, %v8142
        %vm8165 = vcmp.eq.f32.partialorder %v8117, %v8144
        %vm8166 = vcmp.eq.f32.partialorder %v8118, %v8146
        %vm8167 = vcmp.eq.f32.partialorder %v8119, %v8148
        %vm8168 = vcmp.eq.f32.partialorder %v8120, %v8150
        %vm8169 = vcmp.eq.f32.partialorder %v8121, %v8152
        %vm8170 = vcmp.eq.f32.partialorder %v8122, %v8154
        %v8171 = vsub.f32 %v8124, %v8060
        %v8172 = vsub.f32 %v8126, %v8062
        %v8173 = vsub.f32 %v8128, %v8064
        %v8174 = vsub.f32 %v8130, %v8066
        %v8175 = vsub.f32 %v8132, %v8068
        %v8176 = vsub.f32 %v8134, %v8070
        %v8177 = vsub.f32 %v8136, %v8072
        %v8178 = vsub.f32 %v8138, %v8074
        %v8179 = vsub.f32 %v8140, %v8076
        %v8180 = vsub.f32 %v8142, %v8078
        %v8181 = vsub.f32 %v8144, %v8080
        %v8182 = vsub.f32 %v8146, %v8082
        %v8183 = vsub.f32 %v8148, %v8084
        %v8184 = vsub.f32 %v8150, %v8086
        %v8185 = vsub.f32 %v8152, %v8088
        %v8186 = vsub.f32 %v8154, %v8090
        %v8187 = vmul.f32 %v8171, 1.442695
        %v8188 = vpow.pop %v8187
        %v8189 = vmul.f32 %v8172, 1.442695
        %v8190 = vpow.pop %v8189
        %v8191 = vmul.f32 %v8173, 1.442695
        %v8192 = vpow.pop %v8191
        %v8193 = vmul.f32 %v8174, 1.442695
        %v8194 = vpow.pop %v8193
        %v8195 = vmul.f32 %v8175, 1.442695
        %v8196 = vpow.pop %v8195
        %v8197 = vmul.f32 %v8176, 1.442695
        %v8198 = vpow.pop %v8197
        %v8199 = vmul.f32 %v8177, 1.442695
        %v8200 = vpow.pop %v8199
        %v8201 = vmul.f32 %v8178, 1.442695
        %v8202 = vpow.pop %v8201
        %v8203 = vmul.f32 %v8179, 1.442695
        %v8204 = vpow.pop %v8203
        %v8205 = vmul.f32 %v8180, 1.442695
        %v8206 = vpow.pop %v8205
        %v8207 = vmul.f32 %v8181, 1.442695
        %v8208 = vpow.pop %v8207
        %v8209 = vmul.f32 %v8182, 1.442695
        %v8210 = vpow.pop %v8209
        %v8211 = vmul.f32 %v8183, 1.442695
        %v8212 = vpow.pop %v8211
        %v8213 = vmul.f32 %v8184, 1.442695
        %v8214 = vpow.pop %v8213
        %v8215 = vmul.f32 %v8185, 1.442695
        %v8216 = vpow.pop %v8215
        %v8217 = vmul.f32 %v8186, 1.442695
        %v8218 = vpow.pop %v8217
        %v8219 = vadd.f32 %v8188, 1.0
        %v8220 = vadd.f32 %v8190, 1.0
        %v8221 = vadd.f32 %v8192, 1.0
        %v8222 = vadd.f32 %v8194, 1.0
        %v8223 = vadd.f32 %v8196, 1.0
        %v8224 = vadd.f32 %v8198, 1.0
        %v8225 = vadd.f32 %v8200, 1.0
        %v8226 = vadd.f32 %v8202, 1.0
        %v8227 = vadd.f32 %v8204, 1.0
        %v8228 = vadd.f32 %v8206, 1.0
        %v8229 = vadd.f32 %v8208, 1.0
        %v8230 = vadd.f32 %v8210, 1.0
        %v8231 = vadd.f32 %v8212, 1.0
        %v8232 = vadd.f32 %v8214, 1.0
        %v8233 = vadd.f32 %v8216, 1.0
        %v8234 = vadd.f32 %v8218, 1.0
        %v8235 = vrcp.pop %v8219
        %v8236 = vmul.f32 1.0, %v8235
        %v8237 = vrcp.pop %v8220
        %v8238 = vmul.f32 1.0, %v8237
        %v8239 = vrcp.pop %v8221
        %v8240 = vmul.f32 1.0, %v8239
        %v8241 = vrcp.pop %v8222
        %v8242 = vmul.f32 1.0, %v8241
        %v8243 = vrcp.pop %v8223
        %v8244 = vmul.f32 1.0, %v8243
        %v8245 = vrcp.pop %v8224
        %v8246 = vmul.f32 1.0, %v8245
        %v8247 = vrcp.pop %v8225
        %v8248 = vmul.f32 1.0, %v8247
        %v8249 = vrcp.pop %v8226
        %v8250 = vmul.f32 1.0, %v8249
        %v8251 = vrcp.pop %v8227
        %v8252 = vmul.f32 1.0, %v8251
        %v8253 = vrcp.pop %v8228
        %v8254 = vmul.f32 1.0, %v8253
        %v8255 = vrcp.pop %v8229
        %v8256 = vmul.f32 1.0, %v8255
        %v8257 = vrcp.pop %v8230
        %v8258 = vmul.f32 1.0, %v8257
        %v8259 = vrcp.pop %v8231
        %v8260 = vmul.f32 1.0, %v8259
        %v8261 = vrcp.pop %v8232
        %v8262 = vmul.f32 1.0, %v8261
        %v8263 = vrcp.pop %v8233
        %v8264 = vmul.f32 1.0, %v8263
        %v8265 = vrcp.pop %v8234
        %v8266 = vmul.f32 1.0, %v8265
        %v8267 = vmul.f32 %v8188, %v8236
        %v8268 = vmul.f32 %v8190, %v8238
        %v8269 = vmul.f32 %v8192, %v8240
        %v8270 = vmul.f32 %v8194, %v8242
        %v8271 = vmul.f32 %v8196, %v8244
        %v8272 = vmul.f32 %v8198, %v8246
        %v8273 = vmul.f32 %v8200, %v8248
        %v8274 = vmul.f32 %v8202, %v8250
        %v8275 = vmul.f32 %v8204, %v8252
        %v8276 = vmul.f32 %v8206, %v8254
        %v8277 = vmul.f32 %v8208, %v8256
        %v8278 = vmul.f32 %v8210, %v8258
        %v8279 = vmul.f32 %v8212, %v8260
        %v8280 = vmul.f32 %v8214, %v8262
        %v8281 = vmul.f32 %v8216, %v8264
        %v8282 = vmul.f32 %v8218, %v8266
        %v8283 = vsel %vm8091, %v8236, 0.0
        %v8284 = vsel %vm8092, %v8238, 0.0
        %v8285 = vsel %vm8093, %v8240, 0.0
        %v8286 = vsel %vm8094, %v8242, 0.0
        %v8287 = vsel %vm8095, %v8244, 0.0
        %v8288 = vsel %vm8096, %v8246, 0.0
        %v8289 = vsel %vm8097, %v8248, 0.0
        %v8290 = vsel %vm8098, %v8250, 0.0
        %v8291 = vsel %vm8099, %v8252, 0.0
        %v8292 = vsel %vm8100, %v8254, 0.0
        %v8293 = vsel %vm8101, %v8256, 0.0
        %v8294 = vsel %vm8102, %v8258, 0.0
        %v8295 = vsel %vm8103, %v8260, 0.0
        %v8296 = vsel %vm8104, %v8262, 0.0
        %v8297 = vsel %vm8105, %v8264, 0.0
        %v8298 = vsel %vm8106, %v8266, 0.0
        %v8299 = vsel %vm8155, %v8267, 0.0
        %v8300 = vsel %vm8156, %v8268, 0.0
        %v8301 = vsel %vm8157, %v8269, 0.0
        %v8302 = vsel %vm8158, %v8270, 0.0
        %v8303 = vsel %vm8159, %v8271, 0.0
        %v8304 = vsel %vm8160, %v8272, 0.0
        %v8305 = vsel %vm8161, %v8273, 0.0
        %v8306 = vsel %vm8162, %v8274, 0.0
        %v8307 = vsel %vm8163, %v8275, 0.0
        %v8308 = vsel %vm8164, %v8276, 0.0
        %v8309 = vsel %vm8165, %v8277, 0.0
        %v8310 = vsel %vm8166, %v8278, 0.0
        %v8311 = vsel %vm8167, %v8279, 0.0
        %v8312 = vsel %vm8168, %v8280, 0.0
        %v8313 = vsel %vm8169, %v8281, 0.0
        %v8314 = vsel %vm8170, %v8282, 0.0
        %v8315 = vadd.f32 %v8283, %v8299
        %v8316 = vadd.f32 %v8284, %v8300
        %v8317 = vadd.f32 %v8285, %v8301
        %v8318 = vadd.f32 %v8286, %v8302
        %v8319 = vadd.f32 %v8287, %v8303
        %v8320 = vadd.f32 %v8288, %v8304
        %v8321 = vadd.f32 %v8289, %v8305
        %v8322 = vadd.f32 %v8290, %v8306
        %v8323 = vadd.f32 %v8291, %v8307
        %v8324 = vadd.f32 %v8292, %v8308
        %v8325 = vadd.f32 %v8293, %v8309
        %v8326 = vadd.f32 %v8294, %v8310
        %v8327 = vadd.f32 %v8295, %v8311
        %v8328 = vadd.f32 %v8296, %v8312
        %v8329 = vadd.f32 %v8297, %v8313
        %v8330 = vadd.f32 %v8298, %v8314
        %v8331 = vadd.f32 %v8315, %v8316
        %v8332 = vadd.f32 %v8331, %v8317
        %v8333 = vadd.f32 %v8332, %v8318
        %v8334 = vadd.f32 %v8333, %v8319
        %v8335 = vadd.f32 %v8334, %v8320
        %v8336 = vadd.f32 %v8335, %v8321
        %v8337 = vadd.f32 %v8336, %v8322
        %v8338 = vadd.f32 %v8337, %v8323
        %v8339 = vadd.f32 %v8338, %v8324
        %v8340 = vadd.f32 %v8339, %v8325
        %v8341 = vadd.f32 %v8340, %v8326
        %v8342 = vadd.f32 %v8341, %v8327
        %v8343 = vadd.f32 %v8342, %v8328
        %v8344 = vadd.f32 %v8343, %v8329
        %v8345 = vadd.f32 %v8344, %v8330
        %v8346 = vrot.slane %v8345, 4
        %v8347 = vadd.f32 %v8345, %v8346
        %v8348 = vrot.slane %v8347, 2
        %v8349 = vadd.f32 %v8347, %v8348
        %v8350 = vrot.slane %v8349, 1
        %v8351 = vadd.f32 %v8349, %v8350
        %v8352 = vadd.f32 %v5894, %v8351
        %vm8353 = vcmp.gt.f32.partialorder %v8315, 0.0
        %vm8354 = vcmp.gt.f32.partialorder %v8316, 0.0
        %vm8355 = vcmp.gt.f32.partialorder %v8317, 0.0
        %vm8356 = vcmp.gt.f32.partialorder %v8318, 0.0
        %vm8357 = vcmp.gt.f32.partialorder %v8319, 0.0
        %vm8358 = vcmp.gt.f32.partialorder %v8320, 0.0
        %vm8359 = vcmp.gt.f32.partialorder %v8321, 0.0
        %vm8360 = vcmp.gt.f32.partialorder %v8322, 0.0
        %vm8361 = vcmp.gt.f32.partialorder %v8323, 0.0
        %vm8362 = vcmp.gt.f32.partialorder %v8324, 0.0
        %vm8363 = vcmp.gt.f32.partialorder %v8325, 0.0
        %vm8364 = vcmp.gt.f32.partialorder %v8326, 0.0
        %vm8365 = vcmp.gt.f32.partialorder %v8327, 0.0
        %vm8366 = vcmp.gt.f32.partialorder %v8328, 0.0
        %vm8367 = vcmp.gt.f32.partialorder %v8329, 0.0
        %vm8368 = vcmp.gt.f32.partialorder %v8330, 0.0
        %v8369 = vsel %vm8353, 1, 0
        %v8370 = vsel %vm8354, 1, 0
        %v8371 = vsel %vm8355, 1, 0
        %v8372 = vsel %vm8356, 1, 0
        %v8373 = vsel %vm8357, 1, 0
        %v8374 = vsel %vm8358, 1, 0
        %v8375 = vsel %vm8359, 1, 0
        %v8376 = vsel %vm8360, 1, 0
        %v8377 = vsel %vm8361, 1, 0
        %v8378 = vsel %vm8362, 1, 0
        %v8379 = vsel %vm8363, 1, 0
        %v8380 = vsel %vm8364, 1, 0
        %v8381 = vsel %vm8365, 1, 0
        %v8382 = vsel %vm8366, 1, 0
        %v8383 = vsel %vm8367, 1, 0
        %v8384 = vsel %vm8368, 1, 0
        %v8385 = vcvt.s32.f32 %v8369
        %v8386 = vcvt.s32.f32 %v8370
        %v8387 = vcvt.s32.f32 %v8371
        %v8388 = vcvt.s32.f32 %v8372
        %v8389 = vcvt.s32.f32 %v8373
        %v8390 = vcvt.s32.f32 %v8374
        %v8391 = vcvt.s32.f32 %v8375
        %v8392 = vcvt.s32.f32 %v8376
        %v8393 = vcvt.s32.f32 %v8377
        %v8394 = vcvt.s32.f32 %v8378
        %v8395 = vcvt.s32.f32 %v8379
        %v8396 = vcvt.s32.f32 %v8380
        %v8397 = vcvt.s32.f32 %v8381
        %v8398 = vcvt.s32.f32 %v8382
        %v8399 = vcvt.s32.f32 %v8383
        %v8400 = vcvt.s32.f32 %v8384
        %v8401 = vadd.f32 %v8385, %v8386
        %v8402 = vadd.f32 %v8401, %v8387
        %v8403 = vadd.f32 %v8402, %v8388
        %v8404 = vadd.f32 %v8403, %v8389
        %v8405 = vadd.f32 %v8404, %v8390
        %v8406 = vadd.f32 %v8405, %v8391
        %v8407 = vadd.f32 %v8406, %v8392
        %v8408 = vadd.f32 %v8407, %v8393
        %v8409 = vadd.f32 %v8408, %v8394
        %v8410 = vadd.f32 %v8409, %v8395
        %v8411 = vadd.f32 %v8410, %v8396
        %v8412 = vadd.f32 %v8411, %v8397
        %v8413 = vadd.f32 %v8412, %v8398
        %v8414 = vadd.f32 %v8413, %v8399
        %v8415 = vadd.f32 %v8414, %v8400
        %v8416 = vrot.slane %v8415, 4
        %v8417 = vadd.f32 %v8415, %v8416
        %v8418 = vrot.slane %v8417, 2
        %v8419 = vadd.f32 %v8417, %v8418
        %v8420 = vrot.slane %v8419, 1
        %v8421 = vadd.f32 %v8419, %v8420
        %v8422 = vadd.f32 %v5964, %v8421
        %v8423 = vpack.c.bf16 %v7851, %v7850
        %v8424 = vpack.c.bf16 %v7853, %v7852
        %v8425 = vpack.c.bf16 %v7855, %v7854
        %v8426 = vpack.c.bf16 %v7857, %v7856
        %v8427 = vpack.c.bf16 %v7859, %v7858
        %v8428 = vpack.c.bf16 %v7861, %v7860
        %v8429 = vpack.c.bf16 %v7863, %v7862
        %v8430 = vpack.c.bf16 %v7865, %v7864
        %v8431 = vld [vmem:[%s3] sm:$0xff]
        %v8432 = vld [vmem:[%s3 + $0x8] sm:$0xf]
        %v8433 = vld [vmem:[%s3 + $0xc] sm:$0xff]
        %v8434 = vld [vmem:[%s3 + $0x14] sm:$0xf]
        %v8435 = vld [vmem:[%s3 + $0x18] sm:$0xff]
        %v8436 = vld [vmem:[%s3 + $0x20] sm:$0xf]
        %v8437 = vld [vmem:[%s3 + $0x24] sm:$0xff]
        %v8438 = vld [vmem:[%s3 + $0x2c] sm:$0xf]
        %v8439 = vld [vmem:[%s4] sm:$0x7]
        %v8441 = vlaneseq
        %v8442 = vshrl.u32 %v8441, 7
        %v8443 = vsub.s32 0, %v8442
        %v8444 = vrot.slane %v8439, %v8443
        %v8445 = vlaneseq
        %v8446 = vshrl.u32 %v8445, 7
        %v8447 = vsub.s32 1, %v8446
        %v8448 = vrot.slane %v8439, %v8447
        %v8449 = vlaneseq
        %v8450 = vshrl.u32 %v8449, 7
        %v8451 = vsub.s32 2, %v8450
        %v8452 = vrot.slane %v8439, %v8451
        %v8464 = vunpack.c.l.b16 %v8431
        %v8465 = vunpack.c.h.b16 %v8431
        %v8466 = vunpack.c.l.b16 %v8432
        %v8467 = vunpack.c.l.b16 %v8433
        %v8468 = vunpack.c.h.b16 %v8433
        %v8469 = vunpack.c.l.b16 %v8434
        %v8470 = vunpack.c.l.b16 %v8435
        %v8471 = vunpack.c.h.b16 %v8435
        %v8472 = vunpack.c.l.b16 %v8436
        %v8473 = vunpack.c.l.b16 %v8437
        %v8474 = vunpack.c.h.b16 %v8437
        %v8475 = vunpack.c.l.b16 %v8438
        %v8476 = vpack.c.b16 %v8467, %v8464
        %v8477 = vpack.c.b16 %v8468, %v8465
        %v8478 = vpack.c.b16 %v8469, %v8466
        %v8479 = vpack.c.b16 %v8473, %v8470
        %v8480 = vpack.c.b16 %v8474, %v8471
        %v8481 = vpack.c.b16 %v8475, %v8472
        %v8489 = vsel %vm491, %v8423, 0
        %v8492 = vsel %vm491, %v8424, 0
        %v8495 = vsel %vm491, %v8425, 0
        %v8498 = vsel %vm491, %v8426, 0
        %v8501 = vsel %vm491, %v8427, 0
        %v8504 = vsel %vm491, %v8428, 0
        %v8507 = vsel %vm491, %v8429, 0
        %v8510 = vsel %vm491, %v8430, 0
        %8512 = vmatprep.subr.bf16.mxu0 %v8477
        %8513 = vmatpush1.bf16.msra.mxu0 %v8476
        %8514 = vmatprep.subr.bf16.mxu0 %v8480
        %8515 = vmatpush1.bf16.msra.mxu0 %v8479
        %8516 = vmatprep.subr.bf16.mxu0 0
        %8517 = vmatpush1.bf16.msra.mxu0 0
        %8518 = vmatprep.subr.bf16.mxu0 0
        %8519 = vmatpush1.bf16.msra.mxu0 0
        %8520 = vmatprep.subr.bf16.mxu0 0
        %8521 = vmatpush1.bf16.msra.mxu0 0
        %8522 = vmatprep.subr.bf16.mxu0 0
        %8523 = vmatpush1.bf16.msra.mxu0 0
        %8524 = vmatprep.subr.bf16.mxu0 0
        %8525 = vmatpush1.bf16.msra.mxu0 0
        %8526 = vmatprep.subr.bf16.mxu0 0
        %8527 = vmatpush1.bf16.msra.mxu0 0
        %8528 = vmatprep.subr.bf16.mxu0 0
        %8529 = vmatpush1.bf16.msra.mxu0 0
        %8530 = vmatprep.subr.bf16.mxu0 0
        %8531 = vmatpush1.bf16.msra.mxu0 0
        %8532 = vmatprep.subr.bf16.mxu0 0
        %8533 = vmatpush1.bf16.msra.mxu0 0
        %8534 = vmatprep.subr.bf16.mxu0 0
        %8535 = vmatpush1.bf16.msra.mxu0 0
        %8536 = vmatprep.subr.bf16.mxu0 0
        %8537 = vmatpush1.bf16.msra.mxu0 0
        %8538 = vmatprep.subr.bf16.mxu0 0
        %8539 = vmatpush1.bf16.msra.mxu0 0
        %8540 = vmatprep.subr.bf16.mxu0 0
        %8541 = vmatpush1.bf16.msra.mxu0 0
        %8542 = vmatprep.subr.bf16.mxu0 0
        %8543 = vmatpush1.bf16.msra.mxu0 0
        %8544 = vmatprep.mubr.bf16.mxu0 0
        %8545 = vmatmul.mubr.bf16.gmra.mrb[0].mxu0 %v8489
        %v8546 = vpop.f32.mrb[0].mxu0
        %v8547 = vadd.f32 %v8444, %v8546
        %v8548 = vpop.f32.mrb[0].mxu0
        %v8549 = vadd.f32 %v8448, %v8548
        %v8550 = vpop.f32.mrb[0].mxu0
        %v8551 = vadd.f32 %v8444, %v8550
        %v8552 = vpop.f32.mrb[0].mxu0
        %v8553 = vadd.f32 %v8448, %v8552
        %8554 = vmatprep.mubr.bf16.mxu0 0
        %8555 = vmatmul.mubr.bf16.gmra.mrb[0].mxu0 %v8492
        %v8556 = vpop.f32.mrb[0].mxu0
        %v8557 = vadd.f32 %v8444, %v8556
        %v8558 = vpop.f32.mrb[0].mxu0
        %v8559 = vadd.f32 %v8448, %v8558
        %v8560 = vpop.f32.mrb[0].mxu0
        %v8561 = vadd.f32 %v8444, %v8560
        %v8562 = vpop.f32.mrb[0].mxu0
        %v8563 = vadd.f32 %v8448, %v8562
        %8564 = vmatprep.mubr.bf16.mxu0 0
        %8565 = vmatmul.mubr.bf16.gmra.mrb[0].mxu0 %v8495
        %v8566 = vpop.f32.mrb[0].mxu0
        %v8567 = vadd.f32 %v8444, %v8566
        %v8568 = vpop.f32.mrb[0].mxu0
        %v8569 = vadd.f32 %v8448, %v8568
        %v8570 = vpop.f32.mrb[0].mxu0
        %v8571 = vadd.f32 %v8444, %v8570
        %v8572 = vpop.f32.mrb[0].mxu0
        %v8573 = vadd.f32 %v8448, %v8572
        %8574 = vmatprep.mubr.bf16.mxu0 0
        %8575 = vmatmul.mubr.bf16.gmra.mrb[0].mxu0 %v8498
        %v8576 = vpop.f32.mrb[0].mxu0
        %v8577 = vadd.f32 %v8444, %v8576
        %v8578 = vpop.f32.mrb[0].mxu0
        %v8579 = vadd.f32 %v8448, %v8578
        %v8580 = vpop.f32.mrb[0].mxu0
        %v8581 = vadd.f32 %v8444, %v8580
        %v8582 = vpop.f32.mrb[0].mxu0
        %v8583 = vadd.f32 %v8448, %v8582
        %8584 = vmatprep.mubr.bf16.mxu0 0
        %8585 = vmatmul.mubr.bf16.gmra.mrb[0].mxu0 %v8501
        %v8586 = vpop.f32.mrb[0].mxu0
        %v8587 = vadd.f32 %v8444, %v8586
        %v8588 = vpop.f32.mrb[0].mxu0
        %v8589 = vadd.f32 %v8448, %v8588
        %v8590 = vpop.f32.mrb[0].mxu0
        %v8591 = vadd.f32 %v8444, %v8590
        %v8592 = vpop.f32.mrb[0].mxu0
        %v8593 = vadd.f32 %v8448, %v8592
        %8594 = vmatprep.mubr.bf16.mxu0 0
        %8595 = vmatmul.mubr.bf16.gmra.mrb[0].mxu0 %v8504
        %v8596 = vpop.f32.mrb[0].mxu0
        %v8597 = vadd.f32 %v8444, %v8596
        %v8598 = vpop.f32.mrb[0].mxu0
        %v8599 = vadd.f32 %v8448, %v8598
        %v8600 = vpop.f32.mrb[0].mxu0
        %v8601 = vadd.f32 %v8444, %v8600
        %v8602 = vpop.f32.mrb[0].mxu0
        %v8603 = vadd.f32 %v8448, %v8602
        %8604 = vmatprep.mubr.bf16.mxu0 0
        %8605 = vmatmul.mubr.bf16.gmra.mrb[0].mxu0 %v8507
        %v8606 = vpop.f32.mrb[0].mxu0
        %v8607 = vadd.f32 %v8444, %v8606
        %v8608 = vpop.f32.mrb[0].mxu0
        %v8609 = vadd.f32 %v8448, %v8608
        %v8610 = vpop.f32.mrb[0].mxu0
        %v8611 = vadd.f32 %v8444, %v8610
        %v8612 = vpop.f32.mrb[0].mxu0
        %v8613 = vadd.f32 %v8448, %v8612
        %8614 = vmatprep.mubr.bf16.mxu0 0
        %8615 = vmatmul.mubr.bf16.gmra.mrb[0].mxu0 %v8510
        %v8616 = vpop.f32.mrb[0].mxu0
        %v8617 = vadd.f32 %v8444, %v8616
        %v8618 = vpop.f32.mrb[0].mxu0
        %v8619 = vadd.f32 %v8448, %v8618
        %v8620 = vpop.f32.mrb[0].mxu0
        %v8621 = vadd.f32 %v8444, %v8620
        %v8622 = vpop.f32.mrb[0].mxu0
        %v8623 = vadd.f32 %v8448, %v8622
        %8624 = vdwg.mxu0
        %8625 = vmatprep.subr.bf16.mxu0 0
        %8626 = vmatpush1.bf16.msra.mxu0 %v8478
        %8627 = vmatprep.subr.bf16.mxu0 0
        %8628 = vmatpush1.bf16.msra.mxu0 %v8481
        %8629 = vmatprep.subr.bf16.mxu0 0
        %8630 = vmatpush1.bf16.msra.mxu0 0
        %8631 = vmatprep.subr.bf16.mxu0 0
        %8632 = vmatpush1.bf16.msra.mxu0 0
        %8633 = vmatprep.subr.bf16.mxu0 0
        %8634 = vmatpush1.bf16.msra.mxu0 0
        %8635 = vmatprep.subr.bf16.mxu0 0
        %8636 = vmatpush1.bf16.msra.mxu0 0
        %8637 = vmatprep.subr.bf16.mxu0 0
        %8638 = vmatpush1.bf16.msra.mxu0 0
        %8639 = vmatprep.subr.bf16.mxu0 0
        %8640 = vmatpush1.bf16.msra.mxu0 0
        %8641 = vmatprep.subr.bf16.mxu0 0
        %8642 = vmatpush1.bf16.msra.mxu0 0
        %8643 = vmatprep.subr.bf16.mxu0 0
        %8644 = vmatpush1.bf16.msra.mxu0 0
        %8645 = vmatprep.subr.bf16.mxu0 0
        %8646 = vmatpush1.bf16.msra.mxu0 0
        %8647 = vmatprep.subr.bf16.mxu0 0
        %8648 = vmatpush1.bf16.msra.mxu0 0
        %8649 = vmatprep.subr.bf16.mxu0 0
        %8650 = vmatpush1.bf16.msra.mxu0 0
        %8651 = vmatprep.subr.bf16.mxu0 0
        %8652 = vmatpush1.bf16.msra.mxu0 0
        %8653 = vmatprep.subr.bf16.mxu0 0
        %8654 = vmatpush1.bf16.msra.mxu0 0
        %8655 = vmatprep.subr.bf16.mxu0 0
        %8656 = vmatpush1.bf16.msra.mxu0 0
        %8657 = vmatprep.mubr.bf16.mxu0 0
        %8658 = vmatmul.mubr.bf16.gmra.mrb[0].mxu0 %v8489
        %v8659 = vpop.f32.mrb[0].mxu0
        %v8660 = vadd.f32 %v8452, %v8659
        %v8661 = vpop.f32.mrb[0].mxu0
        %v8662 = vpop.f32.mrb[0].mxu0
        %v8663 = vadd.f32 %v8452, %v8662
        %v8664 = vpop.f32.mrb[0].mxu0
        %8665 = vmatprep.mubr.bf16.mxu0 0
        %8666 = vmatmul.mubr.bf16.gmra.mrb[0].mxu0 %v8492
        %v8667 = vpop.f32.mrb[0].mxu0
        %v8668 = vadd.f32 %v8452, %v8667
        %v8669 = vpop.f32.mrb[0].mxu0
        %v8670 = vpop.f32.mrb[0].mxu0
        %v8671 = vadd.f32 %v8452, %v8670
        %v8672 = vpop.f32.mrb[0].mxu0
        %8673 = vmatprep.mubr.bf16.mxu0 0
        %8674 = vmatmul.mubr.bf16.gmra.mrb[0].mxu0 %v8495
        %v8675 = vpop.f32.mrb[0].mxu0
        %v8676 = vadd.f32 %v8452, %v8675
        %v8677 = vpop.f32.mrb[0].mxu0
        %v8678 = vpop.f32.mrb[0].mxu0
        %v8679 = vadd.f32 %v8452, %v8678
        %v8680 = vpop.f32.mrb[0].mxu0
        %8681 = vmatprep.mubr.bf16.mxu0 0
        %8682 = vmatmul.mubr.bf16.gmra.mrb[0].mxu0 %v8498
        %v8683 = vpop.f32.mrb[0].mxu0
        %v8684 = vadd.f32 %v8452, %v8683
        %v8685 = vpop.f32.mrb[0].mxu0
        %v8686 = vpop.f32.mrb[0].mxu0
        %v8687 = vadd.f32 %v8452, %v8686
        %v8688 = vpop.f32.mrb[0].mxu0
        %8689 = vmatprep.mubr.bf16.mxu0 0
        %8690 = vmatmul.mubr.bf16.gmra.mrb[0].mxu0 %v8501
        %v8691 = vpop.f32.mrb[0].mxu0
        %v8692 = vadd.f32 %v8452, %v8691
        %v8693 = vpop.f32.mrb[0].mxu0
        %v8694 = vpop.f32.mrb[0].mxu0
        %v8695 = vadd.f32 %v8452, %v8694
        %v8696 = vpop.f32.mrb[0].mxu0
        %8697 = vmatprep.mubr.bf16.mxu0 0
        %8698 = vmatmul.mubr.bf16.gmra.mrb[0].mxu0 %v8504
        %v8699 = vpop.f32.mrb[0].mxu0
        %v8700 = vadd.f32 %v8452, %v8699
        %v8701 = vpop.f32.mrb[0].mxu0
        %v8702 = vpop.f32.mrb[0].mxu0
        %v8703 = vadd.f32 %v8452, %v8702
        %v8704 = vpop.f32.mrb[0].mxu0
        %8705 = vmatprep.mubr.bf16.mxu0 0
        %8706 = vmatmul.mubr.bf16.gmra.mrb[0].mxu0 %v8507
        %v8707 = vpop.f32.mrb[0].mxu0
        %v8708 = vadd.f32 %v8452, %v8707
        %v8709 = vpop.f32.mrb[0].mxu0
        %v8710 = vpop.f32.mrb[0].mxu0
        %v8711 = vadd.f32 %v8452, %v8710
        %v8712 = vpop.f32.mrb[0].mxu0
        %8713 = vmatprep.mubr.bf16.mxu0 0
        %8714 = vmatmul.mubr.bf16.gmra.mrb[0].mxu0 %v8510
        %v8715 = vpop.f32.mrb[0].mxu0
        %v8716 = vadd.f32 %v8452, %v8715
        %v8717 = vpop.f32.mrb[0].mxu0
        %v8718 = vpop.f32.mrb[0].mxu0
        %v8719 = vadd.f32 %v8452, %v8718
        %v8720 = vpop.f32.mrb[0].mxu0
        %8721 = vdwg.mxu0
        %v8722 = vmul.f32 %v8547, 0.5
        %v8723 = vmul.f32 %v8549, 0.5
        %v8724 = vmul.f32 %v8660, 0.5
        %v8725 = vmul.f32 %v8551, 0.5
        %v8726 = vmul.f32 %v8553, 0.5
        %v8727 = vmul.f32 %v8663, 0.5
        %v8728 = vmul.f32 %v8557, 0.5
        %v8729 = vmul.f32 %v8559, 0.5
        %v8730 = vmul.f32 %v8668, 0.5
        %v8731 = vmul.f32 %v8561, 0.5
        %v8732 = vmul.f32 %v8563, 0.5
        %v8733 = vmul.f32 %v8671, 0.5
        %v8734 = vmul.f32 %v8567, 0.5
        %v8735 = vmul.f32 %v8569, 0.5
        %v8736 = vmul.f32 %v8676, 0.5
        %v8737 = vmul.f32 %v8571, 0.5
        %v8738 = vmul.f32 %v8573, 0.5
        %v8739 = vmul.f32 %v8679, 0.5
        %v8740 = vmul.f32 %v8577, 0.5
        %v8741 = vmul.f32 %v8579, 0.5
        %v8742 = vmul.f32 %v8684, 0.5
        %v8743 = vmul.f32 %v8581, 0.5
        %v8744 = vmul.f32 %v8583, 0.5
        %v8745 = vmul.f32 %v8687, 0.5
        %v8746 = vmul.f32 %v8587, 0.5
        %v8747 = vmul.f32 %v8589, 0.5
        %v8748 = vmul.f32 %v8692, 0.5
        %v8749 = vmul.f32 %v8591, 0.5
        %v8750 = vmul.f32 %v8593, 0.5
        %v8751 = vmul.f32 %v8695, 0.5
        %v8752 = vmul.f32 %v8597, 0.5
        %v8753 = vmul.f32 %v8599, 0.5
        %v8754 = vmul.f32 %v8700, 0.5
        %v8755 = vmul.f32 %v8601, 0.5
        %v8756 = vmul.f32 %v8603, 0.5
        %v8757 = vmul.f32 %v8703, 0.5
        %v8758 = vmul.f32 %v8607, 0.5
        %v8759 = vmul.f32 %v8609, 0.5
        %v8760 = vmul.f32 %v8708, 0.5
        %v8761 = vmul.f32 %v8611, 0.5
        %v8762 = vmul.f32 %v8613, 0.5
        %v8763 = vmul.f32 %v8711, 0.5
        %v8764 = vmul.f32 %v8617, 0.5
        %v8765 = vmul.f32 %v8619, 0.5
        %v8766 = vmul.f32 %v8716, 0.5
        %v8767 = vmul.f32 %v8621, 0.5
        %v8768 = vmul.f32 %v8623, 0.5
        %v8769 = vmul.f32 %v8719, 0.5
        %v8770 = vmul.f32 %v8547, 0.044715
        %v8771 = vmul.f32 %v8549, 0.044715
        %v8772 = vmul.f32 %v8660, 0.044715
        %v8773 = vmul.f32 %v8551, 0.044715
        %v8774 = vmul.f32 %v8553, 0.044715
        %v8775 = vmul.f32 %v8663, 0.044715
        %v8776 = vmul.f32 %v8557, 0.044715
        %v8777 = vmul.f32 %v8559, 0.044715
        %v8778 = vmul.f32 %v8668, 0.044715
        %v8779 = vmul.f32 %v8561, 0.044715
        %v8780 = vmul.f32 %v8563, 0.044715
        %v8781 = vmul.f32 %v8671, 0.044715
        %v8782 = vmul.f32 %v8567, 0.044715
        %v8783 = vmul.f32 %v8569, 0.044715
        %v8784 = vmul.f32 %v8676, 0.044715
        %v8785 = vmul.f32 %v8571, 0.044715
        %v8786 = vmul.f32 %v8573, 0.044715
        %v8787 = vmul.f32 %v8679, 0.044715
        %v8788 = vmul.f32 %v8577, 0.044715
        %v8789 = vmul.f32 %v8579, 0.044715
        %v8790 = vmul.f32 %v8684, 0.044715
        %v8791 = vmul.f32 %v8581, 0.044715
        %v8792 = vmul.f32 %v8583, 0.044715
        %v8793 = vmul.f32 %v8687, 0.044715
        %v8794 = vmul.f32 %v8587, 0.044715
        %v8795 = vmul.f32 %v8589, 0.044715
        %v8796 = vmul.f32 %v8692, 0.044715
        %v8797 = vmul.f32 %v8591, 0.044715
        %v8798 = vmul.f32 %v8593, 0.044715
        %v8799 = vmul.f32 %v8695, 0.044715
        %v8800 = vmul.f32 %v8597, 0.044715
        %v8801 = vmul.f32 %v8599, 0.044715
        %v8802 = vmul.f32 %v8700, 0.044715
        %v8803 = vmul.f32 %v8601, 0.044715
        %v8804 = vmul.f32 %v8603, 0.044715
        %v8805 = vmul.f32 %v8703, 0.044715
        %v8806 = vmul.f32 %v8607, 0.044715
        %v8807 = vmul.f32 %v8609, 0.044715
        %v8808 = vmul.f32 %v8708, 0.044715
        %v8809 = vmul.f32 %v8611, 0.044715
        %v8810 = vmul.f32 %v8613, 0.044715
        %v8811 = vmul.f32 %v8711, 0.044715
        %v8812 = vmul.f32 %v8617, 0.044715
        %v8813 = vmul.f32 %v8619, 0.044715
        %v8814 = vmul.f32 %v8716, 0.044715
        %v8815 = vmul.f32 %v8621, 0.044715
        %v8816 = vmul.f32 %v8623, 0.044715
        %v8817 = vmul.f32 %v8719, 0.044715
        %v8818 = vmul.f32 %v8770, %v8547
        %v8819 = vmul.f32 %v8771, %v8549
        %v8820 = vmul.f32 %v8772, %v8660
        %v8821 = vmul.f32 %v8773, %v8551
        %v8822 = vmul.f32 %v8774, %v8553
        %v8823 = vmul.f32 %v8775, %v8663
        %v8824 = vmul.f32 %v8776, %v8557
        %v8825 = vmul.f32 %v8777, %v8559
        %v8826 = vmul.f32 %v8778, %v8668
        %v8827 = vmul.f32 %v8779, %v8561
        %v8828 = vmul.f32 %v8780, %v8563
        %v8829 = vmul.f32 %v8781, %v8671
        %v8830 = vmul.f32 %v8782, %v8567
        %v8831 = vmul.f32 %v8783, %v8569
        %v8832 = vmul.f32 %v8784, %v8676
        %v8833 = vmul.f32 %v8785, %v8571
        %v8834 = vmul.f32 %v8786, %v8573
        %v8835 = vmul.f32 %v8787, %v8679
        %v8836 = vmul.f32 %v8788, %v8577
        %v8837 = vmul.f32 %v8789, %v8579
        %v8838 = vmul.f32 %v8790, %v8684
        %v8839 = vmul.f32 %v8791, %v8581
        %v8840 = vmul.f32 %v8792, %v8583
        %v8841 = vmul.f32 %v8793, %v8687
        %v8842 = vmul.f32 %v8794, %v8587
        %v8843 = vmul.f32 %v8795, %v8589
        %v8844 = vmul.f32 %v8796, %v8692
        %v8845 = vmul.f32 %v8797, %v8591
        %v8846 = vmul.f32 %v8798, %v8593
        %v8847 = vmul.f32 %v8799, %v8695
        %v8848 = vmul.f32 %v8800, %v8597
        %v8849 = vmul.f32 %v8801, %v8599
        %v8850 = vmul.f32 %v8802, %v8700
        %v8851 = vmul.f32 %v8803, %v8601
        %v8852 = vmul.f32 %v8804, %v8603
        %v8853 = vmul.f32 %v8805, %v8703
        %v8854 = vmul.f32 %v8806, %v8607
        %v8855 = vmul.f32 %v8807, %v8609
        %v8856 = vmul.f32 %v8808, %v8708
        %v8857 = vmul.f32 %v8809, %v8611
        %v8858 = vmul.f32 %v8810, %v8613
        %v8859 = vmul.f32 %v8811, %v8711
        %v8860 = vmul.f32 %v8812, %v8617
        %v8861 = vmul.f32 %v8813, %v8619
        %v8862 = vmul.f32 %v8814, %v8716
        %v8863 = vmul.f32 %v8815, %v8621
        %v8864 = vmul.f32 %v8816, %v8623
        %v8865 = vmul.f32 %v8817, %v8719
        %v8866 = vmul.f32 %v8818, %v8547
        %v8867 = vmul.f32 %v8819, %v8549
        %v8868 = vmul.f32 %v8820, %v8660
        %v8869 = vmul.f32 %v8821, %v8551
        %v8870 = vmul.f32 %v8822, %v8553
        %v8871 = vmul.f32 %v8823, %v8663
        %v8872 = vmul.f32 %v8824, %v8557
        %v8873 = vmul.f32 %v8825, %v8559
        %v8874 = vmul.f32 %v8826, %v8668
        %v8875 = vmul.f32 %v8827, %v8561
        %v8876 = vmul.f32 %v8828, %v8563
        %v8877 = vmul.f32 %v8829, %v8671
        %v8878 = vmul.f32 %v8830, %v8567
        %v8879 = vmul.f32 %v8831, %v8569
        %v8880 = vmul.f32 %v8832, %v8676
        %v8881 = vmul.f32 %v8833, %v8571
        %v8882 = vmul.f32 %v8834, %v8573
        %v8883 = vmul.f32 %v8835, %v8679
        %v8884 = vmul.f32 %v8836, %v8577
        %v8885 = vmul.f32 %v8837, %v8579
        %v8886 = vmul.f32 %v8838, %v8684
        %v8887 = vmul.f32 %v8839, %v8581
        %v8888 = vmul.f32 %v8840, %v8583
        %v8889 = vmul.f32 %v8841, %v8687
        %v8890 = vmul.f32 %v8842, %v8587
        %v8891 = vmul.f32 %v8843, %v8589
        %v8892 = vmul.f32 %v8844, %v8692
        %v8893 = vmul.f32 %v8845, %v8591
        %v8894 = vmul.f32 %v8846, %v8593
        %v8895 = vmul.f32 %v8847, %v8695
        %v8896 = vmul.f32 %v8848, %v8597
        %v8897 = vmul.f32 %v8849, %v8599
        %v8898 = vmul.f32 %v8850, %v8700
        %v8899 = vmul.f32 %v8851, %v8601
        %v8900 = vmul.f32 %v8852, %v8603
        %v8901 = vmul.f32 %v8853, %v8703
        %v8902 = vmul.f32 %v8854, %v8607
        %v8903 = vmul.f32 %v8855, %v8609
        %v8904 = vmul.f32 %v8856, %v8708
        %v8905 = vmul.f32 %v8857, %v8611
        %v8906 = vmul.f32 %v8858, %v8613
        %v8907 = vmul.f32 %v8859, %v8711
        %v8908 = vmul.f32 %v8860, %v8617
        %v8909 = vmul.f32 %v8861, %v8619
        %v8910 = vmul.f32 %v8862, %v8716
        %v8911 = vmul.f32 %v8863, %v8621
        %v8912 = vmul.f32 %v8864, %v8623
        %v8913 = vmul.f32 %v8865, %v8719
        %v8914 = vadd.f32 %v8547, %v8866
        %v8915 = vadd.f32 %v8549, %v8867
        %v8916 = vadd.f32 %v8660, %v8868
        %v8917 = vadd.f32 %v8551, %v8869
        %v8918 = vadd.f32 %v8553, %v8870
        %v8919 = vadd.f32 %v8663, %v8871
        %v8920 = vadd.f32 %v8557, %v8872
        %v8921 = vadd.f32 %v8559, %v8873
        %v8922 = vadd.f32 %v8668, %v8874
        %v8923 = vadd.f32 %v8561, %v8875
        %v8924 = vadd.f32 %v8563, %v8876
        %v8925 = vadd.f32 %v8671, %v8877
        %v8926 = vadd.f32 %v8567, %v8878
        %v8927 = vadd.f32 %v8569, %v8879
        %v8928 = vadd.f32 %v8676, %v8880
        %v8929 = vadd.f32 %v8571, %v8881
        %v8930 = vadd.f32 %v8573, %v8882
        %v8931 = vadd.f32 %v8679, %v8883
        %v8932 = vadd.f32 %v8577, %v8884
        %v8933 = vadd.f32 %v8579, %v8885
        %v8934 = vadd.f32 %v8684, %v8886
        %v8935 = vadd.f32 %v8581, %v8887
        %v8936 = vadd.f32 %v8583, %v8888
        %v8937 = vadd.f32 %v8687, %v8889
        %v8938 = vadd.f32 %v8587, %v8890
        %v8939 = vadd.f32 %v8589, %v8891
        %v8940 = vadd.f32 %v8692, %v8892
        %v8941 = vadd.f32 %v8591, %v8893
        %v8942 = vadd.f32 %v8593, %v8894
        %v8943 = vadd.f32 %v8695, %v8895
        %v8944 = vadd.f32 %v8597, %v8896
        %v8945 = vadd.f32 %v8599, %v8897
        %v8946 = vadd.f32 %v8700, %v8898
        %v8947 = vadd.f32 %v8601, %v8899
        %v8948 = vadd.f32 %v8603, %v8900
        %v8949 = vadd.f32 %v8703, %v8901
        %v8950 = vadd.f32 %v8607, %v8902
        %v8951 = vadd.f32 %v8609, %v8903
        %v8952 = vadd.f32 %v8708, %v8904
        %v8953 = vadd.f32 %v8611, %v8905
        %v8954 = vadd.f32 %v8613, %v8906
        %v8955 = vadd.f32 %v8711, %v8907
        %v8956 = vadd.f32 %v8617, %v8908
        %v8957 = vadd.f32 %v8619, %v8909
        %v8958 = vadd.f32 %v8716, %v8910
        %v8959 = vadd.f32 %v8621, %v8911
        %v8960 = vadd.f32 %v8623, %v8912
        %v8961 = vadd.f32 %v8719, %v8913
        %v8962 = vmul.f32 %v8914, 0.7978846
        %v8963 = vmul.f32 %v8915, 0.7978846
        %v8964 = vmul.f32 %v8916, 0.7978846
        %v8965 = vmul.f32 %v8917, 0.7978846
        %v8966 = vmul.f32 %v8918, 0.7978846
        %v8967 = vmul.f32 %v8919, 0.7978846
        %v8968 = vmul.f32 %v8920, 0.7978846
        %v8969 = vmul.f32 %v8921, 0.7978846
        %v8970 = vmul.f32 %v8922, 0.7978846
        %v8971 = vmul.f32 %v8923, 0.7978846
        %v8972 = vmul.f32 %v8924, 0.7978846
        %v8973 = vmul.f32 %v8925, 0.7978846
        %v8974 = vmul.f32 %v8926, 0.7978846
        %v8975 = vmul.f32 %v8927, 0.7978846
        %v8976 = vmul.f32 %v8928, 0.7978846
        %v8977 = vmul.f32 %v8929, 0.7978846
        %v8978 = vmul.f32 %v8930, 0.7978846
        %v8979 = vmul.f32 %v8931, 0.7978846
        %v8980 = vmul.f32 %v8932, 0.7978846
        %v8981 = vmul.f32 %v8933, 0.7978846
        %v8982 = vmul.f32 %v8934, 0.7978846
        %v8983 = vmul.f32 %v8935, 0.7978846
        %v8984 = vmul.f32 %v8936, 0.7978846
        %v8985 = vmul.f32 %v8937, 0.7978846
        %v8986 = vmul.f32 %v8938, 0.7978846
        %v8987 = vmul.f32 %v8939, 0.7978846
        %v8988 = vmul.f32 %v8940, 0.7978846
        %v8989 = vmul.f32 %v8941, 0.7978846
        %v8990 = vmul.f32 %v8942, 0.7978846
        %v8991 = vmul.f32 %v8943, 0.7978846
        %v8992 = vmul.f32 %v8944, 0.7978846
        %v8993 = vmul.f32 %v8945, 0.7978846
        %v8994 = vmul.f32 %v8946, 0.7978846
        %v8995 = vmul.f32 %v8947, 0.7978846
        %v8996 = vmul.f32 %v8948, 0.7978846
        %v8997 = vmul.f32 %v8949, 0.7978846
        %v8998 = vmul.f32 %v8950, 0.7978846
        %v8999 = vmul.f32 %v8951, 0.7978846
        %v9000 = vmul.f32 %v8952, 0.7978846
        %v9001 = vmul.f32 %v8953, 0.7978846
        %v9002 = vmul.f32 %v8954, 0.7978846
        %v9003 = vmul.f32 %v8955, 0.7978846
        %v9004 = vmul.f32 %v8956, 0.7978846
        %v9005 = vmul.f32 %v8957, 0.7978846
        %v9006 = vmul.f32 %v8958, 0.7978846
        %v9007 = vmul.f32 %v8959, 0.7978846
        %v9008 = vmul.f32 %v8960, 0.7978846
        %v9009 = vmul.f32 %v8961, 0.7978846
        %v9010 = vtanh.pop %v8962
        %v9011 = vtanh.pop %v8963
        %v9012 = vtanh.pop %v8964
        %v9013 = vtanh.pop %v8965
        %v9014 = vtanh.pop %v8966
        %v9015 = vtanh.pop %v8967
        %v9016 = vtanh.pop %v8968
        %v9017 = vtanh.pop %v8969
        %v9018 = vtanh.pop %v8970
        %v9019 = vtanh.pop %v8971
        %v9020 = vtanh.pop %v8972
        %v9021 = vtanh.pop %v8973
        %v9022 = vtanh.pop %v8974
        %v9023 = vtanh.pop %v8975
        %v9024 = vtanh.pop %v8976
        %v9025 = vtanh.pop %v8977
        %v9026 = vtanh.pop %v8978
        %v9027 = vtanh.pop %v8979
        %v9028 = vtanh.pop %v8980
        %v9029 = vtanh.pop %v8981
        %v9030 = vtanh.pop %v8982
        %v9031 = vtanh.pop %v8983
        %v9032 = vtanh.pop %v8984
        %v9033 = vtanh.pop %v8985
        %v9034 = vtanh.pop %v8986
        %v9035 = vtanh.pop %v8987
        %v9036 = vtanh.pop %v8988
        %v9037 = vtanh.pop %v8989
        %v9038 = vtanh.pop %v8990
        %v9039 = vtanh.pop %v8991
        %v9040 = vtanh.pop %v8992
        %v9041 = vtanh.pop %v8993
        %v9042 = vtanh.pop %v8994
        %v9043 = vtanh.pop %v8995
        %v9044 = vtanh.pop %v8996
        %v9045 = vtanh.pop %v8997
        %v9046 = vtanh.pop %v8998
        %v9047 = vtanh.pop %v8999
        %v9048 = vtanh.pop %v9000
        %v9049 = vtanh.pop %v9001
        %v9050 = vtanh.pop %v9002
        %v9051 = vtanh.pop %v9003
        %v9052 = vtanh.pop %v9004
        %v9053 = vtanh.pop %v9005
        %v9054 = vtanh.pop %v9006
        %v9055 = vtanh.pop %v9007
        %v9056 = vtanh.pop %v9008
        %v9057 = vtanh.pop %v9009
        %v9058 = vadd.f32 %v9010, 1.0
        %v9059 = vadd.f32 %v9011, 1.0
        %v9060 = vadd.f32 %v9012, 1.0
        %v9061 = vadd.f32 %v9013, 1.0
        %v9062 = vadd.f32 %v9014, 1.0
        %v9063 = vadd.f32 %v9015, 1.0
        %v9064 = vadd.f32 %v9016, 1.0
        %v9065 = vadd.f32 %v9017, 1.0
        %v9066 = vadd.f32 %v9018, 1.0
        %v9067 = vadd.f32 %v9019, 1.0
        %v9068 = vadd.f32 %v9020, 1.0
        %v9069 = vadd.f32 %v9021, 1.0
        %v9070 = vadd.f32 %v9022, 1.0
        %v9071 = vadd.f32 %v9023, 1.0
        %v9072 = vadd.f32 %v9024, 1.0
        %v9073 = vadd.f32 %v9025, 1.0
        %v9074 = vadd.f32 %v9026, 1.0
        %v9075 = vadd.f32 %v9027, 1.0
        %v9076 = vadd.f32 %v9028, 1.0
        %v9077 = vadd.f32 %v9029, 1.0
        %v9078 = vadd.f32 %v9030, 1.0
        %v9079 = vadd.f32 %v9031, 1.0
        %v9080 = vadd.f32 %v9032, 1.0
        %v9081 = vadd.f32 %v9033, 1.0
        %v9082 = vadd.f32 %v9034, 1.0
        %v9083 = vadd.f32 %v9035, 1.0
        %v9084 = vadd.f32 %v9036, 1.0
        %v9085 = vadd.f32 %v9037, 1.0
        %v9086 = vadd.f32 %v9038, 1.0
        %v9087 = vadd.f32 %v9039, 1.0
        %v9088 = vadd.f32 %v9040, 1.0
        %v9089 = vadd.f32 %v9041, 1.0
        %v9090 = vadd.f32 %v9042, 1.0
        %v9091 = vadd.f32 %v9043, 1.0
        %v9092 = vadd.f32 %v9044, 1.0
        %v9093 = vadd.f32 %v9045, 1.0
        %v9094 = vadd.f32 %v9046, 1.0
        %v9095 = vadd.f32 %v9047, 1.0
        %v9096 = vadd.f32 %v9048, 1.0
        %v9097 = vadd.f32 %v9049, 1.0
        %v9098 = vadd.f32 %v9050, 1.0
        %v9099 = vadd.f32 %v9051, 1.0
        %v9100 = vadd.f32 %v9052, 1.0
        %v9101 = vadd.f32 %v9053, 1.0
        %v9102 = vadd.f32 %v9054, 1.0
        %v9103 = vadd.f32 %v9055, 1.0
        %v9104 = vadd.f32 %v9056, 1.0
        %v9105 = vadd.f32 %v9057, 1.0
        %v9106 = vmul.f32 %v8722, %v9058
        %v9107 = vmul.f32 %v8723, %v9059
        %v9108 = vmul.f32 %v8724, %v9060
        %v9109 = vmul.f32 %v8725, %v9061
        %v9110 = vmul.f32 %v8726, %v9062
        %v9111 = vmul.f32 %v8727, %v9063
        %v9112 = vmul.f32 %v8728, %v9064
        %v9113 = vmul.f32 %v8729, %v9065
        %v9114 = vmul.f32 %v8730, %v9066
        %v9115 = vmul.f32 %v8731, %v9067
        %v9116 = vmul.f32 %v8732, %v9068
        %v9117 = vmul.f32 %v8733, %v9069
        %v9118 = vmul.f32 %v8734, %v9070
        %v9119 = vmul.f32 %v8735, %v9071
        %v9120 = vmul.f32 %v8736, %v9072
        %v9121 = vmul.f32 %v8737, %v9073
        %v9122 = vmul.f32 %v8738, %v9074
        %v9123 = vmul.f32 %v8739, %v9075
        %v9124 = vmul.f32 %v8740, %v9076
        %v9125 = vmul.f32 %v8741, %v9077
        %v9126 = vmul.f32 %v8742, %v9078
        %v9127 = vmul.f32 %v8743, %v9079
        %v9128 = vmul.f32 %v8744, %v9080
        %v9129 = vmul.f32 %v8745, %v9081
        %v9130 = vmul.f32 %v8746, %v9082
        %v9131 = vmul.f32 %v8747, %v9083
        %v9132 = vmul.f32 %v8748, %v9084
        %v9133 = vmul.f32 %v8749, %v9085
        %v9134 = vmul.f32 %v8750, %v9086
        %v9135 = vmul.f32 %v8751, %v9087
        %v9136 = vmul.f32 %v8752, %v9088
        %v9137 = vmul.f32 %v8753, %v9089
        %v9138 = vmul.f32 %v8754, %v9090
        %v9139 = vmul.f32 %v8755, %v9091
        %v9140 = vmul.f32 %v8756, %v9092
        %v9141 = vmul.f32 %v8757, %v9093
        %v9142 = vmul.f32 %v8758, %v9094
        %v9143 = vmul.f32 %v8759, %v9095
        %v9144 = vmul.f32 %v8760, %v9096
        %v9145 = vmul.f32 %v8761, %v9097
        %v9146 = vmul.f32 %v8762, %v9098
        %v9147 = vmul.f32 %v8763, %v9099
        %v9148 = vmul.f32 %v8764, %v9100
        %v9149 = vmul.f32 %v8765, %v9101
        %v9150 = vmul.f32 %v8766, %v9102
        %v9151 = vmul.f32 %v8767, %v9103
        %v9152 = vmul.f32 %v8768, %v9104
        %v9153 = vmul.f32 %v8769, %v9105
        %v9154 = vpack.c.bf16 %v9109, %v9106
        %v9155 = vpack.c.bf16 %v9110, %v9107
        %v9156 = vpack.c.bf16 %v9111, %v9108
        %v9157 = vpack.c.bf16 %v9115, %v9112
        %v9158 = vpack.c.bf16 %v9116, %v9113
        %v9159 = vpack.c.bf16 %v9117, %v9114
        %v9160 = vpack.c.bf16 %v9121, %v9118
        %v9161 = vpack.c.bf16 %v9122, %v9119
        %v9162 = vpack.c.bf16 %v9123, %v9120
        %v9163 = vpack.c.bf16 %v9127, %v9124
        %v9164 = vpack.c.bf16 %v9128, %v9125
        %v9165 = vpack.c.bf16 %v9129, %v9126
        %v9166 = vpack.c.bf16 %v9133, %v9130
        %v9167 = vpack.c.bf16 %v9134, %v9131
        %v9168 = vpack.c.bf16 %v9135, %v9132
        %v9169 = vpack.c.bf16 %v9139, %v9136
        %v9170 = vpack.c.bf16 %v9140, %v9137
        %v9171 = vpack.c.bf16 %v9141, %v9138
        %v9172 = vpack.c.bf16 %v9145, %v9142
        %v9173 = vpack.c.bf16 %v9146, %v9143
        %v9174 = vpack.c.bf16 %v9147, %v9144
        %v9175 = vpack.c.bf16 %v9151, %v9148
        %v9176 = vpack.c.bf16 %v9152, %v9149
        %v9177 = vpack.c.bf16 %v9153, %v9150
        %v9178 = vld [vmem:[%s5] sm:$0xff]
        %v9179 = vld [vmem:[%s5 + $0x8] sm:$0xff]
        %v9180 = vld [vmem:[%s5 + $0x10] sm:$0xff]
        %v9181 = vld [vmem:[%s5 + $0x18] sm:$0xff]
        %v9182 = vld [vmem:[%s5 + $0x20] sm:$0xff]
        %v9183 = vld [vmem:[%s5 + $0x28] sm:$0xff]
        %v9184 = vld [vmem:[%s5 + $0x30] sm:$0xff]
        %v9185 = vld [vmem:[%s5 + $0x38] sm:$0xff]
        %v9186 = vld [vmem:[%s5 + $0x40] sm:$0xff]
        %v9187 = vld [vmem:[%s5 + $0x48] sm:$0xff]
        %v9188 = vld [vmem:[%s5 + $0x50] sm:$0xff]
        %v9189 = vld [vmem:[%s5 + $0x58] sm:$0xff]
        %v9190 = vld [vmem:[%s5 + $0x60] sm:$0xff]
        %v9191 = vld [vmem:[%s5 + $0x68] sm:$0xff]
        %v9192 = vld [vmem:[%s5 + $0x70] sm:$0xff]
        %v9193 = vld [vmem:[%s5 + $0x78] sm:$0xff]
        %v9194 = vld [vmem:[%s5 + $0x80] sm:$0xff]
        %v9195 = vld [vmem:[%s5 + $0x88] sm:$0xff]
        %v9196 = vld [vmem:[%s5 + $0x90] sm:$0xff]
        %v9197 = vld [vmem:[%s5 + $0x98] sm:$0xff]
        %v9198 = vld [vmem:[%s5 + $0xa0] sm:$0xff]
        %v9199 = vld [vmem:[%s5 + $0xa8] sm:$0xff]
        %v9200 = vld [vmem:[%s5 + $0xb0] sm:$0xff]
        %v9201 = vld [vmem:[%s5 + $0xb8] sm:$0xff]
        %v9202 = vld [vmem:[%s5 + $0xc0] sm:$0xff]
        %v9203 = vld [vmem:[%s5 + $0xc8] sm:$0xff]
        %v9204 = vld [vmem:[%s5 + $0xd0] sm:$0xff]
        %v9205 = vld [vmem:[%s5 + $0xd8] sm:$0xff]
        %v9206 = vld [vmem:[%s5 + $0xe0] sm:$0xff]
        %v9207 = vld [vmem:[%s5 + $0xe8] sm:$0xff]
        %v9208 = vld [vmem:[%s5 + $0xf0] sm:$0xff]
        %v9209 = vld [vmem:[%s5 + $0xf8] sm:$0xff]
        %v9210 = vld [vmem:[%s5 + $0x100] sm:$0xff]
        %v9211 = vld [vmem:[%s5 + $0x108] sm:$0xff]
        %v9212 = vld [vmem:[%s5 + $0x110] sm:$0xff]
        %v9213 = vld [vmem:[%s5 + $0x118] sm:$0xff]
        %v9214 = vld [vmem:[%s5 + $0x120] sm:$0xff]
        %v9215 = vld [vmem:[%s5 + $0x128] sm:$0xff]
        %v9216 = vld [vmem:[%s5 + $0x130] sm:$0xff]
        %v9217 = vld [vmem:[%s5 + $0x138] sm:$0xff]
        %v9218 = vld [vmem:[%s5 + $0x140] sm:$0xff]
        %v9219 = vld [vmem:[%s5 + $0x148] sm:$0xff]
        %v9220 = vld [vmem:[%s5 + $0x150] sm:$0xff]
        %v9221 = vld [vmem:[%s5 + $0x158] sm:$0xff]
        %v9222 = vld [vmem:[%s5 + $0x160] sm:$0xff]
        %v9223 = vld [vmem:[%s5 + $0x168] sm:$0xff]
        %v9224 = vld [vmem:[%s5 + $0x170] sm:$0xff]
        %v9225 = vld [vmem:[%s5 + $0x178] sm:$0xff]
        %v9226 = vld [vmem:[%s6] sm:$0x3]
        %v9228 = vlaneseq
        %v9229 = vshrl.u32 %v9228, 7
        %v9230 = vsub.s32 0, %v9229
        %v9231 = vrot.slane %v9226, %v9230
        %v9232 = vlaneseq
        %v9233 = vshrl.u32 %v9232, 7
        %v9234 = vsub.s32 1, %v9233
        %v9235 = vrot.slane %v9226, %v9234
        %v9286 = vunpack.c.l.b16 %v9178
        %v9287 = vunpack.c.h.b16 %v9178
        %v9288 = vunpack.c.l.b16 %v9179
        %v9289 = vunpack.c.h.b16 %v9179
        %v9290 = vunpack.c.l.b16 %v9180
        %v9291 = vunpack.c.h.b16 %v9180
        %v9292 = vunpack.c.l.b16 %v9181
        %v9293 = vunpack.c.h.b16 %v9181
        %v9294 = vunpack.c.l.b16 %v9182
        %v9295 = vunpack.c.h.b16 %v9182
        %v9296 = vunpack.c.l.b16 %v9183
        %v9297 = vunpack.c.h.b16 %v9183
        %v9298 = vunpack.c.l.b16 %v9184
        %v9299 = vunpack.c.h.b16 %v9184
        %v9300 = vunpack.c.l.b16 %v9185
        %v9301 = vunpack.c.h.b16 %v9185
        %v9302 = vunpack.c.l.b16 %v9186
        %v9303 = vunpack.c.h.b16 %v9186
        %v9304 = vunpack.c.l.b16 %v9187
        %v9305 = vunpack.c.h.b16 %v9187
        %v9306 = vunpack.c.l.b16 %v9188
        %v9307 = vunpack.c.h.b16 %v9188
        %v9308 = vunpack.c.l.b16 %v9189
        %v9309 = vunpack.c.h.b16 %v9189
        %v9310 = vunpack.c.l.b16 %v9190
        %v9311 = vunpack.c.h.b16 %v9190
        %v9312 = vunpack.c.l.b16 %v9191
        %v9313 = vunpack.c.h.b16 %v9191
        %v9314 = vunpack.c.l.b16 %v9192
        %v9315 = vunpack.c.h.b16 %v9192
        %v9316 = vunpack.c.l.b16 %v9193
        %v9317 = vunpack.c.h.b16 %v9193
        %v9318 = vunpack.c.l.b16 %v9194
        %v9319 = vunpack.c.h.b16 %v9194
        %v9320 = vunpack.c.l.b16 %v9195
        %v9321 = vunpack.c.h.b16 %v9195
        %v9322 = vunpack.c.l.b16 %v9196
        %v9323 = vunpack.c.h.b16 %v9196
        %v9324 = vunpack.c.l.b16 %v9197
        %v9325 = vunpack.c.h.b16 %v9197
        %v9326 = vunpack.c.l.b16 %v9198
        %v9327 = vunpack.c.h.b16 %v9198
        %v9328 = vunpack.c.l.b16 %v9199
        %v9329 = vunpack.c.h.b16 %v9199
        %v9330 = vunpack.c.l.b16 %v9200
        %v9331 = vunpack.c.h.b16 %v9200
        %v9332 = vunpack.c.l.b16 %v9201
        %v9333 = vunpack.c.h.b16 %v9201
        %v9334 = vunpack.c.l.b16 %v9202
        %v9335 = vunpack.c.h.b16 %v9202
        %v9336 = vunpack.c.l.b16 %v9203
        %v9337 = vunpack.c.h.b16 %v9203
        %v9338 = vunpack.c.l.b16 %v9204
        %v9339 = vunpack.c.h.b16 %v9204
        %v9340 = vunpack.c.l.b16 %v9205
        %v9341 = vunpack.c.h.b16 %v9205
        %v9342 = vunpack.c.l.b16 %v9206
        %v9343 = vunpack.c.h.b16 %v9206
        %v9344 = vunpack.c.l.b16 %v9207
        %v9345 = vunpack.c.h.b16 %v9207
        %v9346 = vunpack.c.l.b16 %v9208
        %v9347 = vunpack.c.h.b16 %v9208
        %v9348 = vunpack.c.l.b16 %v9209
        %v9349 = vunpack.c.h.b16 %v9209
        %v9350 = vunpack.c.l.b16 %v9210
        %v9351 = vunpack.c.h.b16 %v9210
        %v9352 = vunpack.c.l.b16 %v9211
        %v9353 = vunpack.c.h.b16 %v9211
        %v9354 = vunpack.c.l.b16 %v9212
        %v9355 = vunpack.c.h.b16 %v9212
        %v9356 = vunpack.c.l.b16 %v9213
        %v9357 = vunpack.c.h.b16 %v9213
        %v9358 = vunpack.c.l.b16 %v9214
        %v9359 = vunpack.c.h.b16 %v9214
        %v9360 = vunpack.c.l.b16 %v9215
        %v9361 = vunpack.c.h.b16 %v9215
        %v9362 = vunpack.c.l.b16 %v9216
        %v9363 = vunpack.c.h.b16 %v9216
        %v9364 = vunpack.c.l.b16 %v9217
        %v9365 = vunpack.c.h.b16 %v9217
        %v9366 = vunpack.c.l.b16 %v9218
        %v9367 = vunpack.c.h.b16 %v9218
        %v9368 = vunpack.c.l.b16 %v9219
        %v9369 = vunpack.c.h.b16 %v9219
        %v9370 = vunpack.c.l.b16 %v9220
        %v9371 = vunpack.c.h.b16 %v9220
        %v9372 = vunpack.c.l.b16 %v9221
        %v9373 = vunpack.c.h.b16 %v9221
        %v9374 = vunpack.c.l.b16 %v9222
        %v9375 = vunpack.c.h.b16 %v9222
        %v9376 = vunpack.c.l.b16 %v9223
        %v9377 = vunpack.c.h.b16 %v9223
        %v9378 = vunpack.c.l.b16 %v9224
        %v9379 = vunpack.c.h.b16 %v9224
        %v9380 = vunpack.c.l.b16 %v9225
        %v9381 = vunpack.c.h.b16 %v9225
        %v9382 = vpack.c.b16 %v9288, %v9286
        %v9383 = vpack.c.b16 %v9289, %v9287
        %v9384 = vpack.c.b16 %v9292, %v9290
        %v9385 = vpack.c.b16 %v9293, %v9291
        %v9386 = vpack.c.b16 %v9296, %v9294
        %v9387 = vpack.c.b16 %v9297, %v9295
        %v9388 = vpack.c.b16 %v9300, %v9298
        %v9389 = vpack.c.b16 %v9301, %v9299
        %v9390 = vpack.c.b16 %v9304, %v9302
        %v9391 = vpack.c.b16 %v9305, %v9303
        %v9392 = vpack.c.b16 %v9308, %v9306
        %v9393 = vpack.c.b16 %v9309, %v9307
        %v9394 = vpack.c.b16 %v9312, %v9310
        %v9395 = vpack.c.b16 %v9313, %v9311
        %v9396 = vpack.c.b16 %v9316, %v9314
        %v9397 = vpack.c.b16 %v9317, %v9315
        %v9398 = vpack.c.b16 %v9320, %v9318
        %v9399 = vpack.c.b16 %v9321, %v9319
        %v9400 = vpack.c.b16 %v9324, %v9322
        %v9401 = vpack.c.b16 %v9325, %v9323
        %v9402 = vpack.c.b16 %v9328, %v9326
        %v9403 = vpack.c.b16 %v9329, %v9327
        %v9404 = vpack.c.b16 %v9332, %v9330
        %v9405 = vpack.c.b16 %v9333, %v9331
        %v9406 = vpack.c.b16 %v9336, %v9334
        %v9407 = vpack.c.b16 %v9337, %v9335
        %v9408 = vpack.c.b16 %v9340, %v9338
        %v9409 = vpack.c.b16 %v9341, %v9339
        %v9410 = vpack.c.b16 %v9344, %v9342
        %v9411 = vpack.c.b16 %v9345, %v9343
        %v9412 = vpack.c.b16 %v9348, %v9346
        %v9413 = vpack.c.b16 %v9349, %v9347
        %v9414 = vpack.c.b16 %v9352, %v9350
        %v9415 = vpack.c.b16 %v9353, %v9351
        %v9416 = vpack.c.b16 %v9356, %v9354
        %v9417 = vpack.c.b16 %v9357, %v9355
        %v9418 = vpack.c.b16 %v9360, %v9358
        %v9419 = vpack.c.b16 %v9361, %v9359
        %v9420 = vpack.c.b16 %v9364, %v9362
        %v9421 = vpack.c.b16 %v9365, %v9363
        %v9422 = vpack.c.b16 %v9368, %v9366
        %v9423 = vpack.c.b16 %v9369, %v9367
        %v9424 = vpack.c.b16 %v9372, %v9370
        %v9425 = vpack.c.b16 %v9373, %v9371
        %v9426 = vpack.c.b16 %v9376, %v9374
        %v9427 = vpack.c.b16 %v9377, %v9375
        %v9428 = vpack.c.b16 %v9380, %v9378
        %v9429 = vpack.c.b16 %v9381, %v9379
        %9478 = vmatprep.subr.bf16.mxu0 %v9383
        %9479 = vmatpush1.bf16.msra.mxu0 %v9382
        %9480 = vmatprep.subr.bf16.mxu0 %v9385
        %9481 = vmatpush1.bf16.msra.mxu0 %v9384
        %9482 = vmatprep.subr.bf16.mxu0 %v9387
        %9483 = vmatpush1.bf16.msra.mxu0 %v9386
        %9484 = vmatprep.subr.bf16.mxu0 %v9389
        %9485 = vmatpush1.bf16.msra.mxu0 %v9388
        %9486 = vmatprep.subr.bf16.mxu0 %v9391
        %9487 = vmatpush1.bf16.msra.mxu0 %v9390
        %9488 = vmatprep.subr.bf16.mxu0 %v9393
        %9489 = vmatpush1.bf16.msra.mxu0 %v9392
        %9490 = vmatprep.subr.bf16.mxu0 %v9395
        %9491 = vmatpush1.bf16.msra.mxu0 %v9394
        %9492 = vmatprep.subr.bf16.mxu0 %v9397
        %9493 = vmatpush1.bf16.msra.mxu0 %v9396
        %9494 = vmatprep.subr.bf16.mxu0 %v9399
        %9495 = vmatpush1.bf16.msra.mxu0 %v9398
        %9496 = vmatprep.subr.bf16.mxu0 %v9401
        %9497 = vmatpush1.bf16.msra.mxu0 %v9400
        %9498 = vmatprep.subr.bf16.mxu0 %v9403
        %9499 = vmatpush1.bf16.msra.mxu0 %v9402
        %9500 = vmatprep.subr.bf16.mxu0 %v9405
        %9501 = vmatpush1.bf16.msra.mxu0 %v9404
        %9502 = vmatprep.subr.bf16.mxu0 %v9407
        %9503 = vmatpush1.bf16.msra.mxu0 %v9406
        %9504 = vmatprep.subr.bf16.mxu0 %v9409
        %9505 = vmatpush1.bf16.msra.mxu0 %v9408
        %9506 = vmatprep.subr.bf16.mxu0 %v9411
        %9507 = vmatpush1.bf16.msra.mxu0 %v9410
        %9508 = vmatprep.subr.bf16.mxu0 %v9413
        %9509 = vmatpush1.bf16.msra.mxu0 %v9412
        %9510 = vmatprep.mubr.bf16.mxu0 %v9155
        %9511 = vmatmul.mubr.bf16.gmra.mrb[0].mxu0 %v9154
        %v9512 = vpop.f32.mrb[0].mxu0
        %v9513 = vadd.f32 %v9231, %v9512
        %v9514 = vpop.f32.mrb[0].mxu0
        %v9515 = vadd.f32 %v9235, %v9514
        %v9516 = vpop.f32.mrb[0].mxu0
        %v9517 = vadd.f32 %v9231, %v9516
        %v9518 = vpop.f32.mrb[0].mxu0
        %v9519 = vadd.f32 %v9235, %v9518
        %9520 = vmatprep.mubr.bf16.mxu0 %v9158
        %9521 = vmatmul.mubr.bf16.gmra.mrb[0].mxu0 %v9157
        %v9522 = vpop.f32.mrb[0].mxu0
        %v9523 = vadd.f32 %v9231, %v9522
        %v9524 = vpop.f32.mrb[0].mxu0
        %v9525 = vadd.f32 %v9235, %v9524
        %v9526 = vpop.f32.mrb[0].mxu0
        %v9527 = vadd.f32 %v9231, %v9526
        %v9528 = vpop.f32.mrb[0].mxu0
        %v9529 = vadd.f32 %v9235, %v9528
        %9530 = vmatprep.mubr.bf16.mxu0 %v9161
        %9531 = vmatmul.mubr.bf16.gmra.mrb[0].mxu0 %v9160
        %v9532 = vpop.f32.mrb[0].mxu0
        %v9533 = vadd.f32 %v9231, %v9532
        %v9534 = vpop.f32.mrb[0].mxu0
        %v9535 = vadd.f32 %v9235, %v9534
        %v9536 = vpop.f32.mrb[0].mxu0
        %v9537 = vadd.f32 %v9231, %v9536
        %v9538 = vpop.f32.mrb[0].mxu0
        %v9539 = vadd.f32 %v9235, %v9538
        %9540 = vmatprep.mubr.bf16.mxu0 %v9164
        %9541 = vmatmul.mubr.bf16.gmra.mrb[0].mxu0 %v9163
        %v9542 = vpop.f32.mrb[0].mxu0
        %v9543 = vadd.f32 %v9231, %v9542
        %v9544 = vpop.f32.mrb[0].mxu0
        %v9545 = vadd.f32 %v9235, %v9544
        %v9546 = vpop.f32.mrb[0].mxu0
        %v9547 = vadd.f32 %v9231, %v9546
        %v9548 = vpop.f32.mrb[0].mxu0
        %v9549 = vadd.f32 %v9235, %v9548
        %9550 = vmatprep.mubr.bf16.mxu0 %v9167
        %9551 = vmatmul.mubr.bf16.gmra.mrb[0].mxu0 %v9166
        %v9552 = vpop.f32.mrb[0].mxu0
        %v9553 = vadd.f32 %v9231, %v9552
        %v9554 = vpop.f32.mrb[0].mxu0
        %v9555 = vadd.f32 %v9235, %v9554
        %v9556 = vpop.f32.mrb[0].mxu0
        %v9557 = vadd.f32 %v9231, %v9556
        %v9558 = vpop.f32.mrb[0].mxu0
        %v9559 = vadd.f32 %v9235, %v9558
        %9560 = vmatprep.mubr.bf16.mxu0 %v9170
        %9561 = vmatmul.mubr.bf16.gmra.mrb[0].mxu0 %v9169
        %v9562 = vpop.f32.mrb[0].mxu0
        %v9563 = vadd.f32 %v9231, %v9562
        %v9564 = vpop.f32.mrb[0].mxu0
        %v9565 = vadd.f32 %v9235, %v9564
        %v9566 = vpop.f32.mrb[0].mxu0
        %v9567 = vadd.f32 %v9231, %v9566
        %v9568 = vpop.f32.mrb[0].mxu0
        %v9569 = vadd.f32 %v9235, %v9568
        %9570 = vmatprep.mubr.bf16.mxu0 %v9173
        %9571 = vmatmul.mubr.bf16.gmra.mrb[0].mxu0 %v9172
        %v9572 = vpop.f32.mrb[0].mxu0
        %v9573 = vadd.f32 %v9231, %v9572
        %v9574 = vpop.f32.mrb[0].mxu0
        %v9575 = vadd.f32 %v9235, %v9574
        %v9576 = vpop.f32.mrb[0].mxu0
        %v9577 = vadd.f32 %v9231, %v9576
        %v9578 = vpop.f32.mrb[0].mxu0
        %v9579 = vadd.f32 %v9235, %v9578
        %9580 = vmatprep.mubr.bf16.mxu0 %v9176
        %9581 = vmatmul.mubr.bf16.gmra.mrb[0].mxu0 %v9175
        %v9582 = vpop.f32.mrb[0].mxu0
        %v9583 = vadd.f32 %v9231, %v9582
        %v9584 = vpop.f32.mrb[0].mxu0
        %v9585 = vadd.f32 %v9235, %v9584
        %v9586 = vpop.f32.mrb[0].mxu0
        %v9587 = vadd.f32 %v9231, %v9586
        %v9588 = vpop.f32.mrb[0].mxu0
        %v9589 = vadd.f32 %v9235, %v9588
        %9590 = vdwg.mxu0
        %9591 = vmatprep.subr.bf16.mxu0 %v9415
        %9592 = vmatpush1.bf16.msra.mxu0 %v9414
        %9593 = vmatprep.subr.bf16.mxu0 %v9417
        %9594 = vmatpush1.bf16.msra.mxu0 %v9416
        %9595 = vmatprep.subr.bf16.mxu0 %v9419
        %9596 = vmatpush1.bf16.msra.mxu0 %v9418
        %9597 = vmatprep.subr.bf16.mxu0 %v9421
        %9598 = vmatpush1.bf16.msra.mxu0 %v9420
        %9599 = vmatprep.subr.bf16.mxu0 %v9423
        %9600 = vmatpush1.bf16.msra.mxu0 %v9422
        %9601 = vmatprep.subr.bf16.mxu0 %v9425
        %9602 = vmatpush1.bf16.msra.mxu0 %v9424
        %9603 = vmatprep.subr.bf16.mxu0 %v9427
        %9604 = vmatpush1.bf16.msra.mxu0 %v9426
        %9605 = vmatprep.subr.bf16.mxu0 %v9429
        %9606 = vmatpush1.bf16.msra.mxu0 %v9428
        %9607 = vmatprep.subr.bf16.mxu0 0
        %9608 = vmatpush1.bf16.msra.mxu0 0
        %9609 = vmatprep.subr.bf16.mxu0 0
        %9610 = vmatpush1.bf16.msra.mxu0 0
        %9611 = vmatprep.subr.bf16.mxu0 0
        %9612 = vmatpush1.bf16.msra.mxu0 0
        %9613 = vmatprep.subr.bf16.mxu0 0
        %9614 = vmatpush1.bf16.msra.mxu0 0
        %9615 = vmatprep.subr.bf16.mxu0 0
        %9616 = vmatpush1.bf16.msra.mxu0 0
        %9617 = vmatprep.subr.bf16.mxu0 0
        %9618 = vmatpush1.bf16.msra.mxu0 0
        %9619 = vmatprep.subr.bf16.mxu0 0
        %9620 = vmatpush1.bf16.msra.mxu0 0
        %9621 = vmatprep.subr.bf16.mxu0 0
        %9622 = vmatpush1.bf16.msra.mxu0 0
        %9623 = vmatprep.mubr.bf16.mxu0 0
        %9624 = vmatmul.mubr.bf16.gmra.mrb[0].mxu0 %v9156
        %v9625 = vpop.f32.mrb[0].mxu0
        %v9626 = vadd.f32 %v9513, %v9625
        %v9627 = vpop.f32.mrb[0].mxu0
        %v9628 = vadd.f32 %v9515, %v9627
        %v9629 = vpop.f32.mrb[0].mxu0
        %v9630 = vadd.f32 %v9517, %v9629
        %v9631 = vpop.f32.mrb[0].mxu0
        %v9632 = vadd.f32 %v9519, %v9631
        %9633 = vmatprep.mubr.bf16.mxu0 0
        %9634 = vmatmul.mubr.bf16.gmra.mrb[0].mxu0 %v9159
        %v9635 = vpop.f32.mrb[0].mxu0
        %v9636 = vadd.f32 %v9523, %v9635
        %v9637 = vpop.f32.mrb[0].mxu0
        %v9638 = vadd.f32 %v9525, %v9637
        %v9639 = vpop.f32.mrb[0].mxu0
        %v9640 = vadd.f32 %v9527, %v9639
        %v9641 = vpop.f32.mrb[0].mxu0
        %v9642 = vadd.f32 %v9529, %v9641
        %9643 = vmatprep.mubr.bf16.mxu0 0
        %9644 = vmatmul.mubr.bf16.gmra.mrb[0].mxu0 %v9162
        %v9645 = vpop.f32.mrb[0].mxu0
        %v9646 = vadd.f32 %v9533, %v9645
        %v9647 = vpop.f32.mrb[0].mxu0
        %v9648 = vadd.f32 %v9535, %v9647
        %v9649 = vpop.f32.mrb[0].mxu0
        %v9650 = vadd.f32 %v9537, %v9649
        %v9651 = vpop.f32.mrb[0].mxu0
        %v9652 = vadd.f32 %v9539, %v9651
        %9653 = vmatprep.mubr.bf16.mxu0 0
        %9654 = vmatmul.mubr.bf16.gmra.mrb[0].mxu0 %v9165
        %v9655 = vpop.f32.mrb[0].mxu0
        %v9656 = vadd.f32 %v9543, %v9655
        %v9657 = vpop.f32.mrb[0].mxu0
        %v9658 = vadd.f32 %v9545, %v9657
        %v9659 = vpop.f32.mrb[0].mxu0
        %v9660 = vadd.f32 %v9547, %v9659
        %v9661 = vpop.f32.mrb[0].mxu0
        %v9662 = vadd.f32 %v9549, %v9661
        %9663 = vmatprep.mubr.bf16.mxu0 0
        %9664 = vmatmul.mubr.bf16.gmra.mrb[0].mxu0 %v9168
        %v9665 = vpop.f32.mrb[0].mxu0
        %v9666 = vadd.f32 %v9553, %v9665
        %v9667 = vpop.f32.mrb[0].mxu0
        %v9668 = vadd.f32 %v9555, %v9667
        %v9669 = vpop.f32.mrb[0].mxu0
        %v9670 = vadd.f32 %v9557, %v9669
        %v9671 = vpop.f32.mrb[0].mxu0
        %v9672 = vadd.f32 %v9559, %v9671
        %9673 = vmatprep.mubr.bf16.mxu0 0
        %9674 = vmatmul.mubr.bf16.gmra.mrb[0].mxu0 %v9171
        %v9675 = vpop.f32.mrb[0].mxu0
        %v9676 = vadd.f32 %v9563, %v9675
        %v9677 = vpop.f32.mrb[0].mxu0
        %v9678 = vadd.f32 %v9565, %v9677
        %v9679 = vpop.f32.mrb[0].mxu0
        %v9680 = vadd.f32 %v9567, %v9679
        %v9681 = vpop.f32.mrb[0].mxu0
        %v9682 = vadd.f32 %v9569, %v9681
        %9683 = vmatprep.mubr.bf16.mxu0 0
        %9684 = vmatmul.mubr.bf16.gmra.mrb[0].mxu0 %v9174
        %v9685 = vpop.f32.mrb[0].mxu0
        %v9686 = vadd.f32 %v9573, %v9685
        %v9687 = vpop.f32.mrb[0].mxu0
        %v9688 = vadd.f32 %v9575, %v9687
        %v9689 = vpop.f32.mrb[0].mxu0
        %v9690 = vadd.f32 %v9577, %v9689
        %v9691 = vpop.f32.mrb[0].mxu0
        %v9692 = vadd.f32 %v9579, %v9691
        %9693 = vmatprep.mubr.bf16.mxu0 0
        %9694 = vmatmul.mubr.bf16.gmra.mrb[0].mxu0 %v9177
        %v9695 = vpop.f32.mrb[0].mxu0
        %v9696 = vadd.f32 %v9583, %v9695
        %v9697 = vpop.f32.mrb[0].mxu0
        %v9698 = vadd.f32 %v9585, %v9697
        %v9699 = vpop.f32.mrb[0].mxu0
        %v9700 = vadd.f32 %v9587, %v9699
        %v9701 = vpop.f32.mrb[0].mxu0
        %v9702 = vadd.f32 %v9589, %v9701
        %9703 = vdwg.mxu0
        %v9704 = vmul.f32 %v9626, 1.442695
        %v9705 = vpow.pop %v9704
        %v9706 = vmul.f32 %v9628, 1.442695
        %v9707 = vpow.pop %v9706
        %v9708 = vmul.f32 %v9630, 1.442695
        %v9709 = vpow.pop %v9708
        %v9710 = vmul.f32 %v9632, 1.442695
        %v9711 = vpow.pop %v9710
        %v9712 = vmul.f32 %v9636, 1.442695
        %v9713 = vpow.pop %v9712
        %v9714 = vmul.f32 %v9638, 1.442695
        %v9715 = vpow.pop %v9714
        %v9716 = vmul.f32 %v9640, 1.442695
        %v9717 = vpow.pop %v9716
        %v9718 = vmul.f32 %v9642, 1.442695
        %v9719 = vpow.pop %v9718
        %v9720 = vmul.f32 %v9646, 1.442695
        %v9721 = vpow.pop %v9720
        %v9722 = vmul.f32 %v9648, 1.442695
        %v9723 = vpow.pop %v9722
        %v9724 = vmul.f32 %v9650, 1.442695
        %v9725 = vpow.pop %v9724
        %v9726 = vmul.f32 %v9652, 1.442695
        %v9727 = vpow.pop %v9726
        %v9728 = vmul.f32 %v9656, 1.442695
        %v9729 = vpow.pop %v9728
        %v9730 = vmul.f32 %v9658, 1.442695
        %v9731 = vpow.pop %v9730
        %v9732 = vmul.f32 %v9660, 1.442695
        %v9733 = vpow.pop %v9732
        %v9734 = vmul.f32 %v9662, 1.442695
        %v9735 = vpow.pop %v9734
        %v9736 = vmul.f32 %v9666, 1.442695
        %v9737 = vpow.pop %v9736
        %v9738 = vmul.f32 %v9668, 1.442695
        %v9739 = vpow.pop %v9738
        %v9740 = vmul.f32 %v9670, 1.442695
        %v9741 = vpow.pop %v9740
        %v9742 = vmul.f32 %v9672, 1.442695
        %v9743 = vpow.pop %v9742
        %v9744 = vmul.f32 %v9676, 1.442695
        %v9745 = vpow.pop %v9744
        %v9746 = vmul.f32 %v9678, 1.442695
        %v9747 = vpow.pop %v9746
        %v9748 = vmul.f32 %v9680, 1.442695
        %v9749 = vpow.pop %v9748
        %v9750 = vmul.f32 %v9682, 1.442695
        %v9751 = vpow.pop %v9750
        %v9752 = vmul.f32 %v9686, 1.442695
        %v9753 = vpow.pop %v9752
        %v9754 = vmul.f32 %v9688, 1.442695
        %v9755 = vpow.pop %v9754
        %v9756 = vmul.f32 %v9690, 1.442695
        %v9757 = vpow.pop %v9756
        %v9758 = vmul.f32 %v9692, 1.442695
        %v9759 = vpow.pop %v9758
        %v9760 = vmul.f32 %v9696, 1.442695
        %v9761 = vpow.pop %v9760
        %v9762 = vmul.f32 %v9698, 1.442695
        %v9763 = vpow.pop %v9762
        %v9764 = vmul.f32 %v9700, 1.442695
        %v9765 = vpow.pop %v9764
        %v9766 = vmul.f32 %v9702, 1.442695
        %v9767 = vpow.pop %v9766
        %v9768 = vld [vmem:[%s7] sm:$0xff]
        %v9769 = vld [vmem:[%s7 + $0x8] sm:$0xff]
        %v9770 = vld [vmem:[%s7 + $0x10] sm:$0xff]
        %v9771 = vld [vmem:[%s7 + $0x18] sm:$0xff]
        %v9772 = vld [vmem:[%s7 + $0x20] sm:$0xff]
        %v9773 = vld [vmem:[%s7 + $0x28] sm:$0xff]
        %v9774 = vld [vmem:[%s7 + $0x30] sm:$0xff]
        %v9775 = vld [vmem:[%s7 + $0x38] sm:$0xff]
        %v9776 = vld [vmem:[%s7 + $0x40] sm:$0xff]
        %v9777 = vld [vmem:[%s7 + $0x48] sm:$0xff]
        %v9778 = vld [vmem:[%s7 + $0x50] sm:$0xff]
        %v9779 = vld [vmem:[%s7 + $0x58] sm:$0xff]
        %v9780 = vld [vmem:[%s7 + $0x60] sm:$0xff]
        %v9781 = vld [vmem:[%s7 + $0x68] sm:$0xff]
        %v9782 = vld [vmem:[%s7 + $0x70] sm:$0xff]
        %v9783 = vld [vmem:[%s7 + $0x78] sm:$0xff]
        %v9784 = vld [vmem:[%s7 + $0x80] sm:$0xff]
        %v9785 = vld [vmem:[%s7 + $0x88] sm:$0xff]
        %v9786 = vld [vmem:[%s7 + $0x90] sm:$0xff]
        %v9787 = vld [vmem:[%s7 + $0x98] sm:$0xff]
        %v9788 = vld [vmem:[%s7 + $0xa0] sm:$0xff]
        %v9789 = vld [vmem:[%s7 + $0xa8] sm:$0xff]
        %v9790 = vld [vmem:[%s7 + $0xb0] sm:$0xff]
        %v9791 = vld [vmem:[%s7 + $0xb8] sm:$0xff]
        %v9792 = vld [vmem:[%s7 + $0xc0] sm:$0xff]
        %v9793 = vld [vmem:[%s7 + $0xc8] sm:$0xff]
        %v9794 = vld [vmem:[%s7 + $0xd0] sm:$0xff]
        %v9795 = vld [vmem:[%s7 + $0xd8] sm:$0xff]
        %v9796 = vld [vmem:[%s7 + $0xe0] sm:$0xff]
        %v9797 = vld [vmem:[%s7 + $0xe8] sm:$0xff]
        %v9798 = vld [vmem:[%s7 + $0xf0] sm:$0xff]
        %v9799 = vld [vmem:[%s7 + $0xf8] sm:$0xff]
        %9800 = vmatprep.subr.mxu0 %v9769
        %9801 = vmatpush1.msra.mxu0 %v9768
        %9802 = vmatprep.subr.mxu0 %v9771
        %9803 = vmatpush1.msra.mxu0 %v9770
        %9804 = vmatprep.subr.mxu0 %v9773
        %9805 = vmatpush1.msra.mxu0 %v9772
        %9806 = vmatprep.subr.mxu0 %v9775
        %9807 = vmatpush1.msra.mxu0 %v9774
        %9808 = vmatprep.subr.mxu0 %v9777
        %9809 = vmatpush1.msra.mxu0 %v9776
        %9810 = vmatprep.subr.mxu0 %v9779
        %9811 = vmatpush1.msra.mxu0 %v9778
        %9812 = vmatprep.subr.mxu0 %v9781
        %9813 = vmatpush1.msra.mxu0 %v9780
        %9814 = vmatprep.subr.mxu0 %v9783
        %9815 = vmatpush1.msra.mxu0 %v9782
        %9816 = vmatprep.subr.mxu0 %v9785
        %9817 = vmatpush1.msra.mxu0 %v9784
        %9818 = vmatprep.subr.mxu0 %v9787
        %9819 = vmatpush1.msra.mxu0 %v9786
        %9820 = vmatprep.subr.mxu0 %v9789
        %9821 = vmatpush1.msra.mxu0 %v9788
        %9822 = vmatprep.subr.mxu0 %v9791
        %9823 = vmatpush1.msra.mxu0 %v9790
        %9824 = vmatprep.subr.mxu0 %v9793
        %9825 = vmatpush1.msra.mxu0 %v9792
        %9826 = vmatprep.subr.mxu0 %v9795
        %9827 = vmatpush1.msra.mxu0 %v9794
        %9828 = vmatprep.subr.mxu0 %v9797
        %9829 = vmatpush1.msra.mxu0 %v9796
        %9830 = vmatprep.subr.mxu0 %v9799
        %9831 = vmatpush1.msra.mxu0 %v9798
        %9832 = vmatprep.subr.mxu0 0.0
        %9833 = vmatpush1.msra.mxu0 0.0
        %9834 = vmatprep.subr.mxu0 0.0
        %9835 = vmatpush1.msra.mxu0 0.0
        %9836 = vmatprep.subr.mxu0 0.0
        %9837 = vmatpush1.msra.mxu0 0.0
        %9838 = vmatprep.subr.mxu0 0.0
        %9839 = vmatpush1.msra.mxu0 0.0
        %9840 = vmatprep.subr.mxu0 0.0
        %9841 = vmatpush1.msra.mxu0 0.0
        %9842 = vmatprep.subr.mxu0 0.0
        %9843 = vmatpush1.msra.mxu0 0.0
        %9844 = vmatprep.subr.mxu0 0.0
        %9845 = vmatpush1.msra.mxu0 0.0
        %9846 = vmatprep.subr.mxu0 0.0
        %9847 = vmatpush1.msra.mxu0 0.0
        %9848 = vmatprep.subr.mxu0 0.0
        %9849 = vmatpush1.msra.mxu0 0.0
        %9850 = vmatprep.subr.mxu0 0.0
        %9851 = vmatpush1.msra.mxu0 0.0
        %9852 = vmatprep.subr.mxu0 0.0
        %9853 = vmatpush1.msra.mxu0 0.0
        %9854 = vmatprep.subr.mxu0 0.0
        %9855 = vmatpush1.msra.mxu0 0.0
        %9856 = vmatprep.subr.mxu0 0.0
        %9857 = vmatpush1.msra.mxu0 0.0
        %9858 = vmatprep.subr.mxu0 0.0
        %9859 = vmatpush1.msra.mxu0 0.0
        %9860 = vmatprep.subr.mxu0 0.0
        %9861 = vmatpush1.msra.mxu0 0.0
        %9862 = vmatprep.subr.mxu0 0.0
        %9863 = vmatpush1.msra.mxu0 0.0
        %9864 = vmatprep.mubr.f32.mxu0 0.0
        %9865 = vmatmul.mubr.f32.gmra.mrb[0].mxu0 %v8315
        %v9866 = vpop.f32.mrb[0].mxu0
        %v9867 = vadd.f32 0.0, %v9866
        %v9868 = vpop.f32.mrb[0].mxu0
        %v9869 = vadd.f32 0.0, %v9868
        %9870 = vmatprep.mubr.f32.mxu0 0.0
        %9871 = vmatmul.mubr.f32.gmra.mrb[0].mxu0 %v8316
        %v9872 = vpop.f32.mrb[0].mxu0
        %v9873 = vadd.f32 0.0, %v9872
        %v9874 = vpop.f32.mrb[0].mxu0
        %v9875 = vadd.f32 0.0, %v9874
        %9876 = vmatprep.mubr.f32.mxu0 0.0
        %9877 = vmatmul.mubr.f32.gmra.mrb[0].mxu0 %v8317
        %v9878 = vpop.f32.mrb[0].mxu0
        %v9879 = vadd.f32 0.0, %v9878
        %v9880 = vpop.f32.mrb[0].mxu0
        %v9881 = vadd.f32 0.0, %v9880
        %9882 = vmatprep.mubr.f32.mxu0 0.0
        %9883 = vmatmul.mubr.f32.gmra.mrb[0].mxu0 %v8318
        %v9884 = vpop.f32.mrb[0].mxu0
        %v9885 = vadd.f32 0.0, %v9884
        %v9886 = vpop.f32.mrb[0].mxu0
        %v9887 = vadd.f32 0.0, %v9886
        %9888 = vmatprep.mubr.f32.mxu0 0.0
        %9889 = vmatmul.mubr.f32.gmra.mrb[0].mxu0 %v8319
        %v9890 = vpop.f32.mrb[0].mxu0
        %v9891 = vadd.f32 0.0, %v9890
        %v9892 = vpop.f32.mrb[0].mxu0
        %v9893 = vadd.f32 0.0, %v9892
        %9894 = vmatprep.mubr.f32.mxu0 0.0
        %9895 = vmatmul.mubr.f32.gmra.mrb[0].mxu0 %v8320
        %v9896 = vpop.f32.mrb[0].mxu0
        %v9897 = vadd.f32 0.0, %v9896
        %v9898 = vpop.f32.mrb[0].mxu0
        %v9899 = vadd.f32 0.0, %v9898
        %9900 = vmatprep.mubr.f32.mxu0 0.0
        %9901 = vmatmul.mubr.f32.gmra.mrb[0].mxu0 %v8321
        %v9902 = vpop.f32.mrb[0].mxu0
        %v9903 = vadd.f32 0.0, %v9902
        %v9904 = vpop.f32.mrb[0].mxu0
        %v9905 = vadd.f32 0.0, %v9904
        %9906 = vmatprep.mubr.f32.mxu0 0.0
        %9907 = vmatmul.mubr.f32.gmra.mrb[0].mxu0 %v8322
        %v9908 = vpop.f32.mrb[0].mxu0
        %v9909 = vadd.f32 0.0, %v9908
        %v9910 = vpop.f32.mrb[0].mxu0
        %v9911 = vadd.f32 0.0, %v9910
        %9912 = vmatprep.mubr.f32.mxu0 0.0
        %9913 = vmatmul.mubr.f32.gmra.mrb[0].mxu0 %v8323
        %v9914 = vpop.f32.mrb[0].mxu0
        %v9915 = vadd.f32 0.0, %v9914
        %v9916 = vpop.f32.mrb[0].mxu0
        %v9917 = vadd.f32 0.0, %v9916
        %9918 = vmatprep.mubr.f32.mxu0 0.0
        %9919 = vmatmul.mubr.f32.gmra.mrb[0].mxu0 %v8324
        %v9920 = vpop.f32.mrb[0].mxu0
        %v9921 = vadd.f32 0.0, %v9920
        %v9922 = vpop.f32.mrb[0].mxu0
        %v9923 = vadd.f32 0.0, %v9922
        %9924 = vmatprep.mubr.f32.mxu0 0.0
        %9925 = vmatmul.mubr.f32.gmra.mrb[0].mxu0 %v8325
        %v9926 = vpop.f32.mrb[0].mxu0
        %v9927 = vadd.f32 0.0, %v9926
        %v9928 = vpop.f32.mrb[0].mxu0
        %v9929 = vadd.f32 0.0, %v9928
        %9930 = vmatprep.mubr.f32.mxu0 0.0
        %9931 = vmatmul.mubr.f32.gmra.mrb[0].mxu0 %v8326
        %v9932 = vpop.f32.mrb[0].mxu0
        %v9933 = vadd.f32 0.0, %v9932
        %v9934 = vpop.f32.mrb[0].mxu0
        %v9935 = vadd.f32 0.0, %v9934
        %9936 = vmatprep.mubr.f32.mxu0 0.0
        %9937 = vmatmul.mubr.f32.gmra.mrb[0].mxu0 %v8327
        %v9938 = vpop.f32.mrb[0].mxu0
        %v9939 = vadd.f32 0.0, %v9938
        %v9940 = vpop.f32.mrb[0].mxu0
        %v9941 = vadd.f32 0.0, %v9940
        %9942 = vmatprep.mubr.f32.mxu0 0.0
        %9943 = vmatmul.mubr.f32.gmra.mrb[0].mxu0 %v8328
        %v9944 = vpop.f32.mrb[0].mxu0
        %v9945 = vadd.f32 0.0, %v9944
        %v9946 = vpop.f32.mrb[0].mxu0
        %v9947 = vadd.f32 0.0, %v9946
        %9948 = vmatprep.mubr.f32.mxu0 0.0
        %9949 = vmatmul.mubr.f32.gmra.mrb[0].mxu0 %v8329
        %v9950 = vpop.f32.mrb[0].mxu0
        %v9951 = vadd.f32 0.0, %v9950
        %v9952 = vpop.f32.mrb[0].mxu0
        %v9953 = vadd.f32 0.0, %v9952
        %9954 = vmatprep.mubr.f32.mxu0 0.0
        %9955 = vmatmul.mubr.f32.gmra.mrb[0].mxu0 %v8330
        %v9956 = vpop.f32.mrb[0].mxu0
        %v9957 = vadd.f32 0.0, %v9956
        %v9958 = vpop.f32.mrb[0].mxu0
        %v9959 = vadd.f32 0.0, %v9958
        %9960 = vdwg.mxu0
        %v9961 = vmul.f32 %v9867, %v9705
        %v9962 = vmul.f32 %v9869, %v9707
        %v9963 = vmul.f32 %v9873, %v9709
        %v9964 = vmul.f32 %v9875, %v9711
        %v9965 = vmul.f32 %v9879, %v9713
        %v9966 = vmul.f32 %v9881, %v9715
        %v9967 = vmul.f32 %v9885, %v9717
        %v9968 = vmul.f32 %v9887, %v9719
        %v9969 = vmul.f32 %v9891, %v9721
        %v9970 = vmul.f32 %v9893, %v9723
        %v9971 = vmul.f32 %v9897, %v9725
        %v9972 = vmul.f32 %v9899, %v9727
        %v9973 = vmul.f32 %v9903, %v9729
        %v9974 = vmul.f32 %v9905, %v9731
        %v9975 = vmul.f32 %v9909, %v9733
        %v9976 = vmul.f32 %v9911, %v9735
        %v9977 = vmul.f32 %v9915, %v9737
        %v9978 = vmul.f32 %v9917, %v9739
        %v9979 = vmul.f32 %v9921, %v9741
        %v9980 = vmul.f32 %v9923, %v9743
        %v9981 = vmul.f32 %v9927, %v9745
        %v9982 = vmul.f32 %v9929, %v9747
        %v9983 = vmul.f32 %v9933, %v9749
        %v9984 = vmul.f32 %v9935, %v9751
        %v9985 = vmul.f32 %v9939, %v9753
        %v9986 = vmul.f32 %v9941, %v9755
        %v9987 = vmul.f32 %v9945, %v9757
        %v9988 = vmul.f32 %v9947, %v9759
        %v9989 = vmul.f32 %v9951, %v9761
        %v9990 = vmul.f32 %v9953, %v9763
        %v9991 = vmul.f32 %v9957, %v9765
        %v9992 = vmul.f32 %v9959, %v9767
        %v9993 = vld [vmem:[%s8] sm:$0xff]
        %v9994 = vld [vmem:[%s8 + $0x8] sm:$0xff]
        %v9995 = vld [vmem:[%s8 + $0x10] sm:$0xff]
        %v9996 = vld [vmem:[%s8 + $0x18] sm:$0xff]
        %v9997 = vld [vmem:[%s8 + $0x20] sm:$0xff]
        %v9998 = vld [vmem:[%s8 + $0x28] sm:$0xff]
        %v9999 = vld [vmem:[%s8 + $0x30] sm:$0xff]
        %v10000 = vld [vmem:[%s8 + $0x38] sm:$0xff]
        %v10001 = vld [vmem:[%s8 + $0x40] sm:$0xff]
        %v10002 = vld [vmem:[%s8 + $0x48] sm:$0xff]
        %v10003 = vld [vmem:[%s8 + $0x50] sm:$0xff]
        %v10004 = vld [vmem:[%s8 + $0x58] sm:$0xff]
        %v10005 = vld [vmem:[%s8 + $0x60] sm:$0xff]
        %v10006 = vld [vmem:[%s8 + $0x68] sm:$0xff]
        %v10007 = vld [vmem:[%s8 + $0x70] sm:$0xff]
        %v10008 = vld [vmem:[%s8 + $0x78] sm:$0xff]
        %v10009 = vld [vmem:[%s8 + $0x80] sm:$0xff]
        %v10010 = vld [vmem:[%s8 + $0x88] sm:$0xff]
        %v10011 = vld [vmem:[%s8 + $0x90] sm:$0xff]
        %v10012 = vld [vmem:[%s8 + $0x98] sm:$0xff]
        %v10013 = vld [vmem:[%s8 + $0xa0] sm:$0xff]
        %v10014 = vld [vmem:[%s8 + $0xa8] sm:$0xff]
        %v10015 = vld [vmem:[%s8 + $0xb0] sm:$0xff]
        %v10016 = vld [vmem:[%s8 + $0xb8] sm:$0xff]
        %v10018 = vsel %vm2643, %v9962, 0
        %v10021 = vsel %vm2643, %v9964, 0
        %v10024 = vsel %vm2643, %v9966, 0
        %v10027 = vsel %vm2643, %v9968, 0
        %v10030 = vsel %vm2643, %v9970, 0
        %v10033 = vsel %vm2643, %v9972, 0
        %v10036 = vsel %vm2643, %v9974, 0
        %v10039 = vsel %vm2643, %v9976, 0
        %v10042 = vsel %vm2643, %v9978, 0
        %v10045 = vsel %vm2643, %v9980, 0
        %v10048 = vsel %vm2643, %v9982, 0
        %v10051 = vsel %vm2643, %v9984, 0
        %v10054 = vsel %vm2643, %v9986, 0
        %v10057 = vsel %vm2643, %v9988, 0
        %v10060 = vsel %vm2643, %v9990, 0
        %v10063 = vsel %vm2643, %v9992, 0
        %10065 = vmatprep.subr.mxu0 0.0
        %10066 = vmatpush1.msra.mxu0 %v9993
        %10067 = vmatprep.subr.mxu0 0.0
        %10068 = vmatpush1.msra.mxu0 %v9994
        %10069 = vmatprep.subr.mxu0 0.0
        %10070 = vmatpush1.msra.mxu0 %v9995
        %10071 = vmatprep.subr.mxu0 0.0
        %10072 = vmatpush1.msra.mxu0 %v9996
        %10073 = vmatprep.subr.mxu0 0.0
        %10074 = vmatpush1.msra.mxu0 %v9997
        %10075 = vmatprep.subr.mxu0 0.0
        %10076 = vmatpush1.msra.mxu0 %v9998
        %10077 = vmatprep.subr.mxu0 0.0
        %10078 = vmatpush1.msra.mxu0 %v9999
        %10079 = vmatprep.subr.mxu0 0.0
        %10080 = vmatpush1.msra.mxu0 %v10000
        %10081 = vmatprep.subr.mxu0 0.0
        %10082 = vmatpush1.msra.mxu0 %v10001
        %10083 = vmatprep.subr.mxu0 0.0
        %10084 = vmatpush1.msra.mxu0 %v10002
        %10085 = vmatprep.subr.mxu0 0.0
        %10086 = vmatpush1.msra.mxu0 %v10003
        %10087 = vmatprep.subr.mxu0 0.0
        %10088 = vmatpush1.msra.mxu0 %v10004
        %10089 = vmatprep.subr.mxu0 0.0
        %10090 = vmatpush1.msra.mxu0 %v10005
        %10091 = vmatprep.subr.mxu0 0.0
        %10092 = vmatpush1.msra.mxu0 %v10006
        %10093 = vmatprep.subr.mxu0 0.0
        %10094 = vmatpush1.msra.mxu0 %v10007
        %10095 = vmatprep.subr.mxu0 0.0
        %10096 = vmatpush1.msra.mxu0 %v10008
        %10097 = vmatprep.subr.mxu0 0.0
        %10098 = vmatpush1.msra.mxu0 %v10009
        %10099 = vmatprep.subr.mxu0 0.0
        %10100 = vmatpush1.msra.mxu0 %v10010
        %10101 = vmatprep.subr.mxu0 0.0
        %10102 = vmatpush1.msra.mxu0 %v10011
        %10103 = vmatprep.subr.mxu0 0.0
        %10104 = vmatpush1.msra.mxu0 %v10012
        %10105 = vmatprep.subr.mxu0 0.0
        %10106 = vmatpush1.msra.mxu0 %v10013
        %10107 = vmatprep.subr.mxu0 0.0
        %10108 = vmatpush1.msra.mxu0 %v10014
        %10109 = vmatprep.subr.mxu0 0.0
        %10110 = vmatpush1.msra.mxu0 %v10015
        %10111 = vmatprep.subr.mxu0 0.0
        %10112 = vmatpush1.msra.mxu0 %v10016
        %10113 = vmatprep.subr.mxu0 0.0
        %10114 = vmatpush1.msra.mxu0 0.0
        %10115 = vmatprep.subr.mxu0 0.0
        %10116 = vmatpush1.msra.mxu0 0.0
        %10117 = vmatprep.subr.mxu0 0.0
        %10118 = vmatpush1.msra.mxu0 0.0
        %10119 = vmatprep.subr.mxu0 0.0
        %10120 = vmatpush1.msra.mxu0 0.0
        %10121 = vmatprep.subr.mxu0 0.0
        %10122 = vmatpush1.msra.mxu0 0.0
        %10123 = vmatprep.subr.mxu0 0.0
        %10124 = vmatpush1.msra.mxu0 0.0
        %10125 = vmatprep.subr.mxu0 0.0
        %10126 = vmatpush1.msra.mxu0 0.0
        %10127 = vmatprep.subr.mxu0 0.0
        %10128 = vmatpush1.msra.mxu0 0.0
        %10129 = vmatprep.mubr.f32.mxu0 %v10018
        %10130 = vmatmul.mubr.f32.gmra.mrb[0].mxu0 %v9961
        %v10131 = vpop.f32.mrb[0].mxu0
        %v10132 = vadd.f32 0.0, %v10131
        %v10133 = vpop.f32.mrb[0].mxu0
        %10134 = vmatprep.mubr.f32.mxu0 %v10021
        %10135 = vmatmul.mubr.f32.gmra.mrb[0].mxu0 %v9963
        %v10136 = vpop.f32.mrb[0].mxu0
        %v10137 = vadd.f32 0.0, %v10136
        %v10138 = vpop.f32.mrb[0].mxu0
        %10139 = vmatprep.mubr.f32.mxu0 %v10024
        %10140 = vmatmul.mubr.f32.gmra.mrb[0].mxu0 %v9965
        %v10141 = vpop.f32.mrb[0].mxu0
        %v10142 = vadd.f32 0.0, %v10141
        %v10143 = vpop.f32.mrb[0].mxu0
        %10144 = vmatprep.mubr.f32.mxu0 %v10027
        %10145 = vmatmul.mubr.f32.gmra.mrb[0].mxu0 %v9967
        %v10146 = vpop.f32.mrb[0].mxu0
        %v10147 = vadd.f32 0.0, %v10146
        %v10148 = vpop.f32.mrb[0].mxu0
        %10149 = vmatprep.mubr.f32.mxu0 %v10030
        %10150 = vmatmul.mubr.f32.gmra.mrb[0].mxu0 %v9969
        %v10151 = vpop.f32.mrb[0].mxu0
        %v10152 = vadd.f32 0.0, %v10151
        %v10153 = vpop.f32.mrb[0].mxu0
        %10154 = vmatprep.mubr.f32.mxu0 %v10033
        %10155 = vmatmul.mubr.f32.gmra.mrb[0].mxu0 %v9971
        %v10156 = vpop.f32.mrb[0].mxu0
        %v10157 = vadd.f32 0.0, %v10156
        %v10158 = vpop.f32.mrb[0].mxu0
        %10159 = vmatprep.mubr.f32.mxu0 %v10036
        %10160 = vmatmul.mubr.f32.gmra.mrb[0].mxu0 %v9973
        %v10161 = vpop.f32.mrb[0].mxu0
        %v10162 = vadd.f32 0.0, %v10161
        %v10163 = vpop.f32.mrb[0].mxu0
        %10164 = vmatprep.mubr.f32.mxu0 %v10039
        %10165 = vmatmul.mubr.f32.gmra.mrb[0].mxu0 %v9975
        %v10166 = vpop.f32.mrb[0].mxu0
        %v10167 = vadd.f32 0.0, %v10166
        %v10168 = vpop.f32.mrb[0].mxu0
        %10169 = vmatprep.mubr.f32.mxu0 %v10042
        %10170 = vmatmul.mubr.f32.gmra.mrb[0].mxu0 %v9977
        %v10171 = vpop.f32.mrb[0].mxu0
        %v10172 = vadd.f32 0.0, %v10171
        %v10173 = vpop.f32.mrb[0].mxu0
        %10174 = vmatprep.mubr.f32.mxu0 %v10045
        %10175 = vmatmul.mubr.f32.gmra.mrb[0].mxu0 %v9979
        %v10176 = vpop.f32.mrb[0].mxu0
        %v10177 = vadd.f32 0.0, %v10176
        %v10178 = vpop.f32.mrb[0].mxu0
        %10179 = vmatprep.mubr.f32.mxu0 %v10048
        %10180 = vmatmul.mubr.f32.gmra.mrb[0].mxu0 %v9981
        %v10181 = vpop.f32.mrb[0].mxu0
        %v10182 = vadd.f32 0.0, %v10181
        %v10183 = vpop.f32.mrb[0].mxu0
        %10184 = vmatprep.mubr.f32.mxu0 %v10051
        %10185 = vmatmul.mubr.f32.gmra.mrb[0].mxu0 %v9983
        %v10186 = vpop.f32.mrb[0].mxu0
        %v10187 = vadd.f32 0.0, %v10186
        %v10188 = vpop.f32.mrb[0].mxu0
        %10189 = vmatprep.mubr.f32.mxu0 %v10054
        %10190 = vmatmul.mubr.f32.gmra.mrb[0].mxu0 %v9985
        %v10191 = vpop.f32.mrb[0].mxu0
        %v10192 = vadd.f32 0.0, %v10191
        %v10193 = vpop.f32.mrb[0].mxu0
        %10194 = vmatprep.mubr.f32.mxu0 %v10057
        %10195 = vmatmul.mubr.f32.gmra.mrb[0].mxu0 %v9987
        %v10196 = vpop.f32.mrb[0].mxu0
        %v10197 = vadd.f32 0.0, %v10196
        %v10198 = vpop.f32.mrb[0].mxu0
        %10199 = vmatprep.mubr.f32.mxu0 %v10060
        %10200 = vmatmul.mubr.f32.gmra.mrb[0].mxu0 %v9989
        %v10201 = vpop.f32.mrb[0].mxu0
        %v10202 = vadd.f32 0.0, %v10201
        %v10203 = vpop.f32.mrb[0].mxu0
        %10204 = vmatprep.mubr.f32.mxu0 %v10063
        %10205 = vmatmul.mubr.f32.gmra.mrb[0].mxu0 %v9991
        %v10206 = vpop.f32.mrb[0].mxu0
        %v10207 = vadd.f32 0.0, %v10206
        %v10208 = vpop.f32.mrb[0].mxu0
        %10209 = vdwg.mxu0
        %vm10210 = vcmp.eq.f32.partialorder %v10132, 0.0
        %vm10211 = vcmp.eq.f32.partialorder %v10137, 0.0
        %vm10212 = vcmp.eq.f32.partialorder %v10142, 0.0
        %vm10213 = vcmp.eq.f32.partialorder %v10147, 0.0
        %vm10214 = vcmp.eq.f32.partialorder %v10152, 0.0
        %vm10215 = vcmp.eq.f32.partialorder %v10157, 0.0
        %vm10216 = vcmp.eq.f32.partialorder %v10162, 0.0
        %vm10217 = vcmp.eq.f32.partialorder %v10167, 0.0
        %vm10218 = vcmp.eq.f32.partialorder %v10172, 0.0
        %vm10219 = vcmp.eq.f32.partialorder %v10177, 0.0
        %vm10220 = vcmp.eq.f32.partialorder %v10182, 0.0
        %vm10221 = vcmp.eq.f32.partialorder %v10187, 0.0
        %vm10222 = vcmp.eq.f32.partialorder %v10192, 0.0
        %vm10223 = vcmp.eq.f32.partialorder %v10197, 0.0
        %vm10224 = vcmp.eq.f32.partialorder %v10202, 0.0
        %vm10225 = vcmp.eq.f32.partialorder %v10207, 0.0
        %v10226 = vsel %vm10210, 2.220446e-16, %v10132
        %v10227 = vsel %vm10211, 2.220446e-16, %v10137
        %v10228 = vsel %vm10212, 2.220446e-16, %v10142
        %v10229 = vsel %vm10213, 2.220446e-16, %v10147
        %v10230 = vsel %vm10214, 2.220446e-16, %v10152
        %v10231 = vsel %vm10215, 2.220446e-16, %v10157
        %v10232 = vsel %vm10216, 2.220446e-16, %v10162
        %v10233 = vsel %vm10217, 2.220446e-16, %v10167
        %v10234 = vsel %vm10218, 2.220446e-16, %v10172
        %v10235 = vsel %vm10219, 2.220446e-16, %v10177
        %v10236 = vsel %vm10220, 2.220446e-16, %v10182
        %v10237 = vsel %vm10221, 2.220446e-16, %v10187
        %v10238 = vsel %vm10222, 2.220446e-16, %v10192
        %v10239 = vsel %vm10223, 2.220446e-16, %v10197
        %v10240 = vsel %vm10224, 2.220446e-16, %v10202
        %v10241 = vsel %vm10225, 2.220446e-16, %v10207
        %v10242 = vlog2.pop %v10226
        %v10243 = vmul.f32 %v10242, 0.6931472
        %v10244 = vlog2.pop %v10227
        %v10245 = vmul.f32 %v10244, 0.6931472
        %v10246 = vlog2.pop %v10228
        %v10247 = vmul.f32 %v10246, 0.6931472
        %v10248 = vlog2.pop %v10229
        %v10249 = vmul.f32 %v10248, 0.6931472
        %v10250 = vlog2.pop %v10230
        %v10251 = vmul.f32 %v10250, 0.6931472
        %v10252 = vlog2.pop %v10231
        %v10253 = vmul.f32 %v10252, 0.6931472
        %v10254 = vlog2.pop %v10232
        %v10255 = vmul.f32 %v10254, 0.6931472
        %v10256 = vlog2.pop %v10233
        %v10257 = vmul.f32 %v10256, 0.6931472
        %v10258 = vlog2.pop %v10234
        %v10259 = vmul.f32 %v10258, 0.6931472
        %v10260 = vlog2.pop %v10235
        %v10261 = vmul.f32 %v10260, 0.6931472
        %v10262 = vlog2.pop %v10236
        %v10263 = vmul.f32 %v10262, 0.6931472
        %v10264 = vlog2.pop %v10237
        %v10265 = vmul.f32 %v10264, 0.6931472
        %v10266 = vlog2.pop %v10238
        %v10267 = vmul.f32 %v10266, 0.6931472
        %v10268 = vlog2.pop %v10239
        %v10269 = vmul.f32 %v10268, 0.6931472
        %v10270 = vlog2.pop %v10240
        %v10271 = vmul.f32 %v10270, 0.6931472
        %v10272 = vlog2.pop %v10241
        %v10273 = vmul.f32 %v10272, 0.6931472
        %v10274 = vadd.f32 %v10243, %v7850
        %v10275 = vadd.f32 %v10245, %v7851
        %v10276 = vadd.f32 %v10247, %v7852
        %v10277 = vadd.f32 %v10249, %v7853
        %v10278 = vadd.f32 %v10251, %v7854
        %v10279 = vadd.f32 %v10253, %v7855
        %v10280 = vadd.f32 %v10255, %v7856
        %v10281 = vadd.f32 %v10257, %v7857
        %v10282 = vadd.f32 %v10259, %v7858
        %v10283 = vadd.f32 %v10261, %v7859
        %v10284 = vadd.f32 %v10263, %v7860
        %v10285 = vadd.f32 %v10265, %v7861
        %v10286 = vadd.f32 %v10267, %v7862
        %v10287 = vadd.f32 %v10269, %v7863
        %v10288 = vadd.f32 %v10271, %v7864
        %v10289 = vadd.f32 %v10273, %v7865
        %s10290 = scalar_lea.vmem %s461, 384
        %10291 = vst.msk [vmem:[%s10290] sm:$0xff] %vm491, %v10274
        %10292 = vst.msk [vmem:[%s10290 + $0x8] sm:$0xff] %vm491, %v10275
        %10293 = vst.msk [vmem:[%s10290 + $0x10] sm:$0xff] %vm491, %v10276
        %10294 = vst.msk [vmem:[%s10290 + $0x18] sm:$0xff] %vm491, %v10277
        %10295 = vst.msk [vmem:[%s10290 + $0x20] sm:$0xff] %vm491, %v10278
        %10296 = vst.msk [vmem:[%s10290 + $0x28] sm:$0xff] %vm491, %v10279
        %10297 = vst.msk [vmem:[%s10290 + $0x30] sm:$0xff] %vm491, %v10280
        %10298 = vst.msk [vmem:[%s10290 + $0x38] sm:$0xff] %vm491, %v10281
        %10299 = vst.msk [vmem:[%s10290 + $0x40] sm:$0xff] %vm491, %v10282
        %10300 = vst.msk [vmem:[%s10290 + $0x48] sm:$0xff] %vm491, %v10283
        %10301 = vst.msk [vmem:[%s10290 + $0x50] sm:$0xff] %vm491, %v10284
        %10302 = vst.msk [vmem:[%s10290 + $0x58] sm:$0xff] %vm491, %v10285
        %10303 = vst.msk [vmem:[%s10290 + $0x60] sm:$0xff] %vm491, %v10286
        %10304 = vst.msk [vmem:[%s10290 + $0x68] sm:$0xff] %vm491, %v10287
        %10305 = vst.msk [vmem:[%s10290 + $0x70] sm:$0xff] %vm491, %v10288
        %10306 = vst.msk [vmem:[%s10290 + $0x78] sm:$0xff] %vm491, %v10289
        %10307 = vst [vmem:[%s433] sm:$0x1] %v8352
        %10308 = vst [vmem:[%s439] sm:$0x1] %v8422
        %s10309 = smul.u32 64, %s34
        %p10310 = scmp.lt.s32.totalorder %s33, 1
        %s10311 = scalar_select %p10310, %s33, 1
        %p10312 = scmp.lt.s32.totalorder %s10309, 127
        %s10313 = scalar_select %p10312, %s10309, 127
        %s10314 = smul.addr %s10311, 128
        %s10315 = sadd.s32 %s10313, %s10314
        %s10316 = smul.addr %s10315, 8
        %s10317 = scalar_lea.vmem %s9, %s10316
        %s10318 = sand.u32 %s280, 1
        %s10319 = scalar_lea.sflag [#allocation3], %s10318
        %s10320 = sand.u32 %s280, 1
        %s10321 = scalar_lea.vmem [#allocation2], %s10320
        %s10322 = sand.u32 %s308, 1
        %s10323 = scalar_lea.sflag [#allocation5], %s10322
        %s10324 = sand.u32 %s308, 1
        %s10325 = scalar_lea.vmem [#allocation4], %s10324
        // Predicated region
        $region57: #{tpu_custom_call.1} parent=55 // pred_check
          %p10326 = pneg %p262
        $region58: #{tpu_custom_call.1} parent=55 // pred_check_branch
          %10328 = sbr.rel (%p10326) target = $region60
        $region59: #{tpu_custom_call.1} parent=55 // pred_region
          %s10329 = smul.u32 64, %s34
        $region60: #{tpu_custom_call.1} parent=55 // pred_fallthru
          _
        // Predicated region
        $region61: #{tpu_custom_call.1} parent=55 // pred_check
          %p10330 = pneg %p290
        $region62: #{tpu_custom_call.1} parent=55 // pred_check_branch
          %10332 = sbr.rel (%p10330) target = $region64
        $region63: #{tpu_custom_call.1} parent=55 // pred_region
          %s10334 = ssub.s32 16, 16
          %10335 = vsyncadd %s10319, %s10334
          %s10336 = smul.addr %s33, 2
          %s10337 = sadd.s32 %s34, %s10336
          %s10338 = smul.addr %s10337, 16
          %s10339 = scalar_lea.hbm %s10, %s10338
          %s10341 = sshll.u32 %s10321, 4
          %s10342 = int_to_ptr.vmem [resolvable:$true] %s10341
          %10344 = dma.vmem_to_hbm [thread:$0]  %s10342, 16, %s10339, %s10319
        $region64: #{tpu_custom_call.1} parent=55 // pred_fallthru
          _
        // Predicated region
        $region65: #{tpu_custom_call.1} parent=55 // pred_check
          %p10345 = pneg %p318
        $region66: #{tpu_custom_call.1} parent=55 // pred_check_branch
          %10347 = sbr.rel (%p10345) target = $region68
        $region67: #{tpu_custom_call.1} parent=55 // pred_region
          %s10349 = ssub.s32 16, 16
          %10350 = vsyncadd %s10323, %s10349
          %s10351 = smul.addr %s33, 2
          %s10352 = sadd.s32 %s34, %s10351
          %s10353 = smul.addr %s10352, 16
          %s10354 = scalar_lea.hbm %s11, %s10353
          %s10356 = sshll.u32 %s10325, 4
          %s10357 = int_to_ptr.vmem [resolvable:$true] %s10356
          %10359 = dma.vmem_to_hbm [thread:$0]  %s10357, 16, %s10354, %s10323
        $region68: #{tpu_custom_call.1} parent=55 // pred_fallthru
          _
      $region56: #{tpu_custom_call.1} parent=5 // pred_fallthru
        _
      %p10360 = scmp.le.s32.totalorder 2, %s24
      // Predicated region
      $region69: #{tpu_custom_call.1} parent=5 // pred_check
        %p10361 = pneg %p10360
      $region70: #{tpu_custom_call.1} parent=5 // pred_check_branch
        %10363 = sbr.rel (%p10361) target = $region72
      $region71: #{tpu_custom_call.1} parent=5 // pred_region
        %s10364 = ssub.s32 %s24, 2
        // Predicated region
        $region73: #{tpu_custom_call.1} parent=71 // pred_check
          %p10365 = pneg %p268
        $region74: #{tpu_custom_call.1} parent=71 // pred_check_branch
          %10367 = sbr.rel (%p10365) target = $region76
        $region75: #{tpu_custom_call.1} parent=71 // pred_region
          %s10368 = smul.u32 64, %s36
          %p10369 = scmp.lt.s32.totalorder %s35, 1
          %s10370 = scalar_select %p10369, %s35, 1
          %p10371 = scmp.lt.s32.totalorder %s10368, 127
          %s10372 = scalar_select %p10371, %s10368, 127
          %s10373 = smul.addr %s10370, 128
          %s10374 = sadd.s32 %s10372, %s10373
          %s10375 = smul.addr %s10374, 8
          %s10376 = scalar_lea.vmem %s9, %s10375
        $region76: #{tpu_custom_call.1} parent=71 // pred_fallthru
          _
        // Predicated region
        $region77: #{tpu_custom_call.1} parent=71 // pred_check
          %p10377 = pneg %p296
        $region78: #{tpu_custom_call.1} parent=71 // pred_check_branch
          %10379 = sbr.rel (%p10377) target = $region80
        $region79: #{tpu_custom_call.1} parent=71 // pred_region
          %s10380 = sand.u32 %s281, 1
          %s10381 = scalar_lea.sflag [#allocation3], %s10380
          %s10382 = sand.u32 %s281, 1
          %s10383 = scalar_lea.vmem [#allocation2], %s10382
          %10384 = dma.done %s10381, 16
        $region80: #{tpu_custom_call.1} parent=71 // pred_fallthru
          _
        // Predicated region
        $region81: #{tpu_custom_call.1} parent=71 // pred_check
          %p10385 = pneg %p324
        $region82: #{tpu_custom_call.1} parent=71 // pred_check_branch
          %10387 = sbr.rel (%p10385) target = $region84
        $region83: #{tpu_custom_call.1} parent=71 // pred_region
          %s10388 = sand.u32 %s309, 1
          %s10389 = scalar_lea.sflag [#allocation5], %s10388
          %s10390 = sand.u32 %s309, 1
          %s10391 = scalar_lea.vmem [#allocation4], %s10390
          %10392 = dma.done %s10389, 16
        $region84: #{tpu_custom_call.1} parent=71 // pred_fallthru
          _
      $region72: #{tpu_custom_call.1} parent=5 // pred_fallthru
        _
    $region6: #{tpu_custom_call.1} parent=1 // loop_footer
      %s28 = sadd.s32 1, %s24
    $region7: #{tpu_custom_call.1} parent=1 // loop_footer_branch
      %23 = sbr.rel target = $region3
    $region8: #{tpu_custom_call.1} parent=1 // loop_exit
      _
    %10393 = vsyncpa [#allocation3], 1
    %s10394 = scalar_lea.sflag [#allocation3], 1
    %10395 = vsyncpa %s10394, 1
    %10396 = vsyncpa [#allocation5], 1
    %s10397 = scalar_lea.sflag [#allocation5], 1
    %10398 = vsyncpa %s10397, 1

</llo_original>
